<compile_context>
chip_gen: v5e
topology: v5e:2x2
jax: 0.10.0
libtpu: 0.0.40
codegen_flags: <defaults>
</compile_context>

<pallas_src>
import jax
import jax.numpy as jnp
import numpy as np
from jax.experimental import pallas as pl
from jax.experimental.pallas import tpu as pltpu

_EPS = 1e-5                         # PyTorch GroupNorm default eps
_HI = jax.lax.Precision.HIGHEST     # only for tiny f32 GN-statistics dots


def _silu(x):
    # exp + approximate reciprocal both issue on the EUP slot.
    return x * pl.reciprocal(1.0 + jnp.exp(-x), approx=True)


def _make_kernel(D, H, W, Cin, Cout, G):
    R = D * H                       # rows of the folded layout (d, h)
    Lin = W * Cin                   # input lanes  (w, cin)
    L = W * Cout                    # output lanes (w, cout)
    cg = Cout // G
    inv_count = 1.0 / float(D * H * W * cg)
    TAPS = [(kd, kh) for kd in range(3) for kh in range(3)]

    def shift_rows(v, s):
        # u[r, :] = v[r + s, :] for 0 <= r + s < R, else 0.  (s static int)
        if s == 0:
            return v
        pad = jnp.zeros((abs(s), v.shape[1]), v.dtype)
        if s > 0:
            return jnp.concatenate([v[s:, :], pad], axis=0)
        return jnp.concatenate([pad, v[:s, :]], axis=0)

    def gn(h, gamma_l, beta_l, gmap, gmapT):
        # Single-pass statistics: var = E[x^2] - mean^2.  Stats dots stay
        # f32 / HIGHEST so the sums are not bf16-rounded (they are tiny, M=2).
        s1 = jnp.sum(h, axis=0, keepdims=True)                  # (1, L)
        s2 = jnp.sum(h * h, axis=0, keepdims=True)               # (1, L)
        sg = jnp.dot(jnp.concatenate([s1, s2], axis=0), gmap,
                     preferred_element_type=jnp.float32, precision=_HI)  # (2, G)
        mean = sg[0:1] * inv_count
        var = sg[1:2] * inv_count - mean * mean
        inv = jax.lax.rsqrt(var + _EPS)
        ml = jnp.dot(jnp.concatenate([mean, inv], axis=0), gmapT,
                     preferred_element_type=jnp.float32, precision=_HI)  # (2, L)
        a = ml[1:2] * gamma_l
        b = beta_l - ml[0:1] * a
        return h * a + b

    def kernel(x_ref, w1_ref, b1_ref, g1_ref, be1_ref,
               w2_ref, b2_ref, g2_ref, be2_ref,
               dsw_ref, bds_ref, gds_ref, beds_ref,
               gmap_ref, gmapT_ref, o_ref, col1_ref, col2_ref):
        x = x_ref[0]                                             # (R, Lin) f32
        gmap = gmap_ref[...]
        gmapT = gmapT_ref[...]

        # Boundary masks: computed once, reused by both convs.
        h_idx = jax.lax.broadcasted_iota(jnp.int32, (R, 1), 0) % H
        mask_hm = h_idx >= 1          # rows where an (h-1) neighbour exists
        mask_hp = h_idx < (H - 1)     # rows where an (h+1) neighbour exists

        def stage_taps(v, col_ref, slab):
            # Write the 9 shifted/masked bf16 tap views side-by-side into the
            # im2col scratch -> (R, 9*slab).  D-boundary rows are zero-filled
            # by shift_rows; only the H-boundary needs an explicit mask.
            for t, (kd, kh) in enumerate(TAPS):
                u = shift_rows(v, (kd - 1) * H + (kh - 1))
                if kh == 0:
                    u = jnp.where(mask_hm, u, 0.0)
                elif kh == 2:
                    u = jnp.where(mask_hp, u, 0.0)
                col_ref[:, t * slab:(t + 1) * slab] = u.astype(jnp.bfloat16)

        # ---- conv1 (3x3x3): one long-K bf16 matmul, f32 accumulation ----
        stage_taps(x, col1_ref, Lin)
        acc1 = jnp.dot(col1_ref[...], w1_ref[...],
                       preferred_element_type=jnp.float32) + b1_ref[...]
        h1 = _silu(gn(acc1, g1_ref[...], be1_ref[...], gmap, gmapT))

        # ---- downsample branch: 1x1x1 conv + GroupNorm (one small matmul) ----
        dsa = jnp.dot(x.astype(jnp.bfloat16), dsw_ref[...],
                      preferred_element_type=jnp.float32) + bds_ref[...]
        ds = gn(dsa, gds_ref[...], beds_ref[...], gmap, gmapT)

        # ---- conv2 (3x3x3): one long-K bf16 matmul + GroupNorm ----
        stage_taps(h1, col2_ref, L)
        acc2 = jnp.dot(col2_ref[...], w2_ref[...],
                       preferred_element_type=jnp.float32) + b2_ref[...]
        h2 = gn(acc2, g2_ref[...], be2_ref[...], gmap, gmapT)

        # ---- residual add + SiLU (lane-dense store) ----
        o_ref[...] = _silu(h2 + ds).reshape(1, R, L)

    return kernel


# ----------------------- one-time weight preprocessing -----------------------
def _banded_weights_np(w, W):
    # w: (3, 3, 3, cin, cout) -> (9, W*cin, W*cout) block-banded over W
    # (handles W-direction padding for free via the band structure).
    cin, cout = w.shape[3], w.shape[4]
    band = np.zeros((3, 3, W * cin, W * cout), np.float32)
    for kw in range(3):
        for wd in range(W):
            ws = wd + kw - 1
            if 0 <= ws < W:
                band[:, :, ws * cin:(ws + 1) * cin,
                     wd * cout:(wd + 1) * cout] = w[:, :, kw]
    return band.reshape(9, W * cin, W * cout)


def _blockdiag_np(wds, W):
    # wds: (cin, cout) -> (W*cin, W*cout) block-diagonal (1x1x1 conv).
    cin, cout = wds.shape
    m = np.zeros((W * cin, W * cout), np.float32)
    for wp in range(W):
        m[wp * cin:(wp + 1) * cin, wp * cout:(wp + 1) * cout] = wds
    return m


def prepare_params(params, W, num_groups=32):
    """Hoisted per-parameter-set preprocessing (numpy, runs once)."""
    w1 = np.asarray(params["w1"], np.float32)
    w2 = np.asarray(params["w2"], np.float32)
    Cin, Cout = w1.shape[-2], w1.shape[-1]
    G = num_groups
    cg = Cout // G
    L = W * Cout

    band1 = _banded_weights_np(w1.reshape(3, 3, 3, Cin, Cout), W)
    band2 = _banded_weights_np(w2.reshape(3, 3, 3, Cout, Cout), W)
    w1f = band1.reshape(9 * W * Cin, L)          # (288, L)  folded-K conv1
    w2f = band2.reshape(9 * L, L)                # (9L, L)   folded-K conv2
    dsw = _blockdiag_np(np.asarray(params["wds"], np.float32), W)

    def tile_l(v):                               # (1, Cout) -> (1, L)
        return np.tile(np.asarray(v, np.float32).reshape(1, Cout), (1, W))

    grp = (np.arange(L) % Cout) // cg
    gmap = (grp[:, None] == np.arange(G)[None, :]).astype(np.float32)   # (L, G)

    return {
        "w1f": jnp.asarray(w1f, jnp.bfloat16),
        "w2f": jnp.asarray(w2f, jnp.bfloat16),
        "dsw": jnp.asarray(dsw, jnp.bfloat16),
        "b1l": jnp.asarray(tile_l(params["b1"])),
        "g1l": jnp.asarray(tile_l(params["g1"])),
        "be1l": jnp.asarray(tile_l(params["be1"])),
        "b2l": jnp.asarray(tile_l(params["b2"])),
        "g2l": jnp.asarray(tile_l(params["g2"])),
        "be2l": jnp.asarray(tile_l(params["be2"])),
        "bdsl": jnp.asarray(tile_l(params["bds"])),
        "gdsl": jnp.asarray(tile_l(params["gds"])),
        "bedsl": jnp.asarray(tile_l(params["beds"])),
        "gmap": jnp.asarray(gmap),
        "gmapT": jnp.asarray(np.ascontiguousarray(gmap.T)),
    }


# ------------------------------- forward pass --------------------------------
def residual_block_pallas(x, p):
    # x: (N, Cin, D, H, W) float32 (PyTorch NCDHW convention)
    N, Cin, D, H, W = x.shape
    L, G = p["gmap"].shape
    Cout = L // W
    R = D * H
    Lin = W * Cin

    # TODO(synk): channels-last I/O would remove this extra HBM round trip.
    x_r = jnp.transpose(x, (0, 2, 3, 4, 1)).astype(jnp.float32).reshape(N, R, Lin)

    kernel = _make_kernel(D, H, W, Cin, Cout, G)

    def rep(a):  # whole-array block, constant index across the batch grid
        nd = a.ndim
        return pl.BlockSpec(a.shape, lambda n, _nd=nd: (0,) * _nd)

    weights = [p["w1f"], p["b1l"], p["g1l"], p["be1l"],
               p["w2f"], p["b2l"], p["g2l"], p["be2l"],
               p["dsw"], p["bdsl"], p["gdsl"], p["bedsl"],
               p["gmap"], p["gmapT"]]

    out_r = pl.pallas_call(
        kernel,
        out_shape=jax.ShapeDtypeStruct((N, R, L), jnp.float32),
        grid=(N,),
        in_specs=[pl.BlockSpec((1, R, Lin), lambda n: (n, 0, 0))]
                 + [rep(w) for w in weights],
        out_specs=pl.BlockSpec((1, R, L), lambda n: (n, 0, 0)),
        scratch_shapes=[pltpu.VMEM((R, 9 * Lin), jnp.bfloat16),   # conv1 im2col
                        pltpu.VMEM((R, 9 * L), jnp.bfloat16)],    # conv2 im2col
        compiler_params=pltpu.CompilerParams(
            dimension_semantics=("parallel",),
            vmem_limit_bytes=32 * 1024 * 1024),
    )(x_r, *weights)

    out = out_r.reshape(N, D, H, W, Cout)
    return jnp.transpose(out, (0, 4, 1, 2, 3))


# ----------------------------- pure-JAX reference ----------------------------
def _ref_group_norm(h, gamma, beta, num_groups):
    N, D, H, W, C = h.shape
    hg = h.reshape(N, D * H * W, num_groups, C // num_groups)
    mean = jnp.mean(hg, axis=(1, 3), keepdims=True)
    var = jnp.mean((hg - mean) ** 2, axis=(1, 3), keepdims=True)
    hn = ((hg - mean) * jax.lax.rsqrt(var + _EPS)).reshape(N, D, H, W, C)
    return hn * gamma.reshape(1, 1, 1, 1, C) + beta.reshape(1, 1, 1, 1, C)


def _ref_conv3(x_cl, w, b):
    N, D, H, W, Cin = x_cl.shape
    Cout = w.shape[-1]
    xp = jnp.pad(x_cl, ((0, 0), (1, 1), (1, 1), (1, 1), (0, 0)))
    out = jnp.zeros((N, D, H, W, Cout), jnp.float32)
    t = 0
    for kd in range(3):
        for kh in range(3):
            for kw in range(3):
                patch = xp[:, kd:kd + D, kh:kh + H, kw:kw + W, :]
                out = out + jnp.einsum("ndhwc,co->ndhwo", patch, w[t],
                                       precision=_HI)
                t += 1
    return out + b.reshape(1, 1, 1, 1, Cout)


def residual_block_ref(x, params, num_groups=32):
    x_cl = jnp.transpose(x, (0, 2, 3, 4, 1)).astype(jnp.float32)
    h = _ref_conv3(x_cl, params["w1"], params["b1"])
    h = jax.nn.silu(_ref_group_norm(h, params["g1"], params["be1"], num_groups))
    h = _ref_conv3(h, params["w2"], params["b2"])
    h = _ref_group_norm(h, params["g2"], params["be2"], num_groups)
    ds = jnp.einsum("ndhwc,co->ndhwo", x_cl, params["wds"], precision=_HI)
    ds = ds + params["bds"].reshape(1, 1, 1, 1, -1)
    ds = _ref_group_norm(ds, params["gds"], params["beds"], num_groups)
    out = jax.nn.silu(h + ds)
    return jnp.transpose(out, (0, 4, 1, 2, 3))


if __name__ == "__main__":
    # ResidualBlock(inc=4, outc=32): GroupNorm(32, 32) => group size 1.
    N, Cin, Cout = 2, 4, 32
    D = H = W = 8

    key = jax.random.PRNGKey(0)
    keys = jax.random.split(key, 14)
    f32 = jnp.float32
    params = {
        "w1":  0.10 * jax.random.normal(keys[0], (27, Cin, Cout), f32),
        "b1":  0.05 * jax.random.normal(keys[1], (1, Cout), f32),
        "g1":  1.0 + 0.1 * jax.random.normal(keys[2], (1, Cout), f32),
        "be1": 0.1 * jax.random.normal(keys[3], (1, Cout), f32),
        "w2":  0.05 * jax.random.normal(keys[4], (27, Cout, Cout), f32),
        "b2":  0.05 * jax.random.normal(keys[5], (1, Cout), f32),
        "g2":  1.0 + 0.1 * jax.random.normal(keys[6], (1, Cout), f32),
        "be2": 0.1 * jax.random.normal(keys[7], (1, Cout), f32),
        "wds": 0.10 * jax.random.normal(keys[8], (Cin, Cout), f32),
        "bds": 0.05 * jax.random.normal(keys[9], (1, Cout), f32),
        "gds": 1.0 + 0.1 * jax.random.normal(keys[10], (1, Cout), f32),
        "beds": 0.1 * jax.random.normal(keys[11], (1, Cout), f32),
    }
    x = jax.random.normal(keys[12], (N, Cin, D, H, W), f32)

    prepped = prepare_params(params, W, num_groups=32)   # once per param set
    fwd = jax.jit(residual_block_pallas)

    out = jax.block_until_ready(fwd(x, prepped))
    ref = jax.block_until_ready(residual_block_ref(x, params))
    # Conv matmuls run in bf16 (per perf review) with f32 accumulation, so the
    # comparison against the f32 reference uses bf16-level tolerance.
    np.testing.assert_allclose(np.asarray(out), np.asarray(ref),
                               rtol=2e-2, atol=2e-2)
    print("KERNEL_OK")
</pallas_src>

<mosaic_0001>
module attributes {stable_mosaic.version = 11 : i64} {
  func.func @kernel(%arg0: i32, %arg1: memref<1x64x32xf32, #tpu.memory_space<vmem>>, %arg2: memref<288x256xbf16, #tpu.memory_space<vmem>>, %arg3: memref<1x256xf32, #tpu.memory_space<vmem>>, %arg4: memref<1x256xf32, #tpu.memory_space<vmem>>, %arg5: memref<1x256xf32, #tpu.memory_space<vmem>>, %arg6: memref<2304x256xbf16, #tpu.memory_space<vmem>>, %arg7: memref<1x256xf32, #tpu.memory_space<vmem>>, %arg8: memref<1x256xf32, #tpu.memory_space<vmem>>, %arg9: memref<1x256xf32, #tpu.memory_space<vmem>>, %arg10: memref<32x256xbf16, #tpu.memory_space<vmem>>, %arg11: memref<1x256xf32, #tpu.memory_space<vmem>>, %arg12: memref<1x256xf32, #tpu.memory_space<vmem>>, %arg13: memref<1x256xf32, #tpu.memory_space<vmem>>, %arg14: memref<256x32xf32, #tpu.memory_space<vmem>>, %arg15: memref<32x256xf32, #tpu.memory_space<vmem>>, %arg16: memref<1x64x256xf32, #tpu.memory_space<vmem>>, %arg17: memref<64x288xbf16, #tpu.memory_space<vmem>>, %arg18: memref<64x2304xbf16, #tpu.memory_space<vmem>>) attributes {dimension_semantics = [#tpu.dimension_semantics<parallel>], iteration_bounds = array<i64: 2>, scalar_prefetch = 0 : i64, scratch_operands = 2 : i64, tpu.core_type = #tpu.core_type<tc>, window_params = [{transform_indices = @transform_0, window_bounds = array<i64: 1, 64, 32>}, {pipeline_mode = #tpu.pipeline_mode<synchronous>, transform_indices = @transform_1, window_bounds = array<i64: 288, 256>}, {pipeline_mode = #tpu.pipeline_mode<synchronous>, transform_indices = @transform_2, window_bounds = array<i64: 1, 256>}, {pipeline_mode = #tpu.pipeline_mode<synchronous>, transform_indices = @transform_3, window_bounds = array<i64: 1, 256>}, {pipeline_mode = #tpu.pipeline_mode<synchronous>, transform_indices = @transform_4, window_bounds = array<i64: 1, 256>}, {pipeline_mode = #tpu.pipeline_mode<synchronous>, transform_indices = @transform_5, window_bounds = array<i64: 2304, 256>}, {pipeline_mode = #tpu.pipeline_mode<synchronous>, transform_indices = @transform_6, window_bounds = array<i64: 1, 256>}, {pipeline_mode = #tpu.pipeline_mode<synchronous>, transform_indices = @transform_7, window_bounds = array<i64: 1, 256>}, {pipeline_mode = #tpu.pipeline_mode<synchronous>, transform_indices = @transform_8, window_bounds = array<i64: 1, 256>}, {pipeline_mode = #tpu.pipeline_mode<synchronous>, transform_indices = @transform_9, window_bounds = array<i64: 32, 256>}, {pipeline_mode = #tpu.pipeline_mode<synchronous>, transform_indices = @transform_10, window_bounds = array<i64: 1, 256>}, {pipeline_mode = #tpu.pipeline_mode<synchronous>, transform_indices = @transform_11, window_bounds = array<i64: 1, 256>}, {pipeline_mode = #tpu.pipeline_mode<synchronous>, transform_indices = @transform_12, window_bounds = array<i64: 1, 256>}, {pipeline_mode = #tpu.pipeline_mode<synchronous>, transform_indices = @transform_13, window_bounds = array<i64: 256, 32>}, {pipeline_mode = #tpu.pipeline_mode<synchronous>, transform_indices = @transform_14, window_bounds = array<i64: 32, 256>}, {transform_indices = @transform_15, window_bounds = array<i64: 1, 64, 256>}]} {
    %c0 = arith.constant 0 : index
    %c0_0 = arith.constant 0 : index
    %c0_1 = arith.constant 0 : index
    %0 = vector.load %arg1[%c0, %c0_0, %c0_1] : memref<1x64x32xf32, #tpu.memory_space<vmem>>, vector<1x64x32xf32>
    %1 = vector.shape_cast %0 : vector<1x64x32xf32> to vector<64x32xf32>
    %c0_2 = arith.constant 0 : index
    %c0_3 = arith.constant 0 : index
    %2 = vector.load %arg14[%c0_2, %c0_3] : memref<256x32xf32, #tpu.memory_space<vmem>>, vector<256x32xf32>
    %c0_4 = arith.constant 0 : index
    %c0_5 = arith.constant 0 : index
    %3 = vector.load %arg15[%c0_4, %c0_5] : memref<32x256xf32, #tpu.memory_space<vmem>>, vector<32x256xf32>
    %4 = tpu.iota {dimensions = array<i32: 0>} : vector<64x1xi32>
    %c8_i32 = arith.constant 8 : i32
    %c0_i32 = arith.constant 0 : i32
    %5 = arith.cmpi eq, %c8_i32, %c0_i32 : i32
    %c1_i32 = arith.constant 1 : i32
    %6 = arith.select %5, %c1_i32, %c8_i32 : i32
    %7 = vector.broadcast %6 : i32 to vector<64x1xi32>
    %8 = arith.remsi %4, %7 : vector<64x1xi32>
    %c0_i32_6 = arith.constant 0 : i32
    %9 = vector.broadcast %c0_i32_6 : i32 to vector<64x1xi32>
    %10 = arith.cmpi ne, %8, %9 : vector<64x1xi32>
    %c0_i32_7 = arith.constant 0 : i32
    %11 = vector.broadcast %c0_i32_7 : i32 to vector<64x1xi32>
    %12 = arith.cmpi slt, %8, %11 : vector<64x1xi32>
    %c0_i32_8 = arith.constant 0 : i32
    %13 = arith.cmpi slt, %6, %c0_i32_8 : i32
    %14 = vector.broadcast %13 : i1 to vector<64x1xi1>
    %15 = vector.broadcast %14 : vector<64x1xi1> to vector<64x1xi1>
    %16 = arith.xori %12, %15 : vector<64x1xi1>
    %17 = arith.andi %16, %10 : vector<64x1xi1>
    %18 = vector.broadcast %6 : i32 to vector<64x1xi32>
    %19 = arith.addi %8, %18 : vector<64x1xi32>
    %20 = arith.select %17, %19, %8 : vector<64x1xi1>, vector<64x1xi32>
    %c1_i32_9 = arith.constant 1 : i32
    %21 = vector.broadcast %c1_i32_9 : i32 to vector<64x1xi32>
    %22 = arith.cmpi sge, %20, %21 : vector<64x1xi32>
    %c7_i32 = arith.constant 7 : i32
    %23 = vector.broadcast %c7_i32 : i32 to vector<64x1xi32>
    %24 = arith.cmpi slt, %20, %23 : vector<64x1xi32>
    %cst = arith.constant 0.000000e+00 : f32
    %25 = vector.broadcast %cst : f32 to vector<9x32xf32>
    %26 = vector.extract_strided_slice %1 {offsets = [0, 0], sizes = [55, 32], strides = [1, 1]} : vector<64x32xf32> to vector<55x32xf32>
    %27 = tpu.concatenate %25, %26 in 0 : vector<9x32xf32>, vector<55x32xf32> -> vector<64x32xf32>
    %cst_10 = arith.constant 0.000000e+00 : f32
    %28 = vector.shape_cast %22 : vector<64x1xi1> to vector<64x1xi1>
    %29 = vector.broadcast %28 : vector<64x1xi1> to vector<64x32xi1>
    %30 = vector.broadcast %cst_10 : f32 to vector<64x32xf32>
    %31 = arith.select %29, %27, %30 : vector<64x32xi1>, vector<64x32xf32>
    %32 = arith.truncf %31 : vector<64x32xf32> to vector<64x32xbf16>
    %c0_11 = arith.constant 0 : index
    %c0_12 = arith.constant 0 : index
    %33 = vector.load %arg17[%c0_11, %c0_12] : memref<64x288xbf16, #tpu.memory_space<vmem>>, vector<64x32xbf16>
    tpu.vector_store %arg17[%c0_11, %c0_12], %32 {strides = array<i32>} : memref<64x288xbf16, #tpu.memory_space<vmem>>, vector<64x32xbf16>,
    %cst_13 = arith.constant 0.000000e+00 : f32
    %34 = vector.broadcast %cst_13 : f32 to vector<8x32xf32>
    %35 = vector.extract_strided_slice %1 {offsets = [0, 0], sizes = [56, 32], strides = [1, 1]} : vector<64x32xf32> to vector<56x32xf32>
    %36 = tpu.concatenate %34, %35 in 0 : vector<8x32xf32>, vector<56x32xf32> -> vector<64x32xf32>
    %37 = arith.truncf %36 : vector<64x32xf32> to vector<64x32xbf16>
    %c0_14 = arith.constant 0 : index
    %c32 = arith.constant 32 : index
    %38 = vector.load %arg17[%c0_14, %c32] : memref<64x288xbf16, #tpu.memory_space<vmem>>, vector<64x32xbf16>
    tpu.vector_store %arg17[%c0_14, %c32], %37 {strides = array<i32>} : memref<64x288xbf16, #tpu.memory_space<vmem>>, vector<64x32xbf16>,
    %cst_15 = arith.constant 0.000000e+00 : f32
    %39 = vector.broadcast %cst_15 : f32 to vector<7x32xf32>
    %40 = vector.extract_strided_slice %1 {offsets = [0, 0], sizes = [57, 32], strides = [1, 1]} : vector<64x32xf32> to vector<57x32xf32>
    %41 = tpu.concatenate %39, %40 in 0 : vector<7x32xf32>, vector<57x32xf32> -> vector<64x32xf32>
    %cst_16 = arith.constant 0.000000e+00 : f32
    %42 = vector.shape_cast %24 : vector<64x1xi1> to vector<64x1xi1>
    %43 = vector.broadcast %42 : vector<64x1xi1> to vector<64x32xi1>
    %44 = vector.broadcast %cst_16 : f32 to vector<64x32xf32>
    %45 = arith.select %43, %41, %44 : vector<64x32xi1>, vector<64x32xf32>
    %46 = arith.truncf %45 : vector<64x32xf32> to vector<64x32xbf16>
    %c0_17 = arith.constant 0 : index
    %c64 = arith.constant 64 : index
    %47 = vector.load %arg17[%c0_17, %c64] : memref<64x288xbf16, #tpu.memory_space<vmem>>, vector<64x32xbf16>
    tpu.vector_store %arg17[%c0_17, %c64], %46 {strides = array<i32>} : memref<64x288xbf16, #tpu.memory_space<vmem>>, vector<64x32xbf16>,
    %cst_18 = arith.constant 0.000000e+00 : f32
    %48 = vector.broadcast %cst_18 : f32 to vector<1x32xf32>
    %49 = vector.extract_strided_slice %1 {offsets = [0, 0], sizes = [63, 32], strides = [1, 1]} : vector<64x32xf32> to vector<63x32xf32>
    %50 = tpu.concatenate %48, %49 in 0 : vector<1x32xf32>, vector<63x32xf32> -> vector<64x32xf32>
    %cst_19 = arith.constant 0.000000e+00 : f32
    %51 = vector.shape_cast %22 : vector<64x1xi1> to vector<64x1xi1>
    %52 = vector.broadcast %51 : vector<64x1xi1> to vector<64x32xi1>
    %53 = vector.broadcast %cst_19 : f32 to vector<64x32xf32>
    %54 = arith.select %52, %50, %53 : vector<64x32xi1>, vector<64x32xf32>
    %55 = arith.truncf %54 : vector<64x32xf32> to vector<64x32xbf16>
    %c0_20 = arith.constant 0 : index
    %c96 = arith.constant 96 : index
    %56 = vector.load %arg17[%c0_20, %c96] : memref<64x288xbf16, #tpu.memory_space<vmem>>, vector<64x32xbf16>
    tpu.vector_store %arg17[%c0_20, %c96], %55 {strides = array<i32>} : memref<64x288xbf16, #tpu.memory_space<vmem>>, vector<64x32xbf16>,
    %57 = arith.truncf %1 : vector<64x32xf32> to vector<64x32xbf16>
    %c0_21 = arith.constant 0 : index
    %c128 = arith.constant 128 : index
    %58 = vector.load %arg17[%c0_21, %c128] : memref<64x288xbf16, #tpu.memory_space<vmem>>, vector<64x32xbf16>
    tpu.vector_store %arg17[%c0_21, %c128], %57 {strides = array<i32>} : memref<64x288xbf16, #tpu.memory_space<vmem>>, vector<64x32xbf16>,
    %cst_22 = arith.constant 0.000000e+00 : f32
    %59 = vector.broadcast %cst_22 : f32 to vector<1x32xf32>
    %60 = vector.extract_strided_slice %1 {offsets = [1, 0], sizes = [63, 32], strides = [1, 1]} : vector<64x32xf32> to vector<63x32xf32>
    %61 = tpu.concatenate %60, %59 in 0 : vector<63x32xf32>, vector<1x32xf32> -> vector<64x32xf32>
    %cst_23 = arith.constant 0.000000e+00 : f32
    %62 = vector.shape_cast %24 : vector<64x1xi1> to vector<64x1xi1>
    %63 = vector.broadcast %62 : vector<64x1xi1> to vector<64x32xi1>
    %64 = vector.broadcast %cst_23 : f32 to vector<64x32xf32>
    %65 = arith.select %63, %61, %64 : vector<64x32xi1>, vector<64x32xf32>
    %66 = arith.truncf %65 : vector<64x32xf32> to vector<64x32xbf16>
    %c0_24 = arith.constant 0 : index
    %c160 = arith.constant 160 : index
    %67 = vector.load %arg17[%c0_24, %c160] : memref<64x288xbf16, #tpu.memory_space<vmem>>, vector<64x32xbf16>
    tpu.vector_store %arg17[%c0_24, %c160], %66 {strides = array<i32>} : memref<64x288xbf16, #tpu.memory_space<vmem>>, vector<64x32xbf16>,
    %cst_25 = arith.constant 0.000000e+00 : f32
    %68 = vector.broadcast %cst_25 : f32 to vector<7x32xf32>
    %69 = vector.extract_strided_slice %1 {offsets = [7, 0], sizes = [57, 32], strides = [1, 1]} : vector<64x32xf32> to vector<57x32xf32>
    %70 = tpu.concatenate %69, %68 in 0 : vector<57x32xf32>, vector<7x32xf32> -> vector<64x32xf32>
    %cst_26 = arith.constant 0.000000e+00 : f32
    %71 = vector.shape_cast %22 : vector<64x1xi1> to vector<64x1xi1>
    %72 = vector.broadcast %71 : vector<64x1xi1> to vector<64x32xi1>
    %73 = vector.broadcast %cst_26 : f32 to vector<64x32xf32>
    %74 = arith.select %72, %70, %73 : vector<64x32xi1>, vector<64x32xf32>
    %75 = arith.truncf %74 : vector<64x32xf32> to vector<64x32xbf16>
    %c0_27 = arith.constant 0 : index
    %c192 = arith.constant 192 : index
    %76 = vector.load %arg17[%c0_27, %c192] : memref<64x288xbf16, #tpu.memory_space<vmem>>, vector<64x32xbf16>
    tpu.vector_store %arg17[%c0_27, %c192], %75 {strides = array<i32>} : memref<64x288xbf16, #tpu.memory_space<vmem>>, vector<64x32xbf16>,
    %cst_28 = arith.constant 0.000000e+00 : f32
    %77 = vector.broadcast %cst_28 : f32 to vector<8x32xf32>
    %78 = vector.extract_strided_slice %1 {offsets = [8, 0], sizes = [56, 32], strides = [1, 1]} : vector<64x32xf32> to vector<56x32xf32>
    %79 = tpu.concatenate %78, %77 in 0 : vector<56x32xf32>, vector<8x32xf32> -> vector<64x32xf32>
    %80 = arith.truncf %79 : vector<64x32xf32> to vector<64x32xbf16>
    %c0_29 = arith.constant 0 : index
    %c224 = arith.constant 224 : index
    %81 = vector.load %arg17[%c0_29, %c224] : memref<64x288xbf16, #tpu.memory_space<vmem>>, vector<64x32xbf16>
    tpu.vector_store %arg17[%c0_29, %c224], %80 {strides = array<i32>} : memref<64x288xbf16, #tpu.memory_space<vmem>>, vector<64x32xbf16>,
    %cst_30 = arith.constant 0.000000e+00 : f32
    %82 = vector.broadcast %cst_30 : f32 to vector<9x32xf32>
    %83 = vector.extract_strided_slice %1 {offsets = [9, 0], sizes = [55, 32], strides = [1, 1]} : vector<64x32xf32> to vector<55x32xf32>
    %84 = tpu.concatenate %83, %82 in 0 : vector<55x32xf32>, vector<9x32xf32> -> vector<64x32xf32>
    %cst_31 = arith.constant 0.000000e+00 : f32
    %85 = vector.shape_cast %24 : vector<64x1xi1> to vector<64x1xi1>
    %86 = vector.broadcast %85 : vector<64x1xi1> to vector<64x32xi1>
    %87 = vector.broadcast %cst_31 : f32 to vector<64x32xf32>
    %88 = arith.select %86, %84, %87 : vector<64x32xi1>, vector<64x32xf32>
    %89 = arith.truncf %88 : vector<64x32xf32> to vector<64x32xbf16>
    %c0_32 = arith.constant 0 : index
    %c256 = arith.constant 256 : index
    %90 = vector.load %arg17[%c0_32, %c256] : memref<64x288xbf16, #tpu.memory_space<vmem>>, vector<64x32xbf16>
    tpu.vector_store %arg17[%c0_32, %c256], %89 {strides = array<i32>} : memref<64x288xbf16, #tpu.memory_space<vmem>>, vector<64x32xbf16>,
    %c0_33 = arith.constant 0 : index
    %c0_34 = arith.constant 0 : index
    %91 = vector.load %arg17[%c0_33, %c0_34] : memref<64x288xbf16, #tpu.memory_space<vmem>>, vector<64x288xbf16>
    %c0_35 = arith.constant 0 : index
    %c0_36 = arith.constant 0 : index
    %92 = vector.load %arg2[%c0_35, %c0_36] : memref<288x256xbf16, #tpu.memory_space<vmem>>, vector<288x256xbf16>
    %cst_37 = arith.constant dense<0.000000e+00> : vector<64x256xf32>
    %93 = tpu.matmul %91, %92, %cst_37 {dimension_numbers = #tpu.dot_dimension_numbers<[1], [0], [0], [1], [0, 0, 1, 1], [], []>} : vector<64x288xbf16>, vector<288x256xbf16>, vector<64x256xf32> -> vector<64x256xf32>
    %c0_38 = arith.constant 0 : index
    %c0_39 = arith.constant 0 : index
    %94 = vector.load %arg3[%c0_38, %c0_39] : memref<1x256xf32, #tpu.memory_space<vmem>>, vector<1x256xf32>
    %95 = vector.broadcast %94 : vector<1x256xf32> to vector<64x256xf32>
    %96 = arith.addf %93, %95 : vector<64x256xf32>
    %c0_40 = arith.constant 0 : index
    %c0_41 = arith.constant 0 : index
    %97 = vector.load %arg4[%c0_40, %c0_41] : memref<1x256xf32, #tpu.memory_space<vmem>>, vector<1x256xf32>
    %c0_42 = arith.constant 0 : index
    %c0_43 = arith.constant 0 : index
    %98 = vector.load %arg5[%c0_42, %c0_43] : memref<1x256xf32, #tpu.memory_space<vmem>>, vector<1x256xf32>
    %cst_44 = arith.constant dense<0.000000e+00> : vector<256xf32>
    %99 = vector.multi_reduction <add>, %96, %cst_44 [0] : vector<64x256xf32> to vector<256xf32>
    %100 = vector.shape_cast %99 : vector<256xf32> to vector<1x256xf32>
    %101 = arith.mulf %96, %96 : vector<64x256xf32>
    %cst_45 = arith.constant dense<0.000000e+00> : vector<256xf32>
    %102 = vector.multi_reduction <add>, %101, %cst_45 [0] : vector<64x256xf32> to vector<256xf32>
    %103 = vector.shape_cast %102 : vector<256xf32> to vector<1x256xf32>
    %104 = tpu.concatenate %100, %103 in 0 : vector<1x256xf32>, vector<1x256xf32> -> vector<2x256xf32>
    %cst_46 = arith.constant dense<0.000000e+00> : vector<2x32xf32>
    %105 = tpu.matmul %104, %2, %cst_46 {dimension_numbers = #tpu.dot_dimension_numbers<[1], [0], [0], [1], [0, 0, 1, 1], [], []>, precision = #tpu.contract_precision<fp32>} : vector<2x256xf32>, vector<256x32xf32>, vector<2x32xf32> -> vector<2x32xf32>
    %106 = vector.extract_strided_slice %105 {offsets = [0, 0], sizes = [1, 32], strides = [1, 1]} : vector<2x32xf32> to vector<1x32xf32>
    %cst_47 = arith.constant 0.001953125 : f32
    %107 = vector.broadcast %cst_47 : f32 to vector<1x32xf32>
    %108 = arith.mulf %106, %107 : vector<1x32xf32>
    %109 = vector.extract_strided_slice %105 {offsets = [1, 0], sizes = [1, 32], strides = [1, 1]} : vector<2x32xf32> to vector<1x32xf32>
    %cst_48 = arith.constant 0.001953125 : f32
    %110 = vector.broadcast %cst_48 : f32 to vector<1x32xf32>
    %111 = arith.mulf %109, %110 : vector<1x32xf32>
    %112 = arith.mulf %108, %108 : vector<1x32xf32>
    %113 = arith.subf %111, %112 : vector<1x32xf32>
    %cst_49 = arith.constant 9.99999974E-6 : f32
    %114 = vector.broadcast %cst_49 : f32 to vector<1x32xf32>
    %115 = arith.addf %113, %114 : vector<1x32xf32>
    %116 = math.rsqrt %115 : vector<1x32xf32>
    %117 = tpu.concatenate %108, %116 in 0 : vector<1x32xf32>, vector<1x32xf32> -> vector<2x32xf32>
    %cst_50 = arith.constant dense<0.000000e+00> : vector<2x256xf32>
    %118 = tpu.matmul %117, %3, %cst_50 {dimension_numbers = #tpu.dot_dimension_numbers<[1], [0], [0], [1], [0, 0, 1, 1], [], []>, precision = #tpu.contract_precision<fp32>} : vector<2x32xf32>, vector<32x256xf32>, vector<2x256xf32> -> vector<2x256xf32>
    %119 = vector.extract_strided_slice %118 {offsets = [1, 0], sizes = [1, 256], strides = [1, 1]} : vector<2x256xf32> to vector<1x256xf32>
    %120 = arith.mulf %119, %97 : vector<1x256xf32>
    %121 = vector.extract_strided_slice %118 {offsets = [0, 0], sizes = [1, 256], strides = [1, 1]} : vector<2x256xf32> to vector<1x256xf32>
    %122 = arith.mulf %121, %120 : vector<1x256xf32>
    %123 = arith.subf %98, %122 : vector<1x256xf32>
    %124 = vector.broadcast %120 : vector<1x256xf32> to vector<64x256xf32>
    %125 = arith.mulf %96, %124 : vector<64x256xf32>
    %126 = vector.broadcast %123 : vector<1x256xf32> to vector<64x256xf32>
    %127 = arith.addf %125, %126 : vector<64x256xf32>
    %cst_51 = arith.constant 0.000000e+00 : f32
    %128 = vector.broadcast %cst_51 : f32 to vector<64x256xf32>
    %129 = arith.subf %128, %127 : vector<64x256xf32>
    %130 = math.exp %129 : vector<64x256xf32>
    %cst_52 = arith.constant 1.000000e+00 : f32
    %131 = vector.broadcast %cst_52 : f32 to vector<64x256xf32>
    %132 = arith.addf %131, %130 : vector<64x256xf32>
    %133 = tpu.reciprocal %132 {approx = true} : vector<64x256xf32> -> vector<64x256xf32>
    %134 = arith.mulf %127, %133 : vector<64x256xf32>
    %135 = arith.truncf %1 : vector<64x32xf32> to vector<64x32xbf16>
    %c0_53 = arith.constant 0 : index
    %c0_54 = arith.constant 0 : index
    %136 = vector.load %arg10[%c0_53, %c0_54] : memref<32x256xbf16, #tpu.memory_space<vmem>>, vector<32x256xbf16>
    %cst_55 = arith.constant dense<0.000000e+00> : vector<64x256xf32>
    %137 = tpu.matmul %135, %136, %cst_55 {dimension_numbers = #tpu.dot_dimension_numbers<[1], [0], [0], [1], [0, 0, 1, 1], [], []>} : vector<64x32xbf16>, vector<32x256xbf16>, vector<64x256xf32> -> vector<64x256xf32>
    %c0_56 = arith.constant 0 : index
    %c0_57 = arith.constant 0 : index
    %138 = vector.load %arg11[%c0_56, %c0_57] : memref<1x256xf32, #tpu.memory_space<vmem>>, vector<1x256xf32>
    %139 = vector.broadcast %138 : vector<1x256xf32> to vector<64x256xf32>
    %140 = arith.addf %137, %139 : vector<64x256xf32>
    %c0_58 = arith.constant 0 : index
    %c0_59 = arith.constant 0 : index
    %141 = vector.load %arg12[%c0_58, %c0_59] : memref<1x256xf32, #tpu.memory_space<vmem>>, vector<1x256xf32>
    %c0_60 = arith.constant 0 : index
    %c0_61 = arith.constant 0 : index
    %142 = vector.load %arg13[%c0_60, %c0_61] : memref<1x256xf32, #tpu.memory_space<vmem>>, vector<1x256xf32>
    %cst_62 = arith.constant dense<0.000000e+00> : vector<256xf32>
    %143 = vector.multi_reduction <add>, %140, %cst_62 [0] : vector<64x256xf32> to vector<256xf32>
    %144 = vector.shape_cast %143 : vector<256xf32> to vector<1x256xf32>
    %145 = arith.mulf %140, %140 : vector<64x256xf32>
    %cst_63 = arith.constant dense<0.000000e+00> : vector<256xf32>
    %146 = vector.multi_reduction <add>, %145, %cst_63 [0] : vector<64x256xf32> to vector<256xf32>
    %147 = vector.shape_cast %146 : vector<256xf32> to vector<1x256xf32>
    %148 = tpu.concatenate %144, %147 in 0 : vector<1x256xf32>, vector<1x256xf32> -> vector<2x256xf32>
    %cst_64 = arith.constant dense<0.000000e+00> : vector<2x32xf32>
    %149 = tpu.matmul %148, %2, %cst_64 {dimension_numbers = #tpu.dot_dimension_numbers<[1], [0], [0], [1], [0, 0, 1, 1], [], []>, precision = #tpu.contract_precision<fp32>} : vector<2x256xf32>, vector<256x32xf32>, vector<2x32xf32> -> vector<2x32xf32>
    %150 = vector.extract_strided_slice %149 {offsets = [0, 0], sizes = [1, 32], strides = [1, 1]} : vector<2x32xf32> to vector<1x32xf32>
    %cst_65 = arith.constant 0.001953125 : f32
    %151 = vector.broadcast %cst_65 : f32 to vector<1x32xf32>
    %152 = arith.mulf %150, %151 : vector<1x32xf32>
    %153 = vector.extract_strided_slice %149 {offsets = [1, 0], sizes = [1, 32], strides = [1, 1]} : vector<2x32xf32> to vector<1x32xf32>
    %cst_66 = arith.constant 0.001953125 : f32
    %154 = vector.broadcast %cst_66 : f32 to vector<1x32xf32>
    %155 = arith.mulf %153, %154 : vector<1x32xf32>
    %156 = arith.mulf %152, %152 : vector<1x32xf32>
    %157 = arith.subf %155, %156 : vector<1x32xf32>
    %cst_67 = arith.constant 9.99999974E-6 : f32
    %158 = vector.broadcast %cst_67 : f32 to vector<1x32xf32>
    %159 = arith.addf %157, %158 : vector<1x32xf32>
    %160 = math.rsqrt %159 : vector<1x32xf32>
    %161 = tpu.concatenate %152, %160 in 0 : vector<1x32xf32>, vector<1x32xf32> -> vector<2x32xf32>
    %cst_68 = arith.constant dense<0.000000e+00> : vector<2x256xf32>
    %162 = tpu.matmul %161, %3, %cst_68 {dimension_numbers = #tpu.dot_dimension_numbers<[1], [0], [0], [1], [0, 0, 1, 1], [], []>, precision = #tpu.contract_precision<fp32>} : vector<2x32xf32>, vector<32x256xf32>, vector<2x256xf32> -> vector<2x256xf32>
    %163 = vector.extract_strided_slice %162 {offsets = [1, 0], sizes = [1, 256], strides = [1, 1]} : vector<2x256xf32> to vector<1x256xf32>
    %164 = arith.mulf %163, %141 : vector<1x256xf32>
    %165 = vector.extract_strided_slice %162 {offsets = [0, 0], sizes = [1, 256], strides = [1, 1]} : vector<2x256xf32> to vector<1x256xf32>
    %166 = arith.mulf %165, %164 : vector<1x256xf32>
    %167 = arith.subf %142, %166 : vector<1x256xf32>
    %168 = vector.broadcast %164 : vector<1x256xf32> to vector<64x256xf32>
    %169 = arith.mulf %140, %168 : vector<64x256xf32>
    %170 = vector.broadcast %167 : vector<1x256xf32> to vector<64x256xf32>
    %171 = arith.addf %169, %170 : vector<64x256xf32>
    %cst_69 = arith.constant 0.000000e+00 : f32
    %172 = vector.broadcast %cst_69 : f32 to vector<9x256xf32>
    %173 = vector.extract_strided_slice %134 {offsets = [0, 0], sizes = [55, 256], strides = [1, 1]} : vector<64x256xf32> to vector<55x256xf32>
    %174 = tpu.concatenate %172, %173 in 0 : vector<9x256xf32>, vector<55x256xf32> -> vector<64x256xf32>
    %cst_70 = arith.constant 0.000000e+00 : f32
    %175 = vector.shape_cast %22 : vector<64x1xi1> to vector<64x1xi1>
    %176 = vector.broadcast %175 : vector<64x1xi1> to vector<64x256xi1>
    %177 = vector.broadcast %cst_70 : f32 to vector<64x256xf32>
    %178 = arith.select %176, %174, %177 : vector<64x256xi1>, vector<64x256xf32>
    %179 = arith.truncf %178 : vector<64x256xf32> to vector<64x256xbf16>
    %c0_71 = arith.constant 0 : index
    %c0_72 = arith.constant 0 : index
    %180 = vector.load %arg18[%c0_71, %c0_72] : memref<64x2304xbf16, #tpu.memory_space<vmem>>, vector<64x256xbf16>
    tpu.vector_store %arg18[%c0_71, %c0_72], %179 {strides = array<i32>} : memref<64x2304xbf16, #tpu.memory_space<vmem>>, vector<64x256xbf16>,
    %cst_73 = arith.constant 0.000000e+00 : f32
    %181 = vector.broadcast %cst_73 : f32 to vector<8x256xf32>
    %182 = vector.extract_strided_slice %134 {offsets = [0, 0], sizes = [56, 256], strides = [1, 1]} : vector<64x256xf32> to vector<56x256xf32>
    %183 = tpu.concatenate %181, %182 in 0 : vector<8x256xf32>, vector<56x256xf32> -> vector<64x256xf32>
    %184 = arith.truncf %183 : vector<64x256xf32> to vector<64x256xbf16>
    %c0_74 = arith.constant 0 : index
    %c256_75 = arith.constant 256 : index
    %185 = vector.load %arg18[%c0_74, %c256_75] : memref<64x2304xbf16, #tpu.memory_space<vmem>>, vector<64x256xbf16>
    tpu.vector_store %arg18[%c0_74, %c256_75], %184 {strides = array<i32>} : memref<64x2304xbf16, #tpu.memory_space<vmem>>, vector<64x256xbf16>,
    %cst_76 = arith.constant 0.000000e+00 : f32
    %186 = vector.broadcast %cst_76 : f32 to vector<7x256xf32>
    %187 = vector.extract_strided_slice %134 {offsets = [0, 0], sizes = [57, 256], strides = [1, 1]} : vector<64x256xf32> to vector<57x256xf32>
    %188 = tpu.concatenate %186, %187 in 0 : vector<7x256xf32>, vector<57x256xf32> -> vector<64x256xf32>
    %cst_77 = arith.constant 0.000000e+00 : f32
    %189 = vector.shape_cast %24 : vector<64x1xi1> to vector<64x1xi1>
    %190 = vector.broadcast %189 : vector<64x1xi1> to vector<64x256xi1>
    %191 = vector.broadcast %cst_77 : f32 to vector<64x256xf32>
    %192 = arith.select %190, %188, %191 : vector<64x256xi1>, vector<64x256xf32>
    %193 = arith.truncf %192 : vector<64x256xf32> to vector<64x256xbf16>
    %c0_78 = arith.constant 0 : index
    %c512 = arith.constant 512 : index
    %194 = vector.load %arg18[%c0_78, %c512] : memref<64x2304xbf16, #tpu.memory_space<vmem>>, vector<64x256xbf16>
    tpu.vector_store %arg18[%c0_78, %c512], %193 {strides = array<i32>} : memref<64x2304xbf16, #tpu.memory_space<vmem>>, vector<64x256xbf16>,
    %cst_79 = arith.constant 0.000000e+00 : f32
    %195 = vector.broadcast %cst_79 : f32 to vector<1x256xf32>
    %196 = vector.extract_strided_slice %134 {offsets = [0, 0], sizes = [63, 256], strides = [1, 1]} : vector<64x256xf32> to vector<63x256xf32>
    %197 = tpu.concatenate %195, %196 in 0 : vector<1x256xf32>, vector<63x256xf32> -> vector<64x256xf32>
    %cst_80 = arith.constant 0.000000e+00 : f32
    %198 = vector.shape_cast %22 : vector<64x1xi1> to vector<64x1xi1>
    %199 = vector.broadcast %198 : vector<64x1xi1> to vector<64x256xi1>
    %200 = vector.broadcast %cst_80 : f32 to vector<64x256xf32>
    %201 = arith.select %199, %197, %200 : vector<64x256xi1>, vector<64x256xf32>
    %202 = arith.truncf %201 : vector<64x256xf32> to vector<64x256xbf16>
    %c0_81 = arith.constant 0 : index
    %c768 = arith.constant 768 : index
    %203 = vector.load %arg18[%c0_81, %c768] : memref<64x2304xbf16, #tpu.memory_space<vmem>>, vector<64x256xbf16>
    tpu.vector_store %arg18[%c0_81, %c768], %202 {strides = array<i32>} : memref<64x2304xbf16, #tpu.memory_space<vmem>>, vector<64x256xbf16>,
    %204 = arith.truncf %134 : vector<64x256xf32> to vector<64x256xbf16>
    %c0_82 = arith.constant 0 : index
    %c1024 = arith.constant 1024 : index
    %205 = vector.load %arg18[%c0_82, %c1024] : memref<64x2304xbf16, #tpu.memory_space<vmem>>, vector<64x256xbf16>
    tpu.vector_store %arg18[%c0_82, %c1024], %204 {strides = array<i32>} : memref<64x2304xbf16, #tpu.memory_space<vmem>>, vector<64x256xbf16>,
    %cst_83 = arith.constant 0.000000e+00 : f32
    %206 = vector.broadcast %cst_83 : f32 to vector<1x256xf32>
    %207 = vector.extract_strided_slice %134 {offsets = [1, 0], sizes = [63, 256], strides = [1, 1]} : vector<64x256xf32> to vector<63x256xf32>
    %208 = tpu.concatenate %207, %206 in 0 : vector<63x256xf32>, vector<1x256xf32> -> vector<64x256xf32>
    %cst_84 = arith.constant 0.000000e+00 : f32
    %209 = vector.shape_cast %24 : vector<64x1xi1> to vector<64x1xi1>
    %210 = vector.broadcast %209 : vector<64x1xi1> to vector<64x256xi1>
    %211 = vector.broadcast %cst_84 : f32 to vector<64x256xf32>
    %212 = arith.select %210, %208, %211 : vector<64x256xi1>, vector<64x256xf32>
    %213 = arith.truncf %212 : vector<64x256xf32> to vector<64x256xbf16>
    %c0_85 = arith.constant 0 : index
    %c1280 = arith.constant 1280 : index
    %214 = vector.load %arg18[%c0_85, %c1280] : memref<64x2304xbf16, #tpu.memory_space<vmem>>, vector<64x256xbf16>
    tpu.vector_store %arg18[%c0_85, %c1280], %213 {strides = array<i32>} : memref<64x2304xbf16, #tpu.memory_space<vmem>>, vector<64x256xbf16>,
    %cst_86 = arith.constant 0.000000e+00 : f32
    %215 = vector.broadcast %cst_86 : f32 to vector<7x256xf32>
    %216 = vector.extract_strided_slice %134 {offsets = [7, 0], sizes = [57, 256], strides = [1, 1]} : vector<64x256xf32> to vector<57x256xf32>
    %217 = tpu.concatenate %216, %215 in 0 : vector<57x256xf32>, vector<7x256xf32> -> vector<64x256xf32>
    %cst_87 = arith.constant 0.000000e+00 : f32
    %218 = vector.shape_cast %22 : vector<64x1xi1> to vector<64x1xi1>
    %219 = vector.broadcast %218 : vector<64x1xi1> to vector<64x256xi1>
    %220 = vector.broadcast %cst_87 : f32 to vector<64x256xf32>
    %221 = arith.select %219, %217, %220 : vector<64x256xi1>, vector<64x256xf32>
    %222 = arith.truncf %221 : vector<64x256xf32> to vector<64x256xbf16>
    %c0_88 = arith.constant 0 : index
    %c1536 = arith.constant 1536 : index
    %223 = vector.load %arg18[%c0_88, %c1536] : memref<64x2304xbf16, #tpu.memory_space<vmem>>, vector<64x256xbf16>
    tpu.vector_store %arg18[%c0_88, %c1536], %222 {strides = array<i32>} : memref<64x2304xbf16, #tpu.memory_space<vmem>>, vector<64x256xbf16>,
    %cst_89 = arith.constant 0.000000e+00 : f32
    %224 = vector.broadcast %cst_89 : f32 to vector<8x256xf32>
    %225 = vector.extract_strided_slice %134 {offsets = [8, 0], sizes = [56, 256], strides = [1, 1]} : vector<64x256xf32> to vector<56x256xf32>
    %226 = tpu.concatenate %225, %224 in 0 : vector<56x256xf32>, vector<8x256xf32> -> vector<64x256xf32>
    %227 = arith.truncf %226 : vector<64x256xf32> to vector<64x256xbf16>
    %c0_90 = arith.constant 0 : index
    %c1792 = arith.constant 1792 : index
    %228 = vector.load %arg18[%c0_90, %c1792] : memref<64x2304xbf16, #tpu.memory_space<vmem>>, vector<64x256xbf16>
    tpu.vector_store %arg18[%c0_90, %c1792], %227 {strides = array<i32>} : memref<64x2304xbf16, #tpu.memory_space<vmem>>, vector<64x256xbf16>,
    %cst_91 = arith.constant 0.000000e+00 : f32
    %229 = vector.broadcast %cst_91 : f32 to vector<9x256xf32>
    %230 = vector.extract_strided_slice %134 {offsets = [9, 0], sizes = [55, 256], strides = [1, 1]} : vector<64x256xf32> to vector<55x256xf32>
    %231 = tpu.concatenate %230, %229 in 0 : vector<55x256xf32>, vector<9x256xf32> -> vector<64x256xf32>
    %cst_92 = arith.constant 0.000000e+00 : f32
    %232 = vector.shape_cast %24 : vector<64x1xi1> to vector<64x1xi1>
    %233 = vector.broadcast %232 : vector<64x1xi1> to vector<64x256xi1>
    %234 = vector.broadcast %cst_92 : f32 to vector<64x256xf32>
    %235 = arith.select %233, %231, %234 : vector<64x256xi1>, vector<64x256xf32>
    %236 = arith.truncf %235 : vector<64x256xf32> to vector<64x256xbf16>
    %c0_93 = arith.constant 0 : index
    %c2048 = arith.constant 2048 : index
    %237 = vector.load %arg18[%c0_93, %c2048] : memref<64x2304xbf16, #tpu.memory_space<vmem>>, vector<64x256xbf16>
    tpu.vector_store %arg18[%c0_93, %c2048], %236 {strides = array<i32>} : memref<64x2304xbf16, #tpu.memory_space<vmem>>, vector<64x256xbf16>,
    %c0_94 = arith.constant 0 : index
    %c0_95 = arith.constant 0 : index
    %238 = vector.load %arg18[%c0_94, %c0_95] : memref<64x2304xbf16, #tpu.memory_space<vmem>>, vector<64x2304xbf16>
    %c0_96 = arith.constant 0 : index
    %c0_97 = arith.constant 0 : index
    %239 = vector.load %arg6[%c0_96, %c0_97] : memref<2304x256xbf16, #tpu.memory_space<vmem>>, vector<2304x256xbf16>
    %cst_98 = arith.constant dense<0.000000e+00> : vector<64x256xf32>
    %240 = tpu.matmul %238, %239, %cst_98 {dimension_numbers = #tpu.dot_dimension_numbers<[1], [0], [0], [1], [0, 0, 1, 1], [], []>} : vector<64x2304xbf16>, vector<2304x256xbf16>, vector<64x256xf32> -> vector<64x256xf32>
    %c0_99 = arith.constant 0 : index
    %c0_100 = arith.constant 0 : index
    %241 = vector.load %arg7[%c0_99, %c0_100] : memref<1x256xf32, #tpu.memory_space<vmem>>, vector<1x256xf32>
    %242 = vector.broadcast %241 : vector<1x256xf32> to vector<64x256xf32>
    %243 = arith.addf %240, %242 : vector<64x256xf32>
    %c0_101 = arith.constant 0 : index
    %c0_102 = arith.constant 0 : index
    %244 = vector.load %arg8[%c0_101, %c0_102] : memref<1x256xf32, #tpu.memory_space<vmem>>, vector<1x256xf32>
    %c0_103 = arith.constant 0 : index
    %c0_104 = arith.constant 0 : index
    %245 = vector.load %arg9[%c0_103, %c0_104] : memref<1x256xf32, #tpu.memory_space<vmem>>, vector<1x256xf32>
    %cst_105 = arith.constant dense<0.000000e+00> : vector<256xf32>
    %246 = vector.multi_reduction <add>, %243, %cst_105 [0] : vector<64x256xf32> to vector<256xf32>
    %247 = vector.shape_cast %246 : vector<256xf32> to vector<1x256xf32>
    %248 = arith.mulf %243, %243 : vector<64x256xf32>
    %cst_106 = arith.constant dense<0.000000e+00> : vector<256xf32>
    %249 = vector.multi_reduction <add>, %248, %cst_106 [0] : vector<64x256xf32> to vector<256xf32>
    %250 = vector.shape_cast %249 : vector<256xf32> to vector<1x256xf32>
    %251 = tpu.concatenate %247, %250 in 0 : vector<1x256xf32>, vector<1x256xf32> -> vector<2x256xf32>
    %cst_107 = arith.constant dense<0.000000e+00> : vector<2x32xf32>
    %252 = tpu.matmul %251, %2, %cst_107 {dimension_numbers = #tpu.dot_dimension_numbers<[1], [0], [0], [1], [0, 0, 1, 1], [], []>, precision = #tpu.contract_precision<fp32>} : vector<2x256xf32>, vector<256x32xf32>, vector<2x32xf32> -> vector<2x32xf32>
    %253 = vector.extract_strided_slice %252 {offsets = [0, 0], sizes = [1, 32], strides = [1, 1]} : vector<2x32xf32> to vector<1x32xf32>
    %cst_108 = arith.constant 0.001953125 : f32
    %254 = vector.broadcast %cst_108 : f32 to vector<1x32xf32>
    %255 = arith.mulf %253, %254 : vector<1x32xf32>
    %256 = vector.extract_strided_slice %252 {offsets = [1, 0], sizes = [1, 32], strides = [1, 1]} : vector<2x32xf32> to vector<1x32xf32>
    %cst_109 = arith.constant 0.001953125 : f32
    %257 = vector.broadcast %cst_109 : f32 to vector<1x32xf32>
    %258 = arith.mulf %256, %257 : vector<1x32xf32>
    %259 = arith.mulf %255, %255 : vector<1x32xf32>
    %260 = arith.subf %258, %259 : vector<1x32xf32>
    %cst_110 = arith.constant 9.99999974E-6 : f32
    %261 = vector.broadcast %cst_110 : f32 to vector<1x32xf32>
    %262 = arith.addf %260, %261 : vector<1x32xf32>
    %263 = math.rsqrt %262 : vector<1x32xf32>
    %264 = tpu.concatenate %255, %263 in 0 : vector<1x32xf32>, vector<1x32xf32> -> vector<2x32xf32>
    %cst_111 = arith.constant dense<0.000000e+00> : vector<2x256xf32>
    %265 = tpu.matmul %264, %3, %cst_111 {dimension_numbers = #tpu.dot_dimension_numbers<[1], [0], [0], [1], [0, 0, 1, 1], [], []>, precision = #tpu.contract_precision<fp32>} : vector<2x32xf32>, vector<32x256xf32>, vector<2x256xf32> -> vector<2x256xf32>
    %266 = vector.extract_strided_slice %265 {offsets = [1, 0], sizes = [1, 256], strides = [1, 1]} : vector<2x256xf32> to vector<1x256xf32>
    %267 = arith.mulf %266, %244 : vector<1x256xf32>
    %268 = vector.extract_strided_slice %265 {offsets = [0, 0], sizes = [1, 256], strides = [1, 1]} : vector<2x256xf32> to vector<1x256xf32>
    %269 = arith.mulf %268, %267 : vector<1x256xf32>
    %270 = arith.subf %245, %269 : vector<1x256xf32>
    %271 = vector.broadcast %267 : vector<1x256xf32> to vector<64x256xf32>
    %272 = arith.mulf %243, %271 : vector<64x256xf32>
    %273 = vector.broadcast %270 : vector<1x256xf32> to vector<64x256xf32>
    %274 = arith.addf %272, %273 : vector<64x256xf32>
    %275 = arith.addf %274, %171 : vector<64x256xf32>
    %cst_112 = arith.constant 0.000000e+00 : f32
    %276 = vector.broadcast %cst_112 : f32 to vector<64x256xf32>
    %277 = arith.subf %276, %275 : vector<64x256xf32>
    %278 = math.exp %277 : vector<64x256xf32>
    %cst_113 = arith.constant 1.000000e+00 : f32
    %279 = vector.broadcast %cst_113 : f32 to vector<64x256xf32>
    %280 = arith.addf %279, %278 : vector<64x256xf32>
    %281 = tpu.reciprocal %280 {approx = true} : vector<64x256xf32> -> vector<64x256xf32>
    %282 = arith.mulf %275, %281 : vector<64x256xf32>
    %283 = vector.shape_cast %282 : vector<64x256xf32> to vector<1x64x256xf32>
    %c0_114 = arith.constant 0 : index
    %c0_115 = arith.constant 0 : index
    %c0_116 = arith.constant 0 : index
    %284 = vector.load %arg16[%c0_114, %c0_115, %c0_116] : memref<1x64x256xf32, #tpu.memory_space<vmem>>, vector<1x64x256xf32>
    tpu.vector_store %arg16[%c0_114, %c0_115, %c0_116], %283 {strides = array<i32>} : memref<1x64x256xf32, #tpu.memory_space<vmem>>, vector<1x64x256xf32>,
    return
  }
  func.func @transform_0(%arg0: i32) -> (i32, i32, i32) {
    %c0_i32 = arith.constant 0 : i32
    %c0_i32_0 = arith.constant 0 : i32
    %c0_i32_1 = arith.constant 0 : i32
    return %arg0, %c0_i32, %c0_i32_0 : i32, i32, i32
  }
  func.func @transform_1(%arg0: i32) -> (i32, i32) {
    %c0_i32 = arith.constant 0 : i32
    %c0_i32_0 = arith.constant 0 : i32
    %c0_i32_1 = arith.constant 0 : i32
    return %c0_i32, %c0_i32_0 : i32, i32
  }
  func.func @transform_2(%arg0: i32) -> (i32, i32) {
    %c0_i32 = arith.constant 0 : i32
    %c0_i32_0 = arith.constant 0 : i32
    %c0_i32_1 = arith.constant 0 : i32
    return %c0_i32, %c0_i32_0 : i32, i32
  }
  func.func @transform_3(%arg0: i32) -> (i32, i32) {
    %c0_i32 = arith.constant 0 : i32
    %c0_i32_0 = arith.constant 0 : i32
    %c0_i32_1 = arith.constant 0 : i32
    return %c0_i32, %c0_i32_0 : i32, i32
  }
  func.func @transform_4(%arg0: i32) -> (i32, i32) {
    %c0_i32 = arith.constant 0 : i32
    %c0_i32_0 = arith.constant 0 : i32
    %c0_i32_1 = arith.constant 0 : i32
    return %c0_i32, %c0_i32_0 : i32, i32
  }
  func.func @transform_5(%arg0: i32) -> (i32, i32) {
    %c0_i32 = arith.constant 0 : i32
    %c0_i32_0 = arith.constant 0 : i32
    %c0_i32_1 = arith.constant 0 : i32
    return %c0_i32, %c0_i32_0 : i32, i32
  }
  func.func @transform_6(%arg0: i32) -> (i32, i32) {
    %c0_i32 = arith.constant 0 : i32
    %c0_i32_0 = arith.constant 0 : i32
    %c0_i32_1 = arith.constant 0 : i32
    return %c0_i32, %c0_i32_0 : i32, i32
  }
  func.func @transform_7(%arg0: i32) -> (i32, i32) {
    %c0_i32 = arith.constant 0 : i32
    %c0_i32_0 = arith.constant 0 : i32
    %c0_i32_1 = arith.constant 0 : i32
    return %c0_i32, %c0_i32_0 : i32, i32
  }
  func.func @transform_8(%arg0: i32) -> (i32, i32) {
    %c0_i32 = arith.constant 0 : i32
    %c0_i32_0 = arith.constant 0 : i32
    %c0_i32_1 = arith.constant 0 : i32
    return %c0_i32, %c0_i32_0 : i32, i32
  }
  func.func @transform_9(%arg0: i32) -> (i32, i32) {
    %c0_i32 = arith.constant 0 : i32
    %c0_i32_0 = arith.constant 0 : i32
    %c0_i32_1 = arith.constant 0 : i32
    return %c0_i32, %c0_i32_0 : i32, i32
  }
  func.func @transform_10(%arg0: i32) -> (i32, i32) {
    %c0_i32 = arith.constant 0 : i32
    %c0_i32_0 = arith.constant 0 : i32
    %c0_i32_1 = arith.constant 0 : i32
    return %c0_i32, %c0_i32_0 : i32, i32
  }
  func.func @transform_11(%arg0: i32) -> (i32, i32) {
    %c0_i32 = arith.constant 0 : i32
    %c0_i32_0 = arith.constant 0 : i32
    %c0_i32_1 = arith.constant 0 : i32
    return %c0_i32, %c0_i32_0 : i32, i32
  }
  func.func @transform_12(%arg0: i32) -> (i32, i32) {
    %c0_i32 = arith.constant 0 : i32
    %c0_i32_0 = arith.constant 0 : i32
    %c0_i32_1 = arith.constant 0 : i32
    return %c0_i32, %c0_i32_0 : i32, i32
  }
  func.func @transform_13(%arg0: i32) -> (i32, i32) {
    %c0_i32 = arith.constant 0 : i32
    %c0_i32_0 = arith.constant 0 : i32
    %c0_i32_1 = arith.constant 0 : i32
    return %c0_i32, %c0_i32_0 : i32, i32
  }
  func.func @transform_14(%arg0: i32) -> (i32, i32) {
    %c0_i32 = arith.constant 0 : i32
    %c0_i32_0 = arith.constant 0 : i32
    %c0_i32_1 = arith.constant 0 : i32
    return %c0_i32, %c0_i32_0 : i32, i32
  }
  func.func @transform_15(%arg0: i32) -> (i32, i32, i32) {
    %c0_i32 = arith.constant 0 : i32
    %c0_i32_0 = arith.constant 0 : i32
    %c0_i32_1 = arith.constant 0 : i32
    return %arg0, %c0_i32, %c0_i32_0 : i32, i32, i32
  }
}

</mosaic_0001>

<llo_original>
// kernel: residual_block_pallas.1
$region0: #{residual_block_pallas.1}
  #allocation0 [shape = 'u32[]', space=smem, size = 0x4, offset = 0x4, fixed_abs, tag = 'smem constant byte address 0x4 - core index']
  #allocation1 [shape = 'u32[72,128]{1,0:T(1,128)}', space=vmem, size = 0x9000, scoped, tag = 'internal scratch']
  #allocation2 [shape = 'bf16[64,288]{1,0:T(8,128)(2,1)}', space=vmem, size = 0xc000, scoped, tag = 'scratch operand']
  #allocation3 [shape = 'bf16[64,2304]{1,0:T(8,128)(2,1)}', space=vmem, size = 0x48000, scoped, tag = 'scratch operand']
  %s0 = inlined_call_operand.vmem [shape: f32[2,64,32], index: 0, kind: input, shape index: {}]
  %s1 = inlined_call_operand.hbm [shape: bf16[288,256], index: 1, kind: input, shape index: {}]
  %s2 = inlined_call_operand.hbm [shape: f32[1,256], index: 2, kind: input, shape index: {}]
  %s3 = inlined_call_operand.hbm [shape: f32[1,256], index: 3, kind: input, shape index: {}]
  %s4 = inlined_call_operand.hbm [shape: f32[1,256], index: 4, kind: input, shape index: {}]
  %s5 = inlined_call_operand.hbm [shape: bf16[2304,256], index: 5, kind: input, shape index: {}]
  %s6 = inlined_call_operand.hbm [shape: f32[1,256], index: 6, kind: input, shape index: {}]
  %s7 = inlined_call_operand.hbm [shape: f32[1,256], index: 7, kind: input, shape index: {}]
  %s8 = inlined_call_operand.hbm [shape: f32[1,256], index: 8, kind: input, shape index: {}]
  %s9 = inlined_call_operand.hbm [shape: bf16[32,256], index: 9, kind: input, shape index: {}]
  %s10 = inlined_call_operand.hbm [shape: f32[1,256], index: 10, kind: input, shape index: {}]
  %s11 = inlined_call_operand.hbm [shape: f32[1,256], index: 11, kind: input, shape index: {}]
  %s12 = inlined_call_operand.hbm [shape: f32[1,256], index: 12, kind: input, shape index: {}]
  %s13 = inlined_call_operand.vmem [shape: f32[256,32], index: 13, kind: input, shape index: {}]
  %s14 = inlined_call_operand.hbm [shape: f32[32,256], index: 14, kind: input, shape index: {}]
  %s15 = inlined_call_operand.vmem [shape: f32[2,64,256], index: 15, kind: output, shape index: {}]
  %s16 = sld [smem:[#allocation0]]
  $region145: #{residual_block_pallas.1} parent=0
    _
  %s18 = ssub.s32 1, %s16
  %s19 = scalar_select 0, %s18, %s16
  $region1: #{residual_block_pallas.1} parent=0
    #allocation4 [shape = 'u8[147456]{0}', space=vmem, size = 0x24000, scoped, tag = 'input window, operand 1, single buffered']
    #allocation5 [shape = 's32[2]{0}', space=sflag, size = 0x8, scoped, tag = 'scoped memory for residual_block_pallas.1']
    #allocation6 [shape = 'u8[1024]{0}', space=vmem, size = 0x400, scoped, tag = 'input window, operand 2, single buffered']
    #allocation7 [shape = 's32[1]{0}', space=sflag, size = 0x4, scoped, tag = 'scoped memory for residual_block_pallas.1']
    #allocation8 [shape = 'u8[1024]{0}', space=vmem, size = 0x400, scoped, tag = 'input window, operand 3, single buffered']
    #allocation9 [shape = 'u8[1024]{0}', space=vmem, size = 0x400, scoped, tag = 'input window, operand 4, single buffered']
    #allocation10 [shape = 's32[1]{0}', space=sflag, size = 0x4, scoped, tag = 'scoped memory for residual_block_pallas.1']
    #allocation11 [shape = 'u8[1179648]{0}', space=vmem, size = 0x120000, scoped, tag = 'input window, operand 5, single buffered']
    #allocation12 [shape = 'u8[1024]{0}', space=vmem, size = 0x400, scoped, tag = 'input window, operand 6, single buffered']
    #allocation13 [shape = 's32[1]{0}', space=sflag, size = 0x4, scoped, tag = 'scoped memory for residual_block_pallas.1']
    #allocation14 [shape = 'u8[1024]{0}', space=vmem, size = 0x400, scoped, tag = 'input window, operand 7, single buffered']
    #allocation15 [shape = 'u8[1024]{0}', space=vmem, size = 0x400, scoped, tag = 'input window, operand 8, single buffered']
    #allocation16 [shape = 's32[1]{0}', space=sflag, size = 0x4, scoped, tag = 'scoped memory for residual_block_pallas.1']
    #allocation17 [shape = 'u8[16384]{0}', space=vmem, size = 0x4000, scoped, tag = 'input window, operand 9, single buffered']
    #allocation18 [shape = 'u8[1024]{0}', space=vmem, size = 0x400, scoped, tag = 'input window, operand 10, single buffered']
    #allocation19 [shape = 's32[1]{0}', space=sflag, size = 0x4, scoped, tag = 'scoped memory for residual_block_pallas.1']
    #allocation20 [shape = 'u8[1024]{0}', space=vmem, size = 0x400, scoped, tag = 'input window, operand 11, single buffered']
    #allocation21 [shape = 'u8[1024]{0}', space=vmem, size = 0x400, scoped, tag = 'input window, operand 12, single buffered']
    #allocation22 [shape = 's32[1]{0}', space=sflag, size = 0x4, scoped, tag = 'scoped memory for residual_block_pallas.1']
    #allocation23 [shape = 'u8[32768]{0}', space=vmem, size = 0x8000, scoped, tag = 'input window, operand 14, single buffered']
    %20 = vsyncpa [#allocation5], 0
    %21 = vsyncpa [#allocation7], 0
    %22 = vsyncpa [#allocation10], 0
    %23 = vsyncpa [#allocation13], 0
    %24 = vsyncpa [#allocation16], 0
    %25 = vsyncpa [#allocation19], 0
    %26 = vsyncpa [#allocation22], 0
    loop: start=0, step=1, limit=4
    $region2: #{residual_block_pallas.1} parent=1 // loop_pre_header
      _
    $region3: #{residual_block_pallas.1} parent=1 // loop_header
      %s28 = sphi 0, %s32
      %p29 = scmp.ge.s32.totalorder %s28, 4
      %s38 = sphi 0, %s40
      %s41 = sphi 0, %s38
      %s42 = sphi 0, %s41
      %s58 = sphi 0, %s42
      %s62 = sphi 0, %s62
      %s64 = sphi 0, %s62
      %s65 = sphi 0, %s64
      %s79 = sphi 0, %s65
      %s83 = sphi 0, %s83
      %s85 = sphi 0, %s83
      %s86 = sphi 0, %s85
      %s100 = sphi 0, %s86
      %s104 = sphi 0, %s104
      %s106 = sphi 0, %s104
      %s107 = sphi 0, %s106
      %s121 = sphi 0, %s107
      %s125 = sphi 0, %s125
      %s127 = sphi 0, %s125
      %s128 = sphi 0, %s127
      %s142 = sphi 0, %s128
      %s146 = sphi 0, %s146
      %s148 = sphi 0, %s146
      %s149 = sphi 0, %s148
      %s163 = sphi 0, %s149
      %s167 = sphi 0, %s167
      %s169 = sphi 0, %s167
      %s170 = sphi 0, %s169
      %s184 = sphi 0, %s170
      %s188 = sphi 0, %s188
      %s190 = sphi 0, %s188
      %s191 = sphi 0, %s190
      %s205 = sphi 0, %s191
      %s209 = sphi 0, %s209
      %s211 = sphi 0, %s209
      %s212 = sphi 0, %s211
      %s226 = sphi 0, %s212
      %s230 = sphi 0, %s230
      %s232 = sphi 0, %s230
      %s233 = sphi 0, %s232
      %s247 = sphi 0, %s233
      %s251 = sphi 0, %s251
      %s253 = sphi 0, %s251
      %s254 = sphi 0, %s253
      %s268 = sphi 0, %s254
      %s272 = sphi 0, %s272
      %s274 = sphi 0, %s272
      %s275 = sphi 0, %s274
      %s289 = sphi 0, %s275
      %s293 = sphi 0, %s293
      %s295 = sphi 0, %s293
      %s296 = sphi 0, %s295
      %s310 = sphi 0, %s296
      %s314 = sphi 0, %s314
      %s316 = sphi 0, %s314
      %s317 = sphi 0, %s316
      %s331 = sphi 0, %s317
      %s335 = sphi 0, %s335
      %s337 = sphi 0, %s335
      %s338 = sphi 0, %s337
      %s352 = sphi 0, %s338
      %s358 = sphi 0, %s360
      %s361 = sphi 0, %s358
      %s362 = sphi 0, %s361
      %s378 = sphi 0, %s362
    $region4: #{residual_block_pallas.1} parent=1 // loop_header_branch
      %31 = sbr.rel (%p29) target = $region8
    $region5: #{residual_block_pallas.1} parent=1 // loop_body
      %s33 = ssub.s32 %s28, 1
      %s34 = ssub.s32 %s28, 2
      %s35 = sadd.s32 %s28, 1
      %s36 = ssub.s32 %s28, %s35
      %p37 = scmp.eq.s32.totalorder %s36, 0
      %s39 = sadd.s32 %s38, 1
      %s40 = scalar_select %p37, %s38, %s39
      %p43 = pneg %p37
      %p44 = scmp.eq.s32.totalorder %s28, 1
      %p45 = por %p43, %p44
      %p46 = scmp.ne.s32.totalorder %s38, %s41
      %p47 = scmp.eq.s32.totalorder %s28, 0
      %p48 = por %p46, %p47
      %p49 = scmp.ne.s32.totalorder %s38, %s41
      %p50 = scmp.eq.s32.totalorder %s33, 1
      %p51 = por %p49, %p50
      %p52 = scmp.ne.s32.totalorder %s41, %s42
      %p53 = scmp.eq.s32.totalorder %s33, 0
      %p54 = por %p52, %p53
      %p55 = scmp.ne.s32.totalorder %s41, %s42
      %p56 = scmp.eq.s32.totalorder %s34, 1
      %p57 = por %p55, %p56
      %p59 = scmp.ne.s32.totalorder %s42, %s58
      %p60 = scmp.eq.s32.totalorder %s34, 0
      %p61 = por %p59, %p60
      %s63 = sadd.s32 %s62, 1
      %p66 = scmp.eq.s32.totalorder %s28, 1
      %p67 = scmp.ne.s32.totalorder %s62, %s64
      %p68 = scmp.eq.s32.totalorder %s28, 0
      %p69 = por %p67, %p68
      %p70 = scmp.ne.s32.totalorder %s62, %s64
      %p71 = scmp.eq.s32.totalorder %s33, 1
      %p72 = por %p70, %p71
      %p73 = scmp.ne.s32.totalorder %s64, %s65
      %p74 = scmp.eq.s32.totalorder %s33, 0
      %p75 = por %p73, %p74
      %p76 = scmp.ne.s32.totalorder %s64, %s65
      %p77 = scmp.eq.s32.totalorder %s34, 1
      %p78 = por %p76, %p77
      %p80 = scmp.ne.s32.totalorder %s65, %s79
      %p81 = scmp.eq.s32.totalorder %s34, 0
      %p82 = por %p80, %p81
      %s84 = sadd.s32 %s83, 1
      %p87 = scmp.eq.s32.totalorder %s28, 1
      %p88 = scmp.ne.s32.totalorder %s83, %s85
      %p89 = scmp.eq.s32.totalorder %s28, 0
      %p90 = por %p88, %p89
      %p91 = scmp.ne.s32.totalorder %s83, %s85
      %p92 = scmp.eq.s32.totalorder %s33, 1
      %p93 = por %p91, %p92
      %p94 = scmp.ne.s32.totalorder %s85, %s86
      %p95 = scmp.eq.s32.totalorder %s33, 0
      %p96 = por %p94, %p95
      %p97 = scmp.ne.s32.totalorder %s85, %s86
      %p98 = scmp.eq.s32.totalorder %s34, 1
      %p99 = por %p97, %p98
      %p101 = scmp.ne.s32.totalorder %s86, %s100
      %p102 = scmp.eq.s32.totalorder %s34, 0
      %p103 = por %p101, %p102
      %s105 = sadd.s32 %s104, 1
      %p108 = scmp.eq.s32.totalorder %s28, 1
      %p109 = scmp.ne.s32.totalorder %s104, %s106
      %p110 = scmp.eq.s32.totalorder %s28, 0
      %p111 = por %p109, %p110
      %p112 = scmp.ne.s32.totalorder %s104, %s106
      %p113 = scmp.eq.s32.totalorder %s33, 1
      %p114 = por %p112, %p113
      %p115 = scmp.ne.s32.totalorder %s106, %s107
      %p116 = scmp.eq.s32.totalorder %s33, 0
      %p117 = por %p115, %p116
      %p118 = scmp.ne.s32.totalorder %s106, %s107
      %p119 = scmp.eq.s32.totalorder %s34, 1
      %p120 = por %p118, %p119
      %p122 = scmp.ne.s32.totalorder %s107, %s121
      %p123 = scmp.eq.s32.totalorder %s34, 0
      %p124 = por %p122, %p123
      %s126 = sadd.s32 %s125, 1
      %p129 = scmp.eq.s32.totalorder %s28, 1
      %p130 = scmp.ne.s32.totalorder %s125, %s127
      %p131 = scmp.eq.s32.totalorder %s28, 0
      %p132 = por %p130, %p131
      %p133 = scmp.ne.s32.totalorder %s125, %s127
      %p134 = scmp.eq.s32.totalorder %s33, 1
      %p135 = por %p133, %p134
      %p136 = scmp.ne.s32.totalorder %s127, %s128
      %p137 = scmp.eq.s32.totalorder %s33, 0
      %p138 = por %p136, %p137
      %p139 = scmp.ne.s32.totalorder %s127, %s128
      %p140 = scmp.eq.s32.totalorder %s34, 1
      %p141 = por %p139, %p140
      %p143 = scmp.ne.s32.totalorder %s128, %s142
      %p144 = scmp.eq.s32.totalorder %s34, 0
      %p145 = por %p143, %p144
      %s147 = sadd.s32 %s146, 1
      %p150 = scmp.eq.s32.totalorder %s28, 1
      %p151 = scmp.ne.s32.totalorder %s146, %s148
      %p152 = scmp.eq.s32.totalorder %s28, 0
      %p153 = por %p151, %p152
      %p154 = scmp.ne.s32.totalorder %s146, %s148
      %p155 = scmp.eq.s32.totalorder %s33, 1
      %p156 = por %p154, %p155
      %p157 = scmp.ne.s32.totalorder %s148, %s149
      %p158 = scmp.eq.s32.totalorder %s33, 0
      %p159 = por %p157, %p158
      %p160 = scmp.ne.s32.totalorder %s148, %s149
      %p161 = scmp.eq.s32.totalorder %s34, 1
      %p162 = por %p160, %p161
      %p164 = scmp.ne.s32.totalorder %s149, %s163
      %p165 = scmp.eq.s32.totalorder %s34, 0
      %p166 = por %p164, %p165
      %s168 = sadd.s32 %s167, 1
      %p171 = scmp.eq.s32.totalorder %s28, 1
      %p172 = scmp.ne.s32.totalorder %s167, %s169
      %p173 = scmp.eq.s32.totalorder %s28, 0
      %p174 = por %p172, %p173
      %p175 = scmp.ne.s32.totalorder %s167, %s169
      %p176 = scmp.eq.s32.totalorder %s33, 1
      %p177 = por %p175, %p176
      %p178 = scmp.ne.s32.totalorder %s169, %s170
      %p179 = scmp.eq.s32.totalorder %s33, 0
      %p180 = por %p178, %p179
      %p181 = scmp.ne.s32.totalorder %s169, %s170
      %p182 = scmp.eq.s32.totalorder %s34, 1
      %p183 = por %p181, %p182
      %p185 = scmp.ne.s32.totalorder %s170, %s184
      %p186 = scmp.eq.s32.totalorder %s34, 0
      %p187 = por %p185, %p186
      %s189 = sadd.s32 %s188, 1
      %p192 = scmp.eq.s32.totalorder %s28, 1
      %p193 = scmp.ne.s32.totalorder %s188, %s190
      %p194 = scmp.eq.s32.totalorder %s28, 0
      %p195 = por %p193, %p194
      %p196 = scmp.ne.s32.totalorder %s188, %s190
      %p197 = scmp.eq.s32.totalorder %s33, 1
      %p198 = por %p196, %p197
      %p199 = scmp.ne.s32.totalorder %s190, %s191
      %p200 = scmp.eq.s32.totalorder %s33, 0
      %p201 = por %p199, %p200
      %p202 = scmp.ne.s32.totalorder %s190, %s191
      %p203 = scmp.eq.s32.totalorder %s34, 1
      %p204 = por %p202, %p203
      %p206 = scmp.ne.s32.totalorder %s191, %s205
      %p207 = scmp.eq.s32.totalorder %s34, 0
      %p208 = por %p206, %p207
      %s210 = sadd.s32 %s209, 1
      %p213 = scmp.eq.s32.totalorder %s28, 1
      %p214 = scmp.ne.s32.totalorder %s209, %s211
      %p215 = scmp.eq.s32.totalorder %s28, 0
      %p216 = por %p214, %p215
      %p217 = scmp.ne.s32.totalorder %s209, %s211
      %p218 = scmp.eq.s32.totalorder %s33, 1
      %p219 = por %p217, %p218
      %p220 = scmp.ne.s32.totalorder %s211, %s212
      %p221 = scmp.eq.s32.totalorder %s33, 0
      %p222 = por %p220, %p221
      %p223 = scmp.ne.s32.totalorder %s211, %s212
      %p224 = scmp.eq.s32.totalorder %s34, 1
      %p225 = por %p223, %p224
      %p227 = scmp.ne.s32.totalorder %s212, %s226
      %p228 = scmp.eq.s32.totalorder %s34, 0
      %p229 = por %p227, %p228
      %s231 = sadd.s32 %s230, 1
      %p234 = scmp.eq.s32.totalorder %s28, 1
      %p235 = scmp.ne.s32.totalorder %s230, %s232
      %p236 = scmp.eq.s32.totalorder %s28, 0
      %p237 = por %p235, %p236
      %p238 = scmp.ne.s32.totalorder %s230, %s232
      %p239 = scmp.eq.s32.totalorder %s33, 1
      %p240 = por %p238, %p239
      %p241 = scmp.ne.s32.totalorder %s232, %s233
      %p242 = scmp.eq.s32.totalorder %s33, 0
      %p243 = por %p241, %p242
      %p244 = scmp.ne.s32.totalorder %s232, %s233
      %p245 = scmp.eq.s32.totalorder %s34, 1
      %p246 = por %p244, %p245
      %p248 = scmp.ne.s32.totalorder %s233, %s247
      %p249 = scmp.eq.s32.totalorder %s34, 0
      %p250 = por %p248, %p249
      %s252 = sadd.s32 %s251, 1
      %p255 = scmp.eq.s32.totalorder %s28, 1
      %p256 = scmp.ne.s32.totalorder %s251, %s253
      %p257 = scmp.eq.s32.totalorder %s28, 0
      %p258 = por %p256, %p257
      %p259 = scmp.ne.s32.totalorder %s251, %s253
      %p260 = scmp.eq.s32.totalorder %s33, 1
      %p261 = por %p259, %p260
      %p262 = scmp.ne.s32.totalorder %s253, %s254
      %p263 = scmp.eq.s32.totalorder %s33, 0
      %p264 = por %p262, %p263
      %p265 = scmp.ne.s32.totalorder %s253, %s254
      %p266 = scmp.eq.s32.totalorder %s34, 1
      %p267 = por %p265, %p266
      %p269 = scmp.ne.s32.totalorder %s254, %s268
      %p270 = scmp.eq.s32.totalorder %s34, 0
      %p271 = por %p269, %p270
      %s273 = sadd.s32 %s272, 1
      %p276 = scmp.eq.s32.totalorder %s28, 1
      %p277 = scmp.ne.s32.totalorder %s272, %s274
      %p278 = scmp.eq.s32.totalorder %s28, 0
      %p279 = por %p277, %p278
      %p280 = scmp.ne.s32.totalorder %s272, %s274
      %p281 = scmp.eq.s32.totalorder %s33, 1
      %p282 = por %p280, %p281
      %p283 = scmp.ne.s32.totalorder %s274, %s275
      %p284 = scmp.eq.s32.totalorder %s33, 0
      %p285 = por %p283, %p284
      %p286 = scmp.ne.s32.totalorder %s274, %s275
      %p287 = scmp.eq.s32.totalorder %s34, 1
      %p288 = por %p286, %p287
      %p290 = scmp.ne.s32.totalorder %s275, %s289
      %p291 = scmp.eq.s32.totalorder %s34, 0
      %p292 = por %p290, %p291
      %s294 = sadd.s32 %s293, 1
      %p297 = scmp.eq.s32.totalorder %s28, 1
      %p298 = scmp.ne.s32.totalorder %s293, %s295
      %p299 = scmp.eq.s32.totalorder %s28, 0
      %p300 = por %p298, %p299
      %p301 = scmp.ne.s32.totalorder %s293, %s295
      %p302 = scmp.eq.s32.totalorder %s33, 1
      %p303 = por %p301, %p302
      %p304 = scmp.ne.s32.totalorder %s295, %s296
      %p305 = scmp.eq.s32.totalorder %s33, 0
      %p306 = por %p304, %p305
      %p307 = scmp.ne.s32.totalorder %s295, %s296
      %p308 = scmp.eq.s32.totalorder %s34, 1
      %p309 = por %p307, %p308
      %p311 = scmp.ne.s32.totalorder %s296, %s310
      %p312 = scmp.eq.s32.totalorder %s34, 0
      %p313 = por %p311, %p312
      %s315 = sadd.s32 %s314, 1
      %p318 = scmp.eq.s32.totalorder %s28, 1
      %p319 = scmp.ne.s32.totalorder %s314, %s316
      %p320 = scmp.eq.s32.totalorder %s28, 0
      %p321 = por %p319, %p320
      %p322 = scmp.ne.s32.totalorder %s314, %s316
      %p323 = scmp.eq.s32.totalorder %s33, 1
      %p324 = por %p322, %p323
      %p325 = scmp.ne.s32.totalorder %s316, %s317
      %p326 = scmp.eq.s32.totalorder %s33, 0
      %p327 = por %p325, %p326
      %p328 = scmp.ne.s32.totalorder %s316, %s317
      %p329 = scmp.eq.s32.totalorder %s34, 1
      %p330 = por %p328, %p329
      %p332 = scmp.ne.s32.totalorder %s317, %s331
      %p333 = scmp.eq.s32.totalorder %s34, 0
      %p334 = por %p332, %p333
      %s336 = sadd.s32 %s335, 1
      %p339 = scmp.eq.s32.totalorder %s28, 1
      %p340 = scmp.ne.s32.totalorder %s335, %s337
      %p341 = scmp.eq.s32.totalorder %s28, 0
      %p342 = por %p340, %p341
      %p343 = scmp.ne.s32.totalorder %s335, %s337
      %p344 = scmp.eq.s32.totalorder %s33, 1
      %p345 = por %p343, %p344
      %p346 = scmp.ne.s32.totalorder %s337, %s338
      %p347 = scmp.eq.s32.totalorder %s33, 0
      %p348 = por %p346, %p347
      %p349 = scmp.ne.s32.totalorder %s337, %s338
      %p350 = scmp.eq.s32.totalorder %s34, 1
      %p351 = por %p349, %p350
      %p353 = scmp.ne.s32.totalorder %s338, %s352
      %p354 = scmp.eq.s32.totalorder %s34, 0
      %p355 = por %p353, %p354
      %s356 = ssub.s32 %s28, %s35
      %p357 = scmp.eq.s32.totalorder %s356, 0
      %s359 = sadd.s32 %s358, 1
      %s360 = scalar_select %p357, %s358, %s359
      %p363 = pneg %p357
      %p364 = scmp.eq.s32.totalorder %s28, 1
      %p365 = por %p363, %p364
      %p366 = scmp.ne.s32.totalorder %s358, %s361
      %p367 = scmp.eq.s32.totalorder %s28, 0
      %p368 = por %p366, %p367
      %p369 = scmp.ne.s32.totalorder %s358, %s361
      %p370 = scmp.eq.s32.totalorder %s33, 1
      %p371 = por %p369, %p370
      %p372 = scmp.ne.s32.totalorder %s361, %s362
      %p373 = scmp.eq.s32.totalorder %s33, 0
      %p374 = por %p372, %p373
      %p375 = scmp.ne.s32.totalorder %s361, %s362
      %p376 = scmp.eq.s32.totalorder %s34, 1
      %p377 = por %p375, %p376
      %p379 = scmp.ne.s32.totalorder %s362, %s378
      %p380 = scmp.eq.s32.totalorder %s34, 0
      %p381 = por %p379, %p380
      %p382 = scmp.le.s32.totalorder 1, %s28
      %p383 = scmp.lt.s32.totalorder %s28, 3
      %p384 = pnand %p382, %p383
      %p385 = pneg %p384
      // Predicated region
      $region9: #{residual_block_pallas.1} parent=5 // pred_check
        _
      $region10: #{residual_block_pallas.1} parent=5 // pred_check_branch
        %387 = sbr.rel (%p384) target = $region12
      $region11: #{residual_block_pallas.1} parent=5 // pred_region
        %s388 = ssub.s32 %s28, 1
        // Predicated region
        $region13: #{residual_block_pallas.1} parent=11 // pred_check
          %p389 = pneg %p75
        $region14: #{residual_block_pallas.1} parent=11 // pred_check_branch
          %391 = sbr.rel (%p389) target = $region16
        $region15: #{residual_block_pallas.1} parent=11 // pred_region
          %393 = vsyncadd [#allocation5], 0
          %s394 = sshll.u32 %s1, 4
          %s395 = int_to_ptr.hbm [resolvable:$true] %s394
          %s396 = sshll.u32 [#allocation4], 4
          %s397 = int_to_ptr.vmem [resolvable:$true] %s396
          %402 = dma.hbm_to_vmem [thread:$0]  %s395, 4608, %s397, [#allocation5], 128, 128, 8
        $region16: #{residual_block_pallas.1} parent=11 // pred_fallthru
          _
        // Predicated region
        $region17: #{residual_block_pallas.1} parent=11 // pred_check
          %p403 = pneg %p96
        $region18: #{residual_block_pallas.1} parent=11 // pred_check_branch
          %405 = sbr.rel (%p403) target = $region20
        $region19: #{residual_block_pallas.1} parent=11 // pred_region
          %407 = vsyncadd [#allocation7], 0
          %s409 = sshll.u32 %s2, 4
          %s410 = int_to_ptr.hbm [resolvable:$true] %s409
          %s411 = sshll.u32 [#allocation6], 4
          %s412 = int_to_ptr.vmem [resolvable:$true] %s411
          %414 = dma.hbm_to_vmem [thread:$0]  %s410, 32, %s412, [#allocation7]
        $region20: #{residual_block_pallas.1} parent=11 // pred_fallthru
          _
        // Predicated region
        $region21: #{residual_block_pallas.1} parent=11 // pred_check
          %p415 = pneg %p117
        $region22: #{residual_block_pallas.1} parent=11 // pred_check_branch
          %417 = sbr.rel (%p415) target = $region24
        $region23: #{residual_block_pallas.1} parent=11 // pred_region
          %419 = vsyncadd [#allocation7], 0
          %s421 = sshll.u32 %s3, 4
          %s422 = int_to_ptr.hbm [resolvable:$true] %s421
          %s423 = sshll.u32 [#allocation8], 4
          %s424 = int_to_ptr.vmem [resolvable:$true] %s423
          %426 = dma.hbm_to_vmem [thread:$0]  %s422, 32, %s424, [#allocation7]
        $region24: #{residual_block_pallas.1} parent=11 // pred_fallthru
          _
        // Predicated region
        $region25: #{residual_block_pallas.1} parent=11 // pred_check
          %p427 = pneg %p138
        $region26: #{residual_block_pallas.1} parent=11 // pred_check_branch
          %429 = sbr.rel (%p427) target = $region28
        $region27: #{residual_block_pallas.1} parent=11 // pred_region
          %431 = vsyncadd [#allocation10], 0
          %s433 = sshll.u32 %s4, 4
          %s434 = int_to_ptr.hbm [resolvable:$true] %s433
          %s435 = sshll.u32 [#allocation9], 4
          %s436 = int_to_ptr.vmem [resolvable:$true] %s435
          %438 = dma.hbm_to_vmem [thread:$0]  %s434, 32, %s436, [#allocation10]
        $region28: #{residual_block_pallas.1} parent=11 // pred_fallthru
          _
        // Predicated region
        $region29: #{residual_block_pallas.1} parent=11 // pred_check
          %p439 = pneg %p159
        $region30: #{residual_block_pallas.1} parent=11 // pred_check_branch
          %441 = sbr.rel (%p439) target = $region32
        $region31: #{residual_block_pallas.1} parent=11 // pred_region
          %443 = vsyncadd [#allocation10], 0
          %s444 = sshll.u32 %s5, 4
          %s445 = int_to_ptr.hbm [resolvable:$true] %s444
          %s446 = sshll.u32 [#allocation11], 4
          %s447 = int_to_ptr.vmem [resolvable:$true] %s446
          %452 = dma.hbm_to_vmem [thread:$0]  %s445, 36864, %s447, [#allocation10], 128, 128, 8
        $region32: #{residual_block_pallas.1} parent=11 // pred_fallthru
          _
        // Predicated region
        $region33: #{residual_block_pallas.1} parent=11 // pred_check
          %p453 = pneg %p180
        $region34: #{residual_block_pallas.1} parent=11 // pred_check_branch
          %455 = sbr.rel (%p453) target = $region36
        $region35: #{residual_block_pallas.1} parent=11 // pred_region
          %457 = vsyncadd [#allocation13], 0
          %s459 = sshll.u32 %s6, 4
          %s460 = int_to_ptr.hbm [resolvable:$true] %s459
          %s461 = sshll.u32 [#allocation12], 4
          %s462 = int_to_ptr.vmem [resolvable:$true] %s461
          %464 = dma.hbm_to_vmem [thread:$0]  %s460, 32, %s462, [#allocation13]
        $region36: #{residual_block_pallas.1} parent=11 // pred_fallthru
          _
        // Predicated region
        $region37: #{residual_block_pallas.1} parent=11 // pred_check
          %p465 = pneg %p201
        $region38: #{residual_block_pallas.1} parent=11 // pred_check_branch
          %467 = sbr.rel (%p465) target = $region40
        $region39: #{residual_block_pallas.1} parent=11 // pred_region
          %469 = vsyncadd [#allocation13], 0
          %s471 = sshll.u32 %s7, 4
          %s472 = int_to_ptr.hbm [resolvable:$true] %s471
          %s473 = sshll.u32 [#allocation14], 4
          %s474 = int_to_ptr.vmem [resolvable:$true] %s473
          %476 = dma.hbm_to_vmem [thread:$0]  %s472, 32, %s474, [#allocation13]
        $region40: #{residual_block_pallas.1} parent=11 // pred_fallthru
          _
        // Predicated region
        $region41: #{residual_block_pallas.1} parent=11 // pred_check
          %p477 = pneg %p222
        $region42: #{residual_block_pallas.1} parent=11 // pred_check_branch
          %479 = sbr.rel (%p477) target = $region44
        $region43: #{residual_block_pallas.1} parent=11 // pred_region
          %481 = vsyncadd [#allocation16], 0
          %s483 = sshll.u32 %s8, 4
          %s484 = int_to_ptr.hbm [resolvable:$true] %s483
          %s485 = sshll.u32 [#allocation15], 4
          %s486 = int_to_ptr.vmem [resolvable:$true] %s485
          %488 = dma.hbm_to_vmem [thread:$0]  %s484, 32, %s486, [#allocation16]
        $region44: #{residual_block_pallas.1} parent=11 // pred_fallthru
          _
        // Predicated region
        $region45: #{residual_block_pallas.1} parent=11 // pred_check
          %p489 = pneg %p243
        $region46: #{residual_block_pallas.1} parent=11 // pred_check_branch
          %491 = sbr.rel (%p489) target = $region48
        $region47: #{residual_block_pallas.1} parent=11 // pred_region
          %493 = vsyncadd [#allocation16], 0
          %s494 = sshll.u32 %s9, 4
          %s495 = int_to_ptr.hbm [resolvable:$true] %s494
          %s496 = sshll.u32 [#allocation17], 4
          %s497 = int_to_ptr.vmem [resolvable:$true] %s496
          %502 = dma.hbm_to_vmem [thread:$0]  %s495, 512, %s497, [#allocation16], 128, 128, 8
        $region48: #{residual_block_pallas.1} parent=11 // pred_fallthru
          _
        // Predicated region
        $region49: #{residual_block_pallas.1} parent=11 // pred_check
          %p503 = pneg %p264
        $region50: #{residual_block_pallas.1} parent=11 // pred_check_branch
          %505 = sbr.rel (%p503) target = $region52
        $region51: #{residual_block_pallas.1} parent=11 // pred_region
          %507 = vsyncadd [#allocation19], 0
          %s509 = sshll.u32 %s10, 4
          %s510 = int_to_ptr.hbm [resolvable:$true] %s509
          %s511 = sshll.u32 [#allocation18], 4
          %s512 = int_to_ptr.vmem [resolvable:$true] %s511
          %514 = dma.hbm_to_vmem [thread:$0]  %s510, 32, %s512, [#allocation19]
        $region52: #{residual_block_pallas.1} parent=11 // pred_fallthru
          _
        // Predicated region
        $region53: #{residual_block_pallas.1} parent=11 // pred_check
          %p515 = pneg %p285
        $region54: #{residual_block_pallas.1} parent=11 // pred_check_branch
          %517 = sbr.rel (%p515) target = $region56
        $region55: #{residual_block_pallas.1} parent=11 // pred_region
          %519 = vsyncadd [#allocation19], 0
          %s521 = sshll.u32 %s11, 4
          %s522 = int_to_ptr.hbm [resolvable:$true] %s521
          %s523 = sshll.u32 [#allocation20], 4
          %s524 = int_to_ptr.vmem [resolvable:$true] %s523
          %526 = dma.hbm_to_vmem [thread:$0]  %s522, 32, %s524, [#allocation19]
        $region56: #{residual_block_pallas.1} parent=11 // pred_fallthru
          _
        // Predicated region
        $region57: #{residual_block_pallas.1} parent=11 // pred_check
          %p527 = pneg %p306
        $region58: #{residual_block_pallas.1} parent=11 // pred_check_branch
          %529 = sbr.rel (%p527) target = $region60
        $region59: #{residual_block_pallas.1} parent=11 // pred_region
          %531 = vsyncadd [#allocation22], 0
          %s533 = sshll.u32 %s12, 4
          %s534 = int_to_ptr.hbm [resolvable:$true] %s533
          %s535 = sshll.u32 [#allocation21], 4
          %s536 = int_to_ptr.vmem [resolvable:$true] %s535
          %538 = dma.hbm_to_vmem [thread:$0]  %s534, 32, %s536, [#allocation22]
        $region60: #{residual_block_pallas.1} parent=11 // pred_fallthru
          _
        // Predicated region
        $region61: #{residual_block_pallas.1} parent=11 // pred_check
          %p539 = pneg %p327
        $region62: #{residual_block_pallas.1} parent=11 // pred_check_branch
          %541 = sbr.rel (%p539) target = $region64
        $region63: #{residual_block_pallas.1} parent=11 // pred_region
          _
        $region64: #{residual_block_pallas.1} parent=11 // pred_fallthru
          _
        // Predicated region
        $region65: #{residual_block_pallas.1} parent=11 // pred_check
          %p542 = pneg %p348
        $region66: #{residual_block_pallas.1} parent=11 // pred_check_branch
          %544 = sbr.rel (%p542) target = $region68
        $region67: #{residual_block_pallas.1} parent=11 // pred_region
          %546 = vsyncadd [#allocation22], 0
          %s547 = sshll.u32 %s14, 4
          %s548 = int_to_ptr.hbm [resolvable:$true] %s547
          %s549 = sshll.u32 [#allocation23], 4
          %s550 = int_to_ptr.vmem [resolvable:$true] %s549
          %555 = dma.hbm_to_vmem [thread:$0]  %s548, 1024, %s550, [#allocation22], 256, 256, 16
        $region68: #{residual_block_pallas.1} parent=11 // pred_fallthru
          _
      $region12: #{residual_block_pallas.1} parent=5 // pred_fallthru
        _
      %p556 = scmp.lt.s32.totalorder %s28, 2
      // Predicated region
      $region69: #{residual_block_pallas.1} parent=5 // pred_check
        %p557 = pneg %p556
      $region70: #{residual_block_pallas.1} parent=5 // pred_check_branch
        %559 = sbr.rel (%p557) target = $region72
      $region71: #{residual_block_pallas.1} parent=5 // pred_region
        // Predicated region
        $region73: #{residual_block_pallas.1} parent=71 // pred_check
          %p560 = pneg %p48
        $region74: #{residual_block_pallas.1} parent=71 // pred_check_branch
          %562 = sbr.rel (%p560) target = $region76
        $region75: #{residual_block_pallas.1} parent=71 // pred_region
          %p563 = scmp.lt.s32.totalorder %s28, 1
          %s564 = scalar_select %p563, %s28, 1
          %s565 = smul.addr %s564, 8
          %s566 = smul.addr %s565, 8
          %s567 = scalar_lea.vmem %s0, %s566
        $region76: #{residual_block_pallas.1} parent=71 // pred_fallthru
          _
      $region72: #{residual_block_pallas.1} parent=5 // pred_fallthru
        _
      %p568 = scmp.le.s32.totalorder 1, %s28
      %p569 = scmp.lt.s32.totalorder %s28, 3
      %p570 = pnand %p568, %p569
      %p571 = pneg %p570
      // Predicated region
      $region77: #{residual_block_pallas.1} parent=5 // pred_check
        _
      $region78: #{residual_block_pallas.1} parent=5 // pred_check_branch
        %573 = sbr.rel (%p570) target = $region80
      $region79: #{residual_block_pallas.1} parent=5 // pred_region
        %s574 = ssub.s32 %s28, 1
        // Predicated region
        $region81: #{residual_block_pallas.1} parent=79 // pred_check
          %p575 = pneg %p75
        $region82: #{residual_block_pallas.1} parent=79 // pred_check_branch
          %577 = sbr.rel (%p575) target = $region84
        $region83: #{residual_block_pallas.1} parent=79 // pred_region
          %579 = dma.done [#allocation5], 4608
        $region84: #{residual_block_pallas.1} parent=79 // pred_fallthru
          _
        // Predicated region
        $region85: #{residual_block_pallas.1} parent=79 // pred_check
          %p580 = pneg %p96
        $region86: #{residual_block_pallas.1} parent=79 // pred_check_branch
          %582 = sbr.rel (%p580) target = $region88
        $region87: #{residual_block_pallas.1} parent=79 // pred_region
          %584 = dma.done [#allocation7], 32
        $region88: #{residual_block_pallas.1} parent=79 // pred_fallthru
          _
        // Predicated region
        $region89: #{residual_block_pallas.1} parent=79 // pred_check
          %p585 = pneg %p117
        $region90: #{residual_block_pallas.1} parent=79 // pred_check_branch
          %587 = sbr.rel (%p585) target = $region92
        $region91: #{residual_block_pallas.1} parent=79 // pred_region
          %589 = dma.done [#allocation7], 32
        $region92: #{residual_block_pallas.1} parent=79 // pred_fallthru
          _
        // Predicated region
        $region93: #{residual_block_pallas.1} parent=79 // pred_check
          %p590 = pneg %p138
        $region94: #{residual_block_pallas.1} parent=79 // pred_check_branch
          %592 = sbr.rel (%p590) target = $region96
        $region95: #{residual_block_pallas.1} parent=79 // pred_region
          %594 = dma.done [#allocation10], 32
        $region96: #{residual_block_pallas.1} parent=79 // pred_fallthru
          _
        // Predicated region
        $region97: #{residual_block_pallas.1} parent=79 // pred_check
          %p595 = pneg %p159
        $region98: #{residual_block_pallas.1} parent=79 // pred_check_branch
          %597 = sbr.rel (%p595) target = $region100
        $region99: #{residual_block_pallas.1} parent=79 // pred_region
          %599 = dma.done [#allocation10], 36864
        $region100: #{residual_block_pallas.1} parent=79 // pred_fallthru
          _
        // Predicated region
        $region101: #{residual_block_pallas.1} parent=79 // pred_check
          %p600 = pneg %p180
        $region102: #{residual_block_pallas.1} parent=79 // pred_check_branch
          %602 = sbr.rel (%p600) target = $region104
        $region103: #{residual_block_pallas.1} parent=79 // pred_region
          %604 = dma.done [#allocation13], 32
        $region104: #{residual_block_pallas.1} parent=79 // pred_fallthru
          _
        // Predicated region
        $region105: #{residual_block_pallas.1} parent=79 // pred_check
          %p605 = pneg %p201
        $region106: #{residual_block_pallas.1} parent=79 // pred_check_branch
          %607 = sbr.rel (%p605) target = $region108
        $region107: #{residual_block_pallas.1} parent=79 // pred_region
          %609 = dma.done [#allocation13], 32
        $region108: #{residual_block_pallas.1} parent=79 // pred_fallthru
          _
        // Predicated region
        $region109: #{residual_block_pallas.1} parent=79 // pred_check
          %p610 = pneg %p222
        $region110: #{residual_block_pallas.1} parent=79 // pred_check_branch
          %612 = sbr.rel (%p610) target = $region112
        $region111: #{residual_block_pallas.1} parent=79 // pred_region
          %614 = dma.done [#allocation16], 32
        $region112: #{residual_block_pallas.1} parent=79 // pred_fallthru
          _
        // Predicated region
        $region113: #{residual_block_pallas.1} parent=79 // pred_check
          %p615 = pneg %p243
        $region114: #{residual_block_pallas.1} parent=79 // pred_check_branch
          %617 = sbr.rel (%p615) target = $region116
        $region115: #{residual_block_pallas.1} parent=79 // pred_region
          %619 = dma.done [#allocation16], 512
        $region116: #{residual_block_pallas.1} parent=79 // pred_fallthru
          _
        // Predicated region
        $region117: #{residual_block_pallas.1} parent=79 // pred_check
          %p620 = pneg %p264
        $region118: #{residual_block_pallas.1} parent=79 // pred_check_branch
          %622 = sbr.rel (%p620) target = $region120
        $region119: #{residual_block_pallas.1} parent=79 // pred_region
          %624 = dma.done [#allocation19], 32
        $region120: #{residual_block_pallas.1} parent=79 // pred_fallthru
          _
        // Predicated region
        $region121: #{residual_block_pallas.1} parent=79 // pred_check
          %p625 = pneg %p285
        $region122: #{residual_block_pallas.1} parent=79 // pred_check_branch
          %627 = sbr.rel (%p625) target = $region124
        $region123: #{residual_block_pallas.1} parent=79 // pred_region
          %629 = dma.done [#allocation19], 32
        $region124: #{residual_block_pallas.1} parent=79 // pred_fallthru
          _
        // Predicated region
        $region125: #{residual_block_pallas.1} parent=79 // pred_check
          %p630 = pneg %p306
        $region126: #{residual_block_pallas.1} parent=79 // pred_check_branch
          %632 = sbr.rel (%p630) target = $region128
        $region127: #{residual_block_pallas.1} parent=79 // pred_region
          %634 = dma.done [#allocation22], 32
        $region128: #{residual_block_pallas.1} parent=79 // pred_fallthru
          _
        // Predicated region
        $region129: #{residual_block_pallas.1} parent=79 // pred_check
          %p635 = pneg %p348
        $region130: #{residual_block_pallas.1} parent=79 // pred_check_branch
          %637 = sbr.rel (%p635) target = $region132
        $region131: #{residual_block_pallas.1} parent=79 // pred_region
          %639 = dma.done [#allocation22], 1024
        $region132: #{residual_block_pallas.1} parent=79 // pred_fallthru
          _
        %p640 = scmp.lt.s32.totalorder %s33, 1
        %s641 = scalar_select %p640, %s33, 1
        %s642 = smul.addr %s641, 8
        %s643 = smul.addr %s642, 8
        %s644 = scalar_lea.vmem %s0, %s643
        %p645 = pneg %p54
        %p646 = pneg %p51
        %p647 = pneg %p75
        %p648 = pneg %p72
        %p649 = pneg %p96
        %p650 = pneg %p93
        %p651 = pneg %p117
        %p652 = pneg %p114
        %p653 = pneg %p138
        %p654 = pneg %p135
        %p655 = pneg %p159
        %p656 = pneg %p156
        %p657 = pneg %p180
        %p658 = pneg %p177
        %p659 = pneg %p201
        %p660 = pneg %p198
        %p661 = pneg %p222
        %p662 = pneg %p219
        %p663 = pneg %p243
        %p664 = pneg %p240
        %p665 = pneg %p264
        %p666 = pneg %p261
        %p667 = pneg %p285
        %p668 = pneg %p282
        %p669 = pneg %p306
        %p670 = pneg %p303
        %p671 = pneg %p327
        %p672 = pneg %p324
        %p673 = pneg %p348
        %p674 = pneg %p345
        %p675 = pneg %p374
        %p676 = pneg %p371
        %p677 = scmp.lt.s32.totalorder %s33, 1
        %s678 = scalar_select %p677, %s33, 1
        %s679 = smul.addr %s678, 16
        %s680 = smul.addr %s679, 8
        %s681 = scalar_lea.vmem %s15, %s680
        %p682 = scmp.lt.s32.totalorder %s33, 1
        %s683 = scalar_select %p682, %s33, 1
        %s684 = smul.addr %s683, 8
        %s685 = smul.addr %s684, 8
        %s686 = scalar_lea.vmem %s0, %s685
        %p687 = scmp.lt.s32.totalorder %s33, 1
        %s688 = scalar_select %p687, %s33, 1
        %s689 = smul.addr %s688, 16
        %s690 = smul.addr %s689, 8
        %s691 = scalar_lea.vmem %s15, %s690
        %v693 = vld [vmem:[%s686] sm:$0xff]
        %v694 = vld [vmem:[%s686 + $0x8] sm:$0xff]
        %v695 = vld [vmem:[%s686 + $0x10] sm:$0xff]
        %v696 = vld [vmem:[%s686 + $0x18] sm:$0xff]
        %v697 = vld [vmem:[%s686 + $0x20] sm:$0xff]
        %v698 = vld [vmem:[%s686 + $0x28] sm:$0xff]
        %v699 = vld [vmem:[%s686 + $0x30] sm:$0xff]
        %v700 = vld [vmem:[%s686 + $0x38] sm:$0xff]
        %v701 = vld [vmem:[%s13] sm:$0xff]
        %v702 = vld [vmem:[%s13 + $0x8] sm:$0xff]
        %v703 = vld [vmem:[%s13 + $0x10] sm:$0xff]
        %v704 = vld [vmem:[%s13 + $0x18] sm:$0xff]
        %v705 = vld [vmem:[%s13 + $0x20] sm:$0xff]
        %v706 = vld [vmem:[%s13 + $0x28] sm:$0xff]
        %v707 = vld [vmem:[%s13 + $0x30] sm:$0xff]
        %v708 = vld [vmem:[%s13 + $0x38] sm:$0xff]
        %v709 = vld [vmem:[%s13 + $0x40] sm:$0xff]
        %v710 = vld [vmem:[%s13 + $0x48] sm:$0xff]
        %v711 = vld [vmem:[%s13 + $0x50] sm:$0xff]
        %v712 = vld [vmem:[%s13 + $0x58] sm:$0xff]
        %v713 = vld [vmem:[%s13 + $0x60] sm:$0xff]
        %v714 = vld [vmem:[%s13 + $0x68] sm:$0xff]
        %v715 = vld [vmem:[%s13 + $0x70] sm:$0xff]
        %v716 = vld [vmem:[%s13 + $0x78] sm:$0xff]
        %v717 = vld [vmem:[%s13 + $0x80] sm:$0xff]
        %v718 = vld [vmem:[%s13 + $0x88] sm:$0xff]
        %v719 = vld [vmem:[%s13 + $0x90] sm:$0xff]
        %v720 = vld [vmem:[%s13 + $0x98] sm:$0xff]
        %v721 = vld [vmem:[%s13 + $0xa0] sm:$0xff]
        %v722 = vld [vmem:[%s13 + $0xa8] sm:$0xff]
        %v723 = vld [vmem:[%s13 + $0xb0] sm:$0xff]
        %v724 = vld [vmem:[%s13 + $0xb8] sm:$0xff]
        %v725 = vld [vmem:[%s13 + $0xc0] sm:$0xff]
        %v726 = vld [vmem:[%s13 + $0xc8] sm:$0xff]
        %v727 = vld [vmem:[%s13 + $0xd0] sm:$0xff]
        %v728 = vld [vmem:[%s13 + $0xd8] sm:$0xff]
        %v729 = vld [vmem:[%s13 + $0xe0] sm:$0xff]
        %v730 = vld [vmem:[%s13 + $0xe8] sm:$0xff]
        %v731 = vld [vmem:[%s13 + $0xf0] sm:$0xff]
        %v732 = vld [vmem:[%s13 + $0xf8] sm:$0xff]
        %v733 = vld [vmem:[#allocation23] sm:$0xff]
        %v734 = vld [vmem:[#allocation23 + $0x8] sm:$0xff]
        %v735 = vld [vmem:[#allocation23 + $0x10] sm:$0xff]
        %v736 = vld [vmem:[#allocation23 + $0x18] sm:$0xff]
        %v737 = vld [vmem:[#allocation23 + $0x20] sm:$0xff]
        %v738 = vld [vmem:[#allocation23 + $0x28] sm:$0xff]
        %v739 = vld [vmem:[#allocation23 + $0x30] sm:$0xff]
        %v740 = vld [vmem:[#allocation23 + $0x38] sm:$0xff]
        %v741 = vlaneseq
        %v742 = vshrl.u32 %v741, 7
        %v743 = vadd.s32 %v742, 8
        %v744 = vadd.s32 %v742, 16
        %v745 = vadd.s32 %v742, 24
        %v746 = vadd.s32 %v742, 32
        %v747 = vadd.s32 %v742, 40
        %v748 = vadd.s32 %v742, 48
        %v749 = vadd.s32 %v742, 56
        %vm750 = vcmp.lt.s32.totalorder %v742, 0
        %v751 = vsub.s32 0, %v742
        %v752 = vsel %vm750, %v751, %v742
        %v753 = vshrl.u32 %v752, 3
        %v754 = vand.u32 %v752, 7
        %v755 = vsub.s32 0, %v754
        %v756 = vsel %vm750, %v755, %v754
        %vm757 = vcmp.lt.s32.totalorder %v743, 0
        %v758 = vsub.s32 0, %v743
        %v759 = vsel %vm757, %v758, %v743
        %v760 = vshrl.u32 %v759, 3
        %v761 = vand.u32 %v759, 7
        %v762 = vsub.s32 0, %v761
        %v763 = vsel %vm757, %v762, %v761
        %vm764 = vcmp.lt.s32.totalorder %v744, 0
        %v765 = vsub.s32 0, %v744
        %v766 = vsel %vm764, %v765, %v744
        %v767 = vshrl.u32 %v766, 3
        %v768 = vand.u32 %v766, 7
        %v769 = vsub.s32 0, %v768
        %v770 = vsel %vm764, %v769, %v768
        %vm771 = vcmp.lt.s32.totalorder %v745, 0
        %v772 = vsub.s32 0, %v745
        %v773 = vsel %vm771, %v772, %v745
        %v774 = vshrl.u32 %v773, 3
        %v775 = vand.u32 %v773, 7
        %v776 = vsub.s32 0, %v775
        %v777 = vsel %vm771, %v776, %v775
        %vm778 = vcmp.lt.s32.totalorder %v746, 0
        %v779 = vsub.s32 0, %v746
        %v780 = vsel %vm778, %v779, %v746
        %v781 = vshrl.u32 %v780, 3
        %v782 = vand.u32 %v780, 7
        %v783 = vsub.s32 0, %v782
        %v784 = vsel %vm778, %v783, %v782
        %vm785 = vcmp.lt.s32.totalorder %v747, 0
        %v786 = vsub.s32 0, %v747
        %v787 = vsel %vm785, %v786, %v747
        %v788 = vshrl.u32 %v787, 3
        %v789 = vand.u32 %v787, 7
        %v790 = vsub.s32 0, %v789
        %v791 = vsel %vm785, %v790, %v789
        %vm792 = vcmp.lt.s32.totalorder %v748, 0
        %v793 = vsub.s32 0, %v748
        %v794 = vsel %vm792, %v793, %v748
        %v795 = vshrl.u32 %v794, 3
        %v796 = vand.u32 %v794, 7
        %v797 = vsub.s32 0, %v796
        %v798 = vsel %vm792, %v797, %v796
        %vm799 = vcmp.lt.s32.totalorder %v749, 0
        %v800 = vsub.s32 0, %v749
        %v801 = vsel %vm799, %v800, %v749
        %v802 = vshrl.u32 %v801, 3
        %v803 = vand.u32 %v801, 7
        %v804 = vsub.s32 0, %v803
        %v805 = vsel %vm799, %v804, %v803
        %vm806 = vcmp.ne.s32.totalorder %v756, 0
        %vm807 = vcmp.ne.s32.totalorder %v763, 0
        %vm808 = vcmp.ne.s32.totalorder %v770, 0
        %vm809 = vcmp.ne.s32.totalorder %v777, 0
        %vm810 = vcmp.ne.s32.totalorder %v784, 0
        %vm811 = vcmp.ne.s32.totalorder %v791, 0
        %vm812 = vcmp.ne.s32.totalorder %v798, 0
        %vm813 = vcmp.ne.s32.totalorder %v805, 0
        %vm814 = vcmp.lt.s32.totalorder %v756, 0
        %vm815 = vcmp.lt.s32.totalorder %v763, 0
        %vm816 = vcmp.lt.s32.totalorder %v770, 0
        %vm817 = vcmp.lt.s32.totalorder %v777, 0
        %vm818 = vcmp.lt.s32.totalorder %v784, 0
        %vm819 = vcmp.lt.s32.totalorder %v791, 0
        %vm820 = vcmp.lt.s32.totalorder %v798, 0
        %vm821 = vcmp.lt.s32.totalorder %v805, 0
        %vm822 = vmand %vm814, %vm806
        %vm823 = vmand %vm815, %vm807
        %vm824 = vmand %vm816, %vm808
        %vm825 = vmand %vm817, %vm809
        %vm826 = vmand %vm818, %vm810
        %vm827 = vmand %vm819, %vm811
        %vm828 = vmand %vm820, %vm812
        %vm829 = vmand %vm821, %vm813
        %v830 = vadd.s32 %v756, 8
        %v831 = vadd.s32 %v763, 8
        %v832 = vadd.s32 %v770, 8
        %v833 = vadd.s32 %v777, 8
        %v834 = vadd.s32 %v784, 8
        %v835 = vadd.s32 %v791, 8
        %v836 = vadd.s32 %v798, 8
        %v837 = vadd.s32 %v805, 8
        %v838 = vsel %vm822, %v830, %v756
        %v839 = vsel %vm823, %v831, %v763
        %v840 = vsel %vm824, %v832, %v770
        %v841 = vsel %vm825, %v833, %v777
        %v842 = vsel %vm826, %v834, %v784
        %v843 = vsel %vm827, %v835, %v791
        %v844 = vsel %vm828, %v836, %v798
        %v845 = vsel %vm829, %v837, %v805
        %vm846 = vcmp.ge.s32.totalorder %v838, 1
        %vm847 = vcmp.ge.s32.totalorder %v839, 1
        %vm848 = vcmp.ge.s32.totalorder %v840, 1
        %vm849 = vcmp.ge.s32.totalorder %v841, 1
        %vm850 = vcmp.ge.s32.totalorder %v842, 1
        %vm851 = vcmp.ge.s32.totalorder %v843, 1
        %vm852 = vcmp.ge.s32.totalorder %v844, 1
        %vm853 = vcmp.ge.s32.totalorder %v845, 1
        %vm854 = vcmp.lt.s32.totalorder %v838, 7
        %vm855 = vcmp.lt.s32.totalorder %v839, 7
        %vm856 = vcmp.lt.s32.totalorder %v840, 7
        %vm857 = vcmp.lt.s32.totalorder %v841, 7
        %vm858 = vcmp.lt.s32.totalorder %v842, 7
        %vm859 = vcmp.lt.s32.totalorder %v843, 7
        %vm860 = vcmp.lt.s32.totalorder %v844, 7
        %vm861 = vcmp.lt.s32.totalorder %v845, 7
        %vm869 = vcmask 1040384
        %v870 = vrot.slane %v693, 7
        %v871 = vrot.slane %v694, 7
        %v872 = vsel %vm869, %v870, %v871
        %v873 = vrot.slane %v695, 7
        %v874 = vsel %vm869, %v871, %v873
        %v875 = vrot.slane %v696, 7
        %v876 = vsel %vm869, %v873, %v875
        %v877 = vrot.slane %v697, 7
        %v878 = vsel %vm869, %v875, %v877
        %v879 = vrot.slane %v698, 7
        %v880 = vsel %vm869, %v877, %v879
        %v881 = vrot.slane %v699, 7
        %v882 = vsel %vm869, %v879, %v881
        %v890 = vsel %vm869, 0.0, %v870
        %v891 = vsel %vm846, 1, 0
        %v892 = vsel %vm847, 1, 0
        %v893 = vsel %vm848, 1, 0
        %v894 = vsel %vm849, 1, 0
        %v895 = vsel %vm850, 1, 0
        %v896 = vsel %vm851, 1, 0
        %v897 = vsel %vm852, 1, 0
        %v898 = vsel %vm853, 1, 0
        %vm899 = vcmp.eq.s32.totalorder %v891, 1
        %vm900 = vcmp.eq.s32.totalorder %v892, 1
        %vm901 = vcmp.eq.s32.totalorder %v893, 1
        %vm902 = vcmp.eq.s32.totalorder %v894, 1
        %vm903 = vcmp.eq.s32.totalorder %v895, 1
        %vm904 = vcmp.eq.s32.totalorder %v896, 1
        %vm905 = vcmp.eq.s32.totalorder %v897, 1
        %vm906 = vcmp.eq.s32.totalorder %v898, 1
        %v907 = vsel %vm900, %v890, 0.0
        %v908 = vsel %vm901, %v872, 0.0
        %v909 = vsel %vm902, %v874, 0.0
        %v910 = vsel %vm903, %v876, 0.0
        %v911 = vsel %vm904, %v878, 0.0
        %v912 = vsel %vm905, %v880, 0.0
        %v913 = vsel %vm906, %v882, 0.0
        %v914 = vpack.c.bf16 0.0, 0.0
        %v915 = vpack.c.bf16 %v907, %v907
        %v916 = vpack.c.bf16 %v908, %v908
        %v917 = vpack.c.bf16 %v909, %v909
        %v918 = vpack.c.bf16 %v910, %v910
        %v919 = vpack.c.bf16 %v911, %v911
        %v920 = vpack.c.bf16 %v912, %v912
        %v921 = vpack.c.bf16 %v913, %v913
        %vm922 = vcmask 257024
        %923 = vst.msk [vmem:[#allocation2] sm:$0xf] %vm922, %v914
        %924 = vst.msk [vmem:[#allocation2 + $0xc] sm:$0xf] %vm922, %v915
        %925 = vst.msk [vmem:[#allocation2 + $0x18] sm:$0xf] %vm922, %v916
        %926 = vst.msk [vmem:[#allocation2 + $0x24] sm:$0xf] %vm922, %v917
        %927 = vst.msk [vmem:[#allocation2 + $0x30] sm:$0xf] %vm922, %v918
        %928 = vst.msk [vmem:[#allocation2 + $0x3c] sm:$0xf] %vm922, %v919
        %929 = vst.msk [vmem:[#allocation2 + $0x48] sm:$0xf] %vm922, %v920
        %930 = vst.msk [vmem:[#allocation2 + $0x54] sm:$0xf] %vm922, %v921
        %v931 = vpack.c.bf16 %v693, %v693
        %v932 = vpack.c.bf16 %v694, %v694
        %v933 = vpack.c.bf16 %v695, %v695
        %v934 = vpack.c.bf16 %v696, %v696
        %v935 = vpack.c.bf16 %v697, %v697
        %v936 = vpack.c.bf16 %v698, %v698
        %v937 = vpack.c.bf16 %v699, %v699
        %946 = vrot.lane.b32.xlu0 %v914, 32
        %v947 = vpop.permute.xlu0 %946
        %948 = vrot.lane.b32.xlu0 %v931, 32
        %v949 = vpop.permute.xlu0 %948
        %950 = vrot.lane.b32.xlu0 %v932, 32
        %v951 = vpop.permute.xlu0 %950
        %952 = vrot.lane.b32.xlu0 %v933, 32
        %v953 = vpop.permute.xlu0 %952
        %954 = vrot.lane.b32.xlu0 %v934, 32
        %v955 = vpop.permute.xlu0 %954
        %956 = vrot.lane.b32.xlu0 %v935, 32
        %v957 = vpop.permute.xlu0 %956
        %958 = vrot.lane.b32.xlu0 %v936, 32
        %v959 = vpop.permute.xlu0 %958
        %960 = vrot.lane.b32.xlu0 %v937, 32
        %v961 = vpop.permute.xlu0 %960
        %vm970 = vcmask 519424
        %971 = vst.msk [vmem:[#allocation2] sm:$0xf] %vm970, %v947
        %972 = vst.msk [vmem:[#allocation2 + $0xc] sm:$0xf] %vm970, %v949
        %973 = vst.msk [vmem:[#allocation2 + $0x18] sm:$0xf] %vm970, %v951
        %974 = vst.msk [vmem:[#allocation2 + $0x24] sm:$0xf] %vm970, %v953
        %975 = vst.msk [vmem:[#allocation2 + $0x30] sm:$0xf] %vm970, %v955
        %976 = vst.msk [vmem:[#allocation2 + $0x3c] sm:$0xf] %vm970, %v957
        %977 = vst.msk [vmem:[#allocation2 + $0x48] sm:$0xf] %vm970, %v959
        %978 = vst.msk [vmem:[#allocation2 + $0x54] sm:$0xf] %vm970, %v961
        %vm980 = vcmask 1046528
        %v981 = vrot.slane %v693, 1
        %v982 = vrot.slane %v694, 1
        %v983 = vsel %vm980, %v981, %v982
        %v984 = vrot.slane %v695, 1
        %v985 = vsel %vm980, %v982, %v984
        %v986 = vrot.slane %v696, 1
        %v987 = vsel %vm980, %v984, %v986
        %v988 = vrot.slane %v697, 1
        %v989 = vsel %vm980, %v986, %v988
        %v990 = vrot.slane %v698, 1
        %v991 = vsel %vm980, %v988, %v990
        %v992 = vrot.slane %v699, 1
        %v993 = vsel %vm980, %v990, %v992
        %v994 = vrot.slane %v700, 1
        %v995 = vsel %vm980, %v992, %v994
        %v1004 = vsel %vm980, 0.0, %v981
        %v1005 = vsel %vm854, 1, 0
        %v1006 = vsel %vm855, 1, 0
        %v1007 = vsel %vm856, 1, 0
        %v1008 = vsel %vm857, 1, 0
        %v1009 = vsel %vm858, 1, 0
        %v1010 = vsel %vm859, 1, 0
        %v1011 = vsel %vm860, 1, 0
        %v1012 = vsel %vm861, 1, 0
        %vm1013 = vcmp.eq.s32.totalorder %v1005, 1
        %vm1014 = vcmp.eq.s32.totalorder %v1006, 1
        %vm1015 = vcmp.eq.s32.totalorder %v1007, 1
        %vm1016 = vcmp.eq.s32.totalorder %v1008, 1
        %vm1017 = vcmp.eq.s32.totalorder %v1009, 1
        %vm1018 = vcmp.eq.s32.totalorder %v1010, 1
        %vm1019 = vcmp.eq.s32.totalorder %v1011, 1
        %vm1020 = vcmp.eq.s32.totalorder %v1012, 1
        %v1021 = vsel %vm1013, %v1004, 0.0
        %v1022 = vsel %vm1014, %v983, 0.0
        %v1023 = vsel %vm1015, %v985, 0.0
        %v1024 = vsel %vm1016, %v987, 0.0
        %v1025 = vsel %vm1017, %v989, 0.0
        %v1026 = vsel %vm1018, %v991, 0.0
        %v1027 = vsel %vm1019, %v993, 0.0
        %v1028 = vsel %vm1020, %v995, 0.0
        %v1029 = vpack.c.bf16 %v1021, %v1021
        %v1030 = vpack.c.bf16 %v1022, %v1022
        %v1031 = vpack.c.bf16 %v1023, %v1023
        %v1032 = vpack.c.bf16 %v1024, %v1024
        %v1033 = vpack.c.bf16 %v1025, %v1025
        %v1034 = vpack.c.bf16 %v1026, %v1026
        %v1035 = vpack.c.bf16 %v1027, %v1027
        %v1036 = vpack.c.bf16 %v1028, %v1028
        %1045 = vrot.lane.b32.xlu0 %v1029, 64
        %v1046 = vpop.permute.xlu0 %1045
        %1047 = vrot.lane.b32.xlu0 %v1030, 64
        %v1048 = vpop.permute.xlu0 %1047
        %1049 = vrot.lane.b32.xlu0 %v1031, 64
        %v1050 = vpop.permute.xlu0 %1049
        %1051 = vrot.lane.b32.xlu0 %v1032, 64
        %v1052 = vpop.permute.xlu0 %1051
        %1053 = vrot.lane.b32.xlu0 %v1033, 64
        %v1054 = vpop.permute.xlu0 %1053
        %1055 = vrot.lane.b32.xlu0 %v1034, 64
        %v1056 = vpop.permute.xlu0 %1055
        %1057 = vrot.lane.b32.xlu0 %v1035, 64
        %v1058 = vpop.permute.xlu0 %1057
        %1059 = vrot.lane.b32.xlu0 %v1036, 64
        %v1060 = vpop.permute.xlu0 %1059
        %vm1069 = vcmask 781824
        %1070 = vst.msk [vmem:[#allocation2] sm:$0xf] %vm1069, %v1046
        %1071 = vst.msk [vmem:[#allocation2 + $0xc] sm:$0xf] %vm1069, %v1048
        %1072 = vst.msk [vmem:[#allocation2 + $0x18] sm:$0xf] %vm1069, %v1050
        %1073 = vst.msk [vmem:[#allocation2 + $0x24] sm:$0xf] %vm1069, %v1052
        %1074 = vst.msk [vmem:[#allocation2 + $0x30] sm:$0xf] %vm1069, %v1054
        %1075 = vst.msk [vmem:[#allocation2 + $0x3c] sm:$0xf] %vm1069, %v1056
        %1076 = vst.msk [vmem:[#allocation2 + $0x48] sm:$0xf] %vm1069, %v1058
        %1077 = vst.msk [vmem:[#allocation2 + $0x54] sm:$0xf] %vm1069, %v1060
        %v1078 = vrot.slane %v700, 7
        %v1079 = vsel %vm869, %v881, %v1078
        %v1081 = vsel %vm899, %v890, 0.0
        %v1082 = vsel %vm900, %v872, 0.0
        %v1083 = vsel %vm901, %v874, 0.0
        %v1084 = vsel %vm902, %v876, 0.0
        %v1085 = vsel %vm903, %v878, 0.0
        %v1086 = vsel %vm904, %v880, 0.0
        %v1087 = vsel %vm905, %v882, 0.0
        %v1088 = vsel %vm906, %v1079, 0.0
        %v1089 = vpack.c.bf16 %v1081, %v1081
        %v1090 = vpack.c.bf16 %v1082, %v1082
        %v1091 = vpack.c.bf16 %v1083, %v1083
        %v1092 = vpack.c.bf16 %v1084, %v1084
        %v1093 = vpack.c.bf16 %v1085, %v1085
        %v1094 = vpack.c.bf16 %v1086, %v1086
        %v1095 = vpack.c.bf16 %v1087, %v1087
        %v1096 = vpack.c.bf16 %v1088, %v1088
        %1105 = vrot.lane.b32.xlu0 %v1089, 96
        %v1106 = vpop.permute.xlu0 %1105
        %1107 = vrot.lane.b32.xlu0 %v1090, 96
        %v1108 = vpop.permute.xlu0 %1107
        %1109 = vrot.lane.b32.xlu0 %v1091, 96
        %v1110 = vpop.permute.xlu0 %1109
        %1111 = vrot.lane.b32.xlu0 %v1092, 96
        %v1112 = vpop.permute.xlu0 %1111
        %1113 = vrot.lane.b32.xlu0 %v1093, 96
        %v1114 = vpop.permute.xlu0 %1113
        %1115 = vrot.lane.b32.xlu0 %v1094, 96
        %v1116 = vpop.permute.xlu0 %1115
        %1117 = vrot.lane.b32.xlu0 %v1095, 96
        %v1118 = vpop.permute.xlu0 %1117
        %1119 = vrot.lane.b32.xlu0 %v1096, 96
        %v1120 = vpop.permute.xlu0 %1119
        %vm1129 = vcmask 1044224
        %1130 = vst.msk [vmem:[#allocation2] sm:$0xf] %vm1129, %v1106
        %1131 = vst.msk [vmem:[#allocation2 + $0xc] sm:$0xf] %vm1129, %v1108
        %1132 = vst.msk [vmem:[#allocation2 + $0x18] sm:$0xf] %vm1129, %v1110
        %1133 = vst.msk [vmem:[#allocation2 + $0x24] sm:$0xf] %vm1129, %v1112
        %1134 = vst.msk [vmem:[#allocation2 + $0x30] sm:$0xf] %vm1129, %v1114
        %1135 = vst.msk [vmem:[#allocation2 + $0x3c] sm:$0xf] %vm1129, %v1116
        %1136 = vst.msk [vmem:[#allocation2 + $0x48] sm:$0xf] %vm1129, %v1118
        %1137 = vst.msk [vmem:[#allocation2 + $0x54] sm:$0xf] %vm1129, %v1120
        %v1138 = vpack.c.bf16 %v700, %v700
        %1139 = vst.msk [vmem:[#allocation2 + $0x4] sm:$0xf] %vm922, %v931
        %1140 = vst.msk [vmem:[#allocation2 + $0x10] sm:$0xf] %vm922, %v932
        %1141 = vst.msk [vmem:[#allocation2 + $0x1c] sm:$0xf] %vm922, %v933
        %1142 = vst.msk [vmem:[#allocation2 + $0x28] sm:$0xf] %vm922, %v934
        %1143 = vst.msk [vmem:[#allocation2 + $0x34] sm:$0xf] %vm922, %v935
        %1144 = vst.msk [vmem:[#allocation2 + $0x40] sm:$0xf] %vm922, %v936
        %1145 = vst.msk [vmem:[#allocation2 + $0x4c] sm:$0xf] %vm922, %v937
        %1146 = vst.msk [vmem:[#allocation2 + $0x58] sm:$0xf] %vm922, %v1138
        %v1148 = vsel %vm980, %v994, 0.0
        %v1149 = vsel %vm1013, %v983, 0.0
        %v1150 = vsel %vm1014, %v985, 0.0
        %v1151 = vsel %vm1015, %v987, 0.0
        %v1152 = vsel %vm1016, %v989, 0.0
        %v1153 = vsel %vm1017, %v991, 0.0
        %v1154 = vsel %vm1018, %v993, 0.0
        %v1155 = vsel %vm1019, %v995, 0.0
        %v1156 = vsel %vm1020, %v1148, 0.0
        %v1157 = vpack.c.bf16 %v1149, %v1149
        %v1158 = vpack.c.bf16 %v1150, %v1150
        %v1159 = vpack.c.bf16 %v1151, %v1151
        %v1160 = vpack.c.bf16 %v1152, %v1152
        %v1161 = vpack.c.bf16 %v1153, %v1153
        %v1162 = vpack.c.bf16 %v1154, %v1154
        %v1163 = vpack.c.bf16 %v1155, %v1155
        %v1164 = vpack.c.bf16 %v1156, %v1156
        %1173 = vrot.lane.b32.xlu0 %v1157, 32
        %v1174 = vpop.permute.xlu0 %1173
        %1175 = vrot.lane.b32.xlu0 %v1158, 32
        %v1176 = vpop.permute.xlu0 %1175
        %1177 = vrot.lane.b32.xlu0 %v1159, 32
        %v1178 = vpop.permute.xlu0 %1177
        %1179 = vrot.lane.b32.xlu0 %v1160, 32
        %v1180 = vpop.permute.xlu0 %1179
        %1181 = vrot.lane.b32.xlu0 %v1161, 32
        %v1182 = vpop.permute.xlu0 %1181
        %1183 = vrot.lane.b32.xlu0 %v1162, 32
        %v1184 = vpop.permute.xlu0 %1183
        %1185 = vrot.lane.b32.xlu0 %v1163, 32
        %v1186 = vpop.permute.xlu0 %1185
        %1187 = vrot.lane.b32.xlu0 %v1164, 32
        %v1188 = vpop.permute.xlu0 %1187
        %1197 = vst.msk [vmem:[#allocation2 + $0x4] sm:$0xf] %vm970, %v1174
        %1198 = vst.msk [vmem:[#allocation2 + $0x10] sm:$0xf] %vm970, %v1176
        %1199 = vst.msk [vmem:[#allocation2 + $0x1c] sm:$0xf] %vm970, %v1178
        %1200 = vst.msk [vmem:[#allocation2 + $0x28] sm:$0xf] %vm970, %v1180
        %1201 = vst.msk [vmem:[#allocation2 + $0x34] sm:$0xf] %vm970, %v1182
        %1202 = vst.msk [vmem:[#allocation2 + $0x40] sm:$0xf] %vm970, %v1184
        %1203 = vst.msk [vmem:[#allocation2 + $0x4c] sm:$0xf] %vm970, %v1186
        %1204 = vst.msk [vmem:[#allocation2 + $0x58] sm:$0xf] %vm970, %v1188
        %v1206 = vsel %vm869, %v1078, 0.0
        %v1207 = vsel %vm899, %v872, 0.0
        %v1208 = vsel %vm900, %v874, 0.0
        %v1209 = vsel %vm901, %v876, 0.0
        %v1210 = vsel %vm902, %v878, 0.0
        %v1211 = vsel %vm903, %v880, 0.0
        %v1212 = vsel %vm904, %v882, 0.0
        %v1213 = vsel %vm905, %v1079, 0.0
        %v1214 = vsel %vm906, %v1206, 0.0
        %v1215 = vpack.c.bf16 %v1207, %v1207
        %v1216 = vpack.c.bf16 %v1208, %v1208
        %v1217 = vpack.c.bf16 %v1209, %v1209
        %v1218 = vpack.c.bf16 %v1210, %v1210
        %v1219 = vpack.c.bf16 %v1211, %v1211
        %v1220 = vpack.c.bf16 %v1212, %v1212
        %v1221 = vpack.c.bf16 %v1213, %v1213
        %v1222 = vpack.c.bf16 %v1214, %v1214
        %1231 = vrot.lane.b32.xlu0 %v1215, 64
        %v1232 = vpop.permute.xlu0 %1231
        %1233 = vrot.lane.b32.xlu0 %v1216, 64
        %v1234 = vpop.permute.xlu0 %1233
        %1235 = vrot.lane.b32.xlu0 %v1217, 64
        %v1236 = vpop.permute.xlu0 %1235
        %1237 = vrot.lane.b32.xlu0 %v1218, 64
        %v1238 = vpop.permute.xlu0 %1237
        %1239 = vrot.lane.b32.xlu0 %v1219, 64
        %v1240 = vpop.permute.xlu0 %1239
        %1241 = vrot.lane.b32.xlu0 %v1220, 64
        %v1242 = vpop.permute.xlu0 %1241
        %1243 = vrot.lane.b32.xlu0 %v1221, 64
        %v1244 = vpop.permute.xlu0 %1243
        %1245 = vrot.lane.b32.xlu0 %v1222, 64
        %v1246 = vpop.permute.xlu0 %1245
        %1255 = vst.msk [vmem:[#allocation2 + $0x4] sm:$0xf] %vm1069, %v1232
        %1256 = vst.msk [vmem:[#allocation2 + $0x10] sm:$0xf] %vm1069, %v1234
        %1257 = vst.msk [vmem:[#allocation2 + $0x1c] sm:$0xf] %vm1069, %v1236
        %1258 = vst.msk [vmem:[#allocation2 + $0x28] sm:$0xf] %vm1069, %v1238
        %1259 = vst.msk [vmem:[#allocation2 + $0x34] sm:$0xf] %vm1069, %v1240
        %1260 = vst.msk [vmem:[#allocation2 + $0x40] sm:$0xf] %vm1069, %v1242
        %1261 = vst.msk [vmem:[#allocation2 + $0x4c] sm:$0xf] %vm1069, %v1244
        %1262 = vst.msk [vmem:[#allocation2 + $0x58] sm:$0xf] %vm1069, %v1246
        %1264 = vrot.lane.b32.xlu0 %v932, 96
        %v1265 = vpop.permute.xlu0 %1264
        %1266 = vrot.lane.b32.xlu0 %v933, 96
        %v1267 = vpop.permute.xlu0 %1266
        %1268 = vrot.lane.b32.xlu0 %v934, 96
        %v1269 = vpop.permute.xlu0 %1268
        %1270 = vrot.lane.b32.xlu0 %v935, 96
        %v1271 = vpop.permute.xlu0 %1270
        %1272 = vrot.lane.b32.xlu0 %v936, 96
        %v1273 = vpop.permute.xlu0 %1272
        %1274 = vrot.lane.b32.xlu0 %v937, 96
        %v1275 = vpop.permute.xlu0 %1274
        %1276 = vrot.lane.b32.xlu0 %v1138, 96
        %v1277 = vpop.permute.xlu0 %1276
        %1278 = vrot.lane.b32.xlu0 %v914, 96
        %v1279 = vpop.permute.xlu0 %1278
        %1288 = vst.msk [vmem:[#allocation2 + $0x4] sm:$0xf] %vm1129, %v1265
        %1289 = vst.msk [vmem:[#allocation2 + $0x10] sm:$0xf] %vm1129, %v1267
        %1290 = vst.msk [vmem:[#allocation2 + $0x1c] sm:$0xf] %vm1129, %v1269
        %1291 = vst.msk [vmem:[#allocation2 + $0x28] sm:$0xf] %vm1129, %v1271
        %1292 = vst.msk [vmem:[#allocation2 + $0x34] sm:$0xf] %vm1129, %v1273
        %1293 = vst.msk [vmem:[#allocation2 + $0x40] sm:$0xf] %vm1129, %v1275
        %1294 = vst.msk [vmem:[#allocation2 + $0x4c] sm:$0xf] %vm1129, %v1277
        %1295 = vst.msk [vmem:[#allocation2 + $0x58] sm:$0xf] %vm1129, %v1279
        %v1296 = vsel %vm1013, %v985, 0.0
        %v1297 = vsel %vm1014, %v987, 0.0
        %v1298 = vsel %vm1015, %v989, 0.0
        %v1299 = vsel %vm1016, %v991, 0.0
        %v1300 = vsel %vm1017, %v993, 0.0
        %v1301 = vsel %vm1018, %v995, 0.0
        %v1302 = vsel %vm1019, %v1148, 0.0
        %v1303 = vpack.c.bf16 %v1296, %v1296
        %v1304 = vpack.c.bf16 %v1297, %v1297
        %v1305 = vpack.c.bf16 %v1298, %v1298
        %v1306 = vpack.c.bf16 %v1299, %v1299
        %v1307 = vpack.c.bf16 %v1300, %v1300
        %v1308 = vpack.c.bf16 %v1301, %v1301
        %v1309 = vpack.c.bf16 %v1302, %v1302
        %1310 = vst.msk [vmem:[#allocation2 + $0x8] sm:$0xf] %vm922, %v1303
        %1311 = vst.msk [vmem:[#allocation2 + $0x14] sm:$0xf] %vm922, %v1304
        %1312 = vst.msk [vmem:[#allocation2 + $0x20] sm:$0xf] %vm922, %v1305
        %1313 = vst.msk [vmem:[#allocation2 + $0x2c] sm:$0xf] %vm922, %v1306
        %1314 = vst.msk [vmem:[#allocation2 + $0x38] sm:$0xf] %vm922, %v1307
        %1315 = vst.msk [vmem:[#allocation2 + $0x44] sm:$0xf] %vm922, %v1308
        %1316 = vst.msk [vmem:[#allocation2 + $0x50] sm:$0xf] %vm922, %v1309
        %1317 = vst.msk [vmem:[#allocation2 + $0x5c] sm:$0xf] %vm922, %v914
        %v1318 = vld [vmem:[#allocation2] sm:$0xff]
        %v1319 = vld [vmem:[#allocation2 + $0x8] sm:$0xf]
        %v1320 = vld [vmem:[#allocation2 + $0xc] sm:$0xff]
        %v1321 = vld [vmem:[#allocation2 + $0x14] sm:$0xf]
        %v1322 = vld [vmem:[#allocation2 + $0x18] sm:$0xff]
        %v1323 = vld [vmem:[#allocation2 + $0x20] sm:$0xf]
        %v1324 = vld [vmem:[#allocation2 + $0x24] sm:$0xff]
        %v1325 = vld [vmem:[#allocation2 + $0x2c] sm:$0xf]
        %v1326 = vld [vmem:[#allocation2 + $0x30] sm:$0xff]
        %v1327 = vld [vmem:[#allocation2 + $0x38] sm:$0xf]
        %v1328 = vld [vmem:[#allocation2 + $0x3c] sm:$0xff]
        %v1329 = vld [vmem:[#allocation2 + $0x44] sm:$0xf]
        %v1330 = vld [vmem:[#allocation2 + $0x48] sm:$0xff]
        %v1331 = vld [vmem:[#allocation2 + $0x50] sm:$0xf]
        %v1332 = vld [vmem:[#allocation2 + $0x54] sm:$0xff]
        %v1333 = vld [vmem:[#allocation2 + $0x5c] sm:$0xf]
        %v1334 = vld [vmem:[#allocation4] sm:$0xff]
        %v1335 = vld [vmem:[#allocation4 + $0x8] sm:$0xff]
        %v1336 = vld [vmem:[#allocation4 + $0x10] sm:$0xff]
        %v1337 = vld [vmem:[#allocation4 + $0x18] sm:$0xff]
        %v1338 = vld [vmem:[#allocation4 + $0x20] sm:$0xff]
        %v1339 = vld [vmem:[#allocation4 + $0x28] sm:$0xff]
        %v1340 = vld [vmem:[#allocation4 + $0x30] sm:$0xff]
        %v1341 = vld [vmem:[#allocation4 + $0x38] sm:$0xff]
        %v1342 = vld [vmem:[#allocation4 + $0x40] sm:$0xff]
        %v1343 = vld [vmem:[#allocation4 + $0x48] sm:$0xff]
        %v1344 = vld [vmem:[#allocation4 + $0x50] sm:$0xff]
        %v1345 = vld [vmem:[#allocation4 + $0x58] sm:$0xff]
        %v1346 = vld [vmem:[#allocation4 + $0x60] sm:$0xff]
        %v1347 = vld [vmem:[#allocation4 + $0x68] sm:$0xff]
        %v1348 = vld [vmem:[#allocation4 + $0x70] sm:$0xff]
        %v1349 = vld [vmem:[#allocation4 + $0x78] sm:$0xff]
        %v1350 = vld [vmem:[#allocation4 + $0x80] sm:$0xff]
        %v1351 = vld [vmem:[#allocation4 + $0x88] sm:$0xff]
        %v1352 = vld [vmem:[#allocation4 + $0x90] sm:$0xff]
        %v1353 = vld [vmem:[#allocation4 + $0x98] sm:$0xff]
        %v1354 = vld [vmem:[#allocation4 + $0xa0] sm:$0xff]
        %v1355 = vld [vmem:[#allocation4 + $0xa8] sm:$0xff]
        %v1356 = vld [vmem:[#allocation4 + $0xb0] sm:$0xff]
        %v1357 = vld [vmem:[#allocation4 + $0xb8] sm:$0xff]
        %v1358 = vld [vmem:[#allocation4 + $0xc0] sm:$0xff]
        %v1359 = vld [vmem:[#allocation4 + $0xc8] sm:$0xff]
        %v1360 = vld [vmem:[#allocation4 + $0xd0] sm:$0xff]
        %v1361 = vld [vmem:[#allocation4 + $0xd8] sm:$0xff]
        %v1362 = vld [vmem:[#allocation4 + $0xe0] sm:$0xff]
        %v1363 = vld [vmem:[#allocation4 + $0xe8] sm:$0xff]
        %v1364 = vld [vmem:[#allocation4 + $0xf0] sm:$0xff]
        %v1365 = vld [vmem:[#allocation4 + $0xf8] sm:$0xff]
        %v1366 = vld [vmem:[#allocation4 + $0x100] sm:$0xff]
        %v1367 = vld [vmem:[#allocation4 + $0x108] sm:$0xff]
        %v1368 = vld [vmem:[#allocation4 + $0x110] sm:$0xff]
        %v1369 = vld [vmem:[#allocation4 + $0x118] sm:$0xff]
        %v1370 = vld [vmem:[#allocation6] sm:$0x3]
        %v1372 = vperm.slane %v1370, 0
        %v1373 = vperm.slane %v1370, 1
        %v1392 = vunpack.c.l.b16 %v1318
        %v1393 = vunpack.c.h.b16 %v1318
        %v1394 = vunpack.c.l.b16 %v1319
        %v1395 = vunpack.c.l.b16 %v1320
        %v1396 = vunpack.c.h.b16 %v1320
        %v1397 = vunpack.c.l.b16 %v1321
        %v1398 = vunpack.c.l.b16 %v1322
        %v1399 = vunpack.c.h.b16 %v1322
        %v1400 = vunpack.c.l.b16 %v1323
        %v1401 = vunpack.c.l.b16 %v1324
        %v1402 = vunpack.c.h.b16 %v1324
        %v1403 = vunpack.c.l.b16 %v1325
        %v1404 = vunpack.c.l.b16 %v1326
        %v1405 = vunpack.c.h.b16 %v1326
        %v1406 = vunpack.c.l.b16 %v1327
        %v1407 = vunpack.c.l.b16 %v1328
        %v1408 = vunpack.c.h.b16 %v1328
        %v1409 = vunpack.c.l.b16 %v1329
        %v1410 = vunpack.c.l.b16 %v1330
        %v1411 = vunpack.c.h.b16 %v1330
        %v1412 = vunpack.c.l.b16 %v1331
        %v1413 = vunpack.c.l.b16 %v1332
        %v1414 = vunpack.c.h.b16 %v1332
        %v1415 = vunpack.c.l.b16 %v1333
        %v1416 = vpack.c.b16 %v1395, %v1392
        %v1417 = vpack.c.b16 %v1396, %v1393
        %v1418 = vpack.c.b16 %v1397, %v1394
        %v1419 = vpack.c.b16 %v1401, %v1398
        %v1420 = vpack.c.b16 %v1402, %v1399
        %v1421 = vpack.c.b16 %v1403, %v1400
        %v1422 = vpack.c.b16 %v1407, %v1404
        %v1423 = vpack.c.b16 %v1408, %v1405
        %v1424 = vpack.c.b16 %v1409, %v1406
        %v1425 = vpack.c.b16 %v1413, %v1410
        %v1426 = vpack.c.b16 %v1414, %v1411
        %v1427 = vpack.c.b16 %v1415, %v1412
        %v1472 = vunpack.c.l.b16 %v1334
        %v1473 = vunpack.c.h.b16 %v1334
        %v1474 = vunpack.c.l.b16 %v1335
        %v1475 = vunpack.c.h.b16 %v1335
        %v1476 = vunpack.c.l.b16 %v1336
        %v1477 = vunpack.c.h.b16 %v1336
        %v1478 = vunpack.c.l.b16 %v1337
        %v1479 = vunpack.c.h.b16 %v1337
        %v1480 = vunpack.c.l.b16 %v1338
        %v1481 = vunpack.c.h.b16 %v1338
        %v1482 = vunpack.c.l.b16 %v1339
        %v1483 = vunpack.c.h.b16 %v1339
        %v1484 = vunpack.c.l.b16 %v1340
        %v1485 = vunpack.c.h.b16 %v1340
        %v1486 = vunpack.c.l.b16 %v1341
        %v1487 = vunpack.c.h.b16 %v1341
        %v1488 = vunpack.c.l.b16 %v1342
        %v1489 = vunpack.c.h.b16 %v1342
        %v1490 = vunpack.c.l.b16 %v1343
        %v1491 = vunpack.c.h.b16 %v1343
        %v1492 = vunpack.c.l.b16 %v1344
        %v1493 = vunpack.c.h.b16 %v1344
        %v1494 = vunpack.c.l.b16 %v1345
        %v1495 = vunpack.c.h.b16 %v1345
        %v1496 = vunpack.c.l.b16 %v1346
        %v1497 = vunpack.c.h.b16 %v1346
        %v1498 = vunpack.c.l.b16 %v1347
        %v1499 = vunpack.c.h.b16 %v1347
        %v1500 = vunpack.c.l.b16 %v1348
        %v1501 = vunpack.c.h.b16 %v1348
        %v1502 = vunpack.c.l.b16 %v1349
        %v1503 = vunpack.c.h.b16 %v1349
        %v1504 = vunpack.c.l.b16 %v1350
        %v1505 = vunpack.c.h.b16 %v1350
        %v1506 = vunpack.c.l.b16 %v1351
        %v1507 = vunpack.c.h.b16 %v1351
        %v1508 = vunpack.c.l.b16 %v1352
        %v1509 = vunpack.c.h.b16 %v1352
        %v1510 = vunpack.c.l.b16 %v1353
        %v1511 = vunpack.c.h.b16 %v1353
        %v1512 = vunpack.c.l.b16 %v1354
        %v1513 = vunpack.c.h.b16 %v1354
        %v1514 = vunpack.c.l.b16 %v1355
        %v1515 = vunpack.c.h.b16 %v1355
        %v1516 = vunpack.c.l.b16 %v1356
        %v1517 = vunpack.c.h.b16 %v1356
        %v1518 = vunpack.c.l.b16 %v1357
        %v1519 = vunpack.c.h.b16 %v1357
        %v1520 = vunpack.c.l.b16 %v1358
        %v1521 = vunpack.c.h.b16 %v1358
        %v1522 = vunpack.c.l.b16 %v1359
        %v1523 = vunpack.c.h.b16 %v1359
        %v1524 = vunpack.c.l.b16 %v1360
        %v1525 = vunpack.c.h.b16 %v1360
        %v1526 = vunpack.c.l.b16 %v1361
        %v1527 = vunpack.c.h.b16 %v1361
        %v1528 = vunpack.c.l.b16 %v1362
        %v1529 = vunpack.c.h.b16 %v1362
        %v1530 = vunpack.c.l.b16 %v1363
        %v1531 = vunpack.c.h.b16 %v1363
        %v1532 = vunpack.c.l.b16 %v1364
        %v1533 = vunpack.c.h.b16 %v1364
        %v1534 = vunpack.c.l.b16 %v1365
        %v1535 = vunpack.c.h.b16 %v1365
        %v1536 = vunpack.c.l.b16 %v1366
        %v1537 = vunpack.c.h.b16 %v1366
        %v1538 = vunpack.c.l.b16 %v1367
        %v1539 = vunpack.c.h.b16 %v1367
        %v1540 = vunpack.c.l.b16 %v1368
        %v1541 = vunpack.c.h.b16 %v1368
        %v1542 = vunpack.c.l.b16 %v1369
        %v1543 = vunpack.c.h.b16 %v1369
        %v1544 = vpack.c.b16 %v1474, %v1472
        %v1545 = vpack.c.b16 %v1475, %v1473
        %v1546 = vpack.c.b16 %v1478, %v1476
        %v1547 = vpack.c.b16 %v1479, %v1477
        %v1548 = vpack.c.b16 %v1482, %v1480
        %v1549 = vpack.c.b16 %v1483, %v1481
        %v1550 = vpack.c.b16 %v1486, %v1484
        %v1551 = vpack.c.b16 %v1487, %v1485
        %v1552 = vpack.c.b16 %v1490, %v1488
        %v1553 = vpack.c.b16 %v1491, %v1489
        %v1554 = vpack.c.b16 %v1494, %v1492
        %v1555 = vpack.c.b16 %v1495, %v1493
        %v1556 = vpack.c.b16 %v1498, %v1496
        %v1557 = vpack.c.b16 %v1499, %v1497
        %v1558 = vpack.c.b16 %v1502, %v1500
        %v1559 = vpack.c.b16 %v1503, %v1501
        %v1560 = vpack.c.b16 %v1506, %v1504
        %v1561 = vpack.c.b16 %v1507, %v1505
        %v1562 = vpack.c.b16 %v1510, %v1508
        %v1563 = vpack.c.b16 %v1511, %v1509
        %v1564 = vpack.c.b16 %v1514, %v1512
        %v1565 = vpack.c.b16 %v1515, %v1513
        %v1566 = vpack.c.b16 %v1518, %v1516
        %v1567 = vpack.c.b16 %v1519, %v1517
        %v1568 = vpack.c.b16 %v1522, %v1520
        %v1569 = vpack.c.b16 %v1523, %v1521
        %v1570 = vpack.c.b16 %v1526, %v1524
        %v1571 = vpack.c.b16 %v1527, %v1525
        %v1572 = vpack.c.b16 %v1530, %v1528
        %v1573 = vpack.c.b16 %v1531, %v1529
        %v1574 = vpack.c.b16 %v1534, %v1532
        %v1575 = vpack.c.b16 %v1535, %v1533
        %v1576 = vpack.c.b16 %v1538, %v1536
        %v1577 = vpack.c.b16 %v1539, %v1537
        %v1578 = vpack.c.b16 %v1542, %v1540
        %v1579 = vpack.c.b16 %v1543, %v1541
        %vm1616 = vcmask 261120
        %v1618 = vsel %vm1616, %v1418, 0
        %v1621 = vsel %vm1616, %v1421, 0
        %v1624 = vsel %vm1616, %v1424, 0
        %v1627 = vsel %vm1616, %v1427, 0
        %1629 = vmatpush.bf16.msra.mxu0 %v1558
        %1630 = vmatpush.bf16.msra.mxu0 %v1556
        %1631 = vmatpush.bf16.msra.mxu0 %v1554
        %1632 = vmatpush.bf16.msra.mxu0 %v1552
        %1633 = vmatpush.bf16.msra.mxu0 %v1550
        %1634 = vmatpush.bf16.msra.mxu0 %v1548
        %1635 = vmatpush.bf16.msra.mxu0 %v1546
        %1636 = vmatpush.bf16.msra.mxu0 %v1544
        %1637 = vmatmul.bf16.gmra.mxu0 %v1416
        %v1638 = vpop.f32.mrf.mxu0
        %v1639 = vadd.f32 %v1372, %v1638
        %v1640 = vpop.f32.mrf.mxu0
        %v1641 = vadd.f32 %v1372, %v1640
        %1642 = vmatmul.bf16.gmra.mxu0 %v1419
        %v1643 = vpop.f32.mrf.mxu0
        %v1644 = vadd.f32 %v1372, %v1643
        %v1645 = vpop.f32.mrf.mxu0
        %v1646 = vadd.f32 %v1372, %v1645
        %1647 = vmatmul.bf16.gmra.mxu0 %v1422
        %v1648 = vpop.f32.mrf.mxu0
        %v1649 = vadd.f32 %v1372, %v1648
        %v1650 = vpop.f32.mrf.mxu0
        %v1651 = vadd.f32 %v1372, %v1650
        %1652 = vmatmul.bf16.gmra.mxu0 %v1425
        %v1653 = vpop.f32.mrf.mxu0
        %v1654 = vadd.f32 %v1372, %v1653
        %v1655 = vpop.f32.mrf.mxu0
        %v1656 = vadd.f32 %v1372, %v1655
        %1657 = vdwg.mxu0
        %1658 = vmatpush.bf16.msra.mxu0 %v1574
        %1659 = vmatpush.bf16.msra.mxu0 %v1572
        %1660 = vmatpush.bf16.msra.mxu0 %v1570
        %1661 = vmatpush.bf16.msra.mxu0 %v1568
        %1662 = vmatpush.bf16.msra.mxu0 %v1566
        %1663 = vmatpush.bf16.msra.mxu0 %v1564
        %1664 = vmatpush.bf16.msra.mxu0 %v1562
        %1665 = vmatpush.bf16.msra.mxu0 %v1560
        %1666 = vmatmul.bf16.gmra.mxu0 %v1417
        %v1667 = vpop.f32.mrf.mxu0
        %v1668 = vadd.f32 %v1639, %v1667
        %v1669 = vpop.f32.mrf.mxu0
        %v1670 = vadd.f32 %v1641, %v1669
        %1671 = vmatmul.bf16.gmra.mxu0 %v1420
        %v1672 = vpop.f32.mrf.mxu0
        %v1673 = vadd.f32 %v1644, %v1672
        %v1674 = vpop.f32.mrf.mxu0
        %v1675 = vadd.f32 %v1646, %v1674
        %1676 = vmatmul.bf16.gmra.mxu0 %v1423
        %v1677 = vpop.f32.mrf.mxu0
        %v1678 = vadd.f32 %v1649, %v1677
        %v1679 = vpop.f32.mrf.mxu0
        %v1680 = vadd.f32 %v1651, %v1679
        %1681 = vmatmul.bf16.gmra.mxu0 %v1426
        %v1682 = vpop.f32.mrf.mxu0
        %v1683 = vadd.f32 %v1654, %v1682
        %v1684 = vpop.f32.mrf.mxu0
        %v1685 = vadd.f32 %v1656, %v1684
        %1686 = vdwg.mxu0
        %1687 = vmatpush.bf16.msra.mxu0 0
        %1688 = vmatpush.bf16.msra.mxu0 0
        %1689 = vmatpush.bf16.msra.mxu0 0
        %1690 = vmatpush.bf16.msra.mxu0 0
        %1691 = vmatpush.bf16.msra.mxu0 0
        %1692 = vmatpush.bf16.msra.mxu0 0
        %1693 = vmatpush.bf16.msra.mxu0 %v1578
        %1694 = vmatpush.bf16.msra.mxu0 %v1576
        %1695 = vmatmul.bf16.gmra.mxu0 %v1618
        %v1696 = vpop.f32.mrf.mxu0
        %v1697 = vadd.f32 %v1668, %v1696
        %v1698 = vpop.f32.mrf.mxu0
        %v1699 = vadd.f32 %v1670, %v1698
        %1700 = vmatmul.bf16.gmra.mxu0 %v1621
        %v1701 = vpop.f32.mrf.mxu0
        %v1702 = vadd.f32 %v1673, %v1701
        %v1703 = vpop.f32.mrf.mxu0
        %v1704 = vadd.f32 %v1675, %v1703
        %1705 = vmatmul.bf16.gmra.mxu0 %v1624
        %v1706 = vpop.f32.mrf.mxu0
        %v1707 = vadd.f32 %v1678, %v1706
        %v1708 = vpop.f32.mrf.mxu0
        %v1709 = vadd.f32 %v1680, %v1708
        %1710 = vmatmul.bf16.gmra.mxu0 %v1627
        %v1711 = vpop.f32.mrf.mxu0
        %v1712 = vadd.f32 %v1683, %v1711
        %v1713 = vpop.f32.mrf.mxu0
        %v1714 = vadd.f32 %v1685, %v1713
        %1715 = vdwg.mxu0
        %1716 = vmatpush.bf16.msra.mxu0 %v1559
        %1717 = vmatpush.bf16.msra.mxu0 %v1557
        %1718 = vmatpush.bf16.msra.mxu0 %v1555
        %1719 = vmatpush.bf16.msra.mxu0 %v1553
        %1720 = vmatpush.bf16.msra.mxu0 %v1551
        %1721 = vmatpush.bf16.msra.mxu0 %v1549
        %1722 = vmatpush.bf16.msra.mxu0 %v1547
        %1723 = vmatpush.bf16.msra.mxu0 %v1545
        %1724 = vmatmul.bf16.gmra.mxu0 %v1416
        %v1725 = vpop.f32.mrf.mxu0
        %v1726 = vadd.f32 %v1373, %v1725
        %v1727 = vpop.f32.mrf.mxu0
        %v1728 = vadd.f32 %v1373, %v1727
        %1729 = vmatmul.bf16.gmra.mxu0 %v1419
        %v1730 = vpop.f32.mrf.mxu0
        %v1731 = vadd.f32 %v1373, %v1730
        %v1732 = vpop.f32.mrf.mxu0
        %v1733 = vadd.f32 %v1373, %v1732
        %1734 = vmatmul.bf16.gmra.mxu0 %v1422
        %v1735 = vpop.f32.mrf.mxu0
        %v1736 = vadd.f32 %v1373, %v1735
        %v1737 = vpop.f32.mrf.mxu0
        %v1738 = vadd.f32 %v1373, %v1737
        %1739 = vmatmul.bf16.gmra.mxu0 %v1425
        %v1740 = vpop.f32.mrf.mxu0
        %v1741 = vadd.f32 %v1373, %v1740
        %v1742 = vpop.f32.mrf.mxu0
        %v1743 = vadd.f32 %v1373, %v1742
        %1744 = vdwg.mxu0
        %1745 = vmatpush.bf16.msra.mxu0 %v1575
        %1746 = vmatpush.bf16.msra.mxu0 %v1573
        %1747 = vmatpush.bf16.msra.mxu0 %v1571
        %1748 = vmatpush.bf16.msra.mxu0 %v1569
        %1749 = vmatpush.bf16.msra.mxu0 %v1567
        %1750 = vmatpush.bf16.msra.mxu0 %v1565
        %1751 = vmatpush.bf16.msra.mxu0 %v1563
        %1752 = vmatpush.bf16.msra.mxu0 %v1561
        %1753 = vmatmul.bf16.gmra.mxu0 %v1417
        %v1754 = vpop.f32.mrf.mxu0
        %v1755 = vadd.f32 %v1726, %v1754
        %v1756 = vpop.f32.mrf.mxu0
        %v1757 = vadd.f32 %v1728, %v1756
        %1758 = vmatmul.bf16.gmra.mxu0 %v1420
        %v1759 = vpop.f32.mrf.mxu0
        %v1760 = vadd.f32 %v1731, %v1759
        %v1761 = vpop.f32.mrf.mxu0
        %v1762 = vadd.f32 %v1733, %v1761
        %1763 = vmatmul.bf16.gmra.mxu0 %v1423
        %v1764 = vpop.f32.mrf.mxu0
        %v1765 = vadd.f32 %v1736, %v1764
        %v1766 = vpop.f32.mrf.mxu0
        %v1767 = vadd.f32 %v1738, %v1766
        %1768 = vmatmul.bf16.gmra.mxu0 %v1426
        %v1769 = vpop.f32.mrf.mxu0
        %v1770 = vadd.f32 %v1741, %v1769
        %v1771 = vpop.f32.mrf.mxu0
        %v1772 = vadd.f32 %v1743, %v1771
        %1773 = vdwg.mxu0
        %1774 = vmatpush.bf16.msra.mxu0 0
        %1775 = vmatpush.bf16.msra.mxu0 0
        %1776 = vmatpush.bf16.msra.mxu0 0
        %1777 = vmatpush.bf16.msra.mxu0 0
        %1778 = vmatpush.bf16.msra.mxu0 0
        %1779 = vmatpush.bf16.msra.mxu0 0
        %1780 = vmatpush.bf16.msra.mxu0 %v1579
        %1781 = vmatpush.bf16.msra.mxu0 %v1577
        %1782 = vmatmul.bf16.gmra.mxu0 %v1618
        %v1783 = vpop.f32.mrf.mxu0
        %v1784 = vadd.f32 %v1755, %v1783
        %v1785 = vpop.f32.mrf.mxu0
        %v1786 = vadd.f32 %v1757, %v1785
        %1787 = vmatmul.bf16.gmra.mxu0 %v1621
        %v1788 = vpop.f32.mrf.mxu0
        %v1789 = vadd.f32 %v1760, %v1788
        %v1790 = vpop.f32.mrf.mxu0
        %v1791 = vadd.f32 %v1762, %v1790
        %1792 = vmatmul.bf16.gmra.mxu0 %v1624
        %v1793 = vpop.f32.mrf.mxu0
        %v1794 = vadd.f32 %v1765, %v1793
        %v1795 = vpop.f32.mrf.mxu0
        %v1796 = vadd.f32 %v1767, %v1795
        %1797 = vmatmul.bf16.gmra.mxu0 %v1627
        %v1798 = vpop.f32.mrf.mxu0
        %v1799 = vadd.f32 %v1770, %v1798
        %v1800 = vpop.f32.mrf.mxu0
        %v1801 = vadd.f32 %v1772, %v1800
        %1802 = vdwg.mxu0
        %v1803 = vld [vmem:[#allocation8] sm:$0x3]
        %v1804 = vld [vmem:[#allocation9] sm:$0x3]
        %v1805 = vadd.f32 %v1697, %v1699
        %v1806 = vadd.f32 %v1805, %v1702
        %v1807 = vadd.f32 %v1806, %v1704
        %v1808 = vadd.f32 %v1807, %v1707
        %v1809 = vadd.f32 %v1808, %v1709
        %v1810 = vadd.f32 %v1809, %v1712
        %v1811 = vadd.f32 %v1810, %v1714
        %v1812 = vrot.slane %v1811, 4
        %v1813 = vadd.f32 %v1811, %v1812
        %v1814 = vrot.slane %v1813, 2
        %v1815 = vadd.f32 %v1813, %v1814
        %v1816 = vrot.slane %v1815, 1
        %v1817 = vadd.f32 %v1815, %v1816
        %v1818 = vadd.f32 %v1784, %v1786
        %v1819 = vadd.f32 %v1818, %v1789
        %v1820 = vadd.f32 %v1819, %v1791
        %v1821 = vadd.f32 %v1820, %v1794
        %v1822 = vadd.f32 %v1821, %v1796
        %v1823 = vadd.f32 %v1822, %v1799
        %v1824 = vadd.f32 %v1823, %v1801
        %v1825 = vrot.slane %v1824, 4
        %v1826 = vadd.f32 %v1824, %v1825
        %v1827 = vrot.slane %v1826, 2
        %v1828 = vadd.f32 %v1826, %v1827
        %v1829 = vrot.slane %v1828, 1
        %v1830 = vadd.f32 %v1828, %v1829
        %v1831 = vmul.f32 %v1697, %v1697
        %v1832 = vmul.f32 %v1784, %v1784
        %v1833 = vmul.f32 %v1699, %v1699
        %v1834 = vmul.f32 %v1786, %v1786
        %v1835 = vmul.f32 %v1702, %v1702
        %v1836 = vmul.f32 %v1789, %v1789
        %v1837 = vmul.f32 %v1704, %v1704
        %v1838 = vmul.f32 %v1791, %v1791
        %v1839 = vmul.f32 %v1707, %v1707
        %v1840 = vmul.f32 %v1794, %v1794
        %v1841 = vmul.f32 %v1709, %v1709
        %v1842 = vmul.f32 %v1796, %v1796
        %v1843 = vmul.f32 %v1712, %v1712
        %v1844 = vmul.f32 %v1799, %v1799
        %v1845 = vmul.f32 %v1714, %v1714
        %v1846 = vmul.f32 %v1801, %v1801
        %v1847 = vadd.f32 %v1831, %v1833
        %v1848 = vadd.f32 %v1847, %v1835
        %v1849 = vadd.f32 %v1848, %v1837
        %v1850 = vadd.f32 %v1849, %v1839
        %v1851 = vadd.f32 %v1850, %v1841
        %v1852 = vadd.f32 %v1851, %v1843
        %v1853 = vadd.f32 %v1852, %v1845
        %v1854 = vrot.slane %v1853, 4
        %v1855 = vadd.f32 %v1853, %v1854
        %v1856 = vrot.slane %v1855, 2
        %v1857 = vadd.f32 %v1855, %v1856
        %v1858 = vrot.slane %v1857, 1
        %v1859 = vadd.f32 %v1857, %v1858
        %v1860 = vadd.f32 %v1832, %v1834
        %v1861 = vadd.f32 %v1860, %v1836
        %v1862 = vadd.f32 %v1861, %v1838
        %v1863 = vadd.f32 %v1862, %v1840
        %v1864 = vadd.f32 %v1863, %v1842
        %v1865 = vadd.f32 %v1864, %v1844
        %v1866 = vadd.f32 %v1865, %v1846
        %v1867 = vrot.slane %v1866, 4
        %v1868 = vadd.f32 %v1866, %v1867
        %v1869 = vrot.slane %v1868, 2
        %v1870 = vadd.f32 %v1868, %v1869
        %v1871 = vrot.slane %v1870, 1
        %v1872 = vadd.f32 %v1870, %v1871
        %v1873 = vsel %vm869, %v1817, %v1859
        %v1874 = vsel %vm869, %v1830, %v1872
        %v1875 = vand.u32 %v716, 4294901760
        %1876 = vmatpush.msra.mxu0 %v1875
        %v1877 = vand.u32 %v715, 4294901760
        %1878 = vmatpush.msra.mxu0 %v1877
        %v1879 = vand.u32 %v714, 4294901760
        %1880 = vmatpush.msra.mxu0 %v1879
        %v1881 = vand.u32 %v713, 4294901760
        %1882 = vmatpush.msra.mxu0 %v1881
        %v1883 = vand.u32 %v712, 4294901760
        %1884 = vmatpush.msra.mxu0 %v1883
        %v1885 = vand.u32 %v711, 4294901760
        %1886 = vmatpush.msra.mxu0 %v1885
        %v1887 = vand.u32 %v710, 4294901760
        %1888 = vmatpush.msra.mxu0 %v1887
        %v1889 = vand.u32 %v709, 4294901760
        %1890 = vmatpush.msra.mxu0 %v1889
        %v1891 = vand.u32 %v708, 4294901760
        %1892 = vmatpush.msra.mxu0 %v1891
        %v1893 = vand.u32 %v707, 4294901760
        %1894 = vmatpush.msra.mxu0 %v1893
        %v1895 = vand.u32 %v706, 4294901760
        %1896 = vmatpush.msra.mxu0 %v1895
        %v1897 = vand.u32 %v705, 4294901760
        %1898 = vmatpush.msra.mxu0 %v1897
        %v1899 = vand.u32 %v704, 4294901760
        %1900 = vmatpush.msra.mxu0 %v1899
        %v1901 = vand.u32 %v703, 4294901760
        %1902 = vmatpush.msra.mxu0 %v1901
        %v1903 = vand.u32 %v702, 4294901760
        %1904 = vmatpush.msra.mxu0 %v1903
        %v1905 = vand.u32 %v701, 4294901760
        %1906 = vmatpush.msra.mxu0 %v1905
        %v1907 = vand.u32 %v1873, 4294901760
        %v1908 = vsub.f32 %v1873, %v1907
        %v1909 = vand.u32 %v1908, 4294901760
        %v1910 = vsub.f32 %v1908, %v1909
        %v1911 = vand.u32 %v1910, 4294901760
        %1912 = vmatmul.f32.gmra.mxu0 %v1911
        %v1913 = vpop.f32.mrf.mxu0
        %v1914 = vadd.f32 0.0, %v1913
        %1915 = vdwg.mxu0
        %v1916 = vand.u32 %v716, 4294901760
        %v1917 = vsub.f32 %v716, %v1916
        %v1918 = vand.u32 %v1917, 4294901760
        %v1919 = vsub.f32 %v1917, %v1918
        %v1920 = vand.u32 %v1919, 4294901760
        %1921 = vmatpush.msra.mxu0 %v1920
        %v1922 = vand.u32 %v715, 4294901760
        %v1923 = vsub.f32 %v715, %v1922
        %v1924 = vand.u32 %v1923, 4294901760
        %v1925 = vsub.f32 %v1923, %v1924
        %v1926 = vand.u32 %v1925, 4294901760
        %1927 = vmatpush.msra.mxu0 %v1926
        %v1928 = vand.u32 %v714, 4294901760
        %v1929 = vsub.f32 %v714, %v1928
        %v1930 = vand.u32 %v1929, 4294901760
        %v1931 = vsub.f32 %v1929, %v1930
        %v1932 = vand.u32 %v1931, 4294901760
        %1933 = vmatpush.msra.mxu0 %v1932
        %v1934 = vand.u32 %v713, 4294901760
        %v1935 = vsub.f32 %v713, %v1934
        %v1936 = vand.u32 %v1935, 4294901760
        %v1937 = vsub.f32 %v1935, %v1936
        %v1938 = vand.u32 %v1937, 4294901760
        %1939 = vmatpush.msra.mxu0 %v1938
        %v1940 = vand.u32 %v712, 4294901760
        %v1941 = vsub.f32 %v712, %v1940
        %v1942 = vand.u32 %v1941, 4294901760
        %v1943 = vsub.f32 %v1941, %v1942
        %v1944 = vand.u32 %v1943, 4294901760
        %1945 = vmatpush.msra.mxu0 %v1944
        %v1946 = vand.u32 %v711, 4294901760
        %v1947 = vsub.f32 %v711, %v1946
        %v1948 = vand.u32 %v1947, 4294901760
        %v1949 = vsub.f32 %v1947, %v1948
        %v1950 = vand.u32 %v1949, 4294901760
        %1951 = vmatpush.msra.mxu0 %v1950
        %v1952 = vand.u32 %v710, 4294901760
        %v1953 = vsub.f32 %v710, %v1952
        %v1954 = vand.u32 %v1953, 4294901760
        %v1955 = vsub.f32 %v1953, %v1954
        %v1956 = vand.u32 %v1955, 4294901760
        %1957 = vmatpush.msra.mxu0 %v1956
        %v1958 = vand.u32 %v709, 4294901760
        %v1959 = vsub.f32 %v709, %v1958
        %v1960 = vand.u32 %v1959, 4294901760
        %v1961 = vsub.f32 %v1959, %v1960
        %v1962 = vand.u32 %v1961, 4294901760
        %1963 = vmatpush.msra.mxu0 %v1962
        %v1964 = vand.u32 %v708, 4294901760
        %v1965 = vsub.f32 %v708, %v1964
        %v1966 = vand.u32 %v1965, 4294901760
        %v1967 = vsub.f32 %v1965, %v1966
        %v1968 = vand.u32 %v1967, 4294901760
        %1969 = vmatpush.msra.mxu0 %v1968
        %v1970 = vand.u32 %v707, 4294901760
        %v1971 = vsub.f32 %v707, %v1970
        %v1972 = vand.u32 %v1971, 4294901760
        %v1973 = vsub.f32 %v1971, %v1972
        %v1974 = vand.u32 %v1973, 4294901760
        %1975 = vmatpush.msra.mxu0 %v1974
        %v1976 = vand.u32 %v706, 4294901760
        %v1977 = vsub.f32 %v706, %v1976
        %v1978 = vand.u32 %v1977, 4294901760
        %v1979 = vsub.f32 %v1977, %v1978
        %v1980 = vand.u32 %v1979, 4294901760
        %1981 = vmatpush.msra.mxu0 %v1980
        %v1982 = vand.u32 %v705, 4294901760
        %v1983 = vsub.f32 %v705, %v1982
        %v1984 = vand.u32 %v1983, 4294901760
        %v1985 = vsub.f32 %v1983, %v1984
        %v1986 = vand.u32 %v1985, 4294901760
        %1987 = vmatpush.msra.mxu0 %v1986
        %v1988 = vand.u32 %v704, 4294901760
        %v1989 = vsub.f32 %v704, %v1988
        %v1990 = vand.u32 %v1989, 4294901760
        %v1991 = vsub.f32 %v1989, %v1990
        %v1992 = vand.u32 %v1991, 4294901760
        %1993 = vmatpush.msra.mxu0 %v1992
        %v1994 = vand.u32 %v703, 4294901760
        %v1995 = vsub.f32 %v703, %v1994
        %v1996 = vand.u32 %v1995, 4294901760
        %v1997 = vsub.f32 %v1995, %v1996
        %v1998 = vand.u32 %v1997, 4294901760
        %1999 = vmatpush.msra.mxu0 %v1998
        %v2000 = vand.u32 %v702, 4294901760
        %v2001 = vsub.f32 %v702, %v2000
        %v2002 = vand.u32 %v2001, 4294901760
        %v2003 = vsub.f32 %v2001, %v2002
        %v2004 = vand.u32 %v2003, 4294901760
        %2005 = vmatpush.msra.mxu0 %v2004
        %v2006 = vand.u32 %v701, 4294901760
        %v2007 = vsub.f32 %v701, %v2006
        %v2008 = vand.u32 %v2007, 4294901760
        %v2009 = vsub.f32 %v2007, %v2008
        %v2010 = vand.u32 %v2009, 4294901760
        %2011 = vmatpush.msra.mxu0 %v2010
        %v2012 = vand.u32 %v1873, 4294901760
        %2013 = vmatmul.f32.gmra.mxu0 %v2012
        %v2014 = vpop.f32.mrf.mxu0
        %v2015 = vadd.f32 %v1914, %v2014
        %2016 = vdwg.mxu0
        %v2017 = vand.u32 %v716, 4294901760
        %v2018 = vsub.f32 %v716, %v2017
        %2019 = vmatpush.msra.mxu0 %v2018
        %v2020 = vand.u32 %v715, 4294901760
        %v2021 = vsub.f32 %v715, %v2020
        %2022 = vmatpush.msra.mxu0 %v2021
        %v2023 = vand.u32 %v714, 4294901760
        %v2024 = vsub.f32 %v714, %v2023
        %2025 = vmatpush.msra.mxu0 %v2024
        %v2026 = vand.u32 %v713, 4294901760
        %v2027 = vsub.f32 %v713, %v2026
        %2028 = vmatpush.msra.mxu0 %v2027
        %v2029 = vand.u32 %v712, 4294901760
        %v2030 = vsub.f32 %v712, %v2029
        %2031 = vmatpush.msra.mxu0 %v2030
        %v2032 = vand.u32 %v711, 4294901760
        %v2033 = vsub.f32 %v711, %v2032
        %2034 = vmatpush.msra.mxu0 %v2033
        %v2035 = vand.u32 %v710, 4294901760
        %v2036 = vsub.f32 %v710, %v2035
        %2037 = vmatpush.msra.mxu0 %v2036
        %v2038 = vand.u32 %v709, 4294901760
        %v2039 = vsub.f32 %v709, %v2038
        %2040 = vmatpush.msra.mxu0 %v2039
        %v2041 = vand.u32 %v708, 4294901760
        %v2042 = vsub.f32 %v708, %v2041
        %2043 = vmatpush.msra.mxu0 %v2042
        %v2044 = vand.u32 %v707, 4294901760
        %v2045 = vsub.f32 %v707, %v2044
        %2046 = vmatpush.msra.mxu0 %v2045
        %v2047 = vand.u32 %v706, 4294901760
        %v2048 = vsub.f32 %v706, %v2047
        %2049 = vmatpush.msra.mxu0 %v2048
        %v2050 = vand.u32 %v705, 4294901760
        %v2051 = vsub.f32 %v705, %v2050
        %2052 = vmatpush.msra.mxu0 %v2051
        %v2053 = vand.u32 %v704, 4294901760
        %v2054 = vsub.f32 %v704, %v2053
        %2055 = vmatpush.msra.mxu0 %v2054
        %v2056 = vand.u32 %v703, 4294901760
        %v2057 = vsub.f32 %v703, %v2056
        %2058 = vmatpush.msra.mxu0 %v2057
        %v2059 = vand.u32 %v702, 4294901760
        %v2060 = vsub.f32 %v702, %v2059
        %2061 = vmatpush.msra.mxu0 %v2060
        %v2062 = vand.u32 %v701, 4294901760
        %v2063 = vsub.f32 %v701, %v2062
        %2064 = vmatpush.msra.mxu0 %v2063
        %v2065 = vand.u32 %v1873, 4294901760
        %v2066 = vsub.f32 %v1873, %v2065
        %2067 = vmatmul.f32.gmra.mxu0 %v2066
        %v2068 = vpop.f32.mrf.mxu0
        %v2069 = vadd.f32 %v2015, %v2068
        %2070 = vdwg.mxu0
        %v2071 = vand.u32 %v716, 4294901760
        %2072 = vmatpush.msra.mxu0 %v2071
        %v2073 = vand.u32 %v715, 4294901760
        %2074 = vmatpush.msra.mxu0 %v2073
        %v2075 = vand.u32 %v714, 4294901760
        %2076 = vmatpush.msra.mxu0 %v2075
        %v2077 = vand.u32 %v713, 4294901760
        %2078 = vmatpush.msra.mxu0 %v2077
        %v2079 = vand.u32 %v712, 4294901760
        %2080 = vmatpush.msra.mxu0 %v2079
        %v2081 = vand.u32 %v711, 4294901760
        %2082 = vmatpush.msra.mxu0 %v2081
        %v2083 = vand.u32 %v710, 4294901760
        %2084 = vmatpush.msra.mxu0 %v2083
        %v2085 = vand.u32 %v709, 4294901760
        %2086 = vmatpush.msra.mxu0 %v2085
        %v2087 = vand.u32 %v708, 4294901760
        %2088 = vmatpush.msra.mxu0 %v2087
        %v2089 = vand.u32 %v707, 4294901760
        %2090 = vmatpush.msra.mxu0 %v2089
        %v2091 = vand.u32 %v706, 4294901760
        %2092 = vmatpush.msra.mxu0 %v2091
        %v2093 = vand.u32 %v705, 4294901760
        %2094 = vmatpush.msra.mxu0 %v2093
        %v2095 = vand.u32 %v704, 4294901760
        %2096 = vmatpush.msra.mxu0 %v2095
        %v2097 = vand.u32 %v703, 4294901760
        %2098 = vmatpush.msra.mxu0 %v2097
        %v2099 = vand.u32 %v702, 4294901760
        %2100 = vmatpush.msra.mxu0 %v2099
        %v2101 = vand.u32 %v701, 4294901760
        %2102 = vmatpush.msra.mxu0 %v2101
        %v2103 = vand.u32 %v1873, 4294901760
        %v2104 = vsub.f32 %v1873, %v2103
        %v2105 = vand.u32 %v2104, 4294901760
        %2106 = vmatmul.f32.gmra.mxu0 %v2105
        %v2107 = vpop.f32.mrf.mxu0
        %v2108 = vadd.f32 %v2069, %v2107
        %2109 = vdwg.mxu0
        %v2110 = vand.u32 %v716, 4294901760
        %v2111 = vsub.f32 %v716, %v2110
        %v2112 = vand.u32 %v2111, 4294901760
        %2113 = vmatpush.msra.mxu0 %v2112
        %v2114 = vand.u32 %v715, 4294901760
        %v2115 = vsub.f32 %v715, %v2114
        %v2116 = vand.u32 %v2115, 4294901760
        %2117 = vmatpush.msra.mxu0 %v2116
        %v2118 = vand.u32 %v714, 4294901760
        %v2119 = vsub.f32 %v714, %v2118
        %v2120 = vand.u32 %v2119, 4294901760
        %2121 = vmatpush.msra.mxu0 %v2120
        %v2122 = vand.u32 %v713, 4294901760
        %v2123 = vsub.f32 %v713, %v2122
        %v2124 = vand.u32 %v2123, 4294901760
        %2125 = vmatpush.msra.mxu0 %v2124
        %v2126 = vand.u32 %v712, 4294901760
        %v2127 = vsub.f32 %v712, %v2126
        %v2128 = vand.u32 %v2127, 4294901760
        %2129 = vmatpush.msra.mxu0 %v2128
        %v2130 = vand.u32 %v711, 4294901760
        %v2131 = vsub.f32 %v711, %v2130
        %v2132 = vand.u32 %v2131, 4294901760
        %2133 = vmatpush.msra.mxu0 %v2132
        %v2134 = vand.u32 %v710, 4294901760
        %v2135 = vsub.f32 %v710, %v2134
        %v2136 = vand.u32 %v2135, 4294901760
        %2137 = vmatpush.msra.mxu0 %v2136
        %v2138 = vand.u32 %v709, 4294901760
        %v2139 = vsub.f32 %v709, %v2138
        %v2140 = vand.u32 %v2139, 4294901760
        %2141 = vmatpush.msra.mxu0 %v2140
        %v2142 = vand.u32 %v708, 4294901760
        %v2143 = vsub.f32 %v708, %v2142
        %v2144 = vand.u32 %v2143, 4294901760
        %2145 = vmatpush.msra.mxu0 %v2144
        %v2146 = vand.u32 %v707, 4294901760
        %v2147 = vsub.f32 %v707, %v2146
        %v2148 = vand.u32 %v2147, 4294901760
        %2149 = vmatpush.msra.mxu0 %v2148
        %v2150 = vand.u32 %v706, 4294901760
        %v2151 = vsub.f32 %v706, %v2150
        %v2152 = vand.u32 %v2151, 4294901760
        %2153 = vmatpush.msra.mxu0 %v2152
        %v2154 = vand.u32 %v705, 4294901760
        %v2155 = vsub.f32 %v705, %v2154
        %v2156 = vand.u32 %v2155, 4294901760
        %2157 = vmatpush.msra.mxu0 %v2156
        %v2158 = vand.u32 %v704, 4294901760
        %v2159 = vsub.f32 %v704, %v2158
        %v2160 = vand.u32 %v2159, 4294901760
        %2161 = vmatpush.msra.mxu0 %v2160
        %v2162 = vand.u32 %v703, 4294901760
        %v2163 = vsub.f32 %v703, %v2162
        %v2164 = vand.u32 %v2163, 4294901760
        %2165 = vmatpush.msra.mxu0 %v2164
        %v2166 = vand.u32 %v702, 4294901760
        %v2167 = vsub.f32 %v702, %v2166
        %v2168 = vand.u32 %v2167, 4294901760
        %2169 = vmatpush.msra.mxu0 %v2168
        %v2170 = vand.u32 %v701, 4294901760
        %v2171 = vsub.f32 %v701, %v2170
        %v2172 = vand.u32 %v2171, 4294901760
        %2173 = vmatpush.msra.mxu0 %v2172
        %v2174 = vand.u32 %v1873, 4294901760
        %2175 = vmatmul.f32.gmra.mxu0 %v2174
        %v2176 = vpop.f32.mrf.mxu0
        %v2177 = vadd.f32 %v2108, %v2176
        %2178 = vdwg.mxu0
        %v2179 = vand.u32 %v716, 4294901760
        %2180 = vmatpush.msra.mxu0 %v2179
        %v2181 = vand.u32 %v715, 4294901760
        %2182 = vmatpush.msra.mxu0 %v2181
        %v2183 = vand.u32 %v714, 4294901760
        %2184 = vmatpush.msra.mxu0 %v2183
        %v2185 = vand.u32 %v713, 4294901760
        %2186 = vmatpush.msra.mxu0 %v2185
        %v2187 = vand.u32 %v712, 4294901760
        %2188 = vmatpush.msra.mxu0 %v2187
        %v2189 = vand.u32 %v711, 4294901760
        %2190 = vmatpush.msra.mxu0 %v2189
        %v2191 = vand.u32 %v710, 4294901760
        %2192 = vmatpush.msra.mxu0 %v2191
        %v2193 = vand.u32 %v709, 4294901760
        %2194 = vmatpush.msra.mxu0 %v2193
        %v2195 = vand.u32 %v708, 4294901760
        %2196 = vmatpush.msra.mxu0 %v2195
        %v2197 = vand.u32 %v707, 4294901760
        %2198 = vmatpush.msra.mxu0 %v2197
        %v2199 = vand.u32 %v706, 4294901760
        %2200 = vmatpush.msra.mxu0 %v2199
        %v2201 = vand.u32 %v705, 4294901760
        %2202 = vmatpush.msra.mxu0 %v2201
        %v2203 = vand.u32 %v704, 4294901760
        %2204 = vmatpush.msra.mxu0 %v2203
        %v2205 = vand.u32 %v703, 4294901760
        %2206 = vmatpush.msra.mxu0 %v2205
        %v2207 = vand.u32 %v702, 4294901760
        %2208 = vmatpush.msra.mxu0 %v2207
        %v2209 = vand.u32 %v701, 4294901760
        %2210 = vmatpush.msra.mxu0 %v2209
        %v2211 = vand.u32 %v1873, 4294901760
        %2212 = vmatmul.f32.gmra.mxu0 %v2211
        %v2213 = vpop.f32.mrf.mxu0
        %v2214 = vadd.f32 %v2177, %v2213
        %2215 = vdwg.mxu0
        %v2216 = vand.u32 %v732, 4294901760
        %2217 = vmatpush.msra.mxu0 %v2216
        %v2218 = vand.u32 %v731, 4294901760
        %2219 = vmatpush.msra.mxu0 %v2218
        %v2220 = vand.u32 %v730, 4294901760
        %2221 = vmatpush.msra.mxu0 %v2220
        %v2222 = vand.u32 %v729, 4294901760
        %2223 = vmatpush.msra.mxu0 %v2222
        %v2224 = vand.u32 %v728, 4294901760
        %2225 = vmatpush.msra.mxu0 %v2224
        %v2226 = vand.u32 %v727, 4294901760
        %2227 = vmatpush.msra.mxu0 %v2226
        %v2228 = vand.u32 %v726, 4294901760
        %2229 = vmatpush.msra.mxu0 %v2228
        %v2230 = vand.u32 %v725, 4294901760
        %2231 = vmatpush.msra.mxu0 %v2230
        %v2232 = vand.u32 %v724, 4294901760
        %2233 = vmatpush.msra.mxu0 %v2232
        %v2234 = vand.u32 %v723, 4294901760
        %2235 = vmatpush.msra.mxu0 %v2234
        %v2236 = vand.u32 %v722, 4294901760
        %2237 = vmatpush.msra.mxu0 %v2236
        %v2238 = vand.u32 %v721, 4294901760
        %2239 = vmatpush.msra.mxu0 %v2238
        %v2240 = vand.u32 %v720, 4294901760
        %2241 = vmatpush.msra.mxu0 %v2240
        %v2242 = vand.u32 %v719, 4294901760
        %2243 = vmatpush.msra.mxu0 %v2242
        %v2244 = vand.u32 %v718, 4294901760
        %2245 = vmatpush.msra.mxu0 %v2244
        %v2246 = vand.u32 %v717, 4294901760
        %2247 = vmatpush.msra.mxu0 %v2246
        %v2248 = vand.u32 %v1874, 4294901760
        %v2249 = vsub.f32 %v1874, %v2248
        %v2250 = vand.u32 %v2249, 4294901760
        %v2251 = vsub.f32 %v2249, %v2250
        %v2252 = vand.u32 %v2251, 4294901760
        %2253 = vmatmul.f32.gmra.mxu0 %v2252
        %v2254 = vpop.f32.mrf.mxu0
        %v2255 = vadd.f32 %v2214, %v2254
        %2256 = vdwg.mxu0
        %v2257 = vand.u32 %v732, 4294901760
        %v2258 = vsub.f32 %v732, %v2257
        %v2259 = vand.u32 %v2258, 4294901760
        %v2260 = vsub.f32 %v2258, %v2259
        %v2261 = vand.u32 %v2260, 4294901760
        %2262 = vmatpush.msra.mxu0 %v2261
        %v2263 = vand.u32 %v731, 4294901760
        %v2264 = vsub.f32 %v731, %v2263
        %v2265 = vand.u32 %v2264, 4294901760
        %v2266 = vsub.f32 %v2264, %v2265
        %v2267 = vand.u32 %v2266, 4294901760
        %2268 = vmatpush.msra.mxu0 %v2267
        %v2269 = vand.u32 %v730, 4294901760
        %v2270 = vsub.f32 %v730, %v2269
        %v2271 = vand.u32 %v2270, 4294901760
        %v2272 = vsub.f32 %v2270, %v2271
        %v2273 = vand.u32 %v2272, 4294901760
        %2274 = vmatpush.msra.mxu0 %v2273
        %v2275 = vand.u32 %v729, 4294901760
        %v2276 = vsub.f32 %v729, %v2275
        %v2277 = vand.u32 %v2276, 4294901760
        %v2278 = vsub.f32 %v2276, %v2277
        %v2279 = vand.u32 %v2278, 4294901760
        %2280 = vmatpush.msra.mxu0 %v2279
        %v2281 = vand.u32 %v728, 4294901760
        %v2282 = vsub.f32 %v728, %v2281
        %v2283 = vand.u32 %v2282, 4294901760
        %v2284 = vsub.f32 %v2282, %v2283
        %v2285 = vand.u32 %v2284, 4294901760
        %2286 = vmatpush.msra.mxu0 %v2285
        %v2287 = vand.u32 %v727, 4294901760
        %v2288 = vsub.f32 %v727, %v2287
        %v2289 = vand.u32 %v2288, 4294901760
        %v2290 = vsub.f32 %v2288, %v2289
        %v2291 = vand.u32 %v2290, 4294901760
        %2292 = vmatpush.msra.mxu0 %v2291
        %v2293 = vand.u32 %v726, 4294901760
        %v2294 = vsub.f32 %v726, %v2293
        %v2295 = vand.u32 %v2294, 4294901760
        %v2296 = vsub.f32 %v2294, %v2295
        %v2297 = vand.u32 %v2296, 4294901760
        %2298 = vmatpush.msra.mxu0 %v2297
        %v2299 = vand.u32 %v725, 4294901760
        %v2300 = vsub.f32 %v725, %v2299
        %v2301 = vand.u32 %v2300, 4294901760
        %v2302 = vsub.f32 %v2300, %v2301
        %v2303 = vand.u32 %v2302, 4294901760
        %2304 = vmatpush.msra.mxu0 %v2303
        %v2305 = vand.u32 %v724, 4294901760
        %v2306 = vsub.f32 %v724, %v2305
        %v2307 = vand.u32 %v2306, 4294901760
        %v2308 = vsub.f32 %v2306, %v2307
        %v2309 = vand.u32 %v2308, 4294901760
        %2310 = vmatpush.msra.mxu0 %v2309
        %v2311 = vand.u32 %v723, 4294901760
        %v2312 = vsub.f32 %v723, %v2311
        %v2313 = vand.u32 %v2312, 4294901760
        %v2314 = vsub.f32 %v2312, %v2313
        %v2315 = vand.u32 %v2314, 4294901760
        %2316 = vmatpush.msra.mxu0 %v2315
        %v2317 = vand.u32 %v722, 4294901760
        %v2318 = vsub.f32 %v722, %v2317
        %v2319 = vand.u32 %v2318, 4294901760
        %v2320 = vsub.f32 %v2318, %v2319
        %v2321 = vand.u32 %v2320, 4294901760
        %2322 = vmatpush.msra.mxu0 %v2321
        %v2323 = vand.u32 %v721, 4294901760
        %v2324 = vsub.f32 %v721, %v2323
        %v2325 = vand.u32 %v2324, 4294901760
        %v2326 = vsub.f32 %v2324, %v2325
        %v2327 = vand.u32 %v2326, 4294901760
        %2328 = vmatpush.msra.mxu0 %v2327
        %v2329 = vand.u32 %v720, 4294901760
        %v2330 = vsub.f32 %v720, %v2329
        %v2331 = vand.u32 %v2330, 4294901760
        %v2332 = vsub.f32 %v2330, %v2331
        %v2333 = vand.u32 %v2332, 4294901760
        %2334 = vmatpush.msra.mxu0 %v2333
        %v2335 = vand.u32 %v719, 4294901760
        %v2336 = vsub.f32 %v719, %v2335
        %v2337 = vand.u32 %v2336, 4294901760
        %v2338 = vsub.f32 %v2336, %v2337
        %v2339 = vand.u32 %v2338, 4294901760
        %2340 = vmatpush.msra.mxu0 %v2339
        %v2341 = vand.u32 %v718, 4294901760
        %v2342 = vsub.f32 %v718, %v2341
        %v2343 = vand.u32 %v2342, 4294901760
        %v2344 = vsub.f32 %v2342, %v2343
        %v2345 = vand.u32 %v2344, 4294901760
        %2346 = vmatpush.msra.mxu0 %v2345
        %v2347 = vand.u32 %v717, 4294901760
        %v2348 = vsub.f32 %v717, %v2347
        %v2349 = vand.u32 %v2348, 4294901760
        %v2350 = vsub.f32 %v2348, %v2349
        %v2351 = vand.u32 %v2350, 4294901760
        %2352 = vmatpush.msra.mxu0 %v2351
        %v2353 = vand.u32 %v1874, 4294901760
        %2354 = vmatmul.f32.gmra.mxu0 %v2353
        %v2355 = vpop.f32.mrf.mxu0
        %v2356 = vadd.f32 %v2255, %v2355
        %2357 = vdwg.mxu0
        %v2358 = vand.u32 %v732, 4294901760
        %v2359 = vsub.f32 %v732, %v2358
        %2360 = vmatpush.msra.mxu0 %v2359
        %v2361 = vand.u32 %v731, 4294901760
        %v2362 = vsub.f32 %v731, %v2361
        %2363 = vmatpush.msra.mxu0 %v2362
        %v2364 = vand.u32 %v730, 4294901760
        %v2365 = vsub.f32 %v730, %v2364
        %2366 = vmatpush.msra.mxu0 %v2365
        %v2367 = vand.u32 %v729, 4294901760
        %v2368 = vsub.f32 %v729, %v2367
        %2369 = vmatpush.msra.mxu0 %v2368
        %v2370 = vand.u32 %v728, 4294901760
        %v2371 = vsub.f32 %v728, %v2370
        %2372 = vmatpush.msra.mxu0 %v2371
        %v2373 = vand.u32 %v727, 4294901760
        %v2374 = vsub.f32 %v727, %v2373
        %2375 = vmatpush.msra.mxu0 %v2374
        %v2376 = vand.u32 %v726, 4294901760
        %v2377 = vsub.f32 %v726, %v2376
        %2378 = vmatpush.msra.mxu0 %v2377
        %v2379 = vand.u32 %v725, 4294901760
        %v2380 = vsub.f32 %v725, %v2379
        %2381 = vmatpush.msra.mxu0 %v2380
        %v2382 = vand.u32 %v724, 4294901760
        %v2383 = vsub.f32 %v724, %v2382
        %2384 = vmatpush.msra.mxu0 %v2383
        %v2385 = vand.u32 %v723, 4294901760
        %v2386 = vsub.f32 %v723, %v2385
        %2387 = vmatpush.msra.mxu0 %v2386
        %v2388 = vand.u32 %v722, 4294901760
        %v2389 = vsub.f32 %v722, %v2388
        %2390 = vmatpush.msra.mxu0 %v2389
        %v2391 = vand.u32 %v721, 4294901760
        %v2392 = vsub.f32 %v721, %v2391
        %2393 = vmatpush.msra.mxu0 %v2392
        %v2394 = vand.u32 %v720, 4294901760
        %v2395 = vsub.f32 %v720, %v2394
        %2396 = vmatpush.msra.mxu0 %v2395
        %v2397 = vand.u32 %v719, 4294901760
        %v2398 = vsub.f32 %v719, %v2397
        %2399 = vmatpush.msra.mxu0 %v2398
        %v2400 = vand.u32 %v718, 4294901760
        %v2401 = vsub.f32 %v718, %v2400
        %2402 = vmatpush.msra.mxu0 %v2401
        %v2403 = vand.u32 %v717, 4294901760
        %v2404 = vsub.f32 %v717, %v2403
        %2405 = vmatpush.msra.mxu0 %v2404
        %v2406 = vand.u32 %v1874, 4294901760
        %v2407 = vsub.f32 %v1874, %v2406
        %2408 = vmatmul.f32.gmra.mxu0 %v2407
        %v2409 = vpop.f32.mrf.mxu0
        %v2410 = vadd.f32 %v2356, %v2409
        %2411 = vdwg.mxu0
        %v2412 = vand.u32 %v732, 4294901760
        %2413 = vmatpush.msra.mxu0 %v2412
        %v2414 = vand.u32 %v731, 4294901760
        %2415 = vmatpush.msra.mxu0 %v2414
        %v2416 = vand.u32 %v730, 4294901760
        %2417 = vmatpush.msra.mxu0 %v2416
        %v2418 = vand.u32 %v729, 4294901760
        %2419 = vmatpush.msra.mxu0 %v2418
        %v2420 = vand.u32 %v728, 4294901760
        %2421 = vmatpush.msra.mxu0 %v2420
        %v2422 = vand.u32 %v727, 4294901760
        %2423 = vmatpush.msra.mxu0 %v2422
        %v2424 = vand.u32 %v726, 4294901760
        %2425 = vmatpush.msra.mxu0 %v2424
        %v2426 = vand.u32 %v725, 4294901760
        %2427 = vmatpush.msra.mxu0 %v2426
        %v2428 = vand.u32 %v724, 4294901760
        %2429 = vmatpush.msra.mxu0 %v2428
        %v2430 = vand.u32 %v723, 4294901760
        %2431 = vmatpush.msra.mxu0 %v2430
        %v2432 = vand.u32 %v722, 4294901760
        %2433 = vmatpush.msra.mxu0 %v2432
        %v2434 = vand.u32 %v721, 4294901760
        %2435 = vmatpush.msra.mxu0 %v2434
        %v2436 = vand.u32 %v720, 4294901760
        %2437 = vmatpush.msra.mxu0 %v2436
        %v2438 = vand.u32 %v719, 4294901760
        %2439 = vmatpush.msra.mxu0 %v2438
        %v2440 = vand.u32 %v718, 4294901760
        %2441 = vmatpush.msra.mxu0 %v2440
        %v2442 = vand.u32 %v717, 4294901760
        %2443 = vmatpush.msra.mxu0 %v2442
        %v2444 = vand.u32 %v1874, 4294901760
        %v2445 = vsub.f32 %v1874, %v2444
        %v2446 = vand.u32 %v2445, 4294901760
        %2447 = vmatmul.f32.gmra.mxu0 %v2446
        %v2448 = vpop.f32.mrf.mxu0
        %v2449 = vadd.f32 %v2410, %v2448
        %2450 = vdwg.mxu0
        %v2451 = vand.u32 %v732, 4294901760
        %v2452 = vsub.f32 %v732, %v2451
        %v2453 = vand.u32 %v2452, 4294901760
        %2454 = vmatpush.msra.mxu0 %v2453
        %v2455 = vand.u32 %v731, 4294901760
        %v2456 = vsub.f32 %v731, %v2455
        %v2457 = vand.u32 %v2456, 4294901760
        %2458 = vmatpush.msra.mxu0 %v2457
        %v2459 = vand.u32 %v730, 4294901760
        %v2460 = vsub.f32 %v730, %v2459
        %v2461 = vand.u32 %v2460, 4294901760
        %2462 = vmatpush.msra.mxu0 %v2461
        %v2463 = vand.u32 %v729, 4294901760
        %v2464 = vsub.f32 %v729, %v2463
        %v2465 = vand.u32 %v2464, 4294901760
        %2466 = vmatpush.msra.mxu0 %v2465
        %v2467 = vand.u32 %v728, 4294901760
        %v2468 = vsub.f32 %v728, %v2467
        %v2469 = vand.u32 %v2468, 4294901760
        %2470 = vmatpush.msra.mxu0 %v2469
        %v2471 = vand.u32 %v727, 4294901760
        %v2472 = vsub.f32 %v727, %v2471
        %v2473 = vand.u32 %v2472, 4294901760
        %2474 = vmatpush.msra.mxu0 %v2473
        %v2475 = vand.u32 %v726, 4294901760
        %v2476 = vsub.f32 %v726, %v2475
        %v2477 = vand.u32 %v2476, 4294901760
        %2478 = vmatpush.msra.mxu0 %v2477
        %v2479 = vand.u32 %v725, 4294901760
        %v2480 = vsub.f32 %v725, %v2479
        %v2481 = vand.u32 %v2480, 4294901760
        %2482 = vmatpush.msra.mxu0 %v2481
        %v2483 = vand.u32 %v724, 4294901760
        %v2484 = vsub.f32 %v724, %v2483
        %v2485 = vand.u32 %v2484, 4294901760
        %2486 = vmatpush.msra.mxu0 %v2485
        %v2487 = vand.u32 %v723, 4294901760
        %v2488 = vsub.f32 %v723, %v2487
        %v2489 = vand.u32 %v2488, 4294901760
        %2490 = vmatpush.msra.mxu0 %v2489
        %v2491 = vand.u32 %v722, 4294901760
        %v2492 = vsub.f32 %v722, %v2491
        %v2493 = vand.u32 %v2492, 4294901760
        %2494 = vmatpush.msra.mxu0 %v2493
        %v2495 = vand.u32 %v721, 4294901760
        %v2496 = vsub.f32 %v721, %v2495
        %v2497 = vand.u32 %v2496, 4294901760
        %2498 = vmatpush.msra.mxu0 %v2497
        %v2499 = vand.u32 %v720, 4294901760
        %v2500 = vsub.f32 %v720, %v2499
        %v2501 = vand.u32 %v2500, 4294901760
        %2502 = vmatpush.msra.mxu0 %v2501
        %v2503 = vand.u32 %v719, 4294901760
        %v2504 = vsub.f32 %v719, %v2503
        %v2505 = vand.u32 %v2504, 4294901760
        %2506 = vmatpush.msra.mxu0 %v2505
        %v2507 = vand.u32 %v718, 4294901760
        %v2508 = vsub.f32 %v718, %v2507
        %v2509 = vand.u32 %v2508, 4294901760
        %2510 = vmatpush.msra.mxu0 %v2509
        %v2511 = vand.u32 %v717, 4294901760
        %v2512 = vsub.f32 %v717, %v2511
        %v2513 = vand.u32 %v2512, 4294901760
        %2514 = vmatpush.msra.mxu0 %v2513
        %v2515 = vand.u32 %v1874, 4294901760
        %2516 = vmatmul.f32.gmra.mxu0 %v2515
        %v2517 = vpop.f32.mrf.mxu0
        %v2518 = vadd.f32 %v2449, %v2517
        %2519 = vdwg.mxu0
        %v2520 = vand.u32 %v732, 4294901760
        %2521 = vmatpush.msra.mxu0 %v2520
        %v2522 = vand.u32 %v731, 4294901760
        %2523 = vmatpush.msra.mxu0 %v2522
        %v2524 = vand.u32 %v730, 4294901760
        %2525 = vmatpush.msra.mxu0 %v2524
        %v2526 = vand.u32 %v729, 4294901760
        %2527 = vmatpush.msra.mxu0 %v2526
        %v2528 = vand.u32 %v728, 4294901760
        %2529 = vmatpush.msra.mxu0 %v2528
        %v2530 = vand.u32 %v727, 4294901760
        %2531 = vmatpush.msra.mxu0 %v2530
        %v2532 = vand.u32 %v726, 4294901760
        %2533 = vmatpush.msra.mxu0 %v2532
        %v2534 = vand.u32 %v725, 4294901760
        %2535 = vmatpush.msra.mxu0 %v2534
        %v2536 = vand.u32 %v724, 4294901760
        %2537 = vmatpush.msra.mxu0 %v2536
        %v2538 = vand.u32 %v723, 4294901760
        %2539 = vmatpush.msra.mxu0 %v2538
        %v2540 = vand.u32 %v722, 4294901760
        %2541 = vmatpush.msra.mxu0 %v2540
        %v2542 = vand.u32 %v721, 4294901760
        %2543 = vmatpush.msra.mxu0 %v2542
        %v2544 = vand.u32 %v720, 4294901760
        %2545 = vmatpush.msra.mxu0 %v2544
        %v2546 = vand.u32 %v719, 4294901760
        %2547 = vmatpush.msra.mxu0 %v2546
        %v2548 = vand.u32 %v718, 4294901760
        %2549 = vmatpush.msra.mxu0 %v2548
        %v2550 = vand.u32 %v717, 4294901760
        %2551 = vmatpush.msra.mxu0 %v2550
        %v2552 = vand.u32 %v1874, 4294901760
        %2553 = vmatmul.f32.gmra.mxu0 %v2552
        %v2554 = vpop.f32.mrf.mxu0
        %v2555 = vadd.f32 %v2518, %v2554
        %2556 = vdwg.mxu0
        %v2557 = vmul.f32 %v2555, 0.001953125
        %v2558 = vmul.f32 %v2557, %v2557
        %v2560 = vrot.slane %v2558, 7
        %v2562 = vsub.f32 %v2557, %v2560
        %v2563 = vadd.f32 %v2562, 1e-05
        %v2564 = vrsqrt.pop %v2563
        %v2565 = vmul.f32 %v2564, %v2563
        %v2566 = vmul.f32 %v2565, %v2564
        %v2567 = vmul.f32 0.5, %v2566
        %v2568 = vsub.f32 1.5, %v2567
        %v2569 = vmul.f32 %v2564, %v2568
        %vm2570 = vweird.f32 %v2563
        %vm2571 = vweird.f32 %v2564
        %vm2572 = vmor %vm2570, %vm2571
        %v2573 = vsel %vm2572, %v2564, %v2569
        %v2574 = vsel %vm869, %v2557, %v2573
        %v2576 = vsel %vm1616, %v2574, 0
        %2578 = vmatpush.msra.mxu0 0.0
        %2579 = vmatpush.msra.mxu0 0.0
        %2580 = vmatpush.msra.mxu0 0.0
        %2581 = vmatpush.msra.mxu0 0.0
        %2582 = vmatpush.msra.mxu0 0.0
        %2583 = vmatpush.msra.mxu0 0.0
        %2584 = vmatpush.msra.mxu0 0.0
        %2585 = vmatpush.msra.mxu0 0.0
        %2586 = vmatpush.msra.mxu0 0.0
        %2587 = vmatpush.msra.mxu0 0.0
        %2588 = vmatpush.msra.mxu0 0.0
        %2589 = vmatpush.msra.mxu0 0.0
        %v2590 = vand.u32 %v739, 4294901760
        %2591 = vmatpush.msra.mxu0 %v2590
        %v2592 = vand.u32 %v737, 4294901760
        %2593 = vmatpush.msra.mxu0 %v2592
        %v2594 = vand.u32 %v735, 4294901760
        %2595 = vmatpush.msra.mxu0 %v2594
        %v2596 = vand.u32 %v733, 4294901760
        %2597 = vmatpush.msra.mxu0 %v2596
        %v2598 = vand.u32 %v2576, 4294901760
        %v2599 = vsub.f32 %v2576, %v2598
        %v2600 = vand.u32 %v2599, 4294901760
        %v2601 = vsub.f32 %v2599, %v2600
        %v2602 = vand.u32 %v2601, 4294901760
        %2603 = vmatmul.f32.gmra.mxu0 %v2602
        %v2604 = vpop.f32.mrf.mxu0
        %v2605 = vadd.f32 0.0, %v2604
        %2606 = vdwg.mxu0
        %2607 = vmatpush.msra.mxu0 0.0
        %2608 = vmatpush.msra.mxu0 0.0
        %2609 = vmatpush.msra.mxu0 0.0
        %2610 = vmatpush.msra.mxu0 0.0
        %2611 = vmatpush.msra.mxu0 0.0
        %2612 = vmatpush.msra.mxu0 0.0
        %2613 = vmatpush.msra.mxu0 0.0
        %2614 = vmatpush.msra.mxu0 0.0
        %2615 = vmatpush.msra.mxu0 0.0
        %2616 = vmatpush.msra.mxu0 0.0
        %2617 = vmatpush.msra.mxu0 0.0
        %2618 = vmatpush.msra.mxu0 0.0
        %v2619 = vand.u32 %v739, 4294901760
        %v2620 = vsub.f32 %v739, %v2619
        %v2621 = vand.u32 %v2620, 4294901760
        %v2622 = vsub.f32 %v2620, %v2621
        %v2623 = vand.u32 %v2622, 4294901760
        %2624 = vmatpush.msra.mxu0 %v2623
        %v2625 = vand.u32 %v737, 4294901760
        %v2626 = vsub.f32 %v737, %v2625
        %v2627 = vand.u32 %v2626, 4294901760
        %v2628 = vsub.f32 %v2626, %v2627
        %v2629 = vand.u32 %v2628, 4294901760
        %2630 = vmatpush.msra.mxu0 %v2629
        %v2631 = vand.u32 %v735, 4294901760
        %v2632 = vsub.f32 %v735, %v2631
        %v2633 = vand.u32 %v2632, 4294901760
        %v2634 = vsub.f32 %v2632, %v2633
        %v2635 = vand.u32 %v2634, 4294901760
        %2636 = vmatpush.msra.mxu0 %v2635
        %v2637 = vand.u32 %v733, 4294901760
        %v2638 = vsub.f32 %v733, %v2637
        %v2639 = vand.u32 %v2638, 4294901760
        %v2640 = vsub.f32 %v2638, %v2639
        %v2641 = vand.u32 %v2640, 4294901760
        %2642 = vmatpush.msra.mxu0 %v2641
        %v2643 = vand.u32 %v2576, 4294901760
        %2644 = vmatmul.f32.gmra.mxu0 %v2643
        %v2645 = vpop.f32.mrf.mxu0
        %v2646 = vadd.f32 %v2605, %v2645
        %2647 = vdwg.mxu0
        %2648 = vmatpush.msra.mxu0 0.0
        %2649 = vmatpush.msra.mxu0 0.0
        %2650 = vmatpush.msra.mxu0 0.0
        %2651 = vmatpush.msra.mxu0 0.0
        %2652 = vmatpush.msra.mxu0 0.0
        %2653 = vmatpush.msra.mxu0 0.0
        %2654 = vmatpush.msra.mxu0 0.0
        %2655 = vmatpush.msra.mxu0 0.0
        %2656 = vmatpush.msra.mxu0 0.0
        %2657 = vmatpush.msra.mxu0 0.0
        %2658 = vmatpush.msra.mxu0 0.0
        %2659 = vmatpush.msra.mxu0 0.0
        %v2660 = vand.u32 %v739, 4294901760
        %v2661 = vsub.f32 %v739, %v2660
        %2662 = vmatpush.msra.mxu0 %v2661
        %v2663 = vand.u32 %v737, 4294901760
        %v2664 = vsub.f32 %v737, %v2663
        %2665 = vmatpush.msra.mxu0 %v2664
        %v2666 = vand.u32 %v735, 4294901760
        %v2667 = vsub.f32 %v735, %v2666
        %2668 = vmatpush.msra.mxu0 %v2667
        %v2669 = vand.u32 %v733, 4294901760
        %v2670 = vsub.f32 %v733, %v2669
        %2671 = vmatpush.msra.mxu0 %v2670
        %v2672 = vand.u32 %v2576, 4294901760
        %v2673 = vsub.f32 %v2576, %v2672
        %2674 = vmatmul.f32.gmra.mxu0 %v2673
        %v2675 = vpop.f32.mrf.mxu0
        %v2676 = vadd.f32 %v2646, %v2675
        %2677 = vdwg.mxu0
        %2678 = vmatpush.msra.mxu0 0.0
        %2679 = vmatpush.msra.mxu0 0.0
        %2680 = vmatpush.msra.mxu0 0.0
        %2681 = vmatpush.msra.mxu0 0.0
        %2682 = vmatpush.msra.mxu0 0.0
        %2683 = vmatpush.msra.mxu0 0.0
        %2684 = vmatpush.msra.mxu0 0.0
        %2685 = vmatpush.msra.mxu0 0.0
        %2686 = vmatpush.msra.mxu0 0.0
        %2687 = vmatpush.msra.mxu0 0.0
        %2688 = vmatpush.msra.mxu0 0.0
        %2689 = vmatpush.msra.mxu0 0.0
        %v2690 = vand.u32 %v739, 4294901760
        %2691 = vmatpush.msra.mxu0 %v2690
        %v2692 = vand.u32 %v737, 4294901760
        %2693 = vmatpush.msra.mxu0 %v2692
        %v2694 = vand.u32 %v735, 4294901760
        %2695 = vmatpush.msra.mxu0 %v2694
        %v2696 = vand.u32 %v733, 4294901760
        %2697 = vmatpush.msra.mxu0 %v2696
        %v2698 = vand.u32 %v2576, 4294901760
        %v2699 = vsub.f32 %v2576, %v2698
        %v2700 = vand.u32 %v2699, 4294901760
        %2701 = vmatmul.f32.gmra.mxu0 %v2700
        %v2702 = vpop.f32.mrf.mxu0
        %v2703 = vadd.f32 %v2676, %v2702
        %2704 = vdwg.mxu0
        %2705 = vmatpush.msra.mxu0 0.0
        %2706 = vmatpush.msra.mxu0 0.0
        %2707 = vmatpush.msra.mxu0 0.0
        %2708 = vmatpush.msra.mxu0 0.0
        %2709 = vmatpush.msra.mxu0 0.0
        %2710 = vmatpush.msra.mxu0 0.0
        %2711 = vmatpush.msra.mxu0 0.0
        %2712 = vmatpush.msra.mxu0 0.0
        %2713 = vmatpush.msra.mxu0 0.0
        %2714 = vmatpush.msra.mxu0 0.0
        %2715 = vmatpush.msra.mxu0 0.0
        %2716 = vmatpush.msra.mxu0 0.0
        %v2717 = vand.u32 %v739, 4294901760
        %v2718 = vsub.f32 %v739, %v2717
        %v2719 = vand.u32 %v2718, 4294901760
        %2720 = vmatpush.msra.mxu0 %v2719
        %v2721 = vand.u32 %v737, 4294901760
        %v2722 = vsub.f32 %v737, %v2721
        %v2723 = vand.u32 %v2722, 4294901760
        %2724 = vmatpush.msra.mxu0 %v2723
        %v2725 = vand.u32 %v735, 4294901760
        %v2726 = vsub.f32 %v735, %v2725
        %v2727 = vand.u32 %v2726, 4294901760
        %2728 = vmatpush.msra.mxu0 %v2727
        %v2729 = vand.u32 %v733, 4294901760
        %v2730 = vsub.f32 %v733, %v2729
        %v2731 = vand.u32 %v2730, 4294901760
        %2732 = vmatpush.msra.mxu0 %v2731
        %v2733 = vand.u32 %v2576, 4294901760
        %2734 = vmatmul.f32.gmra.mxu0 %v2733
        %v2735 = vpop.f32.mrf.mxu0
        %v2736 = vadd.f32 %v2703, %v2735
        %2737 = vdwg.mxu0
        %2738 = vmatpush.msra.mxu0 0.0
        %2739 = vmatpush.msra.mxu0 0.0
        %2740 = vmatpush.msra.mxu0 0.0
        %2741 = vmatpush.msra.mxu0 0.0
        %2742 = vmatpush.msra.mxu0 0.0
        %2743 = vmatpush.msra.mxu0 0.0
        %2744 = vmatpush.msra.mxu0 0.0
        %2745 = vmatpush.msra.mxu0 0.0
        %2746 = vmatpush.msra.mxu0 0.0
        %2747 = vmatpush.msra.mxu0 0.0
        %2748 = vmatpush.msra.mxu0 0.0
        %2749 = vmatpush.msra.mxu0 0.0
        %v2750 = vand.u32 %v739, 4294901760
        %2751 = vmatpush.msra.mxu0 %v2750
        %v2752 = vand.u32 %v737, 4294901760
        %2753 = vmatpush.msra.mxu0 %v2752
        %v2754 = vand.u32 %v735, 4294901760
        %2755 = vmatpush.msra.mxu0 %v2754
        %v2756 = vand.u32 %v733, 4294901760
        %2757 = vmatpush.msra.mxu0 %v2756
        %v2758 = vand.u32 %v2576, 4294901760
        %2759 = vmatmul.f32.gmra.mxu0 %v2758
        %v2760 = vpop.f32.mrf.mxu0
        %v2761 = vadd.f32 %v2736, %v2760
        %2762 = vdwg.mxu0
        %2763 = vmatpush.msra.mxu0 0.0
        %2764 = vmatpush.msra.mxu0 0.0
        %2765 = vmatpush.msra.mxu0 0.0
        %2766 = vmatpush.msra.mxu0 0.0
        %2767 = vmatpush.msra.mxu0 0.0
        %2768 = vmatpush.msra.mxu0 0.0
        %2769 = vmatpush.msra.mxu0 0.0
        %2770 = vmatpush.msra.mxu0 0.0
        %2771 = vmatpush.msra.mxu0 0.0
        %2772 = vmatpush.msra.mxu0 0.0
        %2773 = vmatpush.msra.mxu0 0.0
        %2774 = vmatpush.msra.mxu0 0.0
        %v2775 = vand.u32 %v740, 4294901760
        %2776 = vmatpush.msra.mxu0 %v2775
        %v2777 = vand.u32 %v738, 4294901760
        %2778 = vmatpush.msra.mxu0 %v2777
        %v2779 = vand.u32 %v736, 4294901760
        %2780 = vmatpush.msra.mxu0 %v2779
        %v2781 = vand.u32 %v734, 4294901760
        %2782 = vmatpush.msra.mxu0 %v2781
        %v2783 = vand.u32 %v2576, 4294901760
        %v2784 = vsub.f32 %v2576, %v2783
        %v2785 = vand.u32 %v2784, 4294901760
        %v2786 = vsub.f32 %v2784, %v2785
        %v2787 = vand.u32 %v2786, 4294901760
        %2788 = vmatmul.f32.gmra.mxu0 %v2787
        %v2789 = vpop.f32.mrf.mxu0
        %v2790 = vadd.f32 0.0, %v2789
        %2791 = vdwg.mxu0
        %2792 = vmatpush.msra.mxu0 0.0
        %2793 = vmatpush.msra.mxu0 0.0
        %2794 = vmatpush.msra.mxu0 0.0
        %2795 = vmatpush.msra.mxu0 0.0
        %2796 = vmatpush.msra.mxu0 0.0
        %2797 = vmatpush.msra.mxu0 0.0
        %2798 = vmatpush.msra.mxu0 0.0
        %2799 = vmatpush.msra.mxu0 0.0
        %2800 = vmatpush.msra.mxu0 0.0
        %2801 = vmatpush.msra.mxu0 0.0
        %2802 = vmatpush.msra.mxu0 0.0
        %2803 = vmatpush.msra.mxu0 0.0
        %v2804 = vand.u32 %v740, 4294901760
        %v2805 = vsub.f32 %v740, %v2804
        %v2806 = vand.u32 %v2805, 4294901760
        %v2807 = vsub.f32 %v2805, %v2806
        %v2808 = vand.u32 %v2807, 4294901760
        %2809 = vmatpush.msra.mxu0 %v2808
        %v2810 = vand.u32 %v738, 4294901760
        %v2811 = vsub.f32 %v738, %v2810
        %v2812 = vand.u32 %v2811, 4294901760
        %v2813 = vsub.f32 %v2811, %v2812
        %v2814 = vand.u32 %v2813, 4294901760
        %2815 = vmatpush.msra.mxu0 %v2814
        %v2816 = vand.u32 %v736, 4294901760
        %v2817 = vsub.f32 %v736, %v2816
        %v2818 = vand.u32 %v2817, 4294901760
        %v2819 = vsub.f32 %v2817, %v2818
        %v2820 = vand.u32 %v2819, 4294901760
        %2821 = vmatpush.msra.mxu0 %v2820
        %v2822 = vand.u32 %v734, 4294901760
        %v2823 = vsub.f32 %v734, %v2822
        %v2824 = vand.u32 %v2823, 4294901760
        %v2825 = vsub.f32 %v2823, %v2824
        %v2826 = vand.u32 %v2825, 4294901760
        %2827 = vmatpush.msra.mxu0 %v2826
        %v2828 = vand.u32 %v2576, 4294901760
        %2829 = vmatmul.f32.gmra.mxu0 %v2828
        %v2830 = vpop.f32.mrf.mxu0
        %v2831 = vadd.f32 %v2790, %v2830
        %2832 = vdwg.mxu0
        %2833 = vmatpush.msra.mxu0 0.0
        %2834 = vmatpush.msra.mxu0 0.0
        %2835 = vmatpush.msra.mxu0 0.0
        %2836 = vmatpush.msra.mxu0 0.0
        %2837 = vmatpush.msra.mxu0 0.0
        %2838 = vmatpush.msra.mxu0 0.0
        %2839 = vmatpush.msra.mxu0 0.0
        %2840 = vmatpush.msra.mxu0 0.0
        %2841 = vmatpush.msra.mxu0 0.0
        %2842 = vmatpush.msra.mxu0 0.0
        %2843 = vmatpush.msra.mxu0 0.0
        %2844 = vmatpush.msra.mxu0 0.0
        %v2845 = vand.u32 %v740, 4294901760
        %v2846 = vsub.f32 %v740, %v2845
        %2847 = vmatpush.msra.mxu0 %v2846
        %v2848 = vand.u32 %v738, 4294901760
        %v2849 = vsub.f32 %v738, %v2848
        %2850 = vmatpush.msra.mxu0 %v2849
        %v2851 = vand.u32 %v736, 4294901760
        %v2852 = vsub.f32 %v736, %v2851
        %2853 = vmatpush.msra.mxu0 %v2852
        %v2854 = vand.u32 %v734, 4294901760
        %v2855 = vsub.f32 %v734, %v2854
        %2856 = vmatpush.msra.mxu0 %v2855
        %v2857 = vand.u32 %v2576, 4294901760
        %v2858 = vsub.f32 %v2576, %v2857
        %2859 = vmatmul.f32.gmra.mxu0 %v2858
        %v2860 = vpop.f32.mrf.mxu0
        %v2861 = vadd.f32 %v2831, %v2860
        %2862 = vdwg.mxu0
        %2863 = vmatpush.msra.mxu0 0.0
        %2864 = vmatpush.msra.mxu0 0.0
        %2865 = vmatpush.msra.mxu0 0.0
        %2866 = vmatpush.msra.mxu0 0.0
        %2867 = vmatpush.msra.mxu0 0.0
        %2868 = vmatpush.msra.mxu0 0.0
        %2869 = vmatpush.msra.mxu0 0.0
        %2870 = vmatpush.msra.mxu0 0.0
        %2871 = vmatpush.msra.mxu0 0.0
        %2872 = vmatpush.msra.mxu0 0.0
        %2873 = vmatpush.msra.mxu0 0.0
        %2874 = vmatpush.msra.mxu0 0.0
        %v2875 = vand.u32 %v740, 4294901760
        %2876 = vmatpush.msra.mxu0 %v2875
        %v2877 = vand.u32 %v738, 4294901760
        %2878 = vmatpush.msra.mxu0 %v2877
        %v2879 = vand.u32 %v736, 4294901760
        %2880 = vmatpush.msra.mxu0 %v2879
        %v2881 = vand.u32 %v734, 4294901760
        %2882 = vmatpush.msra.mxu0 %v2881
        %v2883 = vand.u32 %v2576, 4294901760
        %v2884 = vsub.f32 %v2576, %v2883
        %v2885 = vand.u32 %v2884, 4294901760
        %2886 = vmatmul.f32.gmra.mxu0 %v2885
        %v2887 = vpop.f32.mrf.mxu0
        %v2888 = vadd.f32 %v2861, %v2887
        %2889 = vdwg.mxu0
        %2890 = vmatpush.msra.mxu0 0.0
        %2891 = vmatpush.msra.mxu0 0.0
        %2892 = vmatpush.msra.mxu0 0.0
        %2893 = vmatpush.msra.mxu0 0.0
        %2894 = vmatpush.msra.mxu0 0.0
        %2895 = vmatpush.msra.mxu0 0.0
        %2896 = vmatpush.msra.mxu0 0.0
        %2897 = vmatpush.msra.mxu0 0.0
        %2898 = vmatpush.msra.mxu0 0.0
        %2899 = vmatpush.msra.mxu0 0.0
        %2900 = vmatpush.msra.mxu0 0.0
        %2901 = vmatpush.msra.mxu0 0.0
        %v2902 = vand.u32 %v740, 4294901760
        %v2903 = vsub.f32 %v740, %v2902
        %v2904 = vand.u32 %v2903, 4294901760
        %2905 = vmatpush.msra.mxu0 %v2904
        %v2906 = vand.u32 %v738, 4294901760
        %v2907 = vsub.f32 %v738, %v2906
        %v2908 = vand.u32 %v2907, 4294901760
        %2909 = vmatpush.msra.mxu0 %v2908
        %v2910 = vand.u32 %v736, 4294901760
        %v2911 = vsub.f32 %v736, %v2910
        %v2912 = vand.u32 %v2911, 4294901760
        %2913 = vmatpush.msra.mxu0 %v2912
        %v2914 = vand.u32 %v734, 4294901760
        %v2915 = vsub.f32 %v734, %v2914
        %v2916 = vand.u32 %v2915, 4294901760
        %2917 = vmatpush.msra.mxu0 %v2916
        %v2918 = vand.u32 %v2576, 4294901760
        %2919 = vmatmul.f32.gmra.mxu0 %v2918
        %v2920 = vpop.f32.mrf.mxu0
        %v2921 = vadd.f32 %v2888, %v2920
        %2922 = vdwg.mxu0
        %2923 = vmatpush.msra.mxu0 0.0
        %2924 = vmatpush.msra.mxu0 0.0
        %2925 = vmatpush.msra.mxu0 0.0
        %2926 = vmatpush.msra.mxu0 0.0
        %2927 = vmatpush.msra.mxu0 0.0
        %2928 = vmatpush.msra.mxu0 0.0
        %2929 = vmatpush.msra.mxu0 0.0
        %2930 = vmatpush.msra.mxu0 0.0
        %2931 = vmatpush.msra.mxu0 0.0
        %2932 = vmatpush.msra.mxu0 0.0
        %2933 = vmatpush.msra.mxu0 0.0
        %2934 = vmatpush.msra.mxu0 0.0
        %v2935 = vand.u32 %v740, 4294901760
        %2936 = vmatpush.msra.mxu0 %v2935
        %v2937 = vand.u32 %v738, 4294901760
        %2938 = vmatpush.msra.mxu0 %v2937
        %v2939 = vand.u32 %v736, 4294901760
        %2940 = vmatpush.msra.mxu0 %v2939
        %v2941 = vand.u32 %v734, 4294901760
        %2942 = vmatpush.msra.mxu0 %v2941
        %v2943 = vand.u32 %v2576, 4294901760
        %2944 = vmatmul.f32.gmra.mxu0 %v2943
        %v2945 = vpop.f32.mrf.mxu0
        %v2946 = vadd.f32 %v2921, %v2945
        %2947 = vdwg.mxu0
        %v2949 = vperm.slane %v1803, 0
        %v2950 = vperm.slane %v1803, 1
        %v2953 = vmul.f32 %v2761, %v2949
        %v2954 = vmul.f32 %v2946, %v2950
        %v2957 = vrot.slane %v2953, 1
        %v2958 = vrot.slane %v2954, 1
        %v2961 = vmul.f32 %v2761, %v2957
        %v2962 = vmul.f32 %v2946, %v2958
        %v2965 = vrot.slane %v2962, 7
        %v2966 = vsel %vm869, %v2961, %v2965
        %v2968 = vsub.f32 %v1804, %v2966
        %v2969 = vperm.slane %v2953, 1
        %v2970 = vperm.slane %v2954, 1
        %v2971 = vmul.f32 %v1697, %v2969
        %v2972 = vmul.f32 %v1784, %v2970
        %v2973 = vmul.f32 %v1699, %v2969
        %v2974 = vmul.f32 %v1786, %v2970
        %v2975 = vmul.f32 %v1702, %v2969
        %v2976 = vmul.f32 %v1789, %v2970
        %v2977 = vmul.f32 %v1704, %v2969
        %v2978 = vmul.f32 %v1791, %v2970
        %v2979 = vmul.f32 %v1707, %v2969
        %v2980 = vmul.f32 %v1794, %v2970
        %v2981 = vmul.f32 %v1709, %v2969
        %v2982 = vmul.f32 %v1796, %v2970
        %v2983 = vmul.f32 %v1712, %v2969
        %v2984 = vmul.f32 %v1799, %v2970
        %v2985 = vmul.f32 %v1714, %v2969
        %v2986 = vmul.f32 %v1801, %v2970
        %v2988 = vperm.slane %v2968, 0
        %v2989 = vperm.slane %v2968, 1
        %v2992 = vadd.f32 %v2971, %v2988
        %v2993 = vadd.f32 %v2972, %v2989
        %v2994 = vadd.f32 %v2973, %v2988
        %v2995 = vadd.f32 %v2974, %v2989
        %v2996 = vadd.f32 %v2975, %v2988
        %v2997 = vadd.f32 %v2976, %v2989
        %v2998 = vadd.f32 %v2977, %v2988
        %v2999 = vadd.f32 %v2978, %v2989
        %v3000 = vadd.f32 %v2979, %v2988
        %v3001 = vadd.f32 %v2980, %v2989
        %v3002 = vadd.f32 %v2981, %v2988
        %v3003 = vadd.f32 %v2982, %v2989
        %v3004 = vadd.f32 %v2983, %v2988
        %v3005 = vadd.f32 %v2984, %v2989
        %v3006 = vadd.f32 %v2985, %v2988
        %v3007 = vadd.f32 %v2986, %v2989
        %v3008 = vsub.f32 0.0, %v2992
        %v3009 = vsub.f32 0.0, %v2993
        %v3010 = vsub.f32 0.0, %v2994
        %v3011 = vsub.f32 0.0, %v2995
        %v3012 = vsub.f32 0.0, %v2996
        %v3013 = vsub.f32 0.0, %v2997
        %v3014 = vsub.f32 0.0, %v2998
        %v3015 = vsub.f32 0.0, %v2999
        %v3016 = vsub.f32 0.0, %v3000
        %v3017 = vsub.f32 0.0, %v3001
        %v3018 = vsub.f32 0.0, %v3002
        %v3019 = vsub.f32 0.0, %v3003
        %v3020 = vsub.f32 0.0, %v3004
        %v3021 = vsub.f32 0.0, %v3005
        %v3022 = vsub.f32 0.0, %v3006
        %v3023 = vsub.f32 0.0, %v3007
        %v3024 = vmul.f32 %v3008, 1.442695
        %v3025 = vpow.pop %v3024
        %v3026 = vmul.f32 %v3009, 1.442695
        %v3027 = vpow.pop %v3026
        %v3028 = vmul.f32 %v3010, 1.442695
        %v3029 = vpow.pop %v3028
        %v3030 = vmul.f32 %v3011, 1.442695
        %v3031 = vpow.pop %v3030
        %v3032 = vmul.f32 %v3012, 1.442695
        %v3033 = vpow.pop %v3032
        %v3034 = vmul.f32 %v3013, 1.442695
        %v3035 = vpow.pop %v3034
        %v3036 = vmul.f32 %v3014, 1.442695
        %v3037 = vpow.pop %v3036
        %v3038 = vmul.f32 %v3015, 1.442695
        %v3039 = vpow.pop %v3038
        %v3040 = vmul.f32 %v3016, 1.442695
        %v3041 = vpow.pop %v3040
        %v3042 = vmul.f32 %v3017, 1.442695
        %v3043 = vpow.pop %v3042
        %v3044 = vmul.f32 %v3018, 1.442695
        %v3045 = vpow.pop %v3044
        %v3046 = vmul.f32 %v3019, 1.442695
        %v3047 = vpow.pop %v3046
        %v3048 = vmul.f32 %v3020, 1.442695
        %v3049 = vpow.pop %v3048
        %v3050 = vmul.f32 %v3021, 1.442695
        %v3051 = vpow.pop %v3050
        %v3052 = vmul.f32 %v3022, 1.442695
        %v3053 = vpow.pop %v3052
        %v3054 = vmul.f32 %v3023, 1.442695
        %v3055 = vpow.pop %v3054
        %v3056 = vadd.f32 %v3025, 1.0
        %v3057 = vadd.f32 %v3027, 1.0
        %v3058 = vadd.f32 %v3029, 1.0
        %v3059 = vadd.f32 %v3031, 1.0
        %v3060 = vadd.f32 %v3033, 1.0
        %v3061 = vadd.f32 %v3035, 1.0
        %v3062 = vadd.f32 %v3037, 1.0
        %v3063 = vadd.f32 %v3039, 1.0
        %v3064 = vadd.f32 %v3041, 1.0
        %v3065 = vadd.f32 %v3043, 1.0
        %v3066 = vadd.f32 %v3045, 1.0
        %v3067 = vadd.f32 %v3047, 1.0
        %v3068 = vadd.f32 %v3049, 1.0
        %v3069 = vadd.f32 %v3051, 1.0
        %v3070 = vadd.f32 %v3053, 1.0
        %v3071 = vadd.f32 %v3055, 1.0
        %v3072 = vrcp.pop %v3056
        %v3073 = vrcp.pop %v3057
        %v3074 = vrcp.pop %v3058
        %v3075 = vrcp.pop %v3059
        %v3076 = vrcp.pop %v3060
        %v3077 = vrcp.pop %v3061
        %v3078 = vrcp.pop %v3062
        %v3079 = vrcp.pop %v3063
        %v3080 = vrcp.pop %v3064
        %v3081 = vrcp.pop %v3065
        %v3082 = vrcp.pop %v3066
        %v3083 = vrcp.pop %v3067
        %v3084 = vrcp.pop %v3068
        %v3085 = vrcp.pop %v3069
        %v3086 = vrcp.pop %v3070
        %v3087 = vrcp.pop %v3071
        %v3088 = vmul.f32 %v2992, %v3072
        %v3089 = vmul.f32 %v2993, %v3073
        %v3090 = vmul.f32 %v2994, %v3074
        %v3091 = vmul.f32 %v2995, %v3075
        %v3092 = vmul.f32 %v2996, %v3076
        %v3093 = vmul.f32 %v2997, %v3077
        %v3094 = vmul.f32 %v2998, %v3078
        %v3095 = vmul.f32 %v2999, %v3079
        %v3096 = vmul.f32 %v3000, %v3080
        %v3097 = vmul.f32 %v3001, %v3081
        %v3098 = vmul.f32 %v3002, %v3082
        %v3099 = vmul.f32 %v3003, %v3083
        %v3100 = vmul.f32 %v3004, %v3084
        %v3101 = vmul.f32 %v3005, %v3085
        %v3102 = vmul.f32 %v3006, %v3086
        %v3103 = vmul.f32 %v3007, %v3087
        %v3104 = vld [vmem:[#allocation17] sm:$0xff]
        %v3105 = vld [vmem:[#allocation17 + $0x8] sm:$0xff]
        %v3106 = vld [vmem:[#allocation17 + $0x10] sm:$0xff]
        %v3107 = vld [vmem:[#allocation17 + $0x18] sm:$0xff]
        %v3108 = vld [vmem:[#allocation18] sm:$0x3]
        %v3110 = vperm.slane %v3108, 0
        %v3111 = vperm.slane %v3108, 1
        %v3114 = vunpack.c.l.b16 %v931
        %v3115 = vunpack.c.l.b16 %v932
        %v3116 = vunpack.c.l.b16 %v933
        %v3117 = vunpack.c.l.b16 %v934
        %v3118 = vunpack.c.l.b16 %v935
        %v3119 = vunpack.c.l.b16 %v936
        %v3120 = vunpack.c.l.b16 %v937
        %v3121 = vunpack.c.l.b16 %v1138
        %v3122 = vpack.c.b16 %v3115, %v3114
        %v3123 = vpack.c.b16 %v3117, %v3116
        %v3124 = vpack.c.b16 %v3119, %v3118
        %v3125 = vpack.c.b16 %v3121, %v3120
        %v3130 = vunpack.c.l.b16 %v3104
        %v3131 = vunpack.c.h.b16 %v3104
        %v3132 = vunpack.c.l.b16 %v3105
        %v3133 = vunpack.c.h.b16 %v3105
        %v3134 = vunpack.c.l.b16 %v3106
        %v3135 = vunpack.c.h.b16 %v3106
        %v3136 = vunpack.c.l.b16 %v3107
        %v3137 = vunpack.c.h.b16 %v3107
        %v3138 = vpack.c.b16 %v3132, %v3130
        %v3139 = vpack.c.b16 %v3133, %v3131
        %v3140 = vpack.c.b16 %v3136, %v3134
        %v3141 = vpack.c.b16 %v3137, %v3135
        %v3147 = vsel %vm1616, %v3122, 0
        %v3150 = vsel %vm1616, %v3123, 0
        %v3153 = vsel %vm1616, %v3124, 0
        %v3156 = vsel %vm1616, %v3125, 0
        %3158 = vmatpush.bf16.msra.mxu0 0
        %3159 = vmatpush.bf16.msra.mxu0 0
        %3160 = vmatpush.bf16.msra.mxu0 0
        %3161 = vmatpush.bf16.msra.mxu0 0
        %3162 = vmatpush.bf16.msra.mxu0 0
        %3163 = vmatpush.bf16.msra.mxu0 0
        %3164 = vmatpush.bf16.msra.mxu0 %v3140
        %3165 = vmatpush.bf16.msra.mxu0 %v3138
        %3166 = vmatmul.bf16.gmra.mxu0 %v3147
        %v3167 = vpop.f32.mrf.mxu0
        %v3168 = vadd.f32 %v3110, %v3167
        %v3169 = vpop.f32.mrf.mxu0
        %v3170 = vadd.f32 %v3110, %v3169
        %3171 = vmatmul.bf16.gmra.mxu0 %v3150
        %v3172 = vpop.f32.mrf.mxu0
        %v3173 = vadd.f32 %v3110, %v3172
        %v3174 = vpop.f32.mrf.mxu0
        %v3175 = vadd.f32 %v3110, %v3174
        %3176 = vmatmul.bf16.gmra.mxu0 %v3153
        %v3177 = vpop.f32.mrf.mxu0
        %v3178 = vadd.f32 %v3110, %v3177
        %v3179 = vpop.f32.mrf.mxu0
        %v3180 = vadd.f32 %v3110, %v3179
        %3181 = vmatmul.bf16.gmra.mxu0 %v3156
        %v3182 = vpop.f32.mrf.mxu0
        %v3183 = vadd.f32 %v3110, %v3182
        %v3184 = vpop.f32.mrf.mxu0
        %v3185 = vadd.f32 %v3110, %v3184
        %3186 = vdwg.mxu0
        %3187 = vmatpush.bf16.msra.mxu0 0
        %3188 = vmatpush.bf16.msra.mxu0 0
        %3189 = vmatpush.bf16.msra.mxu0 0
        %3190 = vmatpush.bf16.msra.mxu0 0
        %3191 = vmatpush.bf16.msra.mxu0 0
        %3192 = vmatpush.bf16.msra.mxu0 0
        %3193 = vmatpush.bf16.msra.mxu0 %v3141
        %3194 = vmatpush.bf16.msra.mxu0 %v3139
        %3195 = vmatmul.bf16.gmra.mxu0 %v3147
        %v3196 = vpop.f32.mrf.mxu0
        %v3197 = vadd.f32 %v3111, %v3196
        %v3198 = vpop.f32.mrf.mxu0
        %v3199 = vadd.f32 %v3111, %v3198
        %3200 = vmatmul.bf16.gmra.mxu0 %v3150
        %v3201 = vpop.f32.mrf.mxu0
        %v3202 = vadd.f32 %v3111, %v3201
        %v3203 = vpop.f32.mrf.mxu0
        %v3204 = vadd.f32 %v3111, %v3203
        %3205 = vmatmul.bf16.gmra.mxu0 %v3153
        %v3206 = vpop.f32.mrf.mxu0
        %v3207 = vadd.f32 %v3111, %v3206
        %v3208 = vpop.f32.mrf.mxu0
        %v3209 = vadd.f32 %v3111, %v3208
        %3210 = vmatmul.bf16.gmra.mxu0 %v3156
        %v3211 = vpop.f32.mrf.mxu0
        %v3212 = vadd.f32 %v3111, %v3211
        %v3213 = vpop.f32.mrf.mxu0
        %v3214 = vadd.f32 %v3111, %v3213
        %3215 = vdwg.mxu0
        %v3216 = vld [vmem:[#allocation20] sm:$0x3]
        %v3217 = vld [vmem:[#allocation21] sm:$0x3]
        %v3218 = vadd.f32 %v3168, %v3170
        %v3219 = vadd.f32 %v3218, %v3173
        %v3220 = vadd.f32 %v3219, %v3175
        %v3221 = vadd.f32 %v3220, %v3178
        %v3222 = vadd.f32 %v3221, %v3180
        %v3223 = vadd.f32 %v3222, %v3183
        %v3224 = vadd.f32 %v3223, %v3185
        %v3225 = vrot.slane %v3224, 4
        %v3226 = vadd.f32 %v3224, %v3225
        %v3227 = vrot.slane %v3226, 2
        %v3228 = vadd.f32 %v3226, %v3227
        %v3229 = vrot.slane %v3228, 1
        %v3230 = vadd.f32 %v3228, %v3229
        %v3231 = vadd.f32 %v3197, %v3199
        %v3232 = vadd.f32 %v3231, %v3202
        %v3233 = vadd.f32 %v3232, %v3204
        %v3234 = vadd.f32 %v3233, %v3207
        %v3235 = vadd.f32 %v3234, %v3209
        %v3236 = vadd.f32 %v3235, %v3212
        %v3237 = vadd.f32 %v3236, %v3214
        %v3238 = vrot.slane %v3237, 4
        %v3239 = vadd.f32 %v3237, %v3238
        %v3240 = vrot.slane %v3239, 2
        %v3241 = vadd.f32 %v3239, %v3240
        %v3242 = vrot.slane %v3241, 1
        %v3243 = vadd.f32 %v3241, %v3242
        %v3244 = vmul.f32 %v3168, %v3168
        %v3245 = vmul.f32 %v3197, %v3197
        %v3246 = vmul.f32 %v3170, %v3170
        %v3247 = vmul.f32 %v3199, %v3199
        %v3248 = vmul.f32 %v3173, %v3173
        %v3249 = vmul.f32 %v3202, %v3202
        %v3250 = vmul.f32 %v3175, %v3175
        %v3251 = vmul.f32 %v3204, %v3204
        %v3252 = vmul.f32 %v3178, %v3178
        %v3253 = vmul.f32 %v3207, %v3207
        %v3254 = vmul.f32 %v3180, %v3180
        %v3255 = vmul.f32 %v3209, %v3209
        %v3256 = vmul.f32 %v3183, %v3183
        %v3257 = vmul.f32 %v3212, %v3212
        %v3258 = vmul.f32 %v3185, %v3185
        %v3259 = vmul.f32 %v3214, %v3214
        %v3260 = vadd.f32 %v3244, %v3246
        %v3261 = vadd.f32 %v3260, %v3248
        %v3262 = vadd.f32 %v3261, %v3250
        %v3263 = vadd.f32 %v3262, %v3252
        %v3264 = vadd.f32 %v3263, %v3254
        %v3265 = vadd.f32 %v3264, %v3256
        %v3266 = vadd.f32 %v3265, %v3258
        %v3267 = vrot.slane %v3266, 4
        %v3268 = vadd.f32 %v3266, %v3267
        %v3269 = vrot.slane %v3268, 2
        %v3270 = vadd.f32 %v3268, %v3269
        %v3271 = vrot.slane %v3270, 1
        %v3272 = vadd.f32 %v3270, %v3271
        %v3273 = vadd.f32 %v3245, %v3247
        %v3274 = vadd.f32 %v3273, %v3249
        %v3275 = vadd.f32 %v3274, %v3251
        %v3276 = vadd.f32 %v3275, %v3253
        %v3277 = vadd.f32 %v3276, %v3255
        %v3278 = vadd.f32 %v3277, %v3257
        %v3279 = vadd.f32 %v3278, %v3259
        %v3280 = vrot.slane %v3279, 4
        %v3281 = vadd.f32 %v3279, %v3280
        %v3282 = vrot.slane %v3281, 2
        %v3283 = vadd.f32 %v3281, %v3282
        %v3284 = vrot.slane %v3283, 1
        %v3285 = vadd.f32 %v3283, %v3284
        %v3286 = vsel %vm869, %v3230, %v3272
        %v3287 = vsel %vm869, %v3243, %v3285
        %v3288 = vand.u32 %v716, 4294901760
        %3289 = vmatpush.msra.mxu0 %v3288
        %v3290 = vand.u32 %v715, 4294901760
        %3291 = vmatpush.msra.mxu0 %v3290
        %v3292 = vand.u32 %v714, 4294901760
        %3293 = vmatpush.msra.mxu0 %v3292
        %v3294 = vand.u32 %v713, 4294901760
        %3295 = vmatpush.msra.mxu0 %v3294
        %v3296 = vand.u32 %v712, 4294901760
        %3297 = vmatpush.msra.mxu0 %v3296
        %v3298 = vand.u32 %v711, 4294901760
        %3299 = vmatpush.msra.mxu0 %v3298
        %v3300 = vand.u32 %v710, 4294901760
        %3301 = vmatpush.msra.mxu0 %v3300
        %v3302 = vand.u32 %v709, 4294901760
        %3303 = vmatpush.msra.mxu0 %v3302
        %v3304 = vand.u32 %v708, 4294901760
        %3305 = vmatpush.msra.mxu0 %v3304
        %v3306 = vand.u32 %v707, 4294901760
        %3307 = vmatpush.msra.mxu0 %v3306
        %v3308 = vand.u32 %v706, 4294901760
        %3309 = vmatpush.msra.mxu0 %v3308
        %v3310 = vand.u32 %v705, 4294901760
        %3311 = vmatpush.msra.mxu0 %v3310
        %v3312 = vand.u32 %v704, 4294901760
        %3313 = vmatpush.msra.mxu0 %v3312
        %v3314 = vand.u32 %v703, 4294901760
        %3315 = vmatpush.msra.mxu0 %v3314
        %v3316 = vand.u32 %v702, 4294901760
        %3317 = vmatpush.msra.mxu0 %v3316
        %v3318 = vand.u32 %v701, 4294901760
        %3319 = vmatpush.msra.mxu0 %v3318
        %v3320 = vand.u32 %v3286, 4294901760
        %v3321 = vsub.f32 %v3286, %v3320
        %v3322 = vand.u32 %v3321, 4294901760
        %v3323 = vsub.f32 %v3321, %v3322
        %v3324 = vand.u32 %v3323, 4294901760
        %3325 = vmatmul.f32.gmra.mxu0 %v3324
        %v3326 = vpop.f32.mrf.mxu0
        %v3327 = vadd.f32 0.0, %v3326
        %3328 = vdwg.mxu0
        %v3329 = vand.u32 %v716, 4294901760
        %v3330 = vsub.f32 %v716, %v3329
        %v3331 = vand.u32 %v3330, 4294901760
        %v3332 = vsub.f32 %v3330, %v3331
        %v3333 = vand.u32 %v3332, 4294901760
        %3334 = vmatpush.msra.mxu0 %v3333
        %v3335 = vand.u32 %v715, 4294901760
        %v3336 = vsub.f32 %v715, %v3335
        %v3337 = vand.u32 %v3336, 4294901760
        %v3338 = vsub.f32 %v3336, %v3337
        %v3339 = vand.u32 %v3338, 4294901760
        %3340 = vmatpush.msra.mxu0 %v3339
        %v3341 = vand.u32 %v714, 4294901760
        %v3342 = vsub.f32 %v714, %v3341
        %v3343 = vand.u32 %v3342, 4294901760
        %v3344 = vsub.f32 %v3342, %v3343
        %v3345 = vand.u32 %v3344, 4294901760
        %3346 = vmatpush.msra.mxu0 %v3345
        %v3347 = vand.u32 %v713, 4294901760
        %v3348 = vsub.f32 %v713, %v3347
        %v3349 = vand.u32 %v3348, 4294901760
        %v3350 = vsub.f32 %v3348, %v3349
        %v3351 = vand.u32 %v3350, 4294901760
        %3352 = vmatpush.msra.mxu0 %v3351
        %v3353 = vand.u32 %v712, 4294901760
        %v3354 = vsub.f32 %v712, %v3353
        %v3355 = vand.u32 %v3354, 4294901760
        %v3356 = vsub.f32 %v3354, %v3355
        %v3357 = vand.u32 %v3356, 4294901760
        %3358 = vmatpush.msra.mxu0 %v3357
        %v3359 = vand.u32 %v711, 4294901760
        %v3360 = vsub.f32 %v711, %v3359
        %v3361 = vand.u32 %v3360, 4294901760
        %v3362 = vsub.f32 %v3360, %v3361
        %v3363 = vand.u32 %v3362, 4294901760
        %3364 = vmatpush.msra.mxu0 %v3363
        %v3365 = vand.u32 %v710, 4294901760
        %v3366 = vsub.f32 %v710, %v3365
        %v3367 = vand.u32 %v3366, 4294901760
        %v3368 = vsub.f32 %v3366, %v3367
        %v3369 = vand.u32 %v3368, 4294901760
        %3370 = vmatpush.msra.mxu0 %v3369
        %v3371 = vand.u32 %v709, 4294901760
        %v3372 = vsub.f32 %v709, %v3371
        %v3373 = vand.u32 %v3372, 4294901760
        %v3374 = vsub.f32 %v3372, %v3373
        %v3375 = vand.u32 %v3374, 4294901760
        %3376 = vmatpush.msra.mxu0 %v3375
        %v3377 = vand.u32 %v708, 4294901760
        %v3378 = vsub.f32 %v708, %v3377
        %v3379 = vand.u32 %v3378, 4294901760
        %v3380 = vsub.f32 %v3378, %v3379
        %v3381 = vand.u32 %v3380, 4294901760
        %3382 = vmatpush.msra.mxu0 %v3381
        %v3383 = vand.u32 %v707, 4294901760
        %v3384 = vsub.f32 %v707, %v3383
        %v3385 = vand.u32 %v3384, 4294901760
        %v3386 = vsub.f32 %v3384, %v3385
        %v3387 = vand.u32 %v3386, 4294901760
        %3388 = vmatpush.msra.mxu0 %v3387
        %v3389 = vand.u32 %v706, 4294901760
        %v3390 = vsub.f32 %v706, %v3389
        %v3391 = vand.u32 %v3390, 4294901760
        %v3392 = vsub.f32 %v3390, %v3391
        %v3393 = vand.u32 %v3392, 4294901760
        %3394 = vmatpush.msra.mxu0 %v3393
        %v3395 = vand.u32 %v705, 4294901760
        %v3396 = vsub.f32 %v705, %v3395
        %v3397 = vand.u32 %v3396, 4294901760
        %v3398 = vsub.f32 %v3396, %v3397
        %v3399 = vand.u32 %v3398, 4294901760
        %3400 = vmatpush.msra.mxu0 %v3399
        %v3401 = vand.u32 %v704, 4294901760
        %v3402 = vsub.f32 %v704, %v3401
        %v3403 = vand.u32 %v3402, 4294901760
        %v3404 = vsub.f32 %v3402, %v3403
        %v3405 = vand.u32 %v3404, 4294901760
        %3406 = vmatpush.msra.mxu0 %v3405
        %v3407 = vand.u32 %v703, 4294901760
        %v3408 = vsub.f32 %v703, %v3407
        %v3409 = vand.u32 %v3408, 4294901760
        %v3410 = vsub.f32 %v3408, %v3409
        %v3411 = vand.u32 %v3410, 4294901760
        %3412 = vmatpush.msra.mxu0 %v3411
        %v3413 = vand.u32 %v702, 4294901760
        %v3414 = vsub.f32 %v702, %v3413
        %v3415 = vand.u32 %v3414, 4294901760
        %v3416 = vsub.f32 %v3414, %v3415
        %v3417 = vand.u32 %v3416, 4294901760
        %3418 = vmatpush.msra.mxu0 %v3417
        %v3419 = vand.u32 %v701, 4294901760
        %v3420 = vsub.f32 %v701, %v3419
        %v3421 = vand.u32 %v3420, 4294901760
        %v3422 = vsub.f32 %v3420, %v3421
        %v3423 = vand.u32 %v3422, 4294901760
        %3424 = vmatpush.msra.mxu0 %v3423
        %v3425 = vand.u32 %v3286, 4294901760
        %3426 = vmatmul.f32.gmra.mxu0 %v3425
        %v3427 = vpop.f32.mrf.mxu0
        %v3428 = vadd.f32 %v3327, %v3427
        %3429 = vdwg.mxu0
        %v3430 = vand.u32 %v716, 4294901760
        %v3431 = vsub.f32 %v716, %v3430
        %3432 = vmatpush.msra.mxu0 %v3431
        %v3433 = vand.u32 %v715, 4294901760
        %v3434 = vsub.f32 %v715, %v3433
        %3435 = vmatpush.msra.mxu0 %v3434
        %v3436 = vand.u32 %v714, 4294901760
        %v3437 = vsub.f32 %v714, %v3436
        %3438 = vmatpush.msra.mxu0 %v3437
        %v3439 = vand.u32 %v713, 4294901760
        %v3440 = vsub.f32 %v713, %v3439
        %3441 = vmatpush.msra.mxu0 %v3440
        %v3442 = vand.u32 %v712, 4294901760
        %v3443 = vsub.f32 %v712, %v3442
        %3444 = vmatpush.msra.mxu0 %v3443
        %v3445 = vand.u32 %v711, 4294901760
        %v3446 = vsub.f32 %v711, %v3445
        %3447 = vmatpush.msra.mxu0 %v3446
        %v3448 = vand.u32 %v710, 4294901760
        %v3449 = vsub.f32 %v710, %v3448
        %3450 = vmatpush.msra.mxu0 %v3449
        %v3451 = vand.u32 %v709, 4294901760
        %v3452 = vsub.f32 %v709, %v3451
        %3453 = vmatpush.msra.mxu0 %v3452
        %v3454 = vand.u32 %v708, 4294901760
        %v3455 = vsub.f32 %v708, %v3454
        %3456 = vmatpush.msra.mxu0 %v3455
        %v3457 = vand.u32 %v707, 4294901760
        %v3458 = vsub.f32 %v707, %v3457
        %3459 = vmatpush.msra.mxu0 %v3458
        %v3460 = vand.u32 %v706, 4294901760
        %v3461 = vsub.f32 %v706, %v3460
        %3462 = vmatpush.msra.mxu0 %v3461
        %v3463 = vand.u32 %v705, 4294901760
        %v3464 = vsub.f32 %v705, %v3463
        %3465 = vmatpush.msra.mxu0 %v3464
        %v3466 = vand.u32 %v704, 4294901760
        %v3467 = vsub.f32 %v704, %v3466
        %3468 = vmatpush.msra.mxu0 %v3467
        %v3469 = vand.u32 %v703, 4294901760
        %v3470 = vsub.f32 %v703, %v3469
        %3471 = vmatpush.msra.mxu0 %v3470
        %v3472 = vand.u32 %v702, 4294901760
        %v3473 = vsub.f32 %v702, %v3472
        %3474 = vmatpush.msra.mxu0 %v3473
        %v3475 = vand.u32 %v701, 4294901760
        %v3476 = vsub.f32 %v701, %v3475
        %3477 = vmatpush.msra.mxu0 %v3476
        %v3478 = vand.u32 %v3286, 4294901760
        %v3479 = vsub.f32 %v3286, %v3478
        %3480 = vmatmul.f32.gmra.mxu0 %v3479
        %v3481 = vpop.f32.mrf.mxu0
        %v3482 = vadd.f32 %v3428, %v3481
        %3483 = vdwg.mxu0
        %v3484 = vand.u32 %v716, 4294901760
        %3485 = vmatpush.msra.mxu0 %v3484
        %v3486 = vand.u32 %v715, 4294901760
        %3487 = vmatpush.msra.mxu0 %v3486
        %v3488 = vand.u32 %v714, 4294901760
        %3489 = vmatpush.msra.mxu0 %v3488
        %v3490 = vand.u32 %v713, 4294901760
        %3491 = vmatpush.msra.mxu0 %v3490
        %v3492 = vand.u32 %v712, 4294901760
        %3493 = vmatpush.msra.mxu0 %v3492
        %v3494 = vand.u32 %v711, 4294901760
        %3495 = vmatpush.msra.mxu0 %v3494
        %v3496 = vand.u32 %v710, 4294901760
        %3497 = vmatpush.msra.mxu0 %v3496
        %v3498 = vand.u32 %v709, 4294901760
        %3499 = vmatpush.msra.mxu0 %v3498
        %v3500 = vand.u32 %v708, 4294901760
        %3501 = vmatpush.msra.mxu0 %v3500
        %v3502 = vand.u32 %v707, 4294901760
        %3503 = vmatpush.msra.mxu0 %v3502
        %v3504 = vand.u32 %v706, 4294901760
        %3505 = vmatpush.msra.mxu0 %v3504
        %v3506 = vand.u32 %v705, 4294901760
        %3507 = vmatpush.msra.mxu0 %v3506
        %v3508 = vand.u32 %v704, 4294901760
        %3509 = vmatpush.msra.mxu0 %v3508
        %v3510 = vand.u32 %v703, 4294901760
        %3511 = vmatpush.msra.mxu0 %v3510
        %v3512 = vand.u32 %v702, 4294901760
        %3513 = vmatpush.msra.mxu0 %v3512
        %v3514 = vand.u32 %v701, 4294901760
        %3515 = vmatpush.msra.mxu0 %v3514
        %v3516 = vand.u32 %v3286, 4294901760
        %v3517 = vsub.f32 %v3286, %v3516
        %v3518 = vand.u32 %v3517, 4294901760
        %3519 = vmatmul.f32.gmra.mxu0 %v3518
        %v3520 = vpop.f32.mrf.mxu0
        %v3521 = vadd.f32 %v3482, %v3520
        %3522 = vdwg.mxu0
        %v3523 = vand.u32 %v716, 4294901760
        %v3524 = vsub.f32 %v716, %v3523
        %v3525 = vand.u32 %v3524, 4294901760
        %3526 = vmatpush.msra.mxu0 %v3525
        %v3527 = vand.u32 %v715, 4294901760
        %v3528 = vsub.f32 %v715, %v3527
        %v3529 = vand.u32 %v3528, 4294901760
        %3530 = vmatpush.msra.mxu0 %v3529
        %v3531 = vand.u32 %v714, 4294901760
        %v3532 = vsub.f32 %v714, %v3531
        %v3533 = vand.u32 %v3532, 4294901760
        %3534 = vmatpush.msra.mxu0 %v3533
        %v3535 = vand.u32 %v713, 4294901760
        %v3536 = vsub.f32 %v713, %v3535
        %v3537 = vand.u32 %v3536, 4294901760
        %3538 = vmatpush.msra.mxu0 %v3537
        %v3539 = vand.u32 %v712, 4294901760
        %v3540 = vsub.f32 %v712, %v3539
        %v3541 = vand.u32 %v3540, 4294901760
        %3542 = vmatpush.msra.mxu0 %v3541
        %v3543 = vand.u32 %v711, 4294901760
        %v3544 = vsub.f32 %v711, %v3543
        %v3545 = vand.u32 %v3544, 4294901760
        %3546 = vmatpush.msra.mxu0 %v3545
        %v3547 = vand.u32 %v710, 4294901760
        %v3548 = vsub.f32 %v710, %v3547
        %v3549 = vand.u32 %v3548, 4294901760
        %3550 = vmatpush.msra.mxu0 %v3549
        %v3551 = vand.u32 %v709, 4294901760
        %v3552 = vsub.f32 %v709, %v3551
        %v3553 = vand.u32 %v3552, 4294901760
        %3554 = vmatpush.msra.mxu0 %v3553
        %v3555 = vand.u32 %v708, 4294901760
        %v3556 = vsub.f32 %v708, %v3555
        %v3557 = vand.u32 %v3556, 4294901760
        %3558 = vmatpush.msra.mxu0 %v3557
        %v3559 = vand.u32 %v707, 4294901760
        %v3560 = vsub.f32 %v707, %v3559
        %v3561 = vand.u32 %v3560, 4294901760
        %3562 = vmatpush.msra.mxu0 %v3561
        %v3563 = vand.u32 %v706, 4294901760
        %v3564 = vsub.f32 %v706, %v3563
        %v3565 = vand.u32 %v3564, 4294901760
        %3566 = vmatpush.msra.mxu0 %v3565
        %v3567 = vand.u32 %v705, 4294901760
        %v3568 = vsub.f32 %v705, %v3567
        %v3569 = vand.u32 %v3568, 4294901760
        %3570 = vmatpush.msra.mxu0 %v3569
        %v3571 = vand.u32 %v704, 4294901760
        %v3572 = vsub.f32 %v704, %v3571
        %v3573 = vand.u32 %v3572, 4294901760
        %3574 = vmatpush.msra.mxu0 %v3573
        %v3575 = vand.u32 %v703, 4294901760
        %v3576 = vsub.f32 %v703, %v3575
        %v3577 = vand.u32 %v3576, 4294901760
        %3578 = vmatpush.msra.mxu0 %v3577
        %v3579 = vand.u32 %v702, 4294901760
        %v3580 = vsub.f32 %v702, %v3579
        %v3581 = vand.u32 %v3580, 4294901760
        %3582 = vmatpush.msra.mxu0 %v3581
        %v3583 = vand.u32 %v701, 4294901760
        %v3584 = vsub.f32 %v701, %v3583
        %v3585 = vand.u32 %v3584, 4294901760
        %3586 = vmatpush.msra.mxu0 %v3585
        %v3587 = vand.u32 %v3286, 4294901760
        %3588 = vmatmul.f32.gmra.mxu0 %v3587
        %v3589 = vpop.f32.mrf.mxu0
        %v3590 = vadd.f32 %v3521, %v3589
        %3591 = vdwg.mxu0
        %v3592 = vand.u32 %v716, 4294901760
        %3593 = vmatpush.msra.mxu0 %v3592
        %v3594 = vand.u32 %v715, 4294901760
        %3595 = vmatpush.msra.mxu0 %v3594
        %v3596 = vand.u32 %v714, 4294901760
        %3597 = vmatpush.msra.mxu0 %v3596
        %v3598 = vand.u32 %v713, 4294901760
        %3599 = vmatpush.msra.mxu0 %v3598
        %v3600 = vand.u32 %v712, 4294901760
        %3601 = vmatpush.msra.mxu0 %v3600
        %v3602 = vand.u32 %v711, 4294901760
        %3603 = vmatpush.msra.mxu0 %v3602
        %v3604 = vand.u32 %v710, 4294901760
        %3605 = vmatpush.msra.mxu0 %v3604
        %v3606 = vand.u32 %v709, 4294901760
        %3607 = vmatpush.msra.mxu0 %v3606
        %v3608 = vand.u32 %v708, 4294901760
        %3609 = vmatpush.msra.mxu0 %v3608
        %v3610 = vand.u32 %v707, 4294901760
        %3611 = vmatpush.msra.mxu0 %v3610
        %v3612 = vand.u32 %v706, 4294901760
        %3613 = vmatpush.msra.mxu0 %v3612
        %v3614 = vand.u32 %v705, 4294901760
        %3615 = vmatpush.msra.mxu0 %v3614
        %v3616 = vand.u32 %v704, 4294901760
        %3617 = vmatpush.msra.mxu0 %v3616
        %v3618 = vand.u32 %v703, 4294901760
        %3619 = vmatpush.msra.mxu0 %v3618
        %v3620 = vand.u32 %v702, 4294901760
        %3621 = vmatpush.msra.mxu0 %v3620
        %v3622 = vand.u32 %v701, 4294901760
        %3623 = vmatpush.msra.mxu0 %v3622
        %v3624 = vand.u32 %v3286, 4294901760
        %3625 = vmatmul.f32.gmra.mxu0 %v3624
        %v3626 = vpop.f32.mrf.mxu0
        %v3627 = vadd.f32 %v3590, %v3626
        %3628 = vdwg.mxu0
        %v3629 = vand.u32 %v732, 4294901760
        %3630 = vmatpush.msra.mxu0 %v3629
        %v3631 = vand.u32 %v731, 4294901760
        %3632 = vmatpush.msra.mxu0 %v3631
        %v3633 = vand.u32 %v730, 4294901760
        %3634 = vmatpush.msra.mxu0 %v3633
        %v3635 = vand.u32 %v729, 4294901760
        %3636 = vmatpush.msra.mxu0 %v3635
        %v3637 = vand.u32 %v728, 4294901760
        %3638 = vmatpush.msra.mxu0 %v3637
        %v3639 = vand.u32 %v727, 4294901760
        %3640 = vmatpush.msra.mxu0 %v3639
        %v3641 = vand.u32 %v726, 4294901760
        %3642 = vmatpush.msra.mxu0 %v3641
        %v3643 = vand.u32 %v725, 4294901760
        %3644 = vmatpush.msra.mxu0 %v3643
        %v3645 = vand.u32 %v724, 4294901760
        %3646 = vmatpush.msra.mxu0 %v3645
        %v3647 = vand.u32 %v723, 4294901760
        %3648 = vmatpush.msra.mxu0 %v3647
        %v3649 = vand.u32 %v722, 4294901760
        %3650 = vmatpush.msra.mxu0 %v3649
        %v3651 = vand.u32 %v721, 4294901760
        %3652 = vmatpush.msra.mxu0 %v3651
        %v3653 = vand.u32 %v720, 4294901760
        %3654 = vmatpush.msra.mxu0 %v3653
        %v3655 = vand.u32 %v719, 4294901760
        %3656 = vmatpush.msra.mxu0 %v3655
        %v3657 = vand.u32 %v718, 4294901760
        %3658 = vmatpush.msra.mxu0 %v3657
        %v3659 = vand.u32 %v717, 4294901760
        %3660 = vmatpush.msra.mxu0 %v3659
        %v3661 = vand.u32 %v3287, 4294901760
        %v3662 = vsub.f32 %v3287, %v3661
        %v3663 = vand.u32 %v3662, 4294901760
        %v3664 = vsub.f32 %v3662, %v3663
        %v3665 = vand.u32 %v3664, 4294901760
        %3666 = vmatmul.f32.gmra.mxu0 %v3665
        %v3667 = vpop.f32.mrf.mxu0
        %v3668 = vadd.f32 %v3627, %v3667
        %3669 = vdwg.mxu0
        %v3670 = vand.u32 %v732, 4294901760
        %v3671 = vsub.f32 %v732, %v3670
        %v3672 = vand.u32 %v3671, 4294901760
        %v3673 = vsub.f32 %v3671, %v3672
        %v3674 = vand.u32 %v3673, 4294901760
        %3675 = vmatpush.msra.mxu0 %v3674
        %v3676 = vand.u32 %v731, 4294901760
        %v3677 = vsub.f32 %v731, %v3676
        %v3678 = vand.u32 %v3677, 4294901760
        %v3679 = vsub.f32 %v3677, %v3678
        %v3680 = vand.u32 %v3679, 4294901760
        %3681 = vmatpush.msra.mxu0 %v3680
        %v3682 = vand.u32 %v730, 4294901760
        %v3683 = vsub.f32 %v730, %v3682
        %v3684 = vand.u32 %v3683, 4294901760
        %v3685 = vsub.f32 %v3683, %v3684
        %v3686 = vand.u32 %v3685, 4294901760
        %3687 = vmatpush.msra.mxu0 %v3686
        %v3688 = vand.u32 %v729, 4294901760
        %v3689 = vsub.f32 %v729, %v3688
        %v3690 = vand.u32 %v3689, 4294901760
        %v3691 = vsub.f32 %v3689, %v3690
        %v3692 = vand.u32 %v3691, 4294901760
        %3693 = vmatpush.msra.mxu0 %v3692
        %v3694 = vand.u32 %v728, 4294901760
        %v3695 = vsub.f32 %v728, %v3694
        %v3696 = vand.u32 %v3695, 4294901760
        %v3697 = vsub.f32 %v3695, %v3696
        %v3698 = vand.u32 %v3697, 4294901760
        %3699 = vmatpush.msra.mxu0 %v3698
        %v3700 = vand.u32 %v727, 4294901760
        %v3701 = vsub.f32 %v727, %v3700
        %v3702 = vand.u32 %v3701, 4294901760
        %v3703 = vsub.f32 %v3701, %v3702
        %v3704 = vand.u32 %v3703, 4294901760
        %3705 = vmatpush.msra.mxu0 %v3704
        %v3706 = vand.u32 %v726, 4294901760
        %v3707 = vsub.f32 %v726, %v3706
        %v3708 = vand.u32 %v3707, 4294901760
        %v3709 = vsub.f32 %v3707, %v3708
        %v3710 = vand.u32 %v3709, 4294901760
        %3711 = vmatpush.msra.mxu0 %v3710
        %v3712 = vand.u32 %v725, 4294901760
        %v3713 = vsub.f32 %v725, %v3712
        %v3714 = vand.u32 %v3713, 4294901760
        %v3715 = vsub.f32 %v3713, %v3714
        %v3716 = vand.u32 %v3715, 4294901760
        %3717 = vmatpush.msra.mxu0 %v3716
        %v3718 = vand.u32 %v724, 4294901760
        %v3719 = vsub.f32 %v724, %v3718
        %v3720 = vand.u32 %v3719, 4294901760
        %v3721 = vsub.f32 %v3719, %v3720
        %v3722 = vand.u32 %v3721, 4294901760
        %3723 = vmatpush.msra.mxu0 %v3722
        %v3724 = vand.u32 %v723, 4294901760
        %v3725 = vsub.f32 %v723, %v3724
        %v3726 = vand.u32 %v3725, 4294901760
        %v3727 = vsub.f32 %v3725, %v3726
        %v3728 = vand.u32 %v3727, 4294901760
        %3729 = vmatpush.msra.mxu0 %v3728
        %v3730 = vand.u32 %v722, 4294901760
        %v3731 = vsub.f32 %v722, %v3730
        %v3732 = vand.u32 %v3731, 4294901760
        %v3733 = vsub.f32 %v3731, %v3732
        %v3734 = vand.u32 %v3733, 4294901760
        %3735 = vmatpush.msra.mxu0 %v3734
        %v3736 = vand.u32 %v721, 4294901760
        %v3737 = vsub.f32 %v721, %v3736
        %v3738 = vand.u32 %v3737, 4294901760
        %v3739 = vsub.f32 %v3737, %v3738
        %v3740 = vand.u32 %v3739, 4294901760
        %3741 = vmatpush.msra.mxu0 %v3740
        %v3742 = vand.u32 %v720, 4294901760
        %v3743 = vsub.f32 %v720, %v3742
        %v3744 = vand.u32 %v3743, 4294901760
        %v3745 = vsub.f32 %v3743, %v3744
        %v3746 = vand.u32 %v3745, 4294901760
        %3747 = vmatpush.msra.mxu0 %v3746
        %v3748 = vand.u32 %v719, 4294901760
        %v3749 = vsub.f32 %v719, %v3748
        %v3750 = vand.u32 %v3749, 4294901760
        %v3751 = vsub.f32 %v3749, %v3750
        %v3752 = vand.u32 %v3751, 4294901760
        %3753 = vmatpush.msra.mxu0 %v3752
        %v3754 = vand.u32 %v718, 4294901760
        %v3755 = vsub.f32 %v718, %v3754
        %v3756 = vand.u32 %v3755, 4294901760
        %v3757 = vsub.f32 %v3755, %v3756
        %v3758 = vand.u32 %v3757, 4294901760
        %3759 = vmatpush.msra.mxu0 %v3758
        %v3760 = vand.u32 %v717, 4294901760
        %v3761 = vsub.f32 %v717, %v3760
        %v3762 = vand.u32 %v3761, 4294901760
        %v3763 = vsub.f32 %v3761, %v3762
        %v3764 = vand.u32 %v3763, 4294901760
        %3765 = vmatpush.msra.mxu0 %v3764
        %v3766 = vand.u32 %v3287, 4294901760
        %3767 = vmatmul.f32.gmra.mxu0 %v3766
        %v3768 = vpop.f32.mrf.mxu0
        %v3769 = vadd.f32 %v3668, %v3768
        %3770 = vdwg.mxu0
        %v3771 = vand.u32 %v732, 4294901760
        %v3772 = vsub.f32 %v732, %v3771
        %3773 = vmatpush.msra.mxu0 %v3772
        %v3774 = vand.u32 %v731, 4294901760
        %v3775 = vsub.f32 %v731, %v3774
        %3776 = vmatpush.msra.mxu0 %v3775
        %v3777 = vand.u32 %v730, 4294901760
        %v3778 = vsub.f32 %v730, %v3777
        %3779 = vmatpush.msra.mxu0 %v3778
        %v3780 = vand.u32 %v729, 4294901760
        %v3781 = vsub.f32 %v729, %v3780
        %3782 = vmatpush.msra.mxu0 %v3781
        %v3783 = vand.u32 %v728, 4294901760
        %v3784 = vsub.f32 %v728, %v3783
        %3785 = vmatpush.msra.mxu0 %v3784
        %v3786 = vand.u32 %v727, 4294901760
        %v3787 = vsub.f32 %v727, %v3786
        %3788 = vmatpush.msra.mxu0 %v3787
        %v3789 = vand.u32 %v726, 4294901760
        %v3790 = vsub.f32 %v726, %v3789
        %3791 = vmatpush.msra.mxu0 %v3790
        %v3792 = vand.u32 %v725, 4294901760
        %v3793 = vsub.f32 %v725, %v3792
        %3794 = vmatpush.msra.mxu0 %v3793
        %v3795 = vand.u32 %v724, 4294901760
        %v3796 = vsub.f32 %v724, %v3795
        %3797 = vmatpush.msra.mxu0 %v3796
        %v3798 = vand.u32 %v723, 4294901760
        %v3799 = vsub.f32 %v723, %v3798
        %3800 = vmatpush.msra.mxu0 %v3799
        %v3801 = vand.u32 %v722, 4294901760
        %v3802 = vsub.f32 %v722, %v3801
        %3803 = vmatpush.msra.mxu0 %v3802
        %v3804 = vand.u32 %v721, 4294901760
        %v3805 = vsub.f32 %v721, %v3804
        %3806 = vmatpush.msra.mxu0 %v3805
        %v3807 = vand.u32 %v720, 4294901760
        %v3808 = vsub.f32 %v720, %v3807
        %3809 = vmatpush.msra.mxu0 %v3808
        %v3810 = vand.u32 %v719, 4294901760
        %v3811 = vsub.f32 %v719, %v3810
        %3812 = vmatpush.msra.mxu0 %v3811
        %v3813 = vand.u32 %v718, 4294901760
        %v3814 = vsub.f32 %v718, %v3813
        %3815 = vmatpush.msra.mxu0 %v3814
        %v3816 = vand.u32 %v717, 4294901760
        %v3817 = vsub.f32 %v717, %v3816
        %3818 = vmatpush.msra.mxu0 %v3817
        %v3819 = vand.u32 %v3287, 4294901760
        %v3820 = vsub.f32 %v3287, %v3819
        %3821 = vmatmul.f32.gmra.mxu0 %v3820
        %v3822 = vpop.f32.mrf.mxu0
        %v3823 = vadd.f32 %v3769, %v3822
        %3824 = vdwg.mxu0
        %v3825 = vand.u32 %v732, 4294901760
        %3826 = vmatpush.msra.mxu0 %v3825
        %v3827 = vand.u32 %v731, 4294901760
        %3828 = vmatpush.msra.mxu0 %v3827
        %v3829 = vand.u32 %v730, 4294901760
        %3830 = vmatpush.msra.mxu0 %v3829
        %v3831 = vand.u32 %v729, 4294901760
        %3832 = vmatpush.msra.mxu0 %v3831
        %v3833 = vand.u32 %v728, 4294901760
        %3834 = vmatpush.msra.mxu0 %v3833
        %v3835 = vand.u32 %v727, 4294901760
        %3836 = vmatpush.msra.mxu0 %v3835
        %v3837 = vand.u32 %v726, 4294901760
        %3838 = vmatpush.msra.mxu0 %v3837
        %v3839 = vand.u32 %v725, 4294901760
        %3840 = vmatpush.msra.mxu0 %v3839
        %v3841 = vand.u32 %v724, 4294901760
        %3842 = vmatpush.msra.mxu0 %v3841
        %v3843 = vand.u32 %v723, 4294901760
        %3844 = vmatpush.msra.mxu0 %v3843
        %v3845 = vand.u32 %v722, 4294901760
        %3846 = vmatpush.msra.mxu0 %v3845
        %v3847 = vand.u32 %v721, 4294901760
        %3848 = vmatpush.msra.mxu0 %v3847
        %v3849 = vand.u32 %v720, 4294901760
        %3850 = vmatpush.msra.mxu0 %v3849
        %v3851 = vand.u32 %v719, 4294901760
        %3852 = vmatpush.msra.mxu0 %v3851
        %v3853 = vand.u32 %v718, 4294901760
        %3854 = vmatpush.msra.mxu0 %v3853
        %v3855 = vand.u32 %v717, 4294901760
        %3856 = vmatpush.msra.mxu0 %v3855
        %v3857 = vand.u32 %v3287, 4294901760
        %v3858 = vsub.f32 %v3287, %v3857
        %v3859 = vand.u32 %v3858, 4294901760
        %3860 = vmatmul.f32.gmra.mxu0 %v3859
        %v3861 = vpop.f32.mrf.mxu0
        %v3862 = vadd.f32 %v3823, %v3861
        %3863 = vdwg.mxu0
        %v3864 = vand.u32 %v732, 4294901760
        %v3865 = vsub.f32 %v732, %v3864
        %v3866 = vand.u32 %v3865, 4294901760
        %3867 = vmatpush.msra.mxu0 %v3866
        %v3868 = vand.u32 %v731, 4294901760
        %v3869 = vsub.f32 %v731, %v3868
        %v3870 = vand.u32 %v3869, 4294901760
        %3871 = vmatpush.msra.mxu0 %v3870
        %v3872 = vand.u32 %v730, 4294901760
        %v3873 = vsub.f32 %v730, %v3872
        %v3874 = vand.u32 %v3873, 4294901760
        %3875 = vmatpush.msra.mxu0 %v3874
        %v3876 = vand.u32 %v729, 4294901760
        %v3877 = vsub.f32 %v729, %v3876
        %v3878 = vand.u32 %v3877, 4294901760
        %3879 = vmatpush.msra.mxu0 %v3878
        %v3880 = vand.u32 %v728, 4294901760
        %v3881 = vsub.f32 %v728, %v3880
        %v3882 = vand.u32 %v3881, 4294901760
        %3883 = vmatpush.msra.mxu0 %v3882
        %v3884 = vand.u32 %v727, 4294901760
        %v3885 = vsub.f32 %v727, %v3884
        %v3886 = vand.u32 %v3885, 4294901760
        %3887 = vmatpush.msra.mxu0 %v3886
        %v3888 = vand.u32 %v726, 4294901760
        %v3889 = vsub.f32 %v726, %v3888
        %v3890 = vand.u32 %v3889, 4294901760
        %3891 = vmatpush.msra.mxu0 %v3890
        %v3892 = vand.u32 %v725, 4294901760
        %v3893 = vsub.f32 %v725, %v3892
        %v3894 = vand.u32 %v3893, 4294901760
        %3895 = vmatpush.msra.mxu0 %v3894
        %v3896 = vand.u32 %v724, 4294901760
        %v3897 = vsub.f32 %v724, %v3896
        %v3898 = vand.u32 %v3897, 4294901760
        %3899 = vmatpush.msra.mxu0 %v3898
        %v3900 = vand.u32 %v723, 4294901760
        %v3901 = vsub.f32 %v723, %v3900
        %v3902 = vand.u32 %v3901, 4294901760
        %3903 = vmatpush.msra.mxu0 %v3902
        %v3904 = vand.u32 %v722, 4294901760
        %v3905 = vsub.f32 %v722, %v3904
        %v3906 = vand.u32 %v3905, 4294901760
        %3907 = vmatpush.msra.mxu0 %v3906
        %v3908 = vand.u32 %v721, 4294901760
        %v3909 = vsub.f32 %v721, %v3908
        %v3910 = vand.u32 %v3909, 4294901760
        %3911 = vmatpush.msra.mxu0 %v3910
        %v3912 = vand.u32 %v720, 4294901760
        %v3913 = vsub.f32 %v720, %v3912
        %v3914 = vand.u32 %v3913, 4294901760
        %3915 = vmatpush.msra.mxu0 %v3914
        %v3916 = vand.u32 %v719, 4294901760
        %v3917 = vsub.f32 %v719, %v3916
        %v3918 = vand.u32 %v3917, 4294901760
        %3919 = vmatpush.msra.mxu0 %v3918
        %v3920 = vand.u32 %v718, 4294901760
        %v3921 = vsub.f32 %v718, %v3920
        %v3922 = vand.u32 %v3921, 4294901760
        %3923 = vmatpush.msra.mxu0 %v3922
        %v3924 = vand.u32 %v717, 4294901760
        %v3925 = vsub.f32 %v717, %v3924
        %v3926 = vand.u32 %v3925, 4294901760
        %3927 = vmatpush.msra.mxu0 %v3926
        %v3928 = vand.u32 %v3287, 4294901760
        %3929 = vmatmul.f32.gmra.mxu0 %v3928
        %v3930 = vpop.f32.mrf.mxu0
        %v3931 = vadd.f32 %v3862, %v3930
        %3932 = vdwg.mxu0
        %v3933 = vand.u32 %v732, 4294901760
        %3934 = vmatpush.msra.mxu0 %v3933
        %v3935 = vand.u32 %v731, 4294901760
        %3936 = vmatpush.msra.mxu0 %v3935
        %v3937 = vand.u32 %v730, 4294901760
        %3938 = vmatpush.msra.mxu0 %v3937
        %v3939 = vand.u32 %v729, 4294901760
        %3940 = vmatpush.msra.mxu0 %v3939
        %v3941 = vand.u32 %v728, 4294901760
        %3942 = vmatpush.msra.mxu0 %v3941
        %v3943 = vand.u32 %v727, 4294901760
        %3944 = vmatpush.msra.mxu0 %v3943
        %v3945 = vand.u32 %v726, 4294901760
        %3946 = vmatpush.msra.mxu0 %v3945
        %v3947 = vand.u32 %v725, 4294901760
        %3948 = vmatpush.msra.mxu0 %v3947
        %v3949 = vand.u32 %v724, 4294901760
        %3950 = vmatpush.msra.mxu0 %v3949
        %v3951 = vand.u32 %v723, 4294901760
        %3952 = vmatpush.msra.mxu0 %v3951
        %v3953 = vand.u32 %v722, 4294901760
        %3954 = vmatpush.msra.mxu0 %v3953
        %v3955 = vand.u32 %v721, 4294901760
        %3956 = vmatpush.msra.mxu0 %v3955
        %v3957 = vand.u32 %v720, 4294901760
        %3958 = vmatpush.msra.mxu0 %v3957
        %v3959 = vand.u32 %v719, 4294901760
        %3960 = vmatpush.msra.mxu0 %v3959
        %v3961 = vand.u32 %v718, 4294901760
        %3962 = vmatpush.msra.mxu0 %v3961
        %v3963 = vand.u32 %v717, 4294901760
        %3964 = vmatpush.msra.mxu0 %v3963
        %v3965 = vand.u32 %v3287, 4294901760
        %3966 = vmatmul.f32.gmra.mxu0 %v3965
        %v3967 = vpop.f32.mrf.mxu0
        %v3968 = vadd.f32 %v3931, %v3967
        %3969 = vdwg.mxu0
        %v3970 = vmul.f32 %v3968, 0.001953125
        %v3971 = vmul.f32 %v3970, %v3970
        %v3973 = vrot.slane %v3971, 7
        %v3975 = vsub.f32 %v3970, %v3973
        %v3976 = vadd.f32 %v3975, 1e-05
        %v3977 = vrsqrt.pop %v3976
        %v3978 = vmul.f32 %v3977, %v3976
        %v3979 = vmul.f32 %v3978, %v3977
        %v3980 = vmul.f32 0.5, %v3979
        %v3981 = vsub.f32 1.5, %v3980
        %v3982 = vmul.f32 %v3977, %v3981
        %vm3983 = vweird.f32 %v3976
        %vm3984 = vweird.f32 %v3977
        %vm3985 = vmor %vm3983, %vm3984
        %v3986 = vsel %vm3985, %v3977, %v3982
        %v3987 = vsel %vm869, %v3970, %v3986
        %v3989 = vsel %vm1616, %v3987, 0
        %3991 = vmatpush.msra.mxu0 0.0
        %3992 = vmatpush.msra.mxu0 0.0
        %3993 = vmatpush.msra.mxu0 0.0
        %3994 = vmatpush.msra.mxu0 0.0
        %3995 = vmatpush.msra.mxu0 0.0
        %3996 = vmatpush.msra.mxu0 0.0
        %3997 = vmatpush.msra.mxu0 0.0
        %3998 = vmatpush.msra.mxu0 0.0
        %3999 = vmatpush.msra.mxu0 0.0
        %4000 = vmatpush.msra.mxu0 0.0
        %4001 = vmatpush.msra.mxu0 0.0
        %4002 = vmatpush.msra.mxu0 0.0
        %v4003 = vand.u32 %v739, 4294901760
        %4004 = vmatpush.msra.mxu0 %v4003
        %v4005 = vand.u32 %v737, 4294901760
        %4006 = vmatpush.msra.mxu0 %v4005
        %v4007 = vand.u32 %v735, 4294901760
        %4008 = vmatpush.msra.mxu0 %v4007
        %v4009 = vand.u32 %v733, 4294901760
        %4010 = vmatpush.msra.mxu0 %v4009
        %v4011 = vand.u32 %v3989, 4294901760
        %v4012 = vsub.f32 %v3989, %v4011
        %v4013 = vand.u32 %v4012, 4294901760
        %v4014 = vsub.f32 %v4012, %v4013
        %v4015 = vand.u32 %v4014, 4294901760
        %4016 = vmatmul.f32.gmra.mxu0 %v4015
        %v4017 = vpop.f32.mrf.mxu0
        %v4018 = vadd.f32 0.0, %v4017
        %4019 = vdwg.mxu0
        %4020 = vmatpush.msra.mxu0 0.0
        %4021 = vmatpush.msra.mxu0 0.0
        %4022 = vmatpush.msra.mxu0 0.0
        %4023 = vmatpush.msra.mxu0 0.0
        %4024 = vmatpush.msra.mxu0 0.0
        %4025 = vmatpush.msra.mxu0 0.0
        %4026 = vmatpush.msra.mxu0 0.0
        %4027 = vmatpush.msra.mxu0 0.0
        %4028 = vmatpush.msra.mxu0 0.0
        %4029 = vmatpush.msra.mxu0 0.0
        %4030 = vmatpush.msra.mxu0 0.0
        %4031 = vmatpush.msra.mxu0 0.0
        %v4032 = vand.u32 %v739, 4294901760
        %v4033 = vsub.f32 %v739, %v4032
        %v4034 = vand.u32 %v4033, 4294901760
        %v4035 = vsub.f32 %v4033, %v4034
        %v4036 = vand.u32 %v4035, 4294901760
        %4037 = vmatpush.msra.mxu0 %v4036
        %v4038 = vand.u32 %v737, 4294901760
        %v4039 = vsub.f32 %v737, %v4038
        %v4040 = vand.u32 %v4039, 4294901760
        %v4041 = vsub.f32 %v4039, %v4040
        %v4042 = vand.u32 %v4041, 4294901760
        %4043 = vmatpush.msra.mxu0 %v4042
        %v4044 = vand.u32 %v735, 4294901760
        %v4045 = vsub.f32 %v735, %v4044
        %v4046 = vand.u32 %v4045, 4294901760
        %v4047 = vsub.f32 %v4045, %v4046
        %v4048 = vand.u32 %v4047, 4294901760
        %4049 = vmatpush.msra.mxu0 %v4048
        %v4050 = vand.u32 %v733, 4294901760
        %v4051 = vsub.f32 %v733, %v4050
        %v4052 = vand.u32 %v4051, 4294901760
        %v4053 = vsub.f32 %v4051, %v4052
        %v4054 = vand.u32 %v4053, 4294901760
        %4055 = vmatpush.msra.mxu0 %v4054
        %v4056 = vand.u32 %v3989, 4294901760
        %4057 = vmatmul.f32.gmra.mxu0 %v4056
        %v4058 = vpop.f32.mrf.mxu0
        %v4059 = vadd.f32 %v4018, %v4058
        %4060 = vdwg.mxu0
        %4061 = vmatpush.msra.mxu0 0.0
        %4062 = vmatpush.msra.mxu0 0.0
        %4063 = vmatpush.msra.mxu0 0.0
        %4064 = vmatpush.msra.mxu0 0.0
        %4065 = vmatpush.msra.mxu0 0.0
        %4066 = vmatpush.msra.mxu0 0.0
        %4067 = vmatpush.msra.mxu0 0.0
        %4068 = vmatpush.msra.mxu0 0.0
        %4069 = vmatpush.msra.mxu0 0.0
        %4070 = vmatpush.msra.mxu0 0.0
        %4071 = vmatpush.msra.mxu0 0.0
        %4072 = vmatpush.msra.mxu0 0.0
        %v4073 = vand.u32 %v739, 4294901760
        %v4074 = vsub.f32 %v739, %v4073
        %4075 = vmatpush.msra.mxu0 %v4074
        %v4076 = vand.u32 %v737, 4294901760
        %v4077 = vsub.f32 %v737, %v4076
        %4078 = vmatpush.msra.mxu0 %v4077
        %v4079 = vand.u32 %v735, 4294901760
        %v4080 = vsub.f32 %v735, %v4079
        %4081 = vmatpush.msra.mxu0 %v4080
        %v4082 = vand.u32 %v733, 4294901760
        %v4083 = vsub.f32 %v733, %v4082
        %4084 = vmatpush.msra.mxu0 %v4083
        %v4085 = vand.u32 %v3989, 4294901760
        %v4086 = vsub.f32 %v3989, %v4085
        %4087 = vmatmul.f32.gmra.mxu0 %v4086
        %v4088 = vpop.f32.mrf.mxu0
        %v4089 = vadd.f32 %v4059, %v4088
        %4090 = vdwg.mxu0
        %4091 = vmatpush.msra.mxu0 0.0
        %4092 = vmatpush.msra.mxu0 0.0
        %4093 = vmatpush.msra.mxu0 0.0
        %4094 = vmatpush.msra.mxu0 0.0
        %4095 = vmatpush.msra.mxu0 0.0
        %4096 = vmatpush.msra.mxu0 0.0
        %4097 = vmatpush.msra.mxu0 0.0
        %4098 = vmatpush.msra.mxu0 0.0
        %4099 = vmatpush.msra.mxu0 0.0
        %4100 = vmatpush.msra.mxu0 0.0
        %4101 = vmatpush.msra.mxu0 0.0
        %4102 = vmatpush.msra.mxu0 0.0
        %v4103 = vand.u32 %v739, 4294901760
        %4104 = vmatpush.msra.mxu0 %v4103
        %v4105 = vand.u32 %v737, 4294901760
        %4106 = vmatpush.msra.mxu0 %v4105
        %v4107 = vand.u32 %v735, 4294901760
        %4108 = vmatpush.msra.mxu0 %v4107
        %v4109 = vand.u32 %v733, 4294901760
        %4110 = vmatpush.msra.mxu0 %v4109
        %v4111 = vand.u32 %v3989, 4294901760
        %v4112 = vsub.f32 %v3989, %v4111
        %v4113 = vand.u32 %v4112, 4294901760
        %4114 = vmatmul.f32.gmra.mxu0 %v4113
        %v4115 = vpop.f32.mrf.mxu0
        %v4116 = vadd.f32 %v4089, %v4115
        %4117 = vdwg.mxu0
        %4118 = vmatpush.msra.mxu0 0.0
        %4119 = vmatpush.msra.mxu0 0.0
        %4120 = vmatpush.msra.mxu0 0.0
        %4121 = vmatpush.msra.mxu0 0.0
        %4122 = vmatpush.msra.mxu0 0.0
        %4123 = vmatpush.msra.mxu0 0.0
        %4124 = vmatpush.msra.mxu0 0.0
        %4125 = vmatpush.msra.mxu0 0.0
        %4126 = vmatpush.msra.mxu0 0.0
        %4127 = vmatpush.msra.mxu0 0.0
        %4128 = vmatpush.msra.mxu0 0.0
        %4129 = vmatpush.msra.mxu0 0.0
        %v4130 = vand.u32 %v739, 4294901760
        %v4131 = vsub.f32 %v739, %v4130
        %v4132 = vand.u32 %v4131, 4294901760
        %4133 = vmatpush.msra.mxu0 %v4132
        %v4134 = vand.u32 %v737, 4294901760
        %v4135 = vsub.f32 %v737, %v4134
        %v4136 = vand.u32 %v4135, 4294901760
        %4137 = vmatpush.msra.mxu0 %v4136
        %v4138 = vand.u32 %v735, 4294901760
        %v4139 = vsub.f32 %v735, %v4138
        %v4140 = vand.u32 %v4139, 4294901760
        %4141 = vmatpush.msra.mxu0 %v4140
        %v4142 = vand.u32 %v733, 4294901760
        %v4143 = vsub.f32 %v733, %v4142
        %v4144 = vand.u32 %v4143, 4294901760
        %4145 = vmatpush.msra.mxu0 %v4144
        %v4146 = vand.u32 %v3989, 4294901760
        %4147 = vmatmul.f32.gmra.mxu0 %v4146
        %v4148 = vpop.f32.mrf.mxu0
        %v4149 = vadd.f32 %v4116, %v4148
        %4150 = vdwg.mxu0
        %4151 = vmatpush.msra.mxu0 0.0
        %4152 = vmatpush.msra.mxu0 0.0
        %4153 = vmatpush.msra.mxu0 0.0
        %4154 = vmatpush.msra.mxu0 0.0
        %4155 = vmatpush.msra.mxu0 0.0
        %4156 = vmatpush.msra.mxu0 0.0
        %4157 = vmatpush.msra.mxu0 0.0
        %4158 = vmatpush.msra.mxu0 0.0
        %4159 = vmatpush.msra.mxu0 0.0
        %4160 = vmatpush.msra.mxu0 0.0
        %4161 = vmatpush.msra.mxu0 0.0
        %4162 = vmatpush.msra.mxu0 0.0
        %v4163 = vand.u32 %v739, 4294901760
        %4164 = vmatpush.msra.mxu0 %v4163
        %v4165 = vand.u32 %v737, 4294901760
        %4166 = vmatpush.msra.mxu0 %v4165
        %v4167 = vand.u32 %v735, 4294901760
        %4168 = vmatpush.msra.mxu0 %v4167
        %v4169 = vand.u32 %v733, 4294901760
        %4170 = vmatpush.msra.mxu0 %v4169
        %v4171 = vand.u32 %v3989, 4294901760
        %4172 = vmatmul.f32.gmra.mxu0 %v4171
        %v4173 = vpop.f32.mrf.mxu0
        %v4174 = vadd.f32 %v4149, %v4173
        %4175 = vdwg.mxu0
        %4176 = vmatpush.msra.mxu0 0.0
        %4177 = vmatpush.msra.mxu0 0.0
        %4178 = vmatpush.msra.mxu0 0.0
        %4179 = vmatpush.msra.mxu0 0.0
        %4180 = vmatpush.msra.mxu0 0.0
        %4181 = vmatpush.msra.mxu0 0.0
        %4182 = vmatpush.msra.mxu0 0.0
        %4183 = vmatpush.msra.mxu0 0.0
        %4184 = vmatpush.msra.mxu0 0.0
        %4185 = vmatpush.msra.mxu0 0.0
        %4186 = vmatpush.msra.mxu0 0.0
        %4187 = vmatpush.msra.mxu0 0.0
        %v4188 = vand.u32 %v740, 4294901760
        %4189 = vmatpush.msra.mxu0 %v4188
        %v4190 = vand.u32 %v738, 4294901760
        %4191 = vmatpush.msra.mxu0 %v4190
        %v4192 = vand.u32 %v736, 4294901760
        %4193 = vmatpush.msra.mxu0 %v4192
        %v4194 = vand.u32 %v734, 4294901760
        %4195 = vmatpush.msra.mxu0 %v4194
        %v4196 = vand.u32 %v3989, 4294901760
        %v4197 = vsub.f32 %v3989, %v4196
        %v4198 = vand.u32 %v4197, 4294901760
        %v4199 = vsub.f32 %v4197, %v4198
        %v4200 = vand.u32 %v4199, 4294901760
        %4201 = vmatmul.f32.gmra.mxu0 %v4200
        %v4202 = vpop.f32.mrf.mxu0
        %v4203 = vadd.f32 0.0, %v4202
        %4204 = vdwg.mxu0
        %4205 = vmatpush.msra.mxu0 0.0
        %4206 = vmatpush.msra.mxu0 0.0
        %4207 = vmatpush.msra.mxu0 0.0
        %4208 = vmatpush.msra.mxu0 0.0
        %4209 = vmatpush.msra.mxu0 0.0
        %4210 = vmatpush.msra.mxu0 0.0
        %4211 = vmatpush.msra.mxu0 0.0
        %4212 = vmatpush.msra.mxu0 0.0
        %4213 = vmatpush.msra.mxu0 0.0
        %4214 = vmatpush.msra.mxu0 0.0
        %4215 = vmatpush.msra.mxu0 0.0
        %4216 = vmatpush.msra.mxu0 0.0
        %v4217 = vand.u32 %v740, 4294901760
        %v4218 = vsub.f32 %v740, %v4217
        %v4219 = vand.u32 %v4218, 4294901760
        %v4220 = vsub.f32 %v4218, %v4219
        %v4221 = vand.u32 %v4220, 4294901760
        %4222 = vmatpush.msra.mxu0 %v4221
        %v4223 = vand.u32 %v738, 4294901760
        %v4224 = vsub.f32 %v738, %v4223
        %v4225 = vand.u32 %v4224, 4294901760
        %v4226 = vsub.f32 %v4224, %v4225
        %v4227 = vand.u32 %v4226, 4294901760
        %4228 = vmatpush.msra.mxu0 %v4227
        %v4229 = vand.u32 %v736, 4294901760
        %v4230 = vsub.f32 %v736, %v4229
        %v4231 = vand.u32 %v4230, 4294901760
        %v4232 = vsub.f32 %v4230, %v4231
        %v4233 = vand.u32 %v4232, 4294901760
        %4234 = vmatpush.msra.mxu0 %v4233
        %v4235 = vand.u32 %v734, 4294901760
        %v4236 = vsub.f32 %v734, %v4235
        %v4237 = vand.u32 %v4236, 4294901760
        %v4238 = vsub.f32 %v4236, %v4237
        %v4239 = vand.u32 %v4238, 4294901760
        %4240 = vmatpush.msra.mxu0 %v4239
        %v4241 = vand.u32 %v3989, 4294901760
        %4242 = vmatmul.f32.gmra.mxu0 %v4241
        %v4243 = vpop.f32.mrf.mxu0
        %v4244 = vadd.f32 %v4203, %v4243
        %4245 = vdwg.mxu0
        %4246 = vmatpush.msra.mxu0 0.0
        %4247 = vmatpush.msra.mxu0 0.0
        %4248 = vmatpush.msra.mxu0 0.0
        %4249 = vmatpush.msra.mxu0 0.0
        %4250 = vmatpush.msra.mxu0 0.0
        %4251 = vmatpush.msra.mxu0 0.0
        %4252 = vmatpush.msra.mxu0 0.0
        %4253 = vmatpush.msra.mxu0 0.0
        %4254 = vmatpush.msra.mxu0 0.0
        %4255 = vmatpush.msra.mxu0 0.0
        %4256 = vmatpush.msra.mxu0 0.0
        %4257 = vmatpush.msra.mxu0 0.0
        %v4258 = vand.u32 %v740, 4294901760
        %v4259 = vsub.f32 %v740, %v4258
        %4260 = vmatpush.msra.mxu0 %v4259
        %v4261 = vand.u32 %v738, 4294901760
        %v4262 = vsub.f32 %v738, %v4261
        %4263 = vmatpush.msra.mxu0 %v4262
        %v4264 = vand.u32 %v736, 4294901760
        %v4265 = vsub.f32 %v736, %v4264
        %4266 = vmatpush.msra.mxu0 %v4265
        %v4267 = vand.u32 %v734, 4294901760
        %v4268 = vsub.f32 %v734, %v4267
        %4269 = vmatpush.msra.mxu0 %v4268
        %v4270 = vand.u32 %v3989, 4294901760
        %v4271 = vsub.f32 %v3989, %v4270
        %4272 = vmatmul.f32.gmra.mxu0 %v4271
        %v4273 = vpop.f32.mrf.mxu0
        %v4274 = vadd.f32 %v4244, %v4273
        %4275 = vdwg.mxu0
        %4276 = vmatpush.msra.mxu0 0.0
        %4277 = vmatpush.msra.mxu0 0.0
        %4278 = vmatpush.msra.mxu0 0.0
        %4279 = vmatpush.msra.mxu0 0.0
        %4280 = vmatpush.msra.mxu0 0.0
        %4281 = vmatpush.msra.mxu0 0.0
        %4282 = vmatpush.msra.mxu0 0.0
        %4283 = vmatpush.msra.mxu0 0.0
        %4284 = vmatpush.msra.mxu0 0.0
        %4285 = vmatpush.msra.mxu0 0.0
        %4286 = vmatpush.msra.mxu0 0.0
        %4287 = vmatpush.msra.mxu0 0.0
        %v4288 = vand.u32 %v740, 4294901760
        %4289 = vmatpush.msra.mxu0 %v4288
        %v4290 = vand.u32 %v738, 4294901760
        %4291 = vmatpush.msra.mxu0 %v4290
        %v4292 = vand.u32 %v736, 4294901760
        %4293 = vmatpush.msra.mxu0 %v4292
        %v4294 = vand.u32 %v734, 4294901760
        %4295 = vmatpush.msra.mxu0 %v4294
        %v4296 = vand.u32 %v3989, 4294901760
        %v4297 = vsub.f32 %v3989, %v4296
        %v4298 = vand.u32 %v4297, 4294901760
        %4299 = vmatmul.f32.gmra.mxu0 %v4298
        %v4300 = vpop.f32.mrf.mxu0
        %v4301 = vadd.f32 %v4274, %v4300
        %4302 = vdwg.mxu0
        %4303 = vmatpush.msra.mxu0 0.0
        %4304 = vmatpush.msra.mxu0 0.0
        %4305 = vmatpush.msra.mxu0 0.0
        %4306 = vmatpush.msra.mxu0 0.0
        %4307 = vmatpush.msra.mxu0 0.0
        %4308 = vmatpush.msra.mxu0 0.0
        %4309 = vmatpush.msra.mxu0 0.0
        %4310 = vmatpush.msra.mxu0 0.0
        %4311 = vmatpush.msra.mxu0 0.0
        %4312 = vmatpush.msra.mxu0 0.0
        %4313 = vmatpush.msra.mxu0 0.0
        %4314 = vmatpush.msra.mxu0 0.0
        %v4315 = vand.u32 %v740, 4294901760
        %v4316 = vsub.f32 %v740, %v4315
        %v4317 = vand.u32 %v4316, 4294901760
        %4318 = vmatpush.msra.mxu0 %v4317
        %v4319 = vand.u32 %v738, 4294901760
        %v4320 = vsub.f32 %v738, %v4319
        %v4321 = vand.u32 %v4320, 4294901760
        %4322 = vmatpush.msra.mxu0 %v4321
        %v4323 = vand.u32 %v736, 4294901760
        %v4324 = vsub.f32 %v736, %v4323
        %v4325 = vand.u32 %v4324, 4294901760
        %4326 = vmatpush.msra.mxu0 %v4325
        %v4327 = vand.u32 %v734, 4294901760
        %v4328 = vsub.f32 %v734, %v4327
        %v4329 = vand.u32 %v4328, 4294901760
        %4330 = vmatpush.msra.mxu0 %v4329
        %v4331 = vand.u32 %v3989, 4294901760
        %4332 = vmatmul.f32.gmra.mxu0 %v4331
        %v4333 = vpop.f32.mrf.mxu0
        %v4334 = vadd.f32 %v4301, %v4333
        %4335 = vdwg.mxu0
        %4336 = vmatpush.msra.mxu0 0.0
        %4337 = vmatpush.msra.mxu0 0.0
        %4338 = vmatpush.msra.mxu0 0.0
        %4339 = vmatpush.msra.mxu0 0.0
        %4340 = vmatpush.msra.mxu0 0.0
        %4341 = vmatpush.msra.mxu0 0.0
        %4342 = vmatpush.msra.mxu0 0.0
        %4343 = vmatpush.msra.mxu0 0.0
        %4344 = vmatpush.msra.mxu0 0.0
        %4345 = vmatpush.msra.mxu0 0.0
        %4346 = vmatpush.msra.mxu0 0.0
        %4347 = vmatpush.msra.mxu0 0.0
        %v4348 = vand.u32 %v740, 4294901760
        %4349 = vmatpush.msra.mxu0 %v4348
        %v4350 = vand.u32 %v738, 4294901760
        %4351 = vmatpush.msra.mxu0 %v4350
        %v4352 = vand.u32 %v736, 4294901760
        %4353 = vmatpush.msra.mxu0 %v4352
        %v4354 = vand.u32 %v734, 4294901760
        %4355 = vmatpush.msra.mxu0 %v4354
        %v4356 = vand.u32 %v3989, 4294901760
        %4357 = vmatmul.f32.gmra.mxu0 %v4356
        %v4358 = vpop.f32.mrf.mxu0
        %v4359 = vadd.f32 %v4334, %v4358
        %4360 = vdwg.mxu0
        %v4362 = vperm.slane %v3216, 0
        %v4363 = vperm.slane %v3216, 1
        %v4366 = vmul.f32 %v4174, %v4362
        %v4367 = vmul.f32 %v4359, %v4363
        %v4370 = vrot.slane %v4366, 1
        %v4371 = vrot.slane %v4367, 1
        %v4374 = vmul.f32 %v4174, %v4370
        %v4375 = vmul.f32 %v4359, %v4371
        %v4378 = vrot.slane %v4375, 7
        %v4379 = vsel %vm869, %v4374, %v4378
        %v4381 = vsub.f32 %v3217, %v4379
        %v4382 = vperm.slane %v4366, 1
        %v4383 = vperm.slane %v4367, 1
        %v4384 = vmul.f32 %v3168, %v4382
        %v4385 = vmul.f32 %v3197, %v4383
        %v4386 = vmul.f32 %v3170, %v4382
        %v4387 = vmul.f32 %v3199, %v4383
        %v4388 = vmul.f32 %v3173, %v4382
        %v4389 = vmul.f32 %v3202, %v4383
        %v4390 = vmul.f32 %v3175, %v4382
        %v4391 = vmul.f32 %v3204, %v4383
        %v4392 = vmul.f32 %v3178, %v4382
        %v4393 = vmul.f32 %v3207, %v4383
        %v4394 = vmul.f32 %v3180, %v4382
        %v4395 = vmul.f32 %v3209, %v4383
        %v4396 = vmul.f32 %v3183, %v4382
        %v4397 = vmul.f32 %v3212, %v4383
        %v4398 = vmul.f32 %v3185, %v4382
        %v4399 = vmul.f32 %v3214, %v4383
        %v4401 = vperm.slane %v4381, 0
        %v4402 = vperm.slane %v4381, 1
        %v4405 = vadd.f32 %v4384, %v4401
        %v4406 = vadd.f32 %v4385, %v4402
        %v4407 = vadd.f32 %v4386, %v4401
        %v4408 = vadd.f32 %v4387, %v4402
        %v4409 = vadd.f32 %v4388, %v4401
        %v4410 = vadd.f32 %v4389, %v4402
        %v4411 = vadd.f32 %v4390, %v4401
        %v4412 = vadd.f32 %v4391, %v4402
        %v4413 = vadd.f32 %v4392, %v4401
        %v4414 = vadd.f32 %v4393, %v4402
        %v4415 = vadd.f32 %v4394, %v4401
        %v4416 = vadd.f32 %v4395, %v4402
        %v4417 = vadd.f32 %v4396, %v4401
        %v4418 = vadd.f32 %v4397, %v4402
        %v4419 = vadd.f32 %v4398, %v4401
        %v4420 = vadd.f32 %v4399, %v4402
        %v4435 = vrot.slane %v3088, 7
        %v4436 = vrot.slane %v3089, 7
        %v4437 = vrot.slane %v3090, 7
        %v4438 = vsel %vm869, %v4435, %v4437
        %v4439 = vrot.slane %v3091, 7
        %v4440 = vsel %vm869, %v4436, %v4439
        %v4441 = vrot.slane %v3092, 7
        %v4442 = vsel %vm869, %v4437, %v4441
        %v4443 = vrot.slane %v3093, 7
        %v4444 = vsel %vm869, %v4439, %v4443
        %v4445 = vrot.slane %v3094, 7
        %v4446 = vsel %vm869, %v4441, %v4445
        %v4447 = vrot.slane %v3095, 7
        %v4448 = vsel %vm869, %v4443, %v4447
        %v4449 = vrot.slane %v3096, 7
        %v4450 = vsel %vm869, %v4445, %v4449
        %v4451 = vrot.slane %v3097, 7
        %v4452 = vsel %vm869, %v4447, %v4451
        %v4453 = vrot.slane %v3098, 7
        %v4454 = vsel %vm869, %v4449, %v4453
        %v4455 = vrot.slane %v3099, 7
        %v4456 = vsel %vm869, %v4451, %v4455
        %v4457 = vrot.slane %v3100, 7
        %v4458 = vsel %vm869, %v4453, %v4457
        %v4459 = vrot.slane %v3101, 7
        %v4460 = vsel %vm869, %v4455, %v4459
        %v4475 = vsel %vm869, 0.0, %v4435
        %v4476 = vsel %vm869, 0.0, %v4436
        %v4477 = vsel %vm900, %v4475, 0.0
        %v4478 = vsel %vm900, %v4476, 0.0
        %v4479 = vsel %vm901, %v4438, 0.0
        %v4480 = vsel %vm901, %v4440, 0.0
        %v4481 = vsel %vm902, %v4442, 0.0
        %v4482 = vsel %vm902, %v4444, 0.0
        %v4483 = vsel %vm903, %v4446, 0.0
        %v4484 = vsel %vm903, %v4448, 0.0
        %v4485 = vsel %vm904, %v4450, 0.0
        %v4486 = vsel %vm904, %v4452, 0.0
        %v4487 = vsel %vm905, %v4454, 0.0
        %v4488 = vsel %vm905, %v4456, 0.0
        %v4489 = vsel %vm906, %v4458, 0.0
        %v4490 = vsel %vm906, %v4460, 0.0
        %v4491 = vpack.c.bf16 %v4478, %v4477
        %v4492 = vpack.c.bf16 %v4480, %v4479
        %v4493 = vpack.c.bf16 %v4482, %v4481
        %v4494 = vpack.c.bf16 %v4484, %v4483
        %v4495 = vpack.c.bf16 %v4486, %v4485
        %v4496 = vpack.c.bf16 %v4488, %v4487
        %v4497 = vpack.c.bf16 %v4490, %v4489
        %4498 = vst [vmem:[#allocation3] sm:$0xff] %v914
        %4499 = vst [vmem:[#allocation3 + $0x48] sm:$0xff] %v4491
        %4500 = vst [vmem:[#allocation3 + $0x90] sm:$0xff] %v4492
        %4501 = vst [vmem:[#allocation3 + $0xd8] sm:$0xff] %v4493
        %4502 = vst [vmem:[#allocation3 + $0x120] sm:$0xff] %v4494
        %4503 = vst [vmem:[#allocation3 + $0x168] sm:$0xff] %v4495
        %4504 = vst [vmem:[#allocation3 + $0x1b0] sm:$0xff] %v4496
        %4505 = vst [vmem:[#allocation3 + $0x1f8] sm:$0xff] %v4497
        %v4506 = vpack.c.bf16 %v3089, %v3088
        %v4507 = vpack.c.bf16 %v3091, %v3090
        %v4508 = vpack.c.bf16 %v3093, %v3092
        %v4509 = vpack.c.bf16 %v3095, %v3094
        %v4510 = vpack.c.bf16 %v3097, %v3096
        %v4511 = vpack.c.bf16 %v3099, %v3098
        %v4512 = vpack.c.bf16 %v3101, %v3100
        %4513 = vst [vmem:[#allocation3 + $0x8] sm:$0xff] %v914
        %4514 = vst [vmem:[#allocation3 + $0x50] sm:$0xff] %v4506
        %4515 = vst [vmem:[#allocation3 + $0x98] sm:$0xff] %v4507
        %4516 = vst [vmem:[#allocation3 + $0xe0] sm:$0xff] %v4508
        %4517 = vst [vmem:[#allocation3 + $0x128] sm:$0xff] %v4509
        %4518 = vst [vmem:[#allocation3 + $0x170] sm:$0xff] %v4510
        %4519 = vst [vmem:[#allocation3 + $0x1b8] sm:$0xff] %v4511
        %4520 = vst [vmem:[#allocation3 + $0x200] sm:$0xff] %v4512
        %v4523 = vrot.slane %v3088, 1
        %v4524 = vrot.slane %v3089, 1
        %v4525 = vrot.slane %v3090, 1
        %v4526 = vsel %vm980, %v4523, %v4525
        %v4527 = vrot.slane %v3091, 1
        %v4528 = vsel %vm980, %v4524, %v4527
        %v4529 = vrot.slane %v3092, 1
        %v4530 = vsel %vm980, %v4525, %v4529
        %v4531 = vrot.slane %v3093, 1
        %v4532 = vsel %vm980, %v4527, %v4531
        %v4533 = vrot.slane %v3094, 1
        %v4534 = vsel %vm980, %v4529, %v4533
        %v4535 = vrot.slane %v3095, 1
        %v4536 = vsel %vm980, %v4531, %v4535
        %v4537 = vrot.slane %v3096, 1
        %v4538 = vsel %vm980, %v4533, %v4537
        %v4539 = vrot.slane %v3097, 1
        %v4540 = vsel %vm980, %v4535, %v4539
        %v4541 = vrot.slane %v3098, 1
        %v4542 = vsel %vm980, %v4537, %v4541
        %v4543 = vrot.slane %v3099, 1
        %v4544 = vsel %vm980, %v4539, %v4543
        %v4545 = vrot.slane %v3100, 1
        %v4546 = vsel %vm980, %v4541, %v4545
        %v4547 = vrot.slane %v3101, 1
        %v4548 = vsel %vm980, %v4543, %v4547
        %v4549 = vrot.slane %v3102, 1
        %v4550 = vsel %vm980, %v4545, %v4549
        %v4551 = vrot.slane %v3103, 1
        %v4552 = vsel %vm980, %v4547, %v4551
        %v4569 = vsel %vm980, 0.0, %v4523
        %v4570 = vsel %vm980, 0.0, %v4524
        %v4571 = vsel %vm1013, %v4569, 0.0
        %v4572 = vsel %vm1013, %v4570, 0.0
        %v4573 = vsel %vm1014, %v4526, 0.0
        %v4574 = vsel %vm1014, %v4528, 0.0
        %v4575 = vsel %vm1015, %v4530, 0.0
        %v4576 = vsel %vm1015, %v4532, 0.0
        %v4577 = vsel %vm1016, %v4534, 0.0
        %v4578 = vsel %vm1016, %v4536, 0.0
        %v4579 = vsel %vm1017, %v4538, 0.0
        %v4580 = vsel %vm1017, %v4540, 0.0
        %v4581 = vsel %vm1018, %v4542, 0.0
        %v4582 = vsel %vm1018, %v4544, 0.0
        %v4583 = vsel %vm1019, %v4546, 0.0
        %v4584 = vsel %vm1019, %v4548, 0.0
        %v4585 = vsel %vm1020, %v4550, 0.0
        %v4586 = vsel %vm1020, %v4552, 0.0
        %v4587 = vpack.c.bf16 %v4572, %v4571
        %v4588 = vpack.c.bf16 %v4574, %v4573
        %v4589 = vpack.c.bf16 %v4576, %v4575
        %v4590 = vpack.c.bf16 %v4578, %v4577
        %v4591 = vpack.c.bf16 %v4580, %v4579
        %v4592 = vpack.c.bf16 %v4582, %v4581
        %v4593 = vpack.c.bf16 %v4584, %v4583
        %v4594 = vpack.c.bf16 %v4586, %v4585
        %4595 = vst [vmem:[#allocation3 + $0x10] sm:$0xff] %v4587
        %4596 = vst [vmem:[#allocation3 + $0x58] sm:$0xff] %v4588
        %4597 = vst [vmem:[#allocation3 + $0xa0] sm:$0xff] %v4589
        %4598 = vst [vmem:[#allocation3 + $0xe8] sm:$0xff] %v4590
        %4599 = vst [vmem:[#allocation3 + $0x130] sm:$0xff] %v4591
        %4600 = vst [vmem:[#allocation3 + $0x178] sm:$0xff] %v4592
        %4601 = vst [vmem:[#allocation3 + $0x1c0] sm:$0xff] %v4593
        %4602 = vst [vmem:[#allocation3 + $0x208] sm:$0xff] %v4594
        %v4603 = vrot.slane %v3102, 7
        %v4604 = vsel %vm869, %v4457, %v4603
        %v4605 = vrot.slane %v3103, 7
        %v4606 = vsel %vm869, %v4459, %v4605
        %v4609 = vsel %vm899, %v4475, 0.0
        %v4610 = vsel %vm899, %v4476, 0.0
        %v4611 = vsel %vm900, %v4438, 0.0
        %v4612 = vsel %vm900, %v4440, 0.0
        %v4613 = vsel %vm901, %v4442, 0.0
        %v4614 = vsel %vm901, %v4444, 0.0
        %v4615 = vsel %vm902, %v4446, 0.0
        %v4616 = vsel %vm902, %v4448, 0.0
        %v4617 = vsel %vm903, %v4450, 0.0
        %v4618 = vsel %vm903, %v4452, 0.0
        %v4619 = vsel %vm904, %v4454, 0.0
        %v4620 = vsel %vm904, %v4456, 0.0
        %v4621 = vsel %vm905, %v4458, 0.0
        %v4622 = vsel %vm905, %v4460, 0.0
        %v4623 = vsel %vm906, %v4604, 0.0
        %v4624 = vsel %vm906, %v4606, 0.0
        %v4625 = vpack.c.bf16 %v4610, %v4609
        %v4626 = vpack.c.bf16 %v4612, %v4611
        %v4627 = vpack.c.bf16 %v4614, %v4613
        %v4628 = vpack.c.bf16 %v4616, %v4615
        %v4629 = vpack.c.bf16 %v4618, %v4617
        %v4630 = vpack.c.bf16 %v4620, %v4619
        %v4631 = vpack.c.bf16 %v4622, %v4621
        %v4632 = vpack.c.bf16 %v4624, %v4623
        %4633 = vst [vmem:[#allocation3 + $0x18] sm:$0xff] %v4625
        %4634 = vst [vmem:[#allocation3 + $0x60] sm:$0xff] %v4626
        %4635 = vst [vmem:[#allocation3 + $0xa8] sm:$0xff] %v4627
        %4636 = vst [vmem:[#allocation3 + $0xf0] sm:$0xff] %v4628
        %4637 = vst [vmem:[#allocation3 + $0x138] sm:$0xff] %v4629
        %4638 = vst [vmem:[#allocation3 + $0x180] sm:$0xff] %v4630
        %4639 = vst [vmem:[#allocation3 + $0x1c8] sm:$0xff] %v4631
        %4640 = vst [vmem:[#allocation3 + $0x210] sm:$0xff] %v4632
        %v4641 = vpack.c.bf16 %v3103, %v3102
        %4642 = vst [vmem:[#allocation3 + $0x20] sm:$0xff] %v4506
        %4643 = vst [vmem:[#allocation3 + $0x68] sm:$0xff] %v4507
        %4644 = vst [vmem:[#allocation3 + $0xb0] sm:$0xff] %v4508
        %4645 = vst [vmem:[#allocation3 + $0xf8] sm:$0xff] %v4509
        %4646 = vst [vmem:[#allocation3 + $0x140] sm:$0xff] %v4510
        %4647 = vst [vmem:[#allocation3 + $0x188] sm:$0xff] %v4511
        %4648 = vst [vmem:[#allocation3 + $0x1d0] sm:$0xff] %v4512
        %4649 = vst [vmem:[#allocation3 + $0x218] sm:$0xff] %v4641
        %v4652 = vsel %vm980, %v4549, 0.0
        %v4653 = vsel %vm980, %v4551, 0.0
        %v4654 = vsel %vm1013, %v4526, 0.0
        %v4655 = vsel %vm1013, %v4528, 0.0
        %v4656 = vsel %vm1014, %v4530, 0.0
        %v4657 = vsel %vm1014, %v4532, 0.0
        %v4658 = vsel %vm1015, %v4534, 0.0
        %v4659 = vsel %vm1015, %v4536, 0.0
        %v4660 = vsel %vm1016, %v4538, 0.0
        %v4661 = vsel %vm1016, %v4540, 0.0
        %v4662 = vsel %vm1017, %v4542, 0.0
        %v4663 = vsel %vm1017, %v4544, 0.0
        %v4664 = vsel %vm1018, %v4546, 0.0
        %v4665 = vsel %vm1018, %v4548, 0.0
        %v4666 = vsel %vm1019, %v4550, 0.0
        %v4667 = vsel %vm1019, %v4552, 0.0
        %v4668 = vsel %vm1020, %v4652, 0.0
        %v4669 = vsel %vm1020, %v4653, 0.0
        %v4670 = vpack.c.bf16 %v4655, %v4654
        %v4671 = vpack.c.bf16 %v4657, %v4656
        %v4672 = vpack.c.bf16 %v4659, %v4658
        %v4673 = vpack.c.bf16 %v4661, %v4660
        %v4674 = vpack.c.bf16 %v4663, %v4662
        %v4675 = vpack.c.bf16 %v4665, %v4664
        %v4676 = vpack.c.bf16 %v4667, %v4666
        %v4677 = vpack.c.bf16 %v4669, %v4668
        %4678 = vst [vmem:[#allocation3 + $0x28] sm:$0xff] %v4670
        %4679 = vst [vmem:[#allocation3 + $0x70] sm:$0xff] %v4671
        %4680 = vst [vmem:[#allocation3 + $0xb8] sm:$0xff] %v4672
        %4681 = vst [vmem:[#allocation3 + $0x100] sm:$0xff] %v4673
        %4682 = vst [vmem:[#allocation3 + $0x148] sm:$0xff] %v4674
        %4683 = vst [vmem:[#allocation3 + $0x190] sm:$0xff] %v4675
        %4684 = vst [vmem:[#allocation3 + $0x1d8] sm:$0xff] %v4676
        %4685 = vst [vmem:[#allocation3 + $0x220] sm:$0xff] %v4677
        %v4688 = vsel %vm869, %v4603, 0.0
        %v4689 = vsel %vm869, %v4605, 0.0
        %v4690 = vsel %vm899, %v4438, 0.0
        %v4691 = vsel %vm899, %v4440, 0.0
        %v4692 = vsel %vm900, %v4442, 0.0
        %v4693 = vsel %vm900, %v4444, 0.0
        %v4694 = vsel %vm901, %v4446, 0.0
        %v4695 = vsel %vm901, %v4448, 0.0
        %v4696 = vsel %vm902, %v4450, 0.0
        %v4697 = vsel %vm902, %v4452, 0.0
        %v4698 = vsel %vm903, %v4454, 0.0
        %v4699 = vsel %vm903, %v4456, 0.0
        %v4700 = vsel %vm904, %v4458, 0.0
        %v4701 = vsel %vm904, %v4460, 0.0
        %v4702 = vsel %vm905, %v4604, 0.0
        %v4703 = vsel %vm905, %v4606, 0.0
        %v4704 = vsel %vm906, %v4688, 0.0
        %v4705 = vsel %vm906, %v4689, 0.0
        %v4706 = vpack.c.bf16 %v4691, %v4690
        %v4707 = vpack.c.bf16 %v4693, %v4692
        %v4708 = vpack.c.bf16 %v4695, %v4694
        %v4709 = vpack.c.bf16 %v4697, %v4696
        %v4710 = vpack.c.bf16 %v4699, %v4698
        %v4711 = vpack.c.bf16 %v4701, %v4700
        %v4712 = vpack.c.bf16 %v4703, %v4702
        %v4713 = vpack.c.bf16 %v4705, %v4704
        %4714 = vst [vmem:[#allocation3 + $0x30] sm:$0xff] %v4706
        %4715 = vst [vmem:[#allocation3 + $0x78] sm:$0xff] %v4707
        %4716 = vst [vmem:[#allocation3 + $0xc0] sm:$0xff] %v4708
        %4717 = vst [vmem:[#allocation3 + $0x108] sm:$0xff] %v4709
        %4718 = vst [vmem:[#allocation3 + $0x150] sm:$0xff] %v4710
        %4719 = vst [vmem:[#allocation3 + $0x198] sm:$0xff] %v4711
        %4720 = vst [vmem:[#allocation3 + $0x1e0] sm:$0xff] %v4712
        %4721 = vst [vmem:[#allocation3 + $0x228] sm:$0xff] %v4713
        %4722 = vst [vmem:[#allocation3 + $0x38] sm:$0xff] %v4507
        %4723 = vst [vmem:[#allocation3 + $0x80] sm:$0xff] %v4508
        %4724 = vst [vmem:[#allocation3 + $0xc8] sm:$0xff] %v4509
        %4725 = vst [vmem:[#allocation3 + $0x110] sm:$0xff] %v4510
        %4726 = vst [vmem:[#allocation3 + $0x158] sm:$0xff] %v4511
        %4727 = vst [vmem:[#allocation3 + $0x1a0] sm:$0xff] %v4512
        %4728 = vst [vmem:[#allocation3 + $0x1e8] sm:$0xff] %v4641
        %4729 = vst [vmem:[#allocation3 + $0x230] sm:$0xff] %v914
        %v4730 = vsel %vm1013, %v4530, 0.0
        %v4731 = vsel %vm1013, %v4532, 0.0
        %v4732 = vsel %vm1014, %v4534, 0.0
        %v4733 = vsel %vm1014, %v4536, 0.0
        %v4734 = vsel %vm1015, %v4538, 0.0
        %v4735 = vsel %vm1015, %v4540, 0.0
        %v4736 = vsel %vm1016, %v4542, 0.0
        %v4737 = vsel %vm1016, %v4544, 0.0
        %v4738 = vsel %vm1017, %v4546, 0.0
        %v4739 = vsel %vm1017, %v4548, 0.0
        %v4740 = vsel %vm1018, %v4550, 0.0
        %v4741 = vsel %vm1018, %v4552, 0.0
        %v4742 = vsel %vm1019, %v4652, 0.0
        %v4743 = vsel %vm1019, %v4653, 0.0
        %v4744 = vpack.c.bf16 %v4731, %v4730
        %v4745 = vpack.c.bf16 %v4733, %v4732
        %v4746 = vpack.c.bf16 %v4735, %v4734
        %v4747 = vpack.c.bf16 %v4737, %v4736
        %v4748 = vpack.c.bf16 %v4739, %v4738
        %v4749 = vpack.c.bf16 %v4741, %v4740
        %v4750 = vpack.c.bf16 %v4743, %v4742
        %4751 = vst [vmem:[#allocation3 + $0x40] sm:$0xff] %v4744
        %4752 = vst [vmem:[#allocation3 + $0x88] sm:$0xff] %v4745
        %4753 = vst [vmem:[#allocation3 + $0xd0] sm:$0xff] %v4746
        %4754 = vst [vmem:[#allocation3 + $0x118] sm:$0xff] %v4747
        %4755 = vst [vmem:[#allocation3 + $0x160] sm:$0xff] %v4748
        %4756 = vst [vmem:[#allocation3 + $0x1a8] sm:$0xff] %v4749
        %4757 = vst [vmem:[#allocation3 + $0x1f0] sm:$0xff] %v4750
        %4758 = vst [vmem:[#allocation3 + $0x238] sm:$0xff] %v914
        %v4759 = vld [vmem:[#allocation3] sm:$0xff]
        %v4760 = vld [vmem:[#allocation3 + $0x8] sm:$0xff]
        %v4761 = vld [vmem:[#allocation3 + $0x10] sm:$0xff]
        %v4762 = vld [vmem:[#allocation3 + $0x18] sm:$0xff]
        %v4763 = vld [vmem:[#allocation3 + $0x20] sm:$0xff]
        %v4764 = vld [vmem:[#allocation3 + $0x28] sm:$0xff]
        %v4765 = vld [vmem:[#allocation3 + $0x30] sm:$0xff]
        %v4766 = vld [vmem:[#allocation3 + $0x38] sm:$0xff]
        %v4767 = vld [vmem:[#allocation3 + $0x40] sm:$0xff]
        %v4768 = vld [vmem:[#allocation3 + $0x48] sm:$0xff]
        %v4769 = vld [vmem:[#allocation3 + $0x50] sm:$0xff]
        %v4770 = vld [vmem:[#allocation3 + $0x58] sm:$0xff]
        %v4771 = vld [vmem:[#allocation3 + $0x60] sm:$0xff]
        %v4772 = vld [vmem:[#allocation3 + $0x68] sm:$0xff]
        %v4773 = vld [vmem:[#allocation3 + $0x70] sm:$0xff]
        %v4774 = vld [vmem:[#allocation3 + $0x78] sm:$0xff]
        %v4775 = vld [vmem:[#allocation3 + $0x80] sm:$0xff]
        %v4776 = vld [vmem:[#allocation3 + $0x88] sm:$0xff]
        %v4777 = vld [vmem:[#allocation3 + $0x90] sm:$0xff]
        %v4778 = vld [vmem:[#allocation3 + $0x98] sm:$0xff]
        %v4779 = vld [vmem:[#allocation3 + $0xa0] sm:$0xff]
        %v4780 = vld [vmem:[#allocation3 + $0xa8] sm:$0xff]
        %v4781 = vld [vmem:[#allocation3 + $0xb0] sm:$0xff]
        %v4782 = vld [vmem:[#allocation3 + $0xb8] sm:$0xff]
        %v4783 = vld [vmem:[#allocation3 + $0xc0] sm:$0xff]
        %v4784 = vld [vmem:[#allocation3 + $0xc8] sm:$0xff]
        %v4785 = vld [vmem:[#allocation3 + $0xd0] sm:$0xff]
        %v4786 = vld [vmem:[#allocation3 + $0xd8] sm:$0xff]
        %v4787 = vld [vmem:[#allocation3 + $0xe0] sm:$0xff]
        %v4788 = vld [vmem:[#allocation3 + $0xe8] sm:$0xff]
        %v4789 = vld [vmem:[#allocation3 + $0xf0] sm:$0xff]
        %v4790 = vld [vmem:[#allocation3 + $0xf8] sm:$0xff]
        %v4791 = vld [vmem:[#allocation3 + $0x100] sm:$0xff]
        %v4792 = vld [vmem:[#allocation3 + $0x108] sm:$0xff]
        %v4793 = vld [vmem:[#allocation3 + $0x110] sm:$0xff]
        %v4794 = vld [vmem:[#allocation3 + $0x118] sm:$0xff]
        %v4795 = vld [vmem:[#allocation3 + $0x120] sm:$0xff]
        %v4796 = vld [vmem:[#allocation3 + $0x128] sm:$0xff]
        %v4797 = vld [vmem:[#allocation3 + $0x130] sm:$0xff]
        %v4798 = vld [vmem:[#allocation3 + $0x138] sm:$0xff]
        %v4799 = vld [vmem:[#allocation3 + $0x140] sm:$0xff]
        %v4800 = vld [vmem:[#allocation3 + $0x148] sm:$0xff]
        %v4801 = vld [vmem:[#allocation3 + $0x150] sm:$0xff]
        %v4802 = vld [vmem:[#allocation3 + $0x158] sm:$0xff]
        %v4803 = vld [vmem:[#allocation3 + $0x160] sm:$0xff]
        %v4804 = vld [vmem:[#allocation3 + $0x168] sm:$0xff]
        %v4805 = vld [vmem:[#allocation3 + $0x170] sm:$0xff]
        %v4806 = vld [vmem:[#allocation3 + $0x178] sm:$0xff]
        %v4807 = vld [vmem:[#allocation3 + $0x180] sm:$0xff]
        %v4808 = vld [vmem:[#allocation3 + $0x188] sm:$0xff]
        %v4809 = vld [vmem:[#allocation3 + $0x190] sm:$0xff]
        %v4810 = vld [vmem:[#allocation3 + $0x198] sm:$0xff]
        %v4811 = vld [vmem:[#allocation3 + $0x1a0] sm:$0xff]
        %v4812 = vld [vmem:[#allocation3 + $0x1a8] sm:$0xff]
        %v4813 = vld [vmem:[#allocation3 + $0x1b0] sm:$0xff]
        %v4814 = vld [vmem:[#allocation3 + $0x1b8] sm:$0xff]
        %v4815 = vld [vmem:[#allocation3 + $0x1c0] sm:$0xff]
        %v4816 = vld [vmem:[#allocation3 + $0x1c8] sm:$0xff]
        %v4817 = vld [vmem:[#allocation3 + $0x1d0] sm:$0xff]
        %v4818 = vld [vmem:[#allocation3 + $0x1d8] sm:$0xff]
        %v4819 = vld [vmem:[#allocation3 + $0x1e0] sm:$0xff]
        %v4820 = vld [vmem:[#allocation3 + $0x1e8] sm:$0xff]
        %v4821 = vld [vmem:[#allocation3 + $0x1f0] sm:$0xff]
        %v4822 = vld [vmem:[#allocation3 + $0x1f8] sm:$0xff]
        %v4823 = vld [vmem:[#allocation3 + $0x200] sm:$0xff]
        %v4824 = vld [vmem:[#allocation3 + $0x208] sm:$0xff]
        %v4825 = vld [vmem:[#allocation3 + $0x210] sm:$0xff]
        %v4826 = vld [vmem:[#allocation3 + $0x218] sm:$0xff]
        %v4827 = vld [vmem:[#allocation3 + $0x220] sm:$0xff]
        %v4828 = vld [vmem:[#allocation3 + $0x228] sm:$0xff]
        %v4829 = vld [vmem:[#allocation3 + $0x230] sm:$0xff]
        %v4830 = vld [vmem:[#allocation3 + $0x238] sm:$0xff]
        %v4831 = vld [vmem:[#allocation11] sm:$0xff]
        %v4832 = vld [vmem:[#allocation11 + $0x8] sm:$0xff]
        %v4833 = vld [vmem:[#allocation11 + $0x10] sm:$0xff]
        %v4834 = vld [vmem:[#allocation11 + $0x18] sm:$0xff]
        %v4835 = vld [vmem:[#allocation11 + $0x20] sm:$0xff]
        %v4836 = vld [vmem:[#allocation11 + $0x28] sm:$0xff]
        %v4837 = vld [vmem:[#allocation11 + $0x30] sm:$0xff]
        %v4838 = vld [vmem:[#allocation11 + $0x38] sm:$0xff]
        %v4839 = vld [vmem:[#allocation11 + $0x40] sm:$0xff]
        %v4840 = vld [vmem:[#allocation11 + $0x48] sm:$0xff]
        %v4841 = vld [vmem:[#allocation11 + $0x50] sm:$0xff]
        %v4842 = vld [vmem:[#allocation11 + $0x58] sm:$0xff]
        %v4843 = vld [vmem:[#allocation11 + $0x60] sm:$0xff]
        %v4844 = vld [vmem:[#allocation11 + $0x68] sm:$0xff]
        %v4845 = vld [vmem:[#allocation11 + $0x70] sm:$0xff]
        %v4846 = vld [vmem:[#allocation11 + $0x78] sm:$0xff]
        %v4847 = vld [vmem:[#allocation11 + $0x80] sm:$0xff]
        %v4848 = vld [vmem:[#allocation11 + $0x88] sm:$0xff]
        %v4849 = vld [vmem:[#allocation11 + $0x90] sm:$0xff]
        %v4850 = vld [vmem:[#allocation11 + $0x98] sm:$0xff]
        %v4851 = vld [vmem:[#allocation11 + $0xa0] sm:$0xff]
        %v4852 = vld [vmem:[#allocation11 + $0xa8] sm:$0xff]
        %v4853 = vld [vmem:[#allocation11 + $0xb0] sm:$0xff]
        %v4854 = vld [vmem:[#allocation11 + $0xb8] sm:$0xff]
        %v4855 = vld [vmem:[#allocation11 + $0xc0] sm:$0xff]
        %v4856 = vld [vmem:[#allocation11 + $0xc8] sm:$0xff]
        %v4857 = vld [vmem:[#allocation11 + $0xd0] sm:$0xff]
        %v4858 = vld [vmem:[#allocation11 + $0xd8] sm:$0xff]
        %v4859 = vld [vmem:[#allocation11 + $0xe0] sm:$0xff]
        %v4860 = vld [vmem:[#allocation11 + $0xe8] sm:$0xff]
        %v4861 = vld [vmem:[#allocation11 + $0xf0] sm:$0xff]
        %v4862 = vld [vmem:[#allocation11 + $0xf8] sm:$0xff]
        %v4863 = vld [vmem:[#allocation11 + $0x100] sm:$0xff]
        %v4864 = vld [vmem:[#allocation11 + $0x108] sm:$0xff]
        %v4865 = vld [vmem:[#allocation11 + $0x110] sm:$0xff]
        %v4866 = vld [vmem:[#allocation11 + $0x118] sm:$0xff]
        %v4867 = vld [vmem:[#allocation11 + $0x120] sm:$0xff]
        %v4868 = vld [vmem:[#allocation11 + $0x128] sm:$0xff]
        %v4869 = vld [vmem:[#allocation11 + $0x130] sm:$0xff]
        %v4870 = vld [vmem:[#allocation11 + $0x138] sm:$0xff]
        %v4871 = vld [vmem:[#allocation11 + $0x140] sm:$0xff]
        %v4872 = vld [vmem:[#allocation11 + $0x148] sm:$0xff]
        %v4873 = vld [vmem:[#allocation11 + $0x150] sm:$0xff]
        %v4874 = vld [vmem:[#allocation11 + $0x158] sm:$0xff]
        %v4875 = vld [vmem:[#allocation11 + $0x160] sm:$0xff]
        %v4876 = vld [vmem:[#allocation11 + $0x168] sm:$0xff]
        %v4877 = vld [vmem:[#allocation11 + $0x170] sm:$0xff]
        %v4878 = vld [vmem:[#allocation11 + $0x178] sm:$0xff]
        %v4879 = vld [vmem:[#allocation11 + $0x180] sm:$0xff]
        %v4880 = vld [vmem:[#allocation11 + $0x188] sm:$0xff]
        %v4881 = vld [vmem:[#allocation11 + $0x190] sm:$0xff]
        %v4882 = vld [vmem:[#allocation11 + $0x198] sm:$0xff]
        %v4883 = vld [vmem:[#allocation11 + $0x1a0] sm:$0xff]
        %v4884 = vld [vmem:[#allocation11 + $0x1a8] sm:$0xff]
        %v4885 = vld [vmem:[#allocation11 + $0x1b0] sm:$0xff]
        %v4886 = vld [vmem:[#allocation11 + $0x1b8] sm:$0xff]
        %v4887 = vld [vmem:[#allocation11 + $0x1c0] sm:$0xff]
        %v4888 = vld [vmem:[#allocation11 + $0x1c8] sm:$0xff]
        %v4889 = vld [vmem:[#allocation11 + $0x1d0] sm:$0xff]
        %v4890 = vld [vmem:[#allocation11 + $0x1d8] sm:$0xff]
        %v4891 = vld [vmem:[#allocation11 + $0x1e0] sm:$0xff]
        %v4892 = vld [vmem:[#allocation11 + $0x1e8] sm:$0xff]
        %v4893 = vld [vmem:[#allocation11 + $0x1f0] sm:$0xff]
        %v4894 = vld [vmem:[#allocation11 + $0x1f8] sm:$0xff]
        %v4895 = vld [vmem:[#allocation11 + $0x200] sm:$0xff]
        %v4896 = vld [vmem:[#allocation11 + $0x208] sm:$0xff]
        %v4897 = vld [vmem:[#allocation11 + $0x210] sm:$0xff]
        %v4898 = vld [vmem:[#allocation11 + $0x218] sm:$0xff]
        %v4899 = vld [vmem:[#allocation11 + $0x220] sm:$0xff]
        %v4900 = vld [vmem:[#allocation11 + $0x228] sm:$0xff]
        %v4901 = vld [vmem:[#allocation11 + $0x230] sm:$0xff]
        %v4902 = vld [vmem:[#allocation11 + $0x238] sm:$0xff]
        %v4903 = vld [vmem:[#allocation11 + $0x240] sm:$0xff]
        %v4904 = vld [vmem:[#allocation11 + $0x248] sm:$0xff]
        %v4905 = vld [vmem:[#allocation11 + $0x250] sm:$0xff]
        %v4906 = vld [vmem:[#allocation11 + $0x258] sm:$0xff]
        %v4907 = vld [vmem:[#allocation11 + $0x260] sm:$0xff]
        %v4908 = vld [vmem:[#allocation11 + $0x268] sm:$0xff]
        %v4909 = vld [vmem:[#allocation11 + $0x270] sm:$0xff]
        %v4910 = vld [vmem:[#allocation11 + $0x278] sm:$0xff]
        %v4911 = vld [vmem:[#allocation11 + $0x280] sm:$0xff]
        %v4912 = vld [vmem:[#allocation11 + $0x288] sm:$0xff]
        %v4913 = vld [vmem:[#allocation11 + $0x290] sm:$0xff]
        %v4914 = vld [vmem:[#allocation11 + $0x298] sm:$0xff]
        %v4915 = vld [vmem:[#allocation11 + $0x2a0] sm:$0xff]
        %v4916 = vld [vmem:[#allocation11 + $0x2a8] sm:$0xff]
        %v4917 = vld [vmem:[#allocation11 + $0x2b0] sm:$0xff]
        %v4918 = vld [vmem:[#allocation11 + $0x2b8] sm:$0xff]
        %v4919 = vld [vmem:[#allocation11 + $0x2c0] sm:$0xff]
        %v4920 = vld [vmem:[#allocation11 + $0x2c8] sm:$0xff]
        %v4921 = vld [vmem:[#allocation11 + $0x2d0] sm:$0xff]
        %v4922 = vld [vmem:[#allocation11 + $0x2d8] sm:$0xff]
        %v4923 = vld [vmem:[#allocation11 + $0x2e0] sm:$0xff]
        %v4924 = vld [vmem:[#allocation11 + $0x2e8] sm:$0xff]
        %v4925 = vld [vmem:[#allocation11 + $0x2f0] sm:$0xff]
        %v4926 = vld [vmem:[#allocation11 + $0x2f8] sm:$0xff]
        %v4927 = vld [vmem:[#allocation11 + $0x300] sm:$0xff]
        %v4928 = vld [vmem:[#allocation11 + $0x308] sm:$0xff]
        %v4929 = vld [vmem:[#allocation11 + $0x310] sm:$0xff]
        %v4930 = vld [vmem:[#allocation11 + $0x318] sm:$0xff]
        %v4931 = vld [vmem:[#allocation11 + $0x320] sm:$0xff]
        %v4932 = vld [vmem:[#allocation11 + $0x328] sm:$0xff]
        %v4933 = vld [vmem:[#allocation11 + $0x330] sm:$0xff]
        %v4934 = vld [vmem:[#allocation11 + $0x338] sm:$0xff]
        %v4935 = vld [vmem:[#allocation11 + $0x340] sm:$0xff]
        %v4936 = vld [vmem:[#allocation11 + $0x348] sm:$0xff]
        %v4937 = vld [vmem:[#allocation11 + $0x350] sm:$0xff]
        %v4938 = vld [vmem:[#allocation11 + $0x358] sm:$0xff]
        %v4939 = vld [vmem:[#allocation11 + $0x360] sm:$0xff]
        %v4940 = vld [vmem:[#allocation11 + $0x368] sm:$0xff]
        %v4941 = vld [vmem:[#allocation11 + $0x370] sm:$0xff]
        %v4942 = vld [vmem:[#allocation11 + $0x378] sm:$0xff]
        %v4943 = vld [vmem:[#allocation11 + $0x380] sm:$0xff]
        %v4944 = vld [vmem:[#allocation11 + $0x388] sm:$0xff]
        %v4945 = vld [vmem:[#allocation11 + $0x390] sm:$0xff]
        %v4946 = vld [vmem:[#allocation11 + $0x398] sm:$0xff]
        %v4947 = vld [vmem:[#allocation11 + $0x3a0] sm:$0xff]
        %v4948 = vld [vmem:[#allocation11 + $0x3a8] sm:$0xff]
        %v4949 = vld [vmem:[#allocation11 + $0x3b0] sm:$0xff]
        %v4950 = vld [vmem:[#allocation11 + $0x3b8] sm:$0xff]
        %v4951 = vld [vmem:[#allocation11 + $0x3c0] sm:$0xff]
        %v4952 = vld [vmem:[#allocation11 + $0x3c8] sm:$0xff]
        %v4953 = vld [vmem:[#allocation11 + $0x3d0] sm:$0xff]
        %v4954 = vld [vmem:[#allocation11 + $0x3d8] sm:$0xff]
        %v4955 = vld [vmem:[#allocation11 + $0x3e0] sm:$0xff]
        %v4956 = vld [vmem:[#allocation11 + $0x3e8] sm:$0xff]
        %v4957 = vld [vmem:[#allocation11 + $0x3f0] sm:$0xff]
        %v4958 = vld [vmem:[#allocation11 + $0x3f8] sm:$0xff]
        %v4959 = vld [vmem:[#allocation11 + $0x400] sm:$0xff]
        %v4960 = vld [vmem:[#allocation11 + $0x408] sm:$0xff]
        %v4961 = vld [vmem:[#allocation11 + $0x410] sm:$0xff]
        %v4962 = vld [vmem:[#allocation11 + $0x418] sm:$0xff]
        %v4963 = vld [vmem:[#allocation11 + $0x420] sm:$0xff]
        %v4964 = vld [vmem:[#allocation11 + $0x428] sm:$0xff]
        %v4965 = vld [vmem:[#allocation11 + $0x430] sm:$0xff]
        %v4966 = vld [vmem:[#allocation11 + $0x438] sm:$0xff]
        %v4967 = vld [vmem:[#allocation11 + $0x440] sm:$0xff]
        %v4968 = vld [vmem:[#allocation11 + $0x448] sm:$0xff]
        %v4969 = vld [vmem:[#allocation11 + $0x450] sm:$0xff]
        %v4970 = vld [vmem:[#allocation11 + $0x458] sm:$0xff]
        %v4971 = vld [vmem:[#allocation11 + $0x460] sm:$0xff]
        %v4972 = vld [vmem:[#allocation11 + $0x468] sm:$0xff]
        %v4973 = vld [vmem:[#allocation11 + $0x470] sm:$0xff]
        %v4974 = vld [vmem:[#allocation11 + $0x478] sm:$0xff]
        %v4975 = vld [vmem:[#allocation11 + $0x480] sm:$0xff]
        %v4976 = vld [vmem:[#allocation11 + $0x488] sm:$0xff]
        %v4977 = vld [vmem:[#allocation11 + $0x490] sm:$0xff]
        %v4978 = vld [vmem:[#allocation11 + $0x498] sm:$0xff]
        %v4979 = vld [vmem:[#allocation11 + $0x4a0] sm:$0xff]
        %v4980 = vld [vmem:[#allocation11 + $0x4a8] sm:$0xff]
        %v4981 = vld [vmem:[#allocation11 + $0x4b0] sm:$0xff]
        %v4982 = vld [vmem:[#allocation11 + $0x4b8] sm:$0xff]
        %v4983 = vld [vmem:[#allocation11 + $0x4c0] sm:$0xff]
        %v4984 = vld [vmem:[#allocation11 + $0x4c8] sm:$0xff]
        %v4985 = vld [vmem:[#allocation11 + $0x4d0] sm:$0xff]
        %v4986 = vld [vmem:[#allocation11 + $0x4d8] sm:$0xff]
        %v4987 = vld [vmem:[#allocation11 + $0x4e0] sm:$0xff]
        %v4988 = vld [vmem:[#allocation11 + $0x4e8] sm:$0xff]
        %v4989 = vld [vmem:[#allocation11 + $0x4f0] sm:$0xff]
        %v4990 = vld [vmem:[#allocation11 + $0x4f8] sm:$0xff]
        %v4991 = vld [vmem:[#allocation11 + $0x500] sm:$0xff]
        %v4992 = vld [vmem:[#allocation11 + $0x508] sm:$0xff]
        %v4993 = vld [vmem:[#allocation11 + $0x510] sm:$0xff]
        %v4994 = vld [vmem:[#allocation11 + $0x518] sm:$0xff]
        %v4995 = vld [vmem:[#allocation11 + $0x520] sm:$0xff]
        %v4996 = vld [vmem:[#allocation11 + $0x528] sm:$0xff]
        %v4997 = vld [vmem:[#allocation11 + $0x530] sm:$0xff]
        %v4998 = vld [vmem:[#allocation11 + $0x538] sm:$0xff]
        %v4999 = vld [vmem:[#allocation11 + $0x540] sm:$0xff]
        %v5000 = vld [vmem:[#allocation11 + $0x548] sm:$0xff]
        %v5001 = vld [vmem:[#allocation11 + $0x550] sm:$0xff]
        %v5002 = vld [vmem:[#allocation11 + $0x558] sm:$0xff]
        %v5003 = vld [vmem:[#allocation11 + $0x560] sm:$0xff]
        %v5004 = vld [vmem:[#allocation11 + $0x568] sm:$0xff]
        %v5005 = vld [vmem:[#allocation11 + $0x570] sm:$0xff]
        %v5006 = vld [vmem:[#allocation11 + $0x578] sm:$0xff]
        %v5007 = vld [vmem:[#allocation11 + $0x580] sm:$0xff]
        %v5008 = vld [vmem:[#allocation11 + $0x588] sm:$0xff]
        %v5009 = vld [vmem:[#allocation11 + $0x590] sm:$0xff]
        %v5010 = vld [vmem:[#allocation11 + $0x598] sm:$0xff]
        %v5011 = vld [vmem:[#allocation11 + $0x5a0] sm:$0xff]
        %v5012 = vld [vmem:[#allocation11 + $0x5a8] sm:$0xff]
        %v5013 = vld [vmem:[#allocation11 + $0x5b0] sm:$0xff]
        %v5014 = vld [vmem:[#allocation11 + $0x5b8] sm:$0xff]
        %v5015 = vld [vmem:[#allocation11 + $0x5c0] sm:$0xff]
        %v5016 = vld [vmem:[#allocation11 + $0x5c8] sm:$0xff]
        %v5017 = vld [vmem:[#allocation11 + $0x5d0] sm:$0xff]
        %v5018 = vld [vmem:[#allocation11 + $0x5d8] sm:$0xff]
        %v5019 = vld [vmem:[#allocation11 + $0x5e0] sm:$0xff]
        %v5020 = vld [vmem:[#allocation11 + $0x5e8] sm:$0xff]
        %v5021 = vld [vmem:[#allocation11 + $0x5f0] sm:$0xff]
        %v5022 = vld [vmem:[#allocation11 + $0x5f8] sm:$0xff]
        %v5023 = vld [vmem:[#allocation11 + $0x600] sm:$0xff]
        %v5024 = vld [vmem:[#allocation11 + $0x608] sm:$0xff]
        %v5025 = vld [vmem:[#allocation11 + $0x610] sm:$0xff]
        %v5026 = vld [vmem:[#allocation11 + $0x618] sm:$0xff]
        %v5027 = vld [vmem:[#allocation11 + $0x620] sm:$0xff]
        %v5028 = vld [vmem:[#allocation11 + $0x628] sm:$0xff]
        %v5029 = vld [vmem:[#allocation11 + $0x630] sm:$0xff]
        %v5030 = vld [vmem:[#allocation11 + $0x638] sm:$0xff]
        %v5031 = vld [vmem:[#allocation11 + $0x640] sm:$0xff]
        %v5032 = vld [vmem:[#allocation11 + $0x648] sm:$0xff]
        %v5033 = vld [vmem:[#allocation11 + $0x650] sm:$0xff]
        %v5034 = vld [vmem:[#allocation11 + $0x658] sm:$0xff]
        %v5035 = vld [vmem:[#allocation11 + $0x660] sm:$0xff]
        %v5036 = vld [vmem:[#allocation11 + $0x668] sm:$0xff]
        %v5037 = vld [vmem:[#allocation11 + $0x670] sm:$0xff]
        %v5038 = vld [vmem:[#allocation11 + $0x678] sm:$0xff]
        %v5039 = vld [vmem:[#allocation11 + $0x680] sm:$0xff]
        %v5040 = vld [vmem:[#allocation11 + $0x688] sm:$0xff]
        %v5041 = vld [vmem:[#allocation11 + $0x690] sm:$0xff]
        %v5042 = vld [vmem:[#allocation11 + $0x698] sm:$0xff]
        %v5043 = vld [vmem:[#allocation11 + $0x6a0] sm:$0xff]
        %v5044 = vld [vmem:[#allocation11 + $0x6a8] sm:$0xff]
        %v5045 = vld [vmem:[#allocation11 + $0x6b0] sm:$0xff]
        %v5046 = vld [vmem:[#allocation11 + $0x6b8] sm:$0xff]
        %v5047 = vld [vmem:[#allocation11 + $0x6c0] sm:$0xff]
        %v5048 = vld [vmem:[#allocation11 + $0x6c8] sm:$0xff]
        %v5049 = vld [vmem:[#allocation11 + $0x6d0] sm:$0xff]
        %v5050 = vld [vmem:[#allocation11 + $0x6d8] sm:$0xff]
        %v5051 = vld [vmem:[#allocation11 + $0x6e0] sm:$0xff]
        %v5052 = vld [vmem:[#allocation11 + $0x6e8] sm:$0xff]
        %v5053 = vld [vmem:[#allocation11 + $0x6f0] sm:$0xff]
        %v5054 = vld [vmem:[#allocation11 + $0x6f8] sm:$0xff]
        %v5055 = vld [vmem:[#allocation11 + $0x700] sm:$0xff]
        %v5056 = vld [vmem:[#allocation11 + $0x708] sm:$0xff]
        %v5057 = vld [vmem:[#allocation11 + $0x710] sm:$0xff]
        %v5058 = vld [vmem:[#allocation11 + $0x718] sm:$0xff]
        %v5059 = vld [vmem:[#allocation11 + $0x720] sm:$0xff]
        %v5060 = vld [vmem:[#allocation11 + $0x728] sm:$0xff]
        %v5061 = vld [vmem:[#allocation11 + $0x730] sm:$0xff]
        %v5062 = vld [vmem:[#allocation11 + $0x738] sm:$0xff]
        %v5063 = vld [vmem:[#allocation11 + $0x740] sm:$0xff]
        %v5064 = vld [vmem:[#allocation11 + $0x748] sm:$0xff]
        %v5065 = vld [vmem:[#allocation11 + $0x750] sm:$0xff]
        %v5066 = vld [vmem:[#allocation11 + $0x758] sm:$0xff]
        %v5067 = vld [vmem:[#allocation11 + $0x760] sm:$0xff]
        %v5068 = vld [vmem:[#allocation11 + $0x768] sm:$0xff]
        %v5069 = vld [vmem:[#allocation11 + $0x770] sm:$0xff]
        %v5070 = vld [vmem:[#allocation11 + $0x778] sm:$0xff]
        %v5071 = vld [vmem:[#allocation11 + $0x780] sm:$0xff]
        %v5072 = vld [vmem:[#allocation11 + $0x788] sm:$0xff]
        %v5073 = vld [vmem:[#allocation11 + $0x790] sm:$0xff]
        %v5074 = vld [vmem:[#allocation11 + $0x798] sm:$0xff]
        %v5075 = vld [vmem:[#allocation11 + $0x7a0] sm:$0xff]
        %v5076 = vld [vmem:[#allocation11 + $0x7a8] sm:$0xff]
        %v5077 = vld [vmem:[#allocation11 + $0x7b0] sm:$0xff]
        %v5078 = vld [vmem:[#allocation11 + $0x7b8] sm:$0xff]
        %v5079 = vld [vmem:[#allocation11 + $0x7c0] sm:$0xff]
        %v5080 = vld [vmem:[#allocation11 + $0x7c8] sm:$0xff]
        %v5081 = vld [vmem:[#allocation11 + $0x7d0] sm:$0xff]
        %v5082 = vld [vmem:[#allocation11 + $0x7d8] sm:$0xff]
        %v5083 = vld [vmem:[#allocation11 + $0x7e0] sm:$0xff]
        %v5084 = vld [vmem:[#allocation11 + $0x7e8] sm:$0xff]
        %v5085 = vld [vmem:[#allocation11 + $0x7f0] sm:$0xff]
        %v5086 = vld [vmem:[#allocation11 + $0x7f8] sm:$0xff]
        %v5087 = vld [vmem:[#allocation11 + $0x800] sm:$0xff]
        %v5088 = vld [vmem:[#allocation11 + $0x808] sm:$0xff]
        %v5089 = vld [vmem:[#allocation11 + $0x810] sm:$0xff]
        %v5090 = vld [vmem:[#allocation11 + $0x818] sm:$0xff]
        %v5091 = vld [vmem:[#allocation11 + $0x820] sm:$0xff]
        %v5092 = vld [vmem:[#allocation11 + $0x828] sm:$0xff]
        %v5093 = vld [vmem:[#allocation11 + $0x830] sm:$0xff]
        %v5094 = vld [vmem:[#allocation11 + $0x838] sm:$0xff]
        %v5095 = vld [vmem:[#allocation11 + $0x840] sm:$0xff]
        %v5096 = vld [vmem:[#allocation11 + $0x848] sm:$0xff]
        %v5097 = vld [vmem:[#allocation11 + $0x850] sm:$0xff]
        %v5098 = vld [vmem:[#allocation11 + $0x858] sm:$0xff]
        %v5099 = vld [vmem:[#allocation11 + $0x860] sm:$0xff]
        %v5100 = vld [vmem:[#allocation11 + $0x868] sm:$0xff]
        %v5101 = vld [vmem:[#allocation11 + $0x870] sm:$0xff]
        %v5102 = vld [vmem:[#allocation11 + $0x878] sm:$0xff]
        %v5103 = vld [vmem:[#allocation11 + $0x880] sm:$0xff]
        %v5104 = vld [vmem:[#allocation11 + $0x888] sm:$0xff]
        %v5105 = vld [vmem:[#allocation11 + $0x890] sm:$0xff]
        %v5106 = vld [vmem:[#allocation11 + $0x898] sm:$0xff]
        %v5107 = vld [vmem:[#allocation11 + $0x8a0] sm:$0xff]
        %v5108 = vld [vmem:[#allocation11 + $0x8a8] sm:$0xff]
        %v5109 = vld [vmem:[#allocation11 + $0x8b0] sm:$0xff]
        %v5110 = vld [vmem:[#allocation11 + $0x8b8] sm:$0xff]
        %v5111 = vld [vmem:[#allocation11 + $0x8c0] sm:$0xff]
        %v5112 = vld [vmem:[#allocation11 + $0x8c8] sm:$0xff]
        %v5113 = vld [vmem:[#allocation11 + $0x8d0] sm:$0xff]
        %v5114 = vld [vmem:[#allocation11 + $0x8d8] sm:$0xff]
        %v5115 = vld [vmem:[#allocation11 + $0x8e0] sm:$0xff]
        %v5116 = vld [vmem:[#allocation11 + $0x8e8] sm:$0xff]
        %v5117 = vld [vmem:[#allocation11 + $0x8f0] sm:$0xff]
        %v5118 = vld [vmem:[#allocation11 + $0x8f8] sm:$0xff]
        %v5119 = vld [vmem:[#allocation12] sm:$0x3]
        %v5121 = vperm.slane %v5119, 0
        %v5122 = vperm.slane %v5119, 1
        %v5197 = vunpack.c.l.b16 %v4759
        %v5198 = vunpack.c.h.b16 %v4759
        %v5199 = vunpack.c.l.b16 %v4760
        %v5200 = vunpack.c.h.b16 %v4760
        %v5201 = vunpack.c.l.b16 %v4761
        %v5202 = vunpack.c.h.b16 %v4761
        %v5203 = vunpack.c.l.b16 %v4762
        %v5204 = vunpack.c.h.b16 %v4762
        %v5205 = vunpack.c.l.b16 %v4763
        %v5206 = vunpack.c.h.b16 %v4763
        %v5207 = vunpack.c.l.b16 %v4764
        %v5208 = vunpack.c.h.b16 %v4764
        %v5209 = vunpack.c.l.b16 %v4765
        %v5210 = vunpack.c.h.b16 %v4765
        %v5211 = vunpack.c.l.b16 %v4766
        %v5212 = vunpack.c.h.b16 %v4766
        %v5213 = vunpack.c.l.b16 %v4767
        %v5214 = vunpack.c.h.b16 %v4767
        %v5215 = vunpack.c.l.b16 %v4768
        %v5216 = vunpack.c.h.b16 %v4768
        %v5217 = vunpack.c.l.b16 %v4769
        %v5218 = vunpack.c.h.b16 %v4769
        %v5219 = vunpack.c.l.b16 %v4770
        %v5220 = vunpack.c.h.b16 %v4770
        %v5221 = vunpack.c.l.b16 %v4771
        %v5222 = vunpack.c.h.b16 %v4771
        %v5223 = vunpack.c.l.b16 %v4772
        %v5224 = vunpack.c.h.b16 %v4772
        %v5225 = vunpack.c.l.b16 %v4773
        %v5226 = vunpack.c.h.b16 %v4773
        %v5227 = vunpack.c.l.b16 %v4774
        %v5228 = vunpack.c.h.b16 %v4774
        %v5229 = vunpack.c.l.b16 %v4775
        %v5230 = vunpack.c.h.b16 %v4775
        %v5231 = vunpack.c.l.b16 %v4776
        %v5232 = vunpack.c.h.b16 %v4776
        %v5233 = vunpack.c.l.b16 %v4777
        %v5234 = vunpack.c.h.b16 %v4777
        %v5235 = vunpack.c.l.b16 %v4778
        %v5236 = vunpack.c.h.b16 %v4778
        %v5237 = vunpack.c.l.b16 %v4779
        %v5238 = vunpack.c.h.b16 %v4779
        %v5239 = vunpack.c.l.b16 %v4780
        %v5240 = vunpack.c.h.b16 %v4780
        %v5241 = vunpack.c.l.b16 %v4781
        %v5242 = vunpack.c.h.b16 %v4781
        %v5243 = vunpack.c.l.b16 %v4782
        %v5244 = vunpack.c.h.b16 %v4782
        %v5245 = vunpack.c.l.b16 %v4783
        %v5246 = vunpack.c.h.b16 %v4783
        %v5247 = vunpack.c.l.b16 %v4784
        %v5248 = vunpack.c.h.b16 %v4784
        %v5249 = vunpack.c.l.b16 %v4785
        %v5250 = vunpack.c.h.b16 %v4785
        %v5251 = vunpack.c.l.b16 %v4786
        %v5252 = vunpack.c.h.b16 %v4786
        %v5253 = vunpack.c.l.b16 %v4787
        %v5254 = vunpack.c.h.b16 %v4787
        %v5255 = vunpack.c.l.b16 %v4788
        %v5256 = vunpack.c.h.b16 %v4788
        %v5257 = vunpack.c.l.b16 %v4789
        %v5258 = vunpack.c.h.b16 %v4789
        %v5259 = vunpack.c.l.b16 %v4790
        %v5260 = vunpack.c.h.b16 %v4790
        %v5261 = vunpack.c.l.b16 %v4791
        %v5262 = vunpack.c.h.b16 %v4791
        %v5263 = vunpack.c.l.b16 %v4792
        %v5264 = vunpack.c.h.b16 %v4792
        %v5265 = vunpack.c.l.b16 %v4793
        %v5266 = vunpack.c.h.b16 %v4793
        %v5267 = vunpack.c.l.b16 %v4794
        %v5268 = vunpack.c.h.b16 %v4794
        %v5269 = vunpack.c.l.b16 %v4795
        %v5270 = vunpack.c.h.b16 %v4795
        %v5271 = vunpack.c.l.b16 %v4796
        %v5272 = vunpack.c.h.b16 %v4796
        %v5273 = vunpack.c.l.b16 %v4797
        %v5274 = vunpack.c.h.b16 %v4797
        %v5275 = vunpack.c.l.b16 %v4798
        %v5276 = vunpack.c.h.b16 %v4798
        %v5277 = vunpack.c.l.b16 %v4799
        %v5278 = vunpack.c.h.b16 %v4799
        %v5279 = vunpack.c.l.b16 %v4800
        %v5280 = vunpack.c.h.b16 %v4800
        %v5281 = vunpack.c.l.b16 %v4801
        %v5282 = vunpack.c.h.b16 %v4801
        %v5283 = vunpack.c.l.b16 %v4802
        %v5284 = vunpack.c.h.b16 %v4802
        %v5285 = vunpack.c.l.b16 %v4803
        %v5286 = vunpack.c.h.b16 %v4803
        %v5287 = vunpack.c.l.b16 %v4804
        %v5288 = vunpack.c.h.b16 %v4804
        %v5289 = vunpack.c.l.b16 %v4805
        %v5290 = vunpack.c.h.b16 %v4805
        %v5291 = vunpack.c.l.b16 %v4806
        %v5292 = vunpack.c.h.b16 %v4806
        %v5293 = vunpack.c.l.b16 %v4807
        %v5294 = vunpack.c.h.b16 %v4807
        %v5295 = vunpack.c.l.b16 %v4808
        %v5296 = vunpack.c.h.b16 %v4808
        %v5297 = vunpack.c.l.b16 %v4809
        %v5298 = vunpack.c.h.b16 %v4809
        %v5299 = vunpack.c.l.b16 %v4810
        %v5300 = vunpack.c.h.b16 %v4810
        %v5301 = vunpack.c.l.b16 %v4811
        %v5302 = vunpack.c.h.b16 %v4811
        %v5303 = vunpack.c.l.b16 %v4812
        %v5304 = vunpack.c.h.b16 %v4812
        %v5305 = vunpack.c.l.b16 %v4813
        %v5306 = vunpack.c.h.b16 %v4813
        %v5307 = vunpack.c.l.b16 %v4814
        %v5308 = vunpack.c.h.b16 %v4814
        %v5309 = vunpack.c.l.b16 %v4815
        %v5310 = vunpack.c.h.b16 %v4815
        %v5311 = vunpack.c.l.b16 %v4816
        %v5312 = vunpack.c.h.b16 %v4816
        %v5313 = vunpack.c.l.b16 %v4817
        %v5314 = vunpack.c.h.b16 %v4817
        %v5315 = vunpack.c.l.b16 %v4818
        %v5316 = vunpack.c.h.b16 %v4818
        %v5317 = vunpack.c.l.b16 %v4819
        %v5318 = vunpack.c.h.b16 %v4819
        %v5319 = vunpack.c.l.b16 %v4820
        %v5320 = vunpack.c.h.b16 %v4820
        %v5321 = vunpack.c.l.b16 %v4821
        %v5322 = vunpack.c.h.b16 %v4821
        %v5323 = vunpack.c.l.b16 %v4822
        %v5324 = vunpack.c.h.b16 %v4822
        %v5325 = vunpack.c.l.b16 %v4823
        %v5326 = vunpack.c.h.b16 %v4823
        %v5327 = vunpack.c.l.b16 %v4824
        %v5328 = vunpack.c.h.b16 %v4824
        %v5329 = vunpack.c.l.b16 %v4825
        %v5330 = vunpack.c.h.b16 %v4825
        %v5331 = vunpack.c.l.b16 %v4826
        %v5332 = vunpack.c.h.b16 %v4826
        %v5333 = vunpack.c.l.b16 %v4827
        %v5334 = vunpack.c.h.b16 %v4827
        %v5335 = vunpack.c.l.b16 %v4828
        %v5336 = vunpack.c.h.b16 %v4828
        %v5337 = vunpack.c.l.b16 %v4829
        %v5338 = vunpack.c.h.b16 %v4829
        %v5339 = vunpack.c.l.b16 %v4830
        %v5340 = vunpack.c.h.b16 %v4830
        %v5341 = vpack.c.b16 %v5215, %v5197
        %v5342 = vpack.c.b16 %v5216, %v5198
        %v5343 = vpack.c.b16 %v5217, %v5199
        %v5344 = vpack.c.b16 %v5218, %v5200
        %v5345 = vpack.c.b16 %v5219, %v5201
        %v5346 = vpack.c.b16 %v5220, %v5202
        %v5347 = vpack.c.b16 %v5221, %v5203
        %v5348 = vpack.c.b16 %v5222, %v5204
        %v5349 = vpack.c.b16 %v5223, %v5205
        %v5350 = vpack.c.b16 %v5224, %v5206
        %v5351 = vpack.c.b16 %v5225, %v5207
        %v5352 = vpack.c.b16 %v5226, %v5208
        %v5353 = vpack.c.b16 %v5227, %v5209
        %v5354 = vpack.c.b16 %v5228, %v5210
        %v5355 = vpack.c.b16 %v5229, %v5211
        %v5356 = vpack.c.b16 %v5230, %v5212
        %v5357 = vpack.c.b16 %v5231, %v5213
        %v5358 = vpack.c.b16 %v5232, %v5214
        %v5359 = vpack.c.b16 %v5251, %v5233
        %v5360 = vpack.c.b16 %v5252, %v5234
        %v5361 = vpack.c.b16 %v5253, %v5235
        %v5362 = vpack.c.b16 %v5254, %v5236
        %v5363 = vpack.c.b16 %v5255, %v5237
        %v5364 = vpack.c.b16 %v5256, %v5238
        %v5365 = vpack.c.b16 %v5257, %v5239
        %v5366 = vpack.c.b16 %v5258, %v5240
        %v5367 = vpack.c.b16 %v5259, %v5241
        %v5368 = vpack.c.b16 %v5260, %v5242
        %v5369 = vpack.c.b16 %v5261, %v5243
        %v5370 = vpack.c.b16 %v5262, %v5244
        %v5371 = vpack.c.b16 %v5263, %v5245
        %v5372 = vpack.c.b16 %v5264, %v5246
        %v5373 = vpack.c.b16 %v5265, %v5247
        %v5374 = vpack.c.b16 %v5266, %v5248
        %v5375 = vpack.c.b16 %v5267, %v5249
        %v5376 = vpack.c.b16 %v5268, %v5250
        %v5377 = vpack.c.b16 %v5287, %v5269
        %v5378 = vpack.c.b16 %v5288, %v5270
        %v5379 = vpack.c.b16 %v5289, %v5271
        %v5380 = vpack.c.b16 %v5290, %v5272
        %v5381 = vpack.c.b16 %v5291, %v5273
        %v5382 = vpack.c.b16 %v5292, %v5274
        %v5383 = vpack.c.b16 %v5293, %v5275
        %v5384 = vpack.c.b16 %v5294, %v5276
        %v5385 = vpack.c.b16 %v5295, %v5277
        %v5386 = vpack.c.b16 %v5296, %v5278
        %v5387 = vpack.c.b16 %v5297, %v5279
        %v5388 = vpack.c.b16 %v5298, %v5280
        %v5389 = vpack.c.b16 %v5299, %v5281
        %v5390 = vpack.c.b16 %v5300, %v5282
        %v5391 = vpack.c.b16 %v5301, %v5283
        %v5392 = vpack.c.b16 %v5302, %v5284
        %v5393 = vpack.c.b16 %v5303, %v5285
        %v5394 = vpack.c.b16 %v5304, %v5286
        %v5395 = vpack.c.b16 %v5323, %v5305
        %v5396 = vpack.c.b16 %v5324, %v5306
        %v5397 = vpack.c.b16 %v5325, %v5307
        %v5398 = vpack.c.b16 %v5326, %v5308
        %v5399 = vpack.c.b16 %v5327, %v5309
        %v5400 = vpack.c.b16 %v5328, %v5310
        %v5401 = vpack.c.b16 %v5329, %v5311
        %v5402 = vpack.c.b16 %v5330, %v5312
        %v5403 = vpack.c.b16 %v5331, %v5313
        %v5404 = vpack.c.b16 %v5332, %v5314
        %v5405 = vpack.c.b16 %v5333, %v5315
        %v5406 = vpack.c.b16 %v5334, %v5316
        %v5407 = vpack.c.b16 %v5335, %v5317
        %v5408 = vpack.c.b16 %v5336, %v5318
        %v5409 = vpack.c.b16 %v5337, %v5319
        %v5410 = vpack.c.b16 %v5338, %v5320
        %v5411 = vpack.c.b16 %v5339, %v5321
        %v5412 = vpack.c.b16 %v5340, %v5322
        %v5773 = vunpack.c.l.b16 %v4831
        %v5774 = vunpack.c.h.b16 %v4831
        %v5775 = vunpack.c.l.b16 %v4832
        %v5776 = vunpack.c.h.b16 %v4832
        %v5777 = vunpack.c.l.b16 %v4833
        %v5778 = vunpack.c.h.b16 %v4833
        %v5779 = vunpack.c.l.b16 %v4834
        %v5780 = vunpack.c.h.b16 %v4834
        %v5781 = vunpack.c.l.b16 %v4835
        %v5782 = vunpack.c.h.b16 %v4835
        %v5783 = vunpack.c.l.b16 %v4836
        %v5784 = vunpack.c.h.b16 %v4836
        %v5785 = vunpack.c.l.b16 %v4837
        %v5786 = vunpack.c.h.b16 %v4837
        %v5787 = vunpack.c.l.b16 %v4838
        %v5788 = vunpack.c.h.b16 %v4838
        %v5789 = vunpack.c.l.b16 %v4839
        %v5790 = vunpack.c.h.b16 %v4839
        %v5791 = vunpack.c.l.b16 %v4840
        %v5792 = vunpack.c.h.b16 %v4840
        %v5793 = vunpack.c.l.b16 %v4841
        %v5794 = vunpack.c.h.b16 %v4841
        %v5795 = vunpack.c.l.b16 %v4842
        %v5796 = vunpack.c.h.b16 %v4842
        %v5797 = vunpack.c.l.b16 %v4843
        %v5798 = vunpack.c.h.b16 %v4843
        %v5799 = vunpack.c.l.b16 %v4844
        %v5800 = vunpack.c.h.b16 %v4844
        %v5801 = vunpack.c.l.b16 %v4845
        %v5802 = vunpack.c.h.b16 %v4845
        %v5803 = vunpack.c.l.b16 %v4846
        %v5804 = vunpack.c.h.b16 %v4846
        %v5805 = vunpack.c.l.b16 %v4847
        %v5806 = vunpack.c.h.b16 %v4847
        %v5807 = vunpack.c.l.b16 %v4848
        %v5808 = vunpack.c.h.b16 %v4848
        %v5809 = vunpack.c.l.b16 %v4849
        %v5810 = vunpack.c.h.b16 %v4849
        %v5811 = vunpack.c.l.b16 %v4850
        %v5812 = vunpack.c.h.b16 %v4850
        %v5813 = vunpack.c.l.b16 %v4851
        %v5814 = vunpack.c.h.b16 %v4851
        %v5815 = vunpack.c.l.b16 %v4852
        %v5816 = vunpack.c.h.b16 %v4852
        %v5817 = vunpack.c.l.b16 %v4853
        %v5818 = vunpack.c.h.b16 %v4853
        %v5819 = vunpack.c.l.b16 %v4854
        %v5820 = vunpack.c.h.b16 %v4854
        %v5821 = vunpack.c.l.b16 %v4855
        %v5822 = vunpack.c.h.b16 %v4855
        %v5823 = vunpack.c.l.b16 %v4856
        %v5824 = vunpack.c.h.b16 %v4856
        %v5825 = vunpack.c.l.b16 %v4857
        %v5826 = vunpack.c.h.b16 %v4857
        %v5827 = vunpack.c.l.b16 %v4858
        %v5828 = vunpack.c.h.b16 %v4858
        %v5829 = vunpack.c.l.b16 %v4859
        %v5830 = vunpack.c.h.b16 %v4859
        %v5831 = vunpack.c.l.b16 %v4860
        %v5832 = vunpack.c.h.b16 %v4860
        %v5833 = vunpack.c.l.b16 %v4861
        %v5834 = vunpack.c.h.b16 %v4861
        %v5835 = vunpack.c.l.b16 %v4862
        %v5836 = vunpack.c.h.b16 %v4862
        %v5837 = vunpack.c.l.b16 %v4863
        %v5838 = vunpack.c.h.b16 %v4863
        %v5839 = vunpack.c.l.b16 %v4864
        %v5840 = vunpack.c.h.b16 %v4864
        %v5841 = vunpack.c.l.b16 %v4865
        %v5842 = vunpack.c.h.b16 %v4865
        %v5843 = vunpack.c.l.b16 %v4866
        %v5844 = vunpack.c.h.b16 %v4866
        %v5845 = vunpack.c.l.b16 %v4867
        %v5846 = vunpack.c.h.b16 %v4867
        %v5847 = vunpack.c.l.b16 %v4868
        %v5848 = vunpack.c.h.b16 %v4868
        %v5849 = vunpack.c.l.b16 %v4869
        %v5850 = vunpack.c.h.b16 %v4869
        %v5851 = vunpack.c.l.b16 %v4870
        %v5852 = vunpack.c.h.b16 %v4870
        %v5853 = vunpack.c.l.b16 %v4871
        %v5854 = vunpack.c.h.b16 %v4871
        %v5855 = vunpack.c.l.b16 %v4872
        %v5856 = vunpack.c.h.b16 %v4872
        %v5857 = vunpack.c.l.b16 %v4873
        %v5858 = vunpack.c.h.b16 %v4873
        %v5859 = vunpack.c.l.b16 %v4874
        %v5860 = vunpack.c.h.b16 %v4874
        %v5861 = vunpack.c.l.b16 %v4875
        %v5862 = vunpack.c.h.b16 %v4875
        %v5863 = vunpack.c.l.b16 %v4876
        %v5864 = vunpack.c.h.b16 %v4876
        %v5865 = vunpack.c.l.b16 %v4877
        %v5866 = vunpack.c.h.b16 %v4877
        %v5867 = vunpack.c.l.b16 %v4878
        %v5868 = vunpack.c.h.b16 %v4878
        %v5869 = vunpack.c.l.b16 %v4879
        %v5870 = vunpack.c.h.b16 %v4879
        %v5871 = vunpack.c.l.b16 %v4880
        %v5872 = vunpack.c.h.b16 %v4880
        %v5873 = vunpack.c.l.b16 %v4881
        %v5874 = vunpack.c.h.b16 %v4881
        %v5875 = vunpack.c.l.b16 %v4882
        %v5876 = vunpack.c.h.b16 %v4882
        %v5877 = vunpack.c.l.b16 %v4883
        %v5878 = vunpack.c.h.b16 %v4883
        %v5879 = vunpack.c.l.b16 %v4884
        %v5880 = vunpack.c.h.b16 %v4884
        %v5881 = vunpack.c.l.b16 %v4885
        %v5882 = vunpack.c.h.b16 %v4885
        %v5883 = vunpack.c.l.b16 %v4886
        %v5884 = vunpack.c.h.b16 %v4886
        %v5885 = vunpack.c.l.b16 %v4887
        %v5886 = vunpack.c.h.b16 %v4887
        %v5887 = vunpack.c.l.b16 %v4888
        %v5888 = vunpack.c.h.b16 %v4888
        %v5889 = vunpack.c.l.b16 %v4889
        %v5890 = vunpack.c.h.b16 %v4889
        %v5891 = vunpack.c.l.b16 %v4890
        %v5892 = vunpack.c.h.b16 %v4890
        %v5893 = vunpack.c.l.b16 %v4891
        %v5894 = vunpack.c.h.b16 %v4891
        %v5895 = vunpack.c.l.b16 %v4892
        %v5896 = vunpack.c.h.b16 %v4892
        %v5897 = vunpack.c.l.b16 %v4893
        %v5898 = vunpack.c.h.b16 %v4893
        %v5899 = vunpack.c.l.b16 %v4894
        %v5900 = vunpack.c.h.b16 %v4894
        %v5901 = vunpack.c.l.b16 %v4895
        %v5902 = vunpack.c.h.b16 %v4895
        %v5903 = vunpack.c.l.b16 %v4896
        %v5904 = vunpack.c.h.b16 %v4896
        %v5905 = vunpack.c.l.b16 %v4897
        %v5906 = vunpack.c.h.b16 %v4897
        %v5907 = vunpack.c.l.b16 %v4898
        %v5908 = vunpack.c.h.b16 %v4898
        %v5909 = vunpack.c.l.b16 %v4899
        %v5910 = vunpack.c.h.b16 %v4899
        %v5911 = vunpack.c.l.b16 %v4900
        %v5912 = vunpack.c.h.b16 %v4900
        %v5913 = vunpack.c.l.b16 %v4901
        %v5914 = vunpack.c.h.b16 %v4901
        %v5915 = vunpack.c.l.b16 %v4902
        %v5916 = vunpack.c.h.b16 %v4902
        %v5917 = vunpack.c.l.b16 %v4903
        %v5918 = vunpack.c.h.b16 %v4903
        %v5919 = vunpack.c.l.b16 %v4904
        %v5920 = vunpack.c.h.b16 %v4904
        %v5921 = vunpack.c.l.b16 %v4905
        %v5922 = vunpack.c.h.b16 %v4905
        %v5923 = vunpack.c.l.b16 %v4906
        %v5924 = vunpack.c.h.b16 %v4906
        %v5925 = vunpack.c.l.b16 %v4907
        %v5926 = vunpack.c.h.b16 %v4907
        %v5927 = vunpack.c.l.b16 %v4908
        %v5928 = vunpack.c.h.b16 %v4908
        %v5929 = vunpack.c.l.b16 %v4909
        %v5930 = vunpack.c.h.b16 %v4909
        %v5931 = vunpack.c.l.b16 %v4910
        %v5932 = vunpack.c.h.b16 %v4910
        %v5933 = vunpack.c.l.b16 %v4911
        %v5934 = vunpack.c.h.b16 %v4911
        %v5935 = vunpack.c.l.b16 %v4912
        %v5936 = vunpack.c.h.b16 %v4912
        %v5937 = vunpack.c.l.b16 %v4913
        %v5938 = vunpack.c.h.b16 %v4913
        %v5939 = vunpack.c.l.b16 %v4914
        %v5940 = vunpack.c.h.b16 %v4914
        %v5941 = vunpack.c.l.b16 %v4915
        %v5942 = vunpack.c.h.b16 %v4915
        %v5943 = vunpack.c.l.b16 %v4916
        %v5944 = vunpack.c.h.b16 %v4916
        %v5945 = vunpack.c.l.b16 %v4917
        %v5946 = vunpack.c.h.b16 %v4917
        %v5947 = vunpack.c.l.b16 %v4918
        %v5948 = vunpack.c.h.b16 %v4918
        %v5949 = vunpack.c.l.b16 %v4919
        %v5950 = vunpack.c.h.b16 %v4919
        %v5951 = vunpack.c.l.b16 %v4920
        %v5952 = vunpack.c.h.b16 %v4920
        %v5953 = vunpack.c.l.b16 %v4921
        %v5954 = vunpack.c.h.b16 %v4921
        %v5955 = vunpack.c.l.b16 %v4922
        %v5956 = vunpack.c.h.b16 %v4922
        %v5957 = vunpack.c.l.b16 %v4923
        %v5958 = vunpack.c.h.b16 %v4923
        %v5959 = vunpack.c.l.b16 %v4924
        %v5960 = vunpack.c.h.b16 %v4924
        %v5961 = vunpack.c.l.b16 %v4925
        %v5962 = vunpack.c.h.b16 %v4925
        %v5963 = vunpack.c.l.b16 %v4926
        %v5964 = vunpack.c.h.b16 %v4926
        %v5965 = vunpack.c.l.b16 %v4927
        %v5966 = vunpack.c.h.b16 %v4927
        %v5967 = vunpack.c.l.b16 %v4928
        %v5968 = vunpack.c.h.b16 %v4928
        %v5969 = vunpack.c.l.b16 %v4929
        %v5970 = vunpack.c.h.b16 %v4929
        %v5971 = vunpack.c.l.b16 %v4930
        %v5972 = vunpack.c.h.b16 %v4930
        %v5973 = vunpack.c.l.b16 %v4931
        %v5974 = vunpack.c.h.b16 %v4931
        %v5975 = vunpack.c.l.b16 %v4932
        %v5976 = vunpack.c.h.b16 %v4932
        %v5977 = vunpack.c.l.b16 %v4933
        %v5978 = vunpack.c.h.b16 %v4933
        %v5979 = vunpack.c.l.b16 %v4934
        %v5980 = vunpack.c.h.b16 %v4934
        %v5981 = vunpack.c.l.b16 %v4935
        %v5982 = vunpack.c.h.b16 %v4935
        %v5983 = vunpack.c.l.b16 %v4936
        %v5984 = vunpack.c.h.b16 %v4936
        %v5985 = vunpack.c.l.b16 %v4937
        %v5986 = vunpack.c.h.b16 %v4937
        %v5987 = vunpack.c.l.b16 %v4938
        %v5988 = vunpack.c.h.b16 %v4938
        %v5989 = vunpack.c.l.b16 %v4939
        %v5990 = vunpack.c.h.b16 %v4939
        %v5991 = vunpack.c.l.b16 %v4940
        %v5992 = vunpack.c.h.b16 %v4940
        %v5993 = vunpack.c.l.b16 %v4941
        %v5994 = vunpack.c.h.b16 %v4941
        %v5995 = vunpack.c.l.b16 %v4942
        %v5996 = vunpack.c.h.b16 %v4942
        %v5997 = vunpack.c.l.b16 %v4943
        %v5998 = vunpack.c.h.b16 %v4943
        %v5999 = vunpack.c.l.b16 %v4944
        %v6000 = vunpack.c.h.b16 %v4944
        %v6001 = vunpack.c.l.b16 %v4945
        %v6002 = vunpack.c.h.b16 %v4945
        %v6003 = vunpack.c.l.b16 %v4946
        %v6004 = vunpack.c.h.b16 %v4946
        %v6005 = vunpack.c.l.b16 %v4947
        %v6006 = vunpack.c.h.b16 %v4947
        %v6007 = vunpack.c.l.b16 %v4948
        %v6008 = vunpack.c.h.b16 %v4948
        %v6009 = vunpack.c.l.b16 %v4949
        %v6010 = vunpack.c.h.b16 %v4949
        %v6011 = vunpack.c.l.b16 %v4950
        %v6012 = vunpack.c.h.b16 %v4950
        %v6013 = vunpack.c.l.b16 %v4951
        %v6014 = vunpack.c.h.b16 %v4951
        %v6015 = vunpack.c.l.b16 %v4952
        %v6016 = vunpack.c.h.b16 %v4952
        %v6017 = vunpack.c.l.b16 %v4953
        %v6018 = vunpack.c.h.b16 %v4953
        %v6019 = vunpack.c.l.b16 %v4954
        %v6020 = vunpack.c.h.b16 %v4954
        %v6021 = vunpack.c.l.b16 %v4955
        %v6022 = vunpack.c.h.b16 %v4955
        %v6023 = vunpack.c.l.b16 %v4956
        %v6024 = vunpack.c.h.b16 %v4956
        %v6025 = vunpack.c.l.b16 %v4957
        %v6026 = vunpack.c.h.b16 %v4957
        %v6027 = vunpack.c.l.b16 %v4958
        %v6028 = vunpack.c.h.b16 %v4958
        %v6029 = vunpack.c.l.b16 %v4959
        %v6030 = vunpack.c.h.b16 %v4959
        %v6031 = vunpack.c.l.b16 %v4960
        %v6032 = vunpack.c.h.b16 %v4960
        %v6033 = vunpack.c.l.b16 %v4961
        %v6034 = vunpack.c.h.b16 %v4961
        %v6035 = vunpack.c.l.b16 %v4962
        %v6036 = vunpack.c.h.b16 %v4962
        %v6037 = vunpack.c.l.b16 %v4963
        %v6038 = vunpack.c.h.b16 %v4963
        %v6039 = vunpack.c.l.b16 %v4964
        %v6040 = vunpack.c.h.b16 %v4964
        %v6041 = vunpack.c.l.b16 %v4965
        %v6042 = vunpack.c.h.b16 %v4965
        %v6043 = vunpack.c.l.b16 %v4966
        %v6044 = vunpack.c.h.b16 %v4966
        %v6045 = vunpack.c.l.b16 %v4967
        %v6046 = vunpack.c.h.b16 %v4967
        %v6047 = vunpack.c.l.b16 %v4968
        %v6048 = vunpack.c.h.b16 %v4968
        %v6049 = vunpack.c.l.b16 %v4969
        %v6050 = vunpack.c.h.b16 %v4969
        %v6051 = vunpack.c.l.b16 %v4970
        %v6052 = vunpack.c.h.b16 %v4970
        %v6053 = vunpack.c.l.b16 %v4971
        %v6054 = vunpack.c.h.b16 %v4971
        %v6055 = vunpack.c.l.b16 %v4972
        %v6056 = vunpack.c.h.b16 %v4972
        %v6057 = vunpack.c.l.b16 %v4973
        %v6058 = vunpack.c.h.b16 %v4973
        %v6059 = vunpack.c.l.b16 %v4974
        %v6060 = vunpack.c.h.b16 %v4974
        %v6061 = vunpack.c.l.b16 %v4975
        %v6062 = vunpack.c.h.b16 %v4975
        %v6063 = vunpack.c.l.b16 %v4976
        %v6064 = vunpack.c.h.b16 %v4976
        %v6065 = vunpack.c.l.b16 %v4977
        %v6066 = vunpack.c.h.b16 %v4977
        %v6067 = vunpack.c.l.b16 %v4978
        %v6068 = vunpack.c.h.b16 %v4978
        %v6069 = vunpack.c.l.b16 %v4979
        %v6070 = vunpack.c.h.b16 %v4979
        %v6071 = vunpack.c.l.b16 %v4980
        %v6072 = vunpack.c.h.b16 %v4980
        %v6073 = vunpack.c.l.b16 %v4981
        %v6074 = vunpack.c.h.b16 %v4981
        %v6075 = vunpack.c.l.b16 %v4982
        %v6076 = vunpack.c.h.b16 %v4982
        %v6077 = vunpack.c.l.b16 %v4983
        %v6078 = vunpack.c.h.b16 %v4983
        %v6079 = vunpack.c.l.b16 %v4984
        %v6080 = vunpack.c.h.b16 %v4984
        %v6081 = vunpack.c.l.b16 %v4985
        %v6082 = vunpack.c.h.b16 %v4985
        %v6083 = vunpack.c.l.b16 %v4986
        %v6084 = vunpack.c.h.b16 %v4986
        %v6085 = vunpack.c.l.b16 %v4987
        %v6086 = vunpack.c.h.b16 %v4987
        %v6087 = vunpack.c.l.b16 %v4988
        %v6088 = vunpack.c.h.b16 %v4988
        %v6089 = vunpack.c.l.b16 %v4989
        %v6090 = vunpack.c.h.b16 %v4989
        %v6091 = vunpack.c.l.b16 %v4990
        %v6092 = vunpack.c.h.b16 %v4990
        %v6093 = vunpack.c.l.b16 %v4991
        %v6094 = vunpack.c.h.b16 %v4991
        %v6095 = vunpack.c.l.b16 %v4992
        %v6096 = vunpack.c.h.b16 %v4992
        %v6097 = vunpack.c.l.b16 %v4993
        %v6098 = vunpack.c.h.b16 %v4993
        %v6099 = vunpack.c.l.b16 %v4994
        %v6100 = vunpack.c.h.b16 %v4994
        %v6101 = vunpack.c.l.b16 %v4995
        %v6102 = vunpack.c.h.b16 %v4995
        %v6103 = vunpack.c.l.b16 %v4996
        %v6104 = vunpack.c.h.b16 %v4996
        %v6105 = vunpack.c.l.b16 %v4997
        %v6106 = vunpack.c.h.b16 %v4997
        %v6107 = vunpack.c.l.b16 %v4998
        %v6108 = vunpack.c.h.b16 %v4998
        %v6109 = vunpack.c.l.b16 %v4999
        %v6110 = vunpack.c.h.b16 %v4999
        %v6111 = vunpack.c.l.b16 %v5000
        %v6112 = vunpack.c.h.b16 %v5000
        %v6113 = vunpack.c.l.b16 %v5001
        %v6114 = vunpack.c.h.b16 %v5001
        %v6115 = vunpack.c.l.b16 %v5002
        %v6116 = vunpack.c.h.b16 %v5002
        %v6117 = vunpack.c.l.b16 %v5003
        %v6118 = vunpack.c.h.b16 %v5003
        %v6119 = vunpack.c.l.b16 %v5004
        %v6120 = vunpack.c.h.b16 %v5004
        %v6121 = vunpack.c.l.b16 %v5005
        %v6122 = vunpack.c.h.b16 %v5005
        %v6123 = vunpack.c.l.b16 %v5006
        %v6124 = vunpack.c.h.b16 %v5006
        %v6125 = vunpack.c.l.b16 %v5007
        %v6126 = vunpack.c.h.b16 %v5007
        %v6127 = vunpack.c.l.b16 %v5008
        %v6128 = vunpack.c.h.b16 %v5008
        %v6129 = vunpack.c.l.b16 %v5009
        %v6130 = vunpack.c.h.b16 %v5009
        %v6131 = vunpack.c.l.b16 %v5010
        %v6132 = vunpack.c.h.b16 %v5010
        %v6133 = vunpack.c.l.b16 %v5011
        %v6134 = vunpack.c.h.b16 %v5011
        %v6135 = vunpack.c.l.b16 %v5012
        %v6136 = vunpack.c.h.b16 %v5012
        %v6137 = vunpack.c.l.b16 %v5013
        %v6138 = vunpack.c.h.b16 %v5013
        %v6139 = vunpack.c.l.b16 %v5014
        %v6140 = vunpack.c.h.b16 %v5014
        %v6141 = vunpack.c.l.b16 %v5015
        %v6142 = vunpack.c.h.b16 %v5015
        %v6143 = vunpack.c.l.b16 %v5016
        %v6144 = vunpack.c.h.b16 %v5016
        %v6145 = vunpack.c.l.b16 %v5017
        %v6146 = vunpack.c.h.b16 %v5017
        %v6147 = vunpack.c.l.b16 %v5018
        %v6148 = vunpack.c.h.b16 %v5018
        %v6149 = vunpack.c.l.b16 %v5019
        %v6150 = vunpack.c.h.b16 %v5019
        %v6151 = vunpack.c.l.b16 %v5020
        %v6152 = vunpack.c.h.b16 %v5020
        %v6153 = vunpack.c.l.b16 %v5021
        %v6154 = vunpack.c.h.b16 %v5021
        %v6155 = vunpack.c.l.b16 %v5022
        %v6156 = vunpack.c.h.b16 %v5022
        %v6157 = vunpack.c.l.b16 %v5023
        %v6158 = vunpack.c.h.b16 %v5023
        %v6159 = vunpack.c.l.b16 %v5024
        %v6160 = vunpack.c.h.b16 %v5024
        %v6161 = vunpack.c.l.b16 %v5025
        %v6162 = vunpack.c.h.b16 %v5025
        %v6163 = vunpack.c.l.b16 %v5026
        %v6164 = vunpack.c.h.b16 %v5026
        %v6165 = vunpack.c.l.b16 %v5027
        %v6166 = vunpack.c.h.b16 %v5027
        %v6167 = vunpack.c.l.b16 %v5028
        %v6168 = vunpack.c.h.b16 %v5028
        %v6169 = vunpack.c.l.b16 %v5029
        %v6170 = vunpack.c.h.b16 %v5029
        %v6171 = vunpack.c.l.b16 %v5030
        %v6172 = vunpack.c.h.b16 %v5030
        %v6173 = vunpack.c.l.b16 %v5031
        %v6174 = vunpack.c.h.b16 %v5031
        %v6175 = vunpack.c.l.b16 %v5032
        %v6176 = vunpack.c.h.b16 %v5032
        %v6177 = vunpack.c.l.b16 %v5033
        %v6178 = vunpack.c.h.b16 %v5033
        %v6179 = vunpack.c.l.b16 %v5034
        %v6180 = vunpack.c.h.b16 %v5034
        %v6181 = vunpack.c.l.b16 %v5035
        %v6182 = vunpack.c.h.b16 %v5035
        %v6183 = vunpack.c.l.b16 %v5036
        %v6184 = vunpack.c.h.b16 %v5036
        %v6185 = vunpack.c.l.b16 %v5037
        %v6186 = vunpack.c.h.b16 %v5037
        %v6187 = vunpack.c.l.b16 %v5038
        %v6188 = vunpack.c.h.b16 %v5038
        %v6189 = vunpack.c.l.b16 %v5039
        %v6190 = vunpack.c.h.b16 %v5039
        %v6191 = vunpack.c.l.b16 %v5040
        %v6192 = vunpack.c.h.b16 %v5040
        %v6193 = vunpack.c.l.b16 %v5041
        %v6194 = vunpack.c.h.b16 %v5041
        %v6195 = vunpack.c.l.b16 %v5042
        %v6196 = vunpack.c.h.b16 %v5042
        %v6197 = vunpack.c.l.b16 %v5043
        %v6198 = vunpack.c.h.b16 %v5043
        %v6199 = vunpack.c.l.b16 %v5044
        %v6200 = vunpack.c.h.b16 %v5044
        %v6201 = vunpack.c.l.b16 %v5045
        %v6202 = vunpack.c.h.b16 %v5045
        %v6203 = vunpack.c.l.b16 %v5046
        %v6204 = vunpack.c.h.b16 %v5046
        %v6205 = vunpack.c.l.b16 %v5047
        %v6206 = vunpack.c.h.b16 %v5047
        %v6207 = vunpack.c.l.b16 %v5048
        %v6208 = vunpack.c.h.b16 %v5048
        %v6209 = vunpack.c.l.b16 %v5049
        %v6210 = vunpack.c.h.b16 %v5049
        %v6211 = vunpack.c.l.b16 %v5050
        %v6212 = vunpack.c.h.b16 %v5050
        %v6213 = vunpack.c.l.b16 %v5051
        %v6214 = vunpack.c.h.b16 %v5051
        %v6215 = vunpack.c.l.b16 %v5052
        %v6216 = vunpack.c.h.b16 %v5052
        %v6217 = vunpack.c.l.b16 %v5053
        %v6218 = vunpack.c.h.b16 %v5053
        %v6219 = vunpack.c.l.b16 %v5054
        %v6220 = vunpack.c.h.b16 %v5054
        %v6221 = vunpack.c.l.b16 %v5055
        %v6222 = vunpack.c.h.b16 %v5055
        %v6223 = vunpack.c.l.b16 %v5056
        %v6224 = vunpack.c.h.b16 %v5056
        %v6225 = vunpack.c.l.b16 %v5057
        %v6226 = vunpack.c.h.b16 %v5057
        %v6227 = vunpack.c.l.b16 %v5058
        %v6228 = vunpack.c.h.b16 %v5058
        %v6229 = vunpack.c.l.b16 %v5059
        %v6230 = vunpack.c.h.b16 %v5059
        %v6231 = vunpack.c.l.b16 %v5060
        %v6232 = vunpack.c.h.b16 %v5060
        %v6233 = vunpack.c.l.b16 %v5061
        %v6234 = vunpack.c.h.b16 %v5061
        %v6235 = vunpack.c.l.b16 %v5062
        %v6236 = vunpack.c.h.b16 %v5062
        %v6237 = vunpack.c.l.b16 %v5063
        %v6238 = vunpack.c.h.b16 %v5063
        %v6239 = vunpack.c.l.b16 %v5064
        %v6240 = vunpack.c.h.b16 %v5064
        %v6241 = vunpack.c.l.b16 %v5065
        %v6242 = vunpack.c.h.b16 %v5065
        %v6243 = vunpack.c.l.b16 %v5066
        %v6244 = vunpack.c.h.b16 %v5066
        %v6245 = vunpack.c.l.b16 %v5067
        %v6246 = vunpack.c.h.b16 %v5067
        %v6247 = vunpack.c.l.b16 %v5068
        %v6248 = vunpack.c.h.b16 %v5068
        %v6249 = vunpack.c.l.b16 %v5069
        %v6250 = vunpack.c.h.b16 %v5069
        %v6251 = vunpack.c.l.b16 %v5070
        %v6252 = vunpack.c.h.b16 %v5070
        %v6253 = vunpack.c.l.b16 %v5071
        %v6254 = vunpack.c.h.b16 %v5071
        %v6255 = vunpack.c.l.b16 %v5072
        %v6256 = vunpack.c.h.b16 %v5072
        %v6257 = vunpack.c.l.b16 %v5073
        %v6258 = vunpack.c.h.b16 %v5073
        %v6259 = vunpack.c.l.b16 %v5074
        %v6260 = vunpack.c.h.b16 %v5074
        %v6261 = vunpack.c.l.b16 %v5075
        %v6262 = vunpack.c.h.b16 %v5075
        %v6263 = vunpack.c.l.b16 %v5076
        %v6264 = vunpack.c.h.b16 %v5076
        %v6265 = vunpack.c.l.b16 %v5077
        %v6266 = vunpack.c.h.b16 %v5077
        %v6267 = vunpack.c.l.b16 %v5078
        %v6268 = vunpack.c.h.b16 %v5078
        %v6269 = vunpack.c.l.b16 %v5079
        %v6270 = vunpack.c.h.b16 %v5079
        %v6271 = vunpack.c.l.b16 %v5080
        %v6272 = vunpack.c.h.b16 %v5080
        %v6273 = vunpack.c.l.b16 %v5081
        %v6274 = vunpack.c.h.b16 %v5081
        %v6275 = vunpack.c.l.b16 %v5082
        %v6276 = vunpack.c.h.b16 %v5082
        %v6277 = vunpack.c.l.b16 %v5083
        %v6278 = vunpack.c.h.b16 %v5083
        %v6279 = vunpack.c.l.b16 %v5084
        %v6280 = vunpack.c.h.b16 %v5084
        %v6281 = vunpack.c.l.b16 %v5085
        %v6282 = vunpack.c.h.b16 %v5085
        %v6283 = vunpack.c.l.b16 %v5086
        %v6284 = vunpack.c.h.b16 %v5086
        %v6285 = vunpack.c.l.b16 %v5087
        %v6286 = vunpack.c.h.b16 %v5087
        %v6287 = vunpack.c.l.b16 %v5088
        %v6288 = vunpack.c.h.b16 %v5088
        %v6289 = vunpack.c.l.b16 %v5089
        %v6290 = vunpack.c.h.b16 %v5089
        %v6291 = vunpack.c.l.b16 %v5090
        %v6292 = vunpack.c.h.b16 %v5090
        %v6293 = vunpack.c.l.b16 %v5091
        %v6294 = vunpack.c.h.b16 %v5091
        %v6295 = vunpack.c.l.b16 %v5092
        %v6296 = vunpack.c.h.b16 %v5092
        %v6297 = vunpack.c.l.b16 %v5093
        %v6298 = vunpack.c.h.b16 %v5093
        %v6299 = vunpack.c.l.b16 %v5094
        %v6300 = vunpack.c.h.b16 %v5094
        %v6301 = vunpack.c.l.b16 %v5095
        %v6302 = vunpack.c.h.b16 %v5095
        %v6303 = vunpack.c.l.b16 %v5096
        %v6304 = vunpack.c.h.b16 %v5096
        %v6305 = vunpack.c.l.b16 %v5097
        %v6306 = vunpack.c.h.b16 %v5097
        %v6307 = vunpack.c.l.b16 %v5098
        %v6308 = vunpack.c.h.b16 %v5098
        %v6309 = vunpack.c.l.b16 %v5099
        %v6310 = vunpack.c.h.b16 %v5099
        %v6311 = vunpack.c.l.b16 %v5100
        %v6312 = vunpack.c.h.b16 %v5100
        %v6313 = vunpack.c.l.b16 %v5101
        %v6314 = vunpack.c.h.b16 %v5101
        %v6315 = vunpack.c.l.b16 %v5102
        %v6316 = vunpack.c.h.b16 %v5102
        %v6317 = vunpack.c.l.b16 %v5103
        %v6318 = vunpack.c.h.b16 %v5103
        %v6319 = vunpack.c.l.b16 %v5104
        %v6320 = vunpack.c.h.b16 %v5104
        %v6321 = vunpack.c.l.b16 %v5105
        %v6322 = vunpack.c.h.b16 %v5105
        %v6323 = vunpack.c.l.b16 %v5106
        %v6324 = vunpack.c.h.b16 %v5106
        %v6325 = vunpack.c.l.b16 %v5107
        %v6326 = vunpack.c.h.b16 %v5107
        %v6327 = vunpack.c.l.b16 %v5108
        %v6328 = vunpack.c.h.b16 %v5108
        %v6329 = vunpack.c.l.b16 %v5109
        %v6330 = vunpack.c.h.b16 %v5109
        %v6331 = vunpack.c.l.b16 %v5110
        %v6332 = vunpack.c.h.b16 %v5110
        %v6333 = vunpack.c.l.b16 %v5111
        %v6334 = vunpack.c.h.b16 %v5111
        %v6335 = vunpack.c.l.b16 %v5112
        %v6336 = vunpack.c.h.b16 %v5112
        %v6337 = vunpack.c.l.b16 %v5113
        %v6338 = vunpack.c.h.b16 %v5113
        %v6339 = vunpack.c.l.b16 %v5114
        %v6340 = vunpack.c.h.b16 %v5114
        %v6341 = vunpack.c.l.b16 %v5115
        %v6342 = vunpack.c.h.b16 %v5115
        %v6343 = vunpack.c.l.b16 %v5116
        %v6344 = vunpack.c.h.b16 %v5116
        %v6345 = vunpack.c.l.b16 %v5117
        %v6346 = vunpack.c.h.b16 %v5117
        %v6347 = vunpack.c.l.b16 %v5118
        %v6348 = vunpack.c.h.b16 %v5118
        %v6349 = vpack.c.b16 %v5775, %v5773
        %v6350 = vpack.c.b16 %v5776, %v5774
        %v6351 = vpack.c.b16 %v5779, %v5777
        %v6352 = vpack.c.b16 %v5780, %v5778
        %v6353 = vpack.c.b16 %v5783, %v5781
        %v6354 = vpack.c.b16 %v5784, %v5782
        %v6355 = vpack.c.b16 %v5787, %v5785
        %v6356 = vpack.c.b16 %v5788, %v5786
        %v6357 = vpack.c.b16 %v5791, %v5789
        %v6358 = vpack.c.b16 %v5792, %v5790
        %v6359 = vpack.c.b16 %v5795, %v5793
        %v6360 = vpack.c.b16 %v5796, %v5794
        %v6361 = vpack.c.b16 %v5799, %v5797
        %v6362 = vpack.c.b16 %v5800, %v5798
        %v6363 = vpack.c.b16 %v5803, %v5801
        %v6364 = vpack.c.b16 %v5804, %v5802
        %v6365 = vpack.c.b16 %v5807, %v5805
        %v6366 = vpack.c.b16 %v5808, %v5806
        %v6367 = vpack.c.b16 %v5811, %v5809
        %v6368 = vpack.c.b16 %v5812, %v5810
        %v6369 = vpack.c.b16 %v5815, %v5813
        %v6370 = vpack.c.b16 %v5816, %v5814
        %v6371 = vpack.c.b16 %v5819, %v5817
        %v6372 = vpack.c.b16 %v5820, %v5818
        %v6373 = vpack.c.b16 %v5823, %v5821
        %v6374 = vpack.c.b16 %v5824, %v5822
        %v6375 = vpack.c.b16 %v5827, %v5825
        %v6376 = vpack.c.b16 %v5828, %v5826
        %v6377 = vpack.c.b16 %v5831, %v5829
        %v6378 = vpack.c.b16 %v5832, %v5830
        %v6379 = vpack.c.b16 %v5835, %v5833
        %v6380 = vpack.c.b16 %v5836, %v5834
        %v6381 = vpack.c.b16 %v5839, %v5837
        %v6382 = vpack.c.b16 %v5840, %v5838
        %v6383 = vpack.c.b16 %v5843, %v5841
        %v6384 = vpack.c.b16 %v5844, %v5842
        %v6385 = vpack.c.b16 %v5847, %v5845
        %v6386 = vpack.c.b16 %v5848, %v5846
        %v6387 = vpack.c.b16 %v5851, %v5849
        %v6388 = vpack.c.b16 %v5852, %v5850
        %v6389 = vpack.c.b16 %v5855, %v5853
        %v6390 = vpack.c.b16 %v5856, %v5854
        %v6391 = vpack.c.b16 %v5859, %v5857
        %v6392 = vpack.c.b16 %v5860, %v5858
        %v6393 = vpack.c.b16 %v5863, %v5861
        %v6394 = vpack.c.b16 %v5864, %v5862
        %v6395 = vpack.c.b16 %v5867, %v5865
        %v6396 = vpack.c.b16 %v5868, %v5866
        %v6397 = vpack.c.b16 %v5871, %v5869
        %v6398 = vpack.c.b16 %v5872, %v5870
        %v6399 = vpack.c.b16 %v5875, %v5873
        %v6400 = vpack.c.b16 %v5876, %v5874
        %v6401 = vpack.c.b16 %v5879, %v5877
        %v6402 = vpack.c.b16 %v5880, %v5878
        %v6403 = vpack.c.b16 %v5883, %v5881
        %v6404 = vpack.c.b16 %v5884, %v5882
        %v6405 = vpack.c.b16 %v5887, %v5885
        %v6406 = vpack.c.b16 %v5888, %v5886
        %v6407 = vpack.c.b16 %v5891, %v5889
        %v6408 = vpack.c.b16 %v5892, %v5890
        %v6409 = vpack.c.b16 %v5895, %v5893
        %v6410 = vpack.c.b16 %v5896, %v5894
        %v6411 = vpack.c.b16 %v5899, %v5897
        %v6412 = vpack.c.b16 %v5900, %v5898
        %v6413 = vpack.c.b16 %v5903, %v5901
        %v6414 = vpack.c.b16 %v5904, %v5902
        %v6415 = vpack.c.b16 %v5907, %v5905
        %v6416 = vpack.c.b16 %v5908, %v5906
        %v6417 = vpack.c.b16 %v5911, %v5909
        %v6418 = vpack.c.b16 %v5912, %v5910
        %v6419 = vpack.c.b16 %v5915, %v5913
        %v6420 = vpack.c.b16 %v5916, %v5914
        %v6421 = vpack.c.b16 %v5919, %v5917
        %v6422 = vpack.c.b16 %v5920, %v5918
        %v6423 = vpack.c.b16 %v5923, %v5921
        %v6424 = vpack.c.b16 %v5924, %v5922
        %v6425 = vpack.c.b16 %v5927, %v5925
        %v6426 = vpack.c.b16 %v5928, %v5926
        %v6427 = vpack.c.b16 %v5931, %v5929
        %v6428 = vpack.c.b16 %v5932, %v5930
        %v6429 = vpack.c.b16 %v5935, %v5933
        %v6430 = vpack.c.b16 %v5936, %v5934
        %v6431 = vpack.c.b16 %v5939, %v5937
        %v6432 = vpack.c.b16 %v5940, %v5938
        %v6433 = vpack.c.b16 %v5943, %v5941
        %v6434 = vpack.c.b16 %v5944, %v5942
        %v6435 = vpack.c.b16 %v5947, %v5945
        %v6436 = vpack.c.b16 %v5948, %v5946
        %v6437 = vpack.c.b16 %v5951, %v5949
        %v6438 = vpack.c.b16 %v5952, %v5950
        %v6439 = vpack.c.b16 %v5955, %v5953
        %v6440 = vpack.c.b16 %v5956, %v5954
        %v6441 = vpack.c.b16 %v5959, %v5957
        %v6442 = vpack.c.b16 %v5960, %v5958
        %v6443 = vpack.c.b16 %v5963, %v5961
        %v6444 = vpack.c.b16 %v5964, %v5962
        %v6445 = vpack.c.b16 %v5967, %v5965
        %v6446 = vpack.c.b16 %v5968, %v5966
        %v6447 = vpack.c.b16 %v5971, %v5969
        %v6448 = vpack.c.b16 %v5972, %v5970
        %v6449 = vpack.c.b16 %v5975, %v5973
        %v6450 = vpack.c.b16 %v5976, %v5974
        %v6451 = vpack.c.b16 %v5979, %v5977
        %v6452 = vpack.c.b16 %v5980, %v5978
        %v6453 = vpack.c.b16 %v5983, %v5981
        %v6454 = vpack.c.b16 %v5984, %v5982
        %v6455 = vpack.c.b16 %v5987, %v5985
        %v6456 = vpack.c.b16 %v5988, %v5986
        %v6457 = vpack.c.b16 %v5991, %v5989
        %v6458 = vpack.c.b16 %v5992, %v5990
        %v6459 = vpack.c.b16 %v5995, %v5993
        %v6460 = vpack.c.b16 %v5996, %v5994
        %v6461 = vpack.c.b16 %v5999, %v5997
        %v6462 = vpack.c.b16 %v6000, %v5998
        %v6463 = vpack.c.b16 %v6003, %v6001
        %v6464 = vpack.c.b16 %v6004, %v6002
        %v6465 = vpack.c.b16 %v6007, %v6005
        %v6466 = vpack.c.b16 %v6008, %v6006
        %v6467 = vpack.c.b16 %v6011, %v6009
        %v6468 = vpack.c.b16 %v6012, %v6010
        %v6469 = vpack.c.b16 %v6015, %v6013
        %v6470 = vpack.c.b16 %v6016, %v6014
        %v6471 = vpack.c.b16 %v6019, %v6017
        %v6472 = vpack.c.b16 %v6020, %v6018
        %v6473 = vpack.c.b16 %v6023, %v6021
        %v6474 = vpack.c.b16 %v6024, %v6022
        %v6475 = vpack.c.b16 %v6027, %v6025
        %v6476 = vpack.c.b16 %v6028, %v6026
        %v6477 = vpack.c.b16 %v6031, %v6029
        %v6478 = vpack.c.b16 %v6032, %v6030
        %v6479 = vpack.c.b16 %v6035, %v6033
        %v6480 = vpack.c.b16 %v6036, %v6034
        %v6481 = vpack.c.b16 %v6039, %v6037
        %v6482 = vpack.c.b16 %v6040, %v6038
        %v6483 = vpack.c.b16 %v6043, %v6041
        %v6484 = vpack.c.b16 %v6044, %v6042
        %v6485 = vpack.c.b16 %v6047, %v6045
        %v6486 = vpack.c.b16 %v6048, %v6046
        %v6487 = vpack.c.b16 %v6051, %v6049
        %v6488 = vpack.c.b16 %v6052, %v6050
        %v6489 = vpack.c.b16 %v6055, %v6053
        %v6490 = vpack.c.b16 %v6056, %v6054
        %v6491 = vpack.c.b16 %v6059, %v6057
        %v6492 = vpack.c.b16 %v6060, %v6058
        %v6493 = vpack.c.b16 %v6063, %v6061
        %v6494 = vpack.c.b16 %v6064, %v6062
        %v6495 = vpack.c.b16 %v6067, %v6065
        %v6496 = vpack.c.b16 %v6068, %v6066
        %v6497 = vpack.c.b16 %v6071, %v6069
        %v6498 = vpack.c.b16 %v6072, %v6070
        %v6499 = vpack.c.b16 %v6075, %v6073
        %v6500 = vpack.c.b16 %v6076, %v6074
        %v6501 = vpack.c.b16 %v6079, %v6077
        %v6502 = vpack.c.b16 %v6080, %v6078
        %v6503 = vpack.c.b16 %v6083, %v6081
        %v6504 = vpack.c.b16 %v6084, %v6082
        %v6505 = vpack.c.b16 %v6087, %v6085
        %v6506 = vpack.c.b16 %v6088, %v6086
        %v6507 = vpack.c.b16 %v6091, %v6089
        %v6508 = vpack.c.b16 %v6092, %v6090
        %v6509 = vpack.c.b16 %v6095, %v6093
        %v6510 = vpack.c.b16 %v6096, %v6094
        %v6511 = vpack.c.b16 %v6099, %v6097
        %v6512 = vpack.c.b16 %v6100, %v6098
        %v6513 = vpack.c.b16 %v6103, %v6101
        %v6514 = vpack.c.b16 %v6104, %v6102
        %v6515 = vpack.c.b16 %v6107, %v6105
        %v6516 = vpack.c.b16 %v6108, %v6106
        %v6517 = vpack.c.b16 %v6111, %v6109
        %v6518 = vpack.c.b16 %v6112, %v6110
        %v6519 = vpack.c.b16 %v6115, %v6113
        %v6520 = vpack.c.b16 %v6116, %v6114
        %v6521 = vpack.c.b16 %v6119, %v6117
        %v6522 = vpack.c.b16 %v6120, %v6118
        %v6523 = vpack.c.b16 %v6123, %v6121
        %v6524 = vpack.c.b16 %v6124, %v6122
        %v6525 = vpack.c.b16 %v6127, %v6125
        %v6526 = vpack.c.b16 %v6128, %v6126
        %v6527 = vpack.c.b16 %v6131, %v6129
        %v6528 = vpack.c.b16 %v6132, %v6130
        %v6529 = vpack.c.b16 %v6135, %v6133
        %v6530 = vpack.c.b16 %v6136, %v6134
        %v6531 = vpack.c.b16 %v6139, %v6137
        %v6532 = vpack.c.b16 %v6140, %v6138
        %v6533 = vpack.c.b16 %v6143, %v6141
        %v6534 = vpack.c.b16 %v6144, %v6142
        %v6535 = vpack.c.b16 %v6147, %v6145
        %v6536 = vpack.c.b16 %v6148, %v6146
        %v6537 = vpack.c.b16 %v6151, %v6149
        %v6538 = vpack.c.b16 %v6152, %v6150
        %v6539 = vpack.c.b16 %v6155, %v6153
        %v6540 = vpack.c.b16 %v6156, %v6154
        %v6541 = vpack.c.b16 %v6159, %v6157
        %v6542 = vpack.c.b16 %v6160, %v6158
        %v6543 = vpack.c.b16 %v6163, %v6161
        %v6544 = vpack.c.b16 %v6164, %v6162
        %v6545 = vpack.c.b16 %v6167, %v6165
        %v6546 = vpack.c.b16 %v6168, %v6166
        %v6547 = vpack.c.b16 %v6171, %v6169
        %v6548 = vpack.c.b16 %v6172, %v6170
        %v6549 = vpack.c.b16 %v6175, %v6173
        %v6550 = vpack.c.b16 %v6176, %v6174
        %v6551 = vpack.c.b16 %v6179, %v6177
        %v6552 = vpack.c.b16 %v6180, %v6178
        %v6553 = vpack.c.b16 %v6183, %v6181
        %v6554 = vpack.c.b16 %v6184, %v6182
        %v6555 = vpack.c.b16 %v6187, %v6185
        %v6556 = vpack.c.b16 %v6188, %v6186
        %v6557 = vpack.c.b16 %v6191, %v6189
        %v6558 = vpack.c.b16 %v6192, %v6190
        %v6559 = vpack.c.b16 %v6195, %v6193
        %v6560 = vpack.c.b16 %v6196, %v6194
        %v6561 = vpack.c.b16 %v6199, %v6197
        %v6562 = vpack.c.b16 %v6200, %v6198
        %v6563 = vpack.c.b16 %v6203, %v6201
        %v6564 = vpack.c.b16 %v6204, %v6202
        %v6565 = vpack.c.b16 %v6207, %v6205
        %v6566 = vpack.c.b16 %v6208, %v6206
        %v6567 = vpack.c.b16 %v6211, %v6209
        %v6568 = vpack.c.b16 %v6212, %v6210
        %v6569 = vpack.c.b16 %v6215, %v6213
        %v6570 = vpack.c.b16 %v6216, %v6214
        %v6571 = vpack.c.b16 %v6219, %v6217
        %v6572 = vpack.c.b16 %v6220, %v6218
        %v6573 = vpack.c.b16 %v6223, %v6221
        %v6574 = vpack.c.b16 %v6224, %v6222
        %v6575 = vpack.c.b16 %v6227, %v6225
        %v6576 = vpack.c.b16 %v6228, %v6226
        %v6577 = vpack.c.b16 %v6231, %v6229
        %v6578 = vpack.c.b16 %v6232, %v6230
        %v6579 = vpack.c.b16 %v6235, %v6233
        %v6580 = vpack.c.b16 %v6236, %v6234
        %v6581 = vpack.c.b16 %v6239, %v6237
        %v6582 = vpack.c.b16 %v6240, %v6238
        %v6583 = vpack.c.b16 %v6243, %v6241
        %v6584 = vpack.c.b16 %v6244, %v6242
        %v6585 = vpack.c.b16 %v6247, %v6245
        %v6586 = vpack.c.b16 %v6248, %v6246
        %v6587 = vpack.c.b16 %v6251, %v6249
        %v6588 = vpack.c.b16 %v6252, %v6250
        %v6589 = vpack.c.b16 %v6255, %v6253
        %v6590 = vpack.c.b16 %v6256, %v6254
        %v6591 = vpack.c.b16 %v6259, %v6257
        %v6592 = vpack.c.b16 %v6260, %v6258
        %v6593 = vpack.c.b16 %v6263, %v6261
        %v6594 = vpack.c.b16 %v6264, %v6262
        %v6595 = vpack.c.b16 %v6267, %v6265
        %v6596 = vpack.c.b16 %v6268, %v6266
        %v6597 = vpack.c.b16 %v6271, %v6269
        %v6598 = vpack.c.b16 %v6272, %v6270
        %v6599 = vpack.c.b16 %v6275, %v6273
        %v6600 = vpack.c.b16 %v6276, %v6274
        %v6601 = vpack.c.b16 %v6279, %v6277
        %v6602 = vpack.c.b16 %v6280, %v6278
        %v6603 = vpack.c.b16 %v6283, %v6281
        %v6604 = vpack.c.b16 %v6284, %v6282
        %v6605 = vpack.c.b16 %v6287, %v6285
        %v6606 = vpack.c.b16 %v6288, %v6286
        %v6607 = vpack.c.b16 %v6291, %v6289
        %v6608 = vpack.c.b16 %v6292, %v6290
        %v6609 = vpack.c.b16 %v6295, %v6293
        %v6610 = vpack.c.b16 %v6296, %v6294
        %v6611 = vpack.c.b16 %v6299, %v6297
        %v6612 = vpack.c.b16 %v6300, %v6298
        %v6613 = vpack.c.b16 %v6303, %v6301
        %v6614 = vpack.c.b16 %v6304, %v6302
        %v6615 = vpack.c.b16 %v6307, %v6305
        %v6616 = vpack.c.b16 %v6308, %v6306
        %v6617 = vpack.c.b16 %v6311, %v6309
        %v6618 = vpack.c.b16 %v6312, %v6310
        %v6619 = vpack.c.b16 %v6315, %v6313
        %v6620 = vpack.c.b16 %v6316, %v6314
        %v6621 = vpack.c.b16 %v6319, %v6317
        %v6622 = vpack.c.b16 %v6320, %v6318
        %v6623 = vpack.c.b16 %v6323, %v6321
        %v6624 = vpack.c.b16 %v6324, %v6322
        %v6625 = vpack.c.b16 %v6327, %v6325
        %v6626 = vpack.c.b16 %v6328, %v6326
        %v6627 = vpack.c.b16 %v6331, %v6329
        %v6628 = vpack.c.b16 %v6332, %v6330
        %v6629 = vpack.c.b16 %v6335, %v6333
        %v6630 = vpack.c.b16 %v6336, %v6334
        %v6631 = vpack.c.b16 %v6339, %v6337
        %v6632 = vpack.c.b16 %v6340, %v6338
        %v6633 = vpack.c.b16 %v6343, %v6341
        %v6634 = vpack.c.b16 %v6344, %v6342
        %v6635 = vpack.c.b16 %v6347, %v6345
        %v6636 = vpack.c.b16 %v6348, %v6346
        %6925 = vmatpush.bf16.msra.mxu0 %v6363
        %6926 = vmatpush.bf16.msra.mxu0 %v6361
        %6927 = vmatpush.bf16.msra.mxu0 %v6359
        %6928 = vmatpush.bf16.msra.mxu0 %v6357
        %6929 = vmatpush.bf16.msra.mxu0 %v6355
        %6930 = vmatpush.bf16.msra.mxu0 %v6353
        %6931 = vmatpush.bf16.msra.mxu0 %v6351
        %6932 = vmatpush.bf16.msra.mxu0 %v6349
        %6933 = vmatmul.bf16.gmra.mxu0 %v5341
        %v6934 = vpop.f32.mrf.mxu0
        %v6935 = vadd.f32 %v5121, %v6934
        %v6936 = vpop.f32.mrf.mxu0
        %v6937 = vadd.f32 %v5121, %v6936
        %6938 = vmatmul.bf16.gmra.mxu0 %v5359
        %v6939 = vpop.f32.mrf.mxu0
        %v6940 = vadd.f32 %v5121, %v6939
        %v6941 = vpop.f32.mrf.mxu0
        %v6942 = vadd.f32 %v5121, %v6941
        %6943 = vmatmul.bf16.gmra.mxu0 %v5377
        %v6944 = vpop.f32.mrf.mxu0
        %v6945 = vadd.f32 %v5121, %v6944
        %v6946 = vpop.f32.mrf.mxu0
        %v6947 = vadd.f32 %v5121, %v6946
        %6948 = vmatmul.bf16.gmra.mxu0 %v5395
        %v6949 = vpop.f32.mrf.mxu0
        %v6950 = vadd.f32 %v5121, %v6949
        %v6951 = vpop.f32.mrf.mxu0
        %v6952 = vadd.f32 %v5121, %v6951
        %6953 = vdwg.mxu0
        %6954 = vmatpush.bf16.msra.mxu0 %v6379
        %6955 = vmatpush.bf16.msra.mxu0 %v6377
        %6956 = vmatpush.bf16.msra.mxu0 %v6375
        %6957 = vmatpush.bf16.msra.mxu0 %v6373
        %6958 = vmatpush.bf16.msra.mxu0 %v6371
        %6959 = vmatpush.bf16.msra.mxu0 %v6369
        %6960 = vmatpush.bf16.msra.mxu0 %v6367
        %6961 = vmatpush.bf16.msra.mxu0 %v6365
        %6962 = vmatmul.bf16.gmra.mxu0 %v5342
        %v6963 = vpop.f32.mrf.mxu0
        %v6964 = vadd.f32 %v6935, %v6963
        %v6965 = vpop.f32.mrf.mxu0
        %v6966 = vadd.f32 %v6937, %v6965
        %6967 = vmatmul.bf16.gmra.mxu0 %v5360
        %v6968 = vpop.f32.mrf.mxu0
        %v6969 = vadd.f32 %v6940, %v6968
        %v6970 = vpop.f32.mrf.mxu0
        %v6971 = vadd.f32 %v6942, %v6970
        %6972 = vmatmul.bf16.gmra.mxu0 %v5378
        %v6973 = vpop.f32.mrf.mxu0
        %v6974 = vadd.f32 %v6945, %v6973
        %v6975 = vpop.f32.mrf.mxu0
        %v6976 = vadd.f32 %v6947, %v6975
        %6977 = vmatmul.bf16.gmra.mxu0 %v5396
        %v6978 = vpop.f32.mrf.mxu0
        %v6979 = vadd.f32 %v6950, %v6978
        %v6980 = vpop.f32.mrf.mxu0
        %v6981 = vadd.f32 %v6952, %v6980
        %6982 = vdwg.mxu0
        %6983 = vmatpush.bf16.msra.mxu0 %v6395
        %6984 = vmatpush.bf16.msra.mxu0 %v6393
        %6985 = vmatpush.bf16.msra.mxu0 %v6391
        %6986 = vmatpush.bf16.msra.mxu0 %v6389
        %6987 = vmatpush.bf16.msra.mxu0 %v6387
        %6988 = vmatpush.bf16.msra.mxu0 %v6385
        %6989 = vmatpush.bf16.msra.mxu0 %v6383
        %6990 = vmatpush.bf16.msra.mxu0 %v6381
        %6991 = vmatmul.bf16.gmra.mxu0 %v5343
        %v6992 = vpop.f32.mrf.mxu0
        %v6993 = vadd.f32 %v6964, %v6992
        %v6994 = vpop.f32.mrf.mxu0
        %v6995 = vadd.f32 %v6966, %v6994
        %6996 = vmatmul.bf16.gmra.mxu0 %v5361
        %v6997 = vpop.f32.mrf.mxu0
        %v6998 = vadd.f32 %v6969, %v6997
        %v6999 = vpop.f32.mrf.mxu0
        %v7000 = vadd.f32 %v6971, %v6999
        %7001 = vmatmul.bf16.gmra.mxu0 %v5379
        %v7002 = vpop.f32.mrf.mxu0
        %v7003 = vadd.f32 %v6974, %v7002
        %v7004 = vpop.f32.mrf.mxu0
        %v7005 = vadd.f32 %v6976, %v7004
        %7006 = vmatmul.bf16.gmra.mxu0 %v5397
        %v7007 = vpop.f32.mrf.mxu0
        %v7008 = vadd.f32 %v6979, %v7007
        %v7009 = vpop.f32.mrf.mxu0
        %v7010 = vadd.f32 %v6981, %v7009
        %7011 = vdwg.mxu0
        %7012 = vmatpush.bf16.msra.mxu0 %v6411
        %7013 = vmatpush.bf16.msra.mxu0 %v6409
        %7014 = vmatpush.bf16.msra.mxu0 %v6407
        %7015 = vmatpush.bf16.msra.mxu0 %v6405
        %7016 = vmatpush.bf16.msra.mxu0 %v6403
        %7017 = vmatpush.bf16.msra.mxu0 %v6401
        %7018 = vmatpush.bf16.msra.mxu0 %v6399
        %7019 = vmatpush.bf16.msra.mxu0 %v6397
        %7020 = vmatmul.bf16.gmra.mxu0 %v5344
        %v7021 = vpop.f32.mrf.mxu0
        %v7022 = vadd.f32 %v6993, %v7021
        %v7023 = vpop.f32.mrf.mxu0
        %v7024 = vadd.f32 %v6995, %v7023
        %7025 = vmatmul.bf16.gmra.mxu0 %v5362
        %v7026 = vpop.f32.mrf.mxu0
        %v7027 = vadd.f32 %v6998, %v7026
        %v7028 = vpop.f32.mrf.mxu0
        %v7029 = vadd.f32 %v7000, %v7028
        %7030 = vmatmul.bf16.gmra.mxu0 %v5380
        %v7031 = vpop.f32.mrf.mxu0
        %v7032 = vadd.f32 %v7003, %v7031
        %v7033 = vpop.f32.mrf.mxu0
        %v7034 = vadd.f32 %v7005, %v7033
        %7035 = vmatmul.bf16.gmra.mxu0 %v5398
        %v7036 = vpop.f32.mrf.mxu0
        %v7037 = vadd.f32 %v7008, %v7036
        %v7038 = vpop.f32.mrf.mxu0
        %v7039 = vadd.f32 %v7010, %v7038
        %7040 = vdwg.mxu0
        %7041 = vmatpush.bf16.msra.mxu0 %v6427
        %7042 = vmatpush.bf16.msra.mxu0 %v6425
        %7043 = vmatpush.bf16.msra.mxu0 %v6423
        %7044 = vmatpush.bf16.msra.mxu0 %v6421
        %7045 = vmatpush.bf16.msra.mxu0 %v6419
        %7046 = vmatpush.bf16.msra.mxu0 %v6417
        %7047 = vmatpush.bf16.msra.mxu0 %v6415
        %7048 = vmatpush.bf16.msra.mxu0 %v6413
        %7049 = vmatmul.bf16.gmra.mxu0 %v5345
        %v7050 = vpop.f32.mrf.mxu0
        %v7051 = vadd.f32 %v7022, %v7050
        %v7052 = vpop.f32.mrf.mxu0
        %v7053 = vadd.f32 %v7024, %v7052
        %7054 = vmatmul.bf16.gmra.mxu0 %v5363
        %v7055 = vpop.f32.mrf.mxu0
        %v7056 = vadd.f32 %v7027, %v7055
        %v7057 = vpop.f32.mrf.mxu0
        %v7058 = vadd.f32 %v7029, %v7057
        %7059 = vmatmul.bf16.gmra.mxu0 %v5381
        %v7060 = vpop.f32.mrf.mxu0
        %v7061 = vadd.f32 %v7032, %v7060
        %v7062 = vpop.f32.mrf.mxu0
        %v7063 = vadd.f32 %v7034, %v7062
        %7064 = vmatmul.bf16.gmra.mxu0 %v5399
        %v7065 = vpop.f32.mrf.mxu0
        %v7066 = vadd.f32 %v7037, %v7065
        %v7067 = vpop.f32.mrf.mxu0
        %v7068 = vadd.f32 %v7039, %v7067
        %7069 = vdwg.mxu0
        %7070 = vmatpush.bf16.msra.mxu0 %v6443
        %7071 = vmatpush.bf16.msra.mxu0 %v6441
        %7072 = vmatpush.bf16.msra.mxu0 %v6439
        %7073 = vmatpush.bf16.msra.mxu0 %v6437
        %7074 = vmatpush.bf16.msra.mxu0 %v6435
        %7075 = vmatpush.bf16.msra.mxu0 %v6433
        %7076 = vmatpush.bf16.msra.mxu0 %v6431
        %7077 = vmatpush.bf16.msra.mxu0 %v6429
        %7078 = vmatmul.bf16.gmra.mxu0 %v5346
        %v7079 = vpop.f32.mrf.mxu0
        %v7080 = vadd.f32 %v7051, %v7079
        %v7081 = vpop.f32.mrf.mxu0
        %v7082 = vadd.f32 %v7053, %v7081
        %7083 = vmatmul.bf16.gmra.mxu0 %v5364
        %v7084 = vpop.f32.mrf.mxu0
        %v7085 = vadd.f32 %v7056, %v7084
        %v7086 = vpop.f32.mrf.mxu0
        %v7087 = vadd.f32 %v7058, %v7086
        %7088 = vmatmul.bf16.gmra.mxu0 %v5382
        %v7089 = vpop.f32.mrf.mxu0
        %v7090 = vadd.f32 %v7061, %v7089
        %v7091 = vpop.f32.mrf.mxu0
        %v7092 = vadd.f32 %v7063, %v7091
        %7093 = vmatmul.bf16.gmra.mxu0 %v5400
        %v7094 = vpop.f32.mrf.mxu0
        %v7095 = vadd.f32 %v7066, %v7094
        %v7096 = vpop.f32.mrf.mxu0
        %v7097 = vadd.f32 %v7068, %v7096
        %7098 = vdwg.mxu0
        %7099 = vmatpush.bf16.msra.mxu0 %v6459
        %7100 = vmatpush.bf16.msra.mxu0 %v6457
        %7101 = vmatpush.bf16.msra.mxu0 %v6455
        %7102 = vmatpush.bf16.msra.mxu0 %v6453
        %7103 = vmatpush.bf16.msra.mxu0 %v6451
        %7104 = vmatpush.bf16.msra.mxu0 %v6449
        %7105 = vmatpush.bf16.msra.mxu0 %v6447
        %7106 = vmatpush.bf16.msra.mxu0 %v6445
        %7107 = vmatmul.bf16.gmra.mxu0 %v5347
        %v7108 = vpop.f32.mrf.mxu0
        %v7109 = vadd.f32 %v7080, %v7108
        %v7110 = vpop.f32.mrf.mxu0
        %v7111 = vadd.f32 %v7082, %v7110
        %7112 = vmatmul.bf16.gmra.mxu0 %v5365
        %v7113 = vpop.f32.mrf.mxu0
        %v7114 = vadd.f32 %v7085, %v7113
        %v7115 = vpop.f32.mrf.mxu0
        %v7116 = vadd.f32 %v7087, %v7115
        %7117 = vmatmul.bf16.gmra.mxu0 %v5383
        %v7118 = vpop.f32.mrf.mxu0
        %v7119 = vadd.f32 %v7090, %v7118
        %v7120 = vpop.f32.mrf.mxu0
        %v7121 = vadd.f32 %v7092, %v7120
        %7122 = vmatmul.bf16.gmra.mxu0 %v5401
        %v7123 = vpop.f32.mrf.mxu0
        %v7124 = vadd.f32 %v7095, %v7123
        %v7125 = vpop.f32.mrf.mxu0
        %v7126 = vadd.f32 %v7097, %v7125
        %7127 = vdwg.mxu0
        %7128 = vmatpush.bf16.msra.mxu0 %v6475
        %7129 = vmatpush.bf16.msra.mxu0 %v6473
        %7130 = vmatpush.bf16.msra.mxu0 %v6471
        %7131 = vmatpush.bf16.msra.mxu0 %v6469
        %7132 = vmatpush.bf16.msra.mxu0 %v6467
        %7133 = vmatpush.bf16.msra.mxu0 %v6465
        %7134 = vmatpush.bf16.msra.mxu0 %v6463
        %7135 = vmatpush.bf16.msra.mxu0 %v6461
        %7136 = vmatmul.bf16.gmra.mxu0 %v5348
        %v7137 = vpop.f32.mrf.mxu0
        %v7138 = vadd.f32 %v7109, %v7137
        %v7139 = vpop.f32.mrf.mxu0
        %v7140 = vadd.f32 %v7111, %v7139
        %7141 = vmatmul.bf16.gmra.mxu0 %v5366
        %v7142 = vpop.f32.mrf.mxu0
        %v7143 = vadd.f32 %v7114, %v7142
        %v7144 = vpop.f32.mrf.mxu0
        %v7145 = vadd.f32 %v7116, %v7144
        %7146 = vmatmul.bf16.gmra.mxu0 %v5384
        %v7147 = vpop.f32.mrf.mxu0
        %v7148 = vadd.f32 %v7119, %v7147
        %v7149 = vpop.f32.mrf.mxu0
        %v7150 = vadd.f32 %v7121, %v7149
        %7151 = vmatmul.bf16.gmra.mxu0 %v5402
        %v7152 = vpop.f32.mrf.mxu0
        %v7153 = vadd.f32 %v7124, %v7152
        %v7154 = vpop.f32.mrf.mxu0
        %v7155 = vadd.f32 %v7126, %v7154
        %7156 = vdwg.mxu0
        %7157 = vmatpush.bf16.msra.mxu0 %v6491
        %7158 = vmatpush.bf16.msra.mxu0 %v6489
        %7159 = vmatpush.bf16.msra.mxu0 %v6487
        %7160 = vmatpush.bf16.msra.mxu0 %v6485
        %7161 = vmatpush.bf16.msra.mxu0 %v6483
        %7162 = vmatpush.bf16.msra.mxu0 %v6481
        %7163 = vmatpush.bf16.msra.mxu0 %v6479
        %7164 = vmatpush.bf16.msra.mxu0 %v6477
        %7165 = vmatmul.bf16.gmra.mxu0 %v5349
        %v7166 = vpop.f32.mrf.mxu0
        %v7167 = vadd.f32 %v7138, %v7166
        %v7168 = vpop.f32.mrf.mxu0
        %v7169 = vadd.f32 %v7140, %v7168
        %7170 = vmatmul.bf16.gmra.mxu0 %v5367
        %v7171 = vpop.f32.mrf.mxu0
        %v7172 = vadd.f32 %v7143, %v7171
        %v7173 = vpop.f32.mrf.mxu0
        %v7174 = vadd.f32 %v7145, %v7173
        %7175 = vmatmul.bf16.gmra.mxu0 %v5385
        %v7176 = vpop.f32.mrf.mxu0
        %v7177 = vadd.f32 %v7148, %v7176
        %v7178 = vpop.f32.mrf.mxu0
        %v7179 = vadd.f32 %v7150, %v7178
        %7180 = vmatmul.bf16.gmra.mxu0 %v5403
        %v7181 = vpop.f32.mrf.mxu0
        %v7182 = vadd.f32 %v7153, %v7181
        %v7183 = vpop.f32.mrf.mxu0
        %v7184 = vadd.f32 %v7155, %v7183
        %7185 = vdwg.mxu0
        %7186 = vmatpush.bf16.msra.mxu0 %v6507
        %7187 = vmatpush.bf16.msra.mxu0 %v6505
        %7188 = vmatpush.bf16.msra.mxu0 %v6503
        %7189 = vmatpush.bf16.msra.mxu0 %v6501
        %7190 = vmatpush.bf16.msra.mxu0 %v6499
        %7191 = vmatpush.bf16.msra.mxu0 %v6497
        %7192 = vmatpush.bf16.msra.mxu0 %v6495
        %7193 = vmatpush.bf16.msra.mxu0 %v6493
        %7194 = vmatmul.bf16.gmra.mxu0 %v5350
        %v7195 = vpop.f32.mrf.mxu0
        %v7196 = vadd.f32 %v7167, %v7195
        %v7197 = vpop.f32.mrf.mxu0
        %v7198 = vadd.f32 %v7169, %v7197
        %7199 = vmatmul.bf16.gmra.mxu0 %v5368
        %v7200 = vpop.f32.mrf.mxu0
        %v7201 = vadd.f32 %v7172, %v7200
        %v7202 = vpop.f32.mrf.mxu0
        %v7203 = vadd.f32 %v7174, %v7202
        %7204 = vmatmul.bf16.gmra.mxu0 %v5386
        %v7205 = vpop.f32.mrf.mxu0
        %v7206 = vadd.f32 %v7177, %v7205
        %v7207 = vpop.f32.mrf.mxu0
        %v7208 = vadd.f32 %v7179, %v7207
        %7209 = vmatmul.bf16.gmra.mxu0 %v5404
        %v7210 = vpop.f32.mrf.mxu0
        %v7211 = vadd.f32 %v7182, %v7210
        %v7212 = vpop.f32.mrf.mxu0
        %v7213 = vadd.f32 %v7184, %v7212
        %7214 = vdwg.mxu0
        %7215 = vmatpush.bf16.msra.mxu0 %v6523
        %7216 = vmatpush.bf16.msra.mxu0 %v6521
        %7217 = vmatpush.bf16.msra.mxu0 %v6519
        %7218 = vmatpush.bf16.msra.mxu0 %v6517
        %7219 = vmatpush.bf16.msra.mxu0 %v6515
        %7220 = vmatpush.bf16.msra.mxu0 %v6513
        %7221 = vmatpush.bf16.msra.mxu0 %v6511
        %7222 = vmatpush.bf16.msra.mxu0 %v6509
        %7223 = vmatmul.bf16.gmra.mxu0 %v5351
        %v7224 = vpop.f32.mrf.mxu0
        %v7225 = vadd.f32 %v7196, %v7224
        %v7226 = vpop.f32.mrf.mxu0
        %v7227 = vadd.f32 %v7198, %v7226
        %7228 = vmatmul.bf16.gmra.mxu0 %v5369
        %v7229 = vpop.f32.mrf.mxu0
        %v7230 = vadd.f32 %v7201, %v7229
        %v7231 = vpop.f32.mrf.mxu0
        %v7232 = vadd.f32 %v7203, %v7231
        %7233 = vmatmul.bf16.gmra.mxu0 %v5387
        %v7234 = vpop.f32.mrf.mxu0
        %v7235 = vadd.f32 %v7206, %v7234
        %v7236 = vpop.f32.mrf.mxu0
        %v7237 = vadd.f32 %v7208, %v7236
        %7238 = vmatmul.bf16.gmra.mxu0 %v5405
        %v7239 = vpop.f32.mrf.mxu0
        %v7240 = vadd.f32 %v7211, %v7239
        %v7241 = vpop.f32.mrf.mxu0
        %v7242 = vadd.f32 %v7213, %v7241
        %7243 = vdwg.mxu0
        %7244 = vmatpush.bf16.msra.mxu0 %v6539
        %7245 = vmatpush.bf16.msra.mxu0 %v6537
        %7246 = vmatpush.bf16.msra.mxu0 %v6535
        %7247 = vmatpush.bf16.msra.mxu0 %v6533
        %7248 = vmatpush.bf16.msra.mxu0 %v6531
        %7249 = vmatpush.bf16.msra.mxu0 %v6529
        %7250 = vmatpush.bf16.msra.mxu0 %v6527
        %7251 = vmatpush.bf16.msra.mxu0 %v6525
        %7252 = vmatmul.bf16.gmra.mxu0 %v5352
        %v7253 = vpop.f32.mrf.mxu0
        %v7254 = vadd.f32 %v7225, %v7253
        %v7255 = vpop.f32.mrf.mxu0
        %v7256 = vadd.f32 %v7227, %v7255
        %7257 = vmatmul.bf16.gmra.mxu0 %v5370
        %v7258 = vpop.f32.mrf.mxu0
        %v7259 = vadd.f32 %v7230, %v7258
        %v7260 = vpop.f32.mrf.mxu0
        %v7261 = vadd.f32 %v7232, %v7260
        %7262 = vmatmul.bf16.gmra.mxu0 %v5388
        %v7263 = vpop.f32.mrf.mxu0
        %v7264 = vadd.f32 %v7235, %v7263
        %v7265 = vpop.f32.mrf.mxu0
        %v7266 = vadd.f32 %v7237, %v7265
        %7267 = vmatmul.bf16.gmra.mxu0 %v5406
        %v7268 = vpop.f32.mrf.mxu0
        %v7269 = vadd.f32 %v7240, %v7268
        %v7270 = vpop.f32.mrf.mxu0
        %v7271 = vadd.f32 %v7242, %v7270
        %7272 = vdwg.mxu0
        %7273 = vmatpush.bf16.msra.mxu0 %v6555
        %7274 = vmatpush.bf16.msra.mxu0 %v6553
        %7275 = vmatpush.bf16.msra.mxu0 %v6551
        %7276 = vmatpush.bf16.msra.mxu0 %v6549
        %7277 = vmatpush.bf16.msra.mxu0 %v6547
        %7278 = vmatpush.bf16.msra.mxu0 %v6545
        %7279 = vmatpush.bf16.msra.mxu0 %v6543
        %7280 = vmatpush.bf16.msra.mxu0 %v6541
        %7281 = vmatmul.bf16.gmra.mxu0 %v5353
        %v7282 = vpop.f32.mrf.mxu0
        %v7283 = vadd.f32 %v7254, %v7282
        %v7284 = vpop.f32.mrf.mxu0
        %v7285 = vadd.f32 %v7256, %v7284
        %7286 = vmatmul.bf16.gmra.mxu0 %v5371
        %v7287 = vpop.f32.mrf.mxu0
        %v7288 = vadd.f32 %v7259, %v7287
        %v7289 = vpop.f32.mrf.mxu0
        %v7290 = vadd.f32 %v7261, %v7289
        %7291 = vmatmul.bf16.gmra.mxu0 %v5389
        %v7292 = vpop.f32.mrf.mxu0
        %v7293 = vadd.f32 %v7264, %v7292
        %v7294 = vpop.f32.mrf.mxu0
        %v7295 = vadd.f32 %v7266, %v7294
        %7296 = vmatmul.bf16.gmra.mxu0 %v5407
        %v7297 = vpop.f32.mrf.mxu0
        %v7298 = vadd.f32 %v7269, %v7297
        %v7299 = vpop.f32.mrf.mxu0
        %v7300 = vadd.f32 %v7271, %v7299
        %7301 = vdwg.mxu0
        %7302 = vmatpush.bf16.msra.mxu0 %v6571
        %7303 = vmatpush.bf16.msra.mxu0 %v6569
        %7304 = vmatpush.bf16.msra.mxu0 %v6567
        %7305 = vmatpush.bf16.msra.mxu0 %v6565
        %7306 = vmatpush.bf16.msra.mxu0 %v6563
        %7307 = vmatpush.bf16.msra.mxu0 %v6561
        %7308 = vmatpush.bf16.msra.mxu0 %v6559
        %7309 = vmatpush.bf16.msra.mxu0 %v6557
        %7310 = vmatmul.bf16.gmra.mxu0 %v5354
        %v7311 = vpop.f32.mrf.mxu0
        %v7312 = vadd.f32 %v7283, %v7311
        %v7313 = vpop.f32.mrf.mxu0
        %v7314 = vadd.f32 %v7285, %v7313
        %7315 = vmatmul.bf16.gmra.mxu0 %v5372
        %v7316 = vpop.f32.mrf.mxu0
        %v7317 = vadd.f32 %v7288, %v7316
        %v7318 = vpop.f32.mrf.mxu0
        %v7319 = vadd.f32 %v7290, %v7318
        %7320 = vmatmul.bf16.gmra.mxu0 %v5390
        %v7321 = vpop.f32.mrf.mxu0
        %v7322 = vadd.f32 %v7293, %v7321
        %v7323 = vpop.f32.mrf.mxu0
        %v7324 = vadd.f32 %v7295, %v7323
        %7325 = vmatmul.bf16.gmra.mxu0 %v5408
        %v7326 = vpop.f32.mrf.mxu0
        %v7327 = vadd.f32 %v7298, %v7326
        %v7328 = vpop.f32.mrf.mxu0
        %v7329 = vadd.f32 %v7300, %v7328
        %7330 = vdwg.mxu0
        %7331 = vmatpush.bf16.msra.mxu0 %v6587
        %7332 = vmatpush.bf16.msra.mxu0 %v6585
        %7333 = vmatpush.bf16.msra.mxu0 %v6583
        %7334 = vmatpush.bf16.msra.mxu0 %v6581
        %7335 = vmatpush.bf16.msra.mxu0 %v6579
        %7336 = vmatpush.bf16.msra.mxu0 %v6577
        %7337 = vmatpush.bf16.msra.mxu0 %v6575
        %7338 = vmatpush.bf16.msra.mxu0 %v6573
        %7339 = vmatmul.bf16.gmra.mxu0 %v5355
        %v7340 = vpop.f32.mrf.mxu0
        %v7341 = vadd.f32 %v7312, %v7340
        %v7342 = vpop.f32.mrf.mxu0
        %v7343 = vadd.f32 %v7314, %v7342
        %7344 = vmatmul.bf16.gmra.mxu0 %v5373
        %v7345 = vpop.f32.mrf.mxu0
        %v7346 = vadd.f32 %v7317, %v7345
        %v7347 = vpop.f32.mrf.mxu0
        %v7348 = vadd.f32 %v7319, %v7347
        %7349 = vmatmul.bf16.gmra.mxu0 %v5391
        %v7350 = vpop.f32.mrf.mxu0
        %v7351 = vadd.f32 %v7322, %v7350
        %v7352 = vpop.f32.mrf.mxu0
        %v7353 = vadd.f32 %v7324, %v7352
        %7354 = vmatmul.bf16.gmra.mxu0 %v5409
        %v7355 = vpop.f32.mrf.mxu0
        %v7356 = vadd.f32 %v7327, %v7355
        %v7357 = vpop.f32.mrf.mxu0
        %v7358 = vadd.f32 %v7329, %v7357
        %7359 = vdwg.mxu0
        %7360 = vmatpush.bf16.msra.mxu0 %v6603
        %7361 = vmatpush.bf16.msra.mxu0 %v6601
        %7362 = vmatpush.bf16.msra.mxu0 %v6599
        %7363 = vmatpush.bf16.msra.mxu0 %v6597
        %7364 = vmatpush.bf16.msra.mxu0 %v6595
        %7365 = vmatpush.bf16.msra.mxu0 %v6593
        %7366 = vmatpush.bf16.msra.mxu0 %v6591
        %7367 = vmatpush.bf16.msra.mxu0 %v6589
        %7368 = vmatmul.bf16.gmra.mxu0 %v5356
        %v7369 = vpop.f32.mrf.mxu0
        %v7370 = vadd.f32 %v7341, %v7369
        %v7371 = vpop.f32.mrf.mxu0
        %v7372 = vadd.f32 %v7343, %v7371
        %7373 = vmatmul.bf16.gmra.mxu0 %v5374
        %v7374 = vpop.f32.mrf.mxu0
        %v7375 = vadd.f32 %v7346, %v7374
        %v7376 = vpop.f32.mrf.mxu0
        %v7377 = vadd.f32 %v7348, %v7376
        %7378 = vmatmul.bf16.gmra.mxu0 %v5392
        %v7379 = vpop.f32.mrf.mxu0
        %v7380 = vadd.f32 %v7351, %v7379
        %v7381 = vpop.f32.mrf.mxu0
        %v7382 = vadd.f32 %v7353, %v7381
        %7383 = vmatmul.bf16.gmra.mxu0 %v5410
        %v7384 = vpop.f32.mrf.mxu0
        %v7385 = vadd.f32 %v7356, %v7384
        %v7386 = vpop.f32.mrf.mxu0
        %v7387 = vadd.f32 %v7358, %v7386
        %7388 = vdwg.mxu0
        %7389 = vmatpush.bf16.msra.mxu0 %v6619
        %7390 = vmatpush.bf16.msra.mxu0 %v6617
        %7391 = vmatpush.bf16.msra.mxu0 %v6615
        %7392 = vmatpush.bf16.msra.mxu0 %v6613
        %7393 = vmatpush.bf16.msra.mxu0 %v6611
        %7394 = vmatpush.bf16.msra.mxu0 %v6609
        %7395 = vmatpush.bf16.msra.mxu0 %v6607
        %7396 = vmatpush.bf16.msra.mxu0 %v6605
        %7397 = vmatmul.bf16.gmra.mxu0 %v5357
        %v7398 = vpop.f32.mrf.mxu0
        %v7399 = vadd.f32 %v7370, %v7398
        %v7400 = vpop.f32.mrf.mxu0
        %v7401 = vadd.f32 %v7372, %v7400
        %7402 = vmatmul.bf16.gmra.mxu0 %v5375
        %v7403 = vpop.f32.mrf.mxu0
        %v7404 = vadd.f32 %v7375, %v7403
        %v7405 = vpop.f32.mrf.mxu0
        %v7406 = vadd.f32 %v7377, %v7405
        %7407 = vmatmul.bf16.gmra.mxu0 %v5393
        %v7408 = vpop.f32.mrf.mxu0
        %v7409 = vadd.f32 %v7380, %v7408
        %v7410 = vpop.f32.mrf.mxu0
        %v7411 = vadd.f32 %v7382, %v7410
        %7412 = vmatmul.bf16.gmra.mxu0 %v5411
        %v7413 = vpop.f32.mrf.mxu0
        %v7414 = vadd.f32 %v7385, %v7413
        %v7415 = vpop.f32.mrf.mxu0
        %v7416 = vadd.f32 %v7387, %v7415
        %7417 = vdwg.mxu0
        %7418 = vmatpush.bf16.msra.mxu0 %v6635
        %7419 = vmatpush.bf16.msra.mxu0 %v6633
        %7420 = vmatpush.bf16.msra.mxu0 %v6631
        %7421 = vmatpush.bf16.msra.mxu0 %v6629
        %7422 = vmatpush.bf16.msra.mxu0 %v6627
        %7423 = vmatpush.bf16.msra.mxu0 %v6625
        %7424 = vmatpush.bf16.msra.mxu0 %v6623
        %7425 = vmatpush.bf16.msra.mxu0 %v6621
        %7426 = vmatmul.bf16.gmra.mxu0 %v5358
        %v7427 = vpop.f32.mrf.mxu0
        %v7428 = vadd.f32 %v7399, %v7427
        %v7429 = vpop.f32.mrf.mxu0
        %v7430 = vadd.f32 %v7401, %v7429
        %7431 = vmatmul.bf16.gmra.mxu0 %v5376
        %v7432 = vpop.f32.mrf.mxu0
        %v7433 = vadd.f32 %v7404, %v7432
        %v7434 = vpop.f32.mrf.mxu0
        %v7435 = vadd.f32 %v7406, %v7434
        %7436 = vmatmul.bf16.gmra.mxu0 %v5394
        %v7437 = vpop.f32.mrf.mxu0
        %v7438 = vadd.f32 %v7409, %v7437
        %v7439 = vpop.f32.mrf.mxu0
        %v7440 = vadd.f32 %v7411, %v7439
        %7441 = vmatmul.bf16.gmra.mxu0 %v5412
        %v7442 = vpop.f32.mrf.mxu0
        %v7443 = vadd.f32 %v7414, %v7442
        %v7444 = vpop.f32.mrf.mxu0
        %v7445 = vadd.f32 %v7416, %v7444
        %7446 = vdwg.mxu0
        %7447 = vmatpush.bf16.msra.mxu0 %v6364
        %7448 = vmatpush.bf16.msra.mxu0 %v6362
        %7449 = vmatpush.bf16.msra.mxu0 %v6360
        %7450 = vmatpush.bf16.msra.mxu0 %v6358
        %7451 = vmatpush.bf16.msra.mxu0 %v6356
        %7452 = vmatpush.bf16.msra.mxu0 %v6354
        %7453 = vmatpush.bf16.msra.mxu0 %v6352
        %7454 = vmatpush.bf16.msra.mxu0 %v6350
        %7455 = vmatmul.bf16.gmra.mxu0 %v5341
        %v7456 = vpop.f32.mrf.mxu0
        %v7457 = vadd.f32 %v5122, %v7456
        %v7458 = vpop.f32.mrf.mxu0
        %v7459 = vadd.f32 %v5122, %v7458
        %7460 = vmatmul.bf16.gmra.mxu0 %v5359
        %v7461 = vpop.f32.mrf.mxu0
        %v7462 = vadd.f32 %v5122, %v7461
        %v7463 = vpop.f32.mrf.mxu0
        %v7464 = vadd.f32 %v5122, %v7463
        %7465 = vmatmul.bf16.gmra.mxu0 %v5377
        %v7466 = vpop.f32.mrf.mxu0
        %v7467 = vadd.f32 %v5122, %v7466
        %v7468 = vpop.f32.mrf.mxu0
        %v7469 = vadd.f32 %v5122, %v7468
        %7470 = vmatmul.bf16.gmra.mxu0 %v5395
        %v7471 = vpop.f32.mrf.mxu0
        %v7472 = vadd.f32 %v5122, %v7471
        %v7473 = vpop.f32.mrf.mxu0
        %v7474 = vadd.f32 %v5122, %v7473
        %7475 = vdwg.mxu0
        %7476 = vmatpush.bf16.msra.mxu0 %v6380
        %7477 = vmatpush.bf16.msra.mxu0 %v6378
        %7478 = vmatpush.bf16.msra.mxu0 %v6376
        %7479 = vmatpush.bf16.msra.mxu0 %v6374
        %7480 = vmatpush.bf16.msra.mxu0 %v6372
        %7481 = vmatpush.bf16.msra.mxu0 %v6370
        %7482 = vmatpush.bf16.msra.mxu0 %v6368
        %7483 = vmatpush.bf16.msra.mxu0 %v6366
        %7484 = vmatmul.bf16.gmra.mxu0 %v5342
        %v7485 = vpop.f32.mrf.mxu0
        %v7486 = vadd.f32 %v7457, %v7485
        %v7487 = vpop.f32.mrf.mxu0
        %v7488 = vadd.f32 %v7459, %v7487
        %7489 = vmatmul.bf16.gmra.mxu0 %v5360
        %v7490 = vpop.f32.mrf.mxu0
        %v7491 = vadd.f32 %v7462, %v7490
        %v7492 = vpop.f32.mrf.mxu0
        %v7493 = vadd.f32 %v7464, %v7492
        %7494 = vmatmul.bf16.gmra.mxu0 %v5378
        %v7495 = vpop.f32.mrf.mxu0
        %v7496 = vadd.f32 %v7467, %v7495
        %v7497 = vpop.f32.mrf.mxu0
        %v7498 = vadd.f32 %v7469, %v7497
        %7499 = vmatmul.bf16.gmra.mxu0 %v5396
        %v7500 = vpop.f32.mrf.mxu0
        %v7501 = vadd.f32 %v7472, %v7500
        %v7502 = vpop.f32.mrf.mxu0
        %v7503 = vadd.f32 %v7474, %v7502
        %7504 = vdwg.mxu0
        %7505 = vmatpush.bf16.msra.mxu0 %v6396
        %7506 = vmatpush.bf16.msra.mxu0 %v6394
        %7507 = vmatpush.bf16.msra.mxu0 %v6392
        %7508 = vmatpush.bf16.msra.mxu0 %v6390
        %7509 = vmatpush.bf16.msra.mxu0 %v6388
        %7510 = vmatpush.bf16.msra.mxu0 %v6386
        %7511 = vmatpush.bf16.msra.mxu0 %v6384
        %7512 = vmatpush.bf16.msra.mxu0 %v6382
        %7513 = vmatmul.bf16.gmra.mxu0 %v5343
        %v7514 = vpop.f32.mrf.mxu0
        %v7515 = vadd.f32 %v7486, %v7514
        %v7516 = vpop.f32.mrf.mxu0
        %v7517 = vadd.f32 %v7488, %v7516
        %7518 = vmatmul.bf16.gmra.mxu0 %v5361
        %v7519 = vpop.f32.mrf.mxu0
        %v7520 = vadd.f32 %v7491, %v7519
        %v7521 = vpop.f32.mrf.mxu0
        %v7522 = vadd.f32 %v7493, %v7521
        %7523 = vmatmul.bf16.gmra.mxu0 %v5379
        %v7524 = vpop.f32.mrf.mxu0
        %v7525 = vadd.f32 %v7496, %v7524
        %v7526 = vpop.f32.mrf.mxu0
        %v7527 = vadd.f32 %v7498, %v7526
        %7528 = vmatmul.bf16.gmra.mxu0 %v5397
        %v7529 = vpop.f32.mrf.mxu0
        %v7530 = vadd.f32 %v7501, %v7529
        %v7531 = vpop.f32.mrf.mxu0
        %v7532 = vadd.f32 %v7503, %v7531
        %7533 = vdwg.mxu0
        %7534 = vmatpush.bf16.msra.mxu0 %v6412
        %7535 = vmatpush.bf16.msra.mxu0 %v6410
        %7536 = vmatpush.bf16.msra.mxu0 %v6408
        %7537 = vmatpush.bf16.msra.mxu0 %v6406
        %7538 = vmatpush.bf16.msra.mxu0 %v6404
        %7539 = vmatpush.bf16.msra.mxu0 %v6402
        %7540 = vmatpush.bf16.msra.mxu0 %v6400
        %7541 = vmatpush.bf16.msra.mxu0 %v6398
        %7542 = vmatmul.bf16.gmra.mxu0 %v5344
        %v7543 = vpop.f32.mrf.mxu0
        %v7544 = vadd.f32 %v7515, %v7543
        %v7545 = vpop.f32.mrf.mxu0
        %v7546 = vadd.f32 %v7517, %v7545
        %7547 = vmatmul.bf16.gmra.mxu0 %v5362
        %v7548 = vpop.f32.mrf.mxu0
        %v7549 = vadd.f32 %v7520, %v7548
        %v7550 = vpop.f32.mrf.mxu0
        %v7551 = vadd.f32 %v7522, %v7550
        %7552 = vmatmul.bf16.gmra.mxu0 %v5380
        %v7553 = vpop.f32.mrf.mxu0
        %v7554 = vadd.f32 %v7525, %v7553
        %v7555 = vpop.f32.mrf.mxu0
        %v7556 = vadd.f32 %v7527, %v7555
        %7557 = vmatmul.bf16.gmra.mxu0 %v5398
        %v7558 = vpop.f32.mrf.mxu0
        %v7559 = vadd.f32 %v7530, %v7558
        %v7560 = vpop.f32.mrf.mxu0
        %v7561 = vadd.f32 %v7532, %v7560
        %7562 = vdwg.mxu0
        %7563 = vmatpush.bf16.msra.mxu0 %v6428
        %7564 = vmatpush.bf16.msra.mxu0 %v6426
        %7565 = vmatpush.bf16.msra.mxu0 %v6424
        %7566 = vmatpush.bf16.msra.mxu0 %v6422
        %7567 = vmatpush.bf16.msra.mxu0 %v6420
        %7568 = vmatpush.bf16.msra.mxu0 %v6418
        %7569 = vmatpush.bf16.msra.mxu0 %v6416
        %7570 = vmatpush.bf16.msra.mxu0 %v6414
        %7571 = vmatmul.bf16.gmra.mxu0 %v5345
        %v7572 = vpop.f32.mrf.mxu0
        %v7573 = vadd.f32 %v7544, %v7572
        %v7574 = vpop.f32.mrf.mxu0
        %v7575 = vadd.f32 %v7546, %v7574
        %7576 = vmatmul.bf16.gmra.mxu0 %v5363
        %v7577 = vpop.f32.mrf.mxu0
        %v7578 = vadd.f32 %v7549, %v7577
        %v7579 = vpop.f32.mrf.mxu0
        %v7580 = vadd.f32 %v7551, %v7579
        %7581 = vmatmul.bf16.gmra.mxu0 %v5381
        %v7582 = vpop.f32.mrf.mxu0
        %v7583 = vadd.f32 %v7554, %v7582
        %v7584 = vpop.f32.mrf.mxu0
        %v7585 = vadd.f32 %v7556, %v7584
        %7586 = vmatmul.bf16.gmra.mxu0 %v5399
        %v7587 = vpop.f32.mrf.mxu0
        %v7588 = vadd.f32 %v7559, %v7587
        %v7589 = vpop.f32.mrf.mxu0
        %v7590 = vadd.f32 %v7561, %v7589
        %7591 = vdwg.mxu0
        %7592 = vmatpush.bf16.msra.mxu0 %v6444
        %7593 = vmatpush.bf16.msra.mxu0 %v6442
        %7594 = vmatpush.bf16.msra.mxu0 %v6440
        %7595 = vmatpush.bf16.msra.mxu0 %v6438
        %7596 = vmatpush.bf16.msra.mxu0 %v6436
        %7597 = vmatpush.bf16.msra.mxu0 %v6434
        %7598 = vmatpush.bf16.msra.mxu0 %v6432
        %7599 = vmatpush.bf16.msra.mxu0 %v6430
        %7600 = vmatmul.bf16.gmra.mxu0 %v5346
        %v7601 = vpop.f32.mrf.mxu0
        %v7602 = vadd.f32 %v7573, %v7601
        %v7603 = vpop.f32.mrf.mxu0
        %v7604 = vadd.f32 %v7575, %v7603
        %7605 = vmatmul.bf16.gmra.mxu0 %v5364
        %v7606 = vpop.f32.mrf.mxu0
        %v7607 = vadd.f32 %v7578, %v7606
        %v7608 = vpop.f32.mrf.mxu0
        %v7609 = vadd.f32 %v7580, %v7608
        %7610 = vmatmul.bf16.gmra.mxu0 %v5382
        %v7611 = vpop.f32.mrf.mxu0
        %v7612 = vadd.f32 %v7583, %v7611
        %v7613 = vpop.f32.mrf.mxu0
        %v7614 = vadd.f32 %v7585, %v7613
        %7615 = vmatmul.bf16.gmra.mxu0 %v5400
        %v7616 = vpop.f32.mrf.mxu0
        %v7617 = vadd.f32 %v7588, %v7616
        %v7618 = vpop.f32.mrf.mxu0
        %v7619 = vadd.f32 %v7590, %v7618
        %7620 = vdwg.mxu0
        %7621 = vmatpush.bf16.msra.mxu0 %v6460
        %7622 = vmatpush.bf16.msra.mxu0 %v6458
        %7623 = vmatpush.bf16.msra.mxu0 %v6456
        %7624 = vmatpush.bf16.msra.mxu0 %v6454
        %7625 = vmatpush.bf16.msra.mxu0 %v6452
        %7626 = vmatpush.bf16.msra.mxu0 %v6450
        %7627 = vmatpush.bf16.msra.mxu0 %v6448
        %7628 = vmatpush.bf16.msra.mxu0 %v6446
        %7629 = vmatmul.bf16.gmra.mxu0 %v5347
        %v7630 = vpop.f32.mrf.mxu0
        %v7631 = vadd.f32 %v7602, %v7630
        %v7632 = vpop.f32.mrf.mxu0
        %v7633 = vadd.f32 %v7604, %v7632
        %7634 = vmatmul.bf16.gmra.mxu0 %v5365
        %v7635 = vpop.f32.mrf.mxu0
        %v7636 = vadd.f32 %v7607, %v7635
        %v7637 = vpop.f32.mrf.mxu0
        %v7638 = vadd.f32 %v7609, %v7637
        %7639 = vmatmul.bf16.gmra.mxu0 %v5383
        %v7640 = vpop.f32.mrf.mxu0
        %v7641 = vadd.f32 %v7612, %v7640
        %v7642 = vpop.f32.mrf.mxu0
        %v7643 = vadd.f32 %v7614, %v7642
        %7644 = vmatmul.bf16.gmra.mxu0 %v5401
        %v7645 = vpop.f32.mrf.mxu0
        %v7646 = vadd.f32 %v7617, %v7645
        %v7647 = vpop.f32.mrf.mxu0
        %v7648 = vadd.f32 %v7619, %v7647
        %7649 = vdwg.mxu0
        %7650 = vmatpush.bf16.msra.mxu0 %v6476
        %7651 = vmatpush.bf16.msra.mxu0 %v6474
        %7652 = vmatpush.bf16.msra.mxu0 %v6472
        %7653 = vmatpush.bf16.msra.mxu0 %v6470
        %7654 = vmatpush.bf16.msra.mxu0 %v6468
        %7655 = vmatpush.bf16.msra.mxu0 %v6466
        %7656 = vmatpush.bf16.msra.mxu0 %v6464
        %7657 = vmatpush.bf16.msra.mxu0 %v6462
        %7658 = vmatmul.bf16.gmra.mxu0 %v5348
        %v7659 = vpop.f32.mrf.mxu0
        %v7660 = vadd.f32 %v7631, %v7659
        %v7661 = vpop.f32.mrf.mxu0
        %v7662 = vadd.f32 %v7633, %v7661
        %7663 = vmatmul.bf16.gmra.mxu0 %v5366
        %v7664 = vpop.f32.mrf.mxu0
        %v7665 = vadd.f32 %v7636, %v7664
        %v7666 = vpop.f32.mrf.mxu0
        %v7667 = vadd.f32 %v7638, %v7666
        %7668 = vmatmul.bf16.gmra.mxu0 %v5384
        %v7669 = vpop.f32.mrf.mxu0
        %v7670 = vadd.f32 %v7641, %v7669
        %v7671 = vpop.f32.mrf.mxu0
        %v7672 = vadd.f32 %v7643, %v7671
        %7673 = vmatmul.bf16.gmra.mxu0 %v5402
        %v7674 = vpop.f32.mrf.mxu0
        %v7675 = vadd.f32 %v7646, %v7674
        %v7676 = vpop.f32.mrf.mxu0
        %v7677 = vadd.f32 %v7648, %v7676
        %7678 = vdwg.mxu0
        %7679 = vmatpush.bf16.msra.mxu0 %v6492
        %7680 = vmatpush.bf16.msra.mxu0 %v6490
        %7681 = vmatpush.bf16.msra.mxu0 %v6488
        %7682 = vmatpush.bf16.msra.mxu0 %v6486
        %7683 = vmatpush.bf16.msra.mxu0 %v6484
        %7684 = vmatpush.bf16.msra.mxu0 %v6482
        %7685 = vmatpush.bf16.msra.mxu0 %v6480
        %7686 = vmatpush.bf16.msra.mxu0 %v6478
        %7687 = vmatmul.bf16.gmra.mxu0 %v5349
        %v7688 = vpop.f32.mrf.mxu0
        %v7689 = vadd.f32 %v7660, %v7688
        %v7690 = vpop.f32.mrf.mxu0
        %v7691 = vadd.f32 %v7662, %v7690
        %7692 = vmatmul.bf16.gmra.mxu0 %v5367
        %v7693 = vpop.f32.mrf.mxu0
        %v7694 = vadd.f32 %v7665, %v7693
        %v7695 = vpop.f32.mrf.mxu0
        %v7696 = vadd.f32 %v7667, %v7695
        %7697 = vmatmul.bf16.gmra.mxu0 %v5385
        %v7698 = vpop.f32.mrf.mxu0
        %v7699 = vadd.f32 %v7670, %v7698
        %v7700 = vpop.f32.mrf.mxu0
        %v7701 = vadd.f32 %v7672, %v7700
        %7702 = vmatmul.bf16.gmra.mxu0 %v5403
        %v7703 = vpop.f32.mrf.mxu0
        %v7704 = vadd.f32 %v7675, %v7703
        %v7705 = vpop.f32.mrf.mxu0
        %v7706 = vadd.f32 %v7677, %v7705
        %7707 = vdwg.mxu0
        %7708 = vmatpush.bf16.msra.mxu0 %v6508
        %7709 = vmatpush.bf16.msra.mxu0 %v6506
        %7710 = vmatpush.bf16.msra.mxu0 %v6504
        %7711 = vmatpush.bf16.msra.mxu0 %v6502
        %7712 = vmatpush.bf16.msra.mxu0 %v6500
        %7713 = vmatpush.bf16.msra.mxu0 %v6498
        %7714 = vmatpush.bf16.msra.mxu0 %v6496
        %7715 = vmatpush.bf16.msra.mxu0 %v6494
        %7716 = vmatmul.bf16.gmra.mxu0 %v5350
        %v7717 = vpop.f32.mrf.mxu0
        %v7718 = vadd.f32 %v7689, %v7717
        %v7719 = vpop.f32.mrf.mxu0
        %v7720 = vadd.f32 %v7691, %v7719
        %7721 = vmatmul.bf16.gmra.mxu0 %v5368
        %v7722 = vpop.f32.mrf.mxu0
        %v7723 = vadd.f32 %v7694, %v7722
        %v7724 = vpop.f32.mrf.mxu0
        %v7725 = vadd.f32 %v7696, %v7724
        %7726 = vmatmul.bf16.gmra.mxu0 %v5386
        %v7727 = vpop.f32.mrf.mxu0
        %v7728 = vadd.f32 %v7699, %v7727
        %v7729 = vpop.f32.mrf.mxu0
        %v7730 = vadd.f32 %v7701, %v7729
        %7731 = vmatmul.bf16.gmra.mxu0 %v5404
        %v7732 = vpop.f32.mrf.mxu0
        %v7733 = vadd.f32 %v7704, %v7732
        %v7734 = vpop.f32.mrf.mxu0
        %v7735 = vadd.f32 %v7706, %v7734
        %7736 = vdwg.mxu0
        %7737 = vmatpush.bf16.msra.mxu0 %v6524
        %7738 = vmatpush.bf16.msra.mxu0 %v6522
        %7739 = vmatpush.bf16.msra.mxu0 %v6520
        %7740 = vmatpush.bf16.msra.mxu0 %v6518
        %7741 = vmatpush.bf16.msra.mxu0 %v6516
        %7742 = vmatpush.bf16.msra.mxu0 %v6514
        %7743 = vmatpush.bf16.msra.mxu0 %v6512
        %7744 = vmatpush.bf16.msra.mxu0 %v6510
        %7745 = vmatmul.bf16.gmra.mxu0 %v5351
        %v7746 = vpop.f32.mrf.mxu0
        %v7747 = vadd.f32 %v7718, %v7746
        %v7748 = vpop.f32.mrf.mxu0
        %v7749 = vadd.f32 %v7720, %v7748
        %7750 = vmatmul.bf16.gmra.mxu0 %v5369
        %v7751 = vpop.f32.mrf.mxu0
        %v7752 = vadd.f32 %v7723, %v7751
        %v7753 = vpop.f32.mrf.mxu0
        %v7754 = vadd.f32 %v7725, %v7753
        %7755 = vmatmul.bf16.gmra.mxu0 %v5387
        %v7756 = vpop.f32.mrf.mxu0
        %v7757 = vadd.f32 %v7728, %v7756
        %v7758 = vpop.f32.mrf.mxu0
        %v7759 = vadd.f32 %v7730, %v7758
        %7760 = vmatmul.bf16.gmra.mxu0 %v5405
        %v7761 = vpop.f32.mrf.mxu0
        %v7762 = vadd.f32 %v7733, %v7761
        %v7763 = vpop.f32.mrf.mxu0
        %v7764 = vadd.f32 %v7735, %v7763
        %7765 = vdwg.mxu0
        %7766 = vmatpush.bf16.msra.mxu0 %v6540
        %7767 = vmatpush.bf16.msra.mxu0 %v6538
        %7768 = vmatpush.bf16.msra.mxu0 %v6536
        %7769 = vmatpush.bf16.msra.mxu0 %v6534
        %7770 = vmatpush.bf16.msra.mxu0 %v6532
        %7771 = vmatpush.bf16.msra.mxu0 %v6530
        %7772 = vmatpush.bf16.msra.mxu0 %v6528
        %7773 = vmatpush.bf16.msra.mxu0 %v6526
        %7774 = vmatmul.bf16.gmra.mxu0 %v5352
        %v7775 = vpop.f32.mrf.mxu0
        %v7776 = vadd.f32 %v7747, %v7775
        %v7777 = vpop.f32.mrf.mxu0
        %v7778 = vadd.f32 %v7749, %v7777
        %7779 = vmatmul.bf16.gmra.mxu0 %v5370
        %v7780 = vpop.f32.mrf.mxu0
        %v7781 = vadd.f32 %v7752, %v7780
        %v7782 = vpop.f32.mrf.mxu0
        %v7783 = vadd.f32 %v7754, %v7782
        %7784 = vmatmul.bf16.gmra.mxu0 %v5388
        %v7785 = vpop.f32.mrf.mxu0
        %v7786 = vadd.f32 %v7757, %v7785
        %v7787 = vpop.f32.mrf.mxu0
        %v7788 = vadd.f32 %v7759, %v7787
        %7789 = vmatmul.bf16.gmra.mxu0 %v5406
        %v7790 = vpop.f32.mrf.mxu0
        %v7791 = vadd.f32 %v7762, %v7790
        %v7792 = vpop.f32.mrf.mxu0
        %v7793 = vadd.f32 %v7764, %v7792
        %7794 = vdwg.mxu0
        %7795 = vmatpush.bf16.msra.mxu0 %v6556
        %7796 = vmatpush.bf16.msra.mxu0 %v6554
        %7797 = vmatpush.bf16.msra.mxu0 %v6552
        %7798 = vmatpush.bf16.msra.mxu0 %v6550
        %7799 = vmatpush.bf16.msra.mxu0 %v6548
        %7800 = vmatpush.bf16.msra.mxu0 %v6546
        %7801 = vmatpush.bf16.msra.mxu0 %v6544
        %7802 = vmatpush.bf16.msra.mxu0 %v6542
        %7803 = vmatmul.bf16.gmra.mxu0 %v5353
        %v7804 = vpop.f32.mrf.mxu0
        %v7805 = vadd.f32 %v7776, %v7804
        %v7806 = vpop.f32.mrf.mxu0
        %v7807 = vadd.f32 %v7778, %v7806
        %7808 = vmatmul.bf16.gmra.mxu0 %v5371
        %v7809 = vpop.f32.mrf.mxu0
        %v7810 = vadd.f32 %v7781, %v7809
        %v7811 = vpop.f32.mrf.mxu0
        %v7812 = vadd.f32 %v7783, %v7811
        %7813 = vmatmul.bf16.gmra.mxu0 %v5389
        %v7814 = vpop.f32.mrf.mxu0
        %v7815 = vadd.f32 %v7786, %v7814
        %v7816 = vpop.f32.mrf.mxu0
        %v7817 = vadd.f32 %v7788, %v7816
        %7818 = vmatmul.bf16.gmra.mxu0 %v5407
        %v7819 = vpop.f32.mrf.mxu0
        %v7820 = vadd.f32 %v7791, %v7819
        %v7821 = vpop.f32.mrf.mxu0
        %v7822 = vadd.f32 %v7793, %v7821
        %7823 = vdwg.mxu0
        %7824 = vmatpush.bf16.msra.mxu0 %v6572
        %7825 = vmatpush.bf16.msra.mxu0 %v6570
        %7826 = vmatpush.bf16.msra.mxu0 %v6568
        %7827 = vmatpush.bf16.msra.mxu0 %v6566
        %7828 = vmatpush.bf16.msra.mxu0 %v6564
        %7829 = vmatpush.bf16.msra.mxu0 %v6562
        %7830 = vmatpush.bf16.msra.mxu0 %v6560
        %7831 = vmatpush.bf16.msra.mxu0 %v6558
        %7832 = vmatmul.bf16.gmra.mxu0 %v5354
        %v7833 = vpop.f32.mrf.mxu0
        %v7834 = vadd.f32 %v7805, %v7833
        %v7835 = vpop.f32.mrf.mxu0
        %v7836 = vadd.f32 %v7807, %v7835
        %7837 = vmatmul.bf16.gmra.mxu0 %v5372
        %v7838 = vpop.f32.mrf.mxu0
        %v7839 = vadd.f32 %v7810, %v7838
        %v7840 = vpop.f32.mrf.mxu0
        %v7841 = vadd.f32 %v7812, %v7840
        %7842 = vmatmul.bf16.gmra.mxu0 %v5390
        %v7843 = vpop.f32.mrf.mxu0
        %v7844 = vadd.f32 %v7815, %v7843
        %v7845 = vpop.f32.mrf.mxu0
        %v7846 = vadd.f32 %v7817, %v7845
        %7847 = vmatmul.bf16.gmra.mxu0 %v5408
        %v7848 = vpop.f32.mrf.mxu0
        %v7849 = vadd.f32 %v7820, %v7848
        %v7850 = vpop.f32.mrf.mxu0
        %v7851 = vadd.f32 %v7822, %v7850
        %7852 = vdwg.mxu0
        %7853 = vmatpush.bf16.msra.mxu0 %v6588
        %7854 = vmatpush.bf16.msra.mxu0 %v6586
        %7855 = vmatpush.bf16.msra.mxu0 %v6584
        %7856 = vmatpush.bf16.msra.mxu0 %v6582
        %7857 = vmatpush.bf16.msra.mxu0 %v6580
        %7858 = vmatpush.bf16.msra.mxu0 %v6578
        %7859 = vmatpush.bf16.msra.mxu0 %v6576
        %7860 = vmatpush.bf16.msra.mxu0 %v6574
        %7861 = vmatmul.bf16.gmra.mxu0 %v5355
        %v7862 = vpop.f32.mrf.mxu0
        %v7863 = vadd.f32 %v7834, %v7862
        %v7864 = vpop.f32.mrf.mxu0
        %v7865 = vadd.f32 %v7836, %v7864
        %7866 = vmatmul.bf16.gmra.mxu0 %v5373
        %v7867 = vpop.f32.mrf.mxu0
        %v7868 = vadd.f32 %v7839, %v7867
        %v7869 = vpop.f32.mrf.mxu0
        %v7870 = vadd.f32 %v7841, %v7869
        %7871 = vmatmul.bf16.gmra.mxu0 %v5391
        %v7872 = vpop.f32.mrf.mxu0
        %v7873 = vadd.f32 %v7844, %v7872
        %v7874 = vpop.f32.mrf.mxu0
        %v7875 = vadd.f32 %v7846, %v7874
        %7876 = vmatmul.bf16.gmra.mxu0 %v5409
        %v7877 = vpop.f32.mrf.mxu0
        %v7878 = vadd.f32 %v7849, %v7877
        %v7879 = vpop.f32.mrf.mxu0
        %v7880 = vadd.f32 %v7851, %v7879
        %7881 = vdwg.mxu0
        %7882 = vmatpush.bf16.msra.mxu0 %v6604
        %7883 = vmatpush.bf16.msra.mxu0 %v6602
        %7884 = vmatpush.bf16.msra.mxu0 %v6600
        %7885 = vmatpush.bf16.msra.mxu0 %v6598
        %7886 = vmatpush.bf16.msra.mxu0 %v6596
        %7887 = vmatpush.bf16.msra.mxu0 %v6594
        %7888 = vmatpush.bf16.msra.mxu0 %v6592
        %7889 = vmatpush.bf16.msra.mxu0 %v6590
        %7890 = vmatmul.bf16.gmra.mxu0 %v5356
        %v7891 = vpop.f32.mrf.mxu0
        %v7892 = vadd.f32 %v7863, %v7891
        %v7893 = vpop.f32.mrf.mxu0
        %v7894 = vadd.f32 %v7865, %v7893
        %7895 = vmatmul.bf16.gmra.mxu0 %v5374
        %v7896 = vpop.f32.mrf.mxu0
        %v7897 = vadd.f32 %v7868, %v7896
        %v7898 = vpop.f32.mrf.mxu0
        %v7899 = vadd.f32 %v7870, %v7898
        %7900 = vmatmul.bf16.gmra.mxu0 %v5392
        %v7901 = vpop.f32.mrf.mxu0
        %v7902 = vadd.f32 %v7873, %v7901
        %v7903 = vpop.f32.mrf.mxu0
        %v7904 = vadd.f32 %v7875, %v7903
        %7905 = vmatmul.bf16.gmra.mxu0 %v5410
        %v7906 = vpop.f32.mrf.mxu0
        %v7907 = vadd.f32 %v7878, %v7906
        %v7908 = vpop.f32.mrf.mxu0
        %v7909 = vadd.f32 %v7880, %v7908
        %7910 = vdwg.mxu0
        %7911 = vmatpush.bf16.msra.mxu0 %v6620
        %7912 = vmatpush.bf16.msra.mxu0 %v6618
        %7913 = vmatpush.bf16.msra.mxu0 %v6616
        %7914 = vmatpush.bf16.msra.mxu0 %v6614
        %7915 = vmatpush.bf16.msra.mxu0 %v6612
        %7916 = vmatpush.bf16.msra.mxu0 %v6610
        %7917 = vmatpush.bf16.msra.mxu0 %v6608
        %7918 = vmatpush.bf16.msra.mxu0 %v6606
        %7919 = vmatmul.bf16.gmra.mxu0 %v5357
        %v7920 = vpop.f32.mrf.mxu0
        %v7921 = vadd.f32 %v7892, %v7920
        %v7922 = vpop.f32.mrf.mxu0
        %v7923 = vadd.f32 %v7894, %v7922
        %7924 = vmatmul.bf16.gmra.mxu0 %v5375
        %v7925 = vpop.f32.mrf.mxu0
        %v7926 = vadd.f32 %v7897, %v7925
        %v7927 = vpop.f32.mrf.mxu0
        %v7928 = vadd.f32 %v7899, %v7927
        %7929 = vmatmul.bf16.gmra.mxu0 %v5393
        %v7930 = vpop.f32.mrf.mxu0
        %v7931 = vadd.f32 %v7902, %v7930
        %v7932 = vpop.f32.mrf.mxu0
        %v7933 = vadd.f32 %v7904, %v7932
        %7934 = vmatmul.bf16.gmra.mxu0 %v5411
        %v7935 = vpop.f32.mrf.mxu0
        %v7936 = vadd.f32 %v7907, %v7935
        %v7937 = vpop.f32.mrf.mxu0
        %v7938 = vadd.f32 %v7909, %v7937
        %7939 = vdwg.mxu0
        %7940 = vmatpush.bf16.msra.mxu0 %v6636
        %7941 = vmatpush.bf16.msra.mxu0 %v6634
        %7942 = vmatpush.bf16.msra.mxu0 %v6632
        %7943 = vmatpush.bf16.msra.mxu0 %v6630
        %7944 = vmatpush.bf16.msra.mxu0 %v6628
        %7945 = vmatpush.bf16.msra.mxu0 %v6626
        %7946 = vmatpush.bf16.msra.mxu0 %v6624
        %7947 = vmatpush.bf16.msra.mxu0 %v6622
        %7948 = vmatmul.bf16.gmra.mxu0 %v5358
        %v7949 = vpop.f32.mrf.mxu0
        %v7950 = vadd.f32 %v7921, %v7949
        %v7951 = vpop.f32.mrf.mxu0
        %v7952 = vadd.f32 %v7923, %v7951
        %7953 = vmatmul.bf16.gmra.mxu0 %v5376
        %v7954 = vpop.f32.mrf.mxu0
        %v7955 = vadd.f32 %v7926, %v7954
        %v7956 = vpop.f32.mrf.mxu0
        %v7957 = vadd.f32 %v7928, %v7956
        %7958 = vmatmul.bf16.gmra.mxu0 %v5394
        %v7959 = vpop.f32.mrf.mxu0
        %v7960 = vadd.f32 %v7931, %v7959
        %v7961 = vpop.f32.mrf.mxu0
        %v7962 = vadd.f32 %v7933, %v7961
        %7963 = vmatmul.bf16.gmra.mxu0 %v5412
        %v7964 = vpop.f32.mrf.mxu0
        %v7965 = vadd.f32 %v7936, %v7964
        %v7966 = vpop.f32.mrf.mxu0
        %v7967 = vadd.f32 %v7938, %v7966
        %7968 = vdwg.mxu0
        %v7969 = vld [vmem:[#allocation14] sm:$0x3]
        %v7970 = vld [vmem:[#allocation15] sm:$0x3]
        %v7971 = vadd.f32 %v7428, %v7430
        %v7972 = vadd.f32 %v7971, %v7433
        %v7973 = vadd.f32 %v7972, %v7435
        %v7974 = vadd.f32 %v7973, %v7438
        %v7975 = vadd.f32 %v7974, %v7440
        %v7976 = vadd.f32 %v7975, %v7443
        %v7977 = vadd.f32 %v7976, %v7445
        %v7978 = vrot.slane %v7977, 4
        %v7979 = vadd.f32 %v7977, %v7978
        %v7980 = vrot.slane %v7979, 2
        %v7981 = vadd.f32 %v7979, %v7980
        %v7982 = vrot.slane %v7981, 1
        %v7983 = vadd.f32 %v7981, %v7982
        %v7984 = vadd.f32 %v7950, %v7952
        %v7985 = vadd.f32 %v7984, %v7955
        %v7986 = vadd.f32 %v7985, %v7957
        %v7987 = vadd.f32 %v7986, %v7960
        %v7988 = vadd.f32 %v7987, %v7962
        %v7989 = vadd.f32 %v7988, %v7965
        %v7990 = vadd.f32 %v7989, %v7967
        %v7991 = vrot.slane %v7990, 4
        %v7992 = vadd.f32 %v7990, %v7991
        %v7993 = vrot.slane %v7992, 2
        %v7994 = vadd.f32 %v7992, %v7993
        %v7995 = vrot.slane %v7994, 1
        %v7996 = vadd.f32 %v7994, %v7995
        %v7997 = vmul.f32 %v7428, %v7428
        %v7998 = vmul.f32 %v7950, %v7950
        %v7999 = vmul.f32 %v7430, %v7430
        %v8000 = vmul.f32 %v7952, %v7952
        %v8001 = vmul.f32 %v7433, %v7433
        %v8002 = vmul.f32 %v7955, %v7955
        %v8003 = vmul.f32 %v7435, %v7435
        %v8004 = vmul.f32 %v7957, %v7957
        %v8005 = vmul.f32 %v7438, %v7438
        %v8006 = vmul.f32 %v7960, %v7960
        %v8007 = vmul.f32 %v7440, %v7440
        %v8008 = vmul.f32 %v7962, %v7962
        %v8009 = vmul.f32 %v7443, %v7443
        %v8010 = vmul.f32 %v7965, %v7965
        %v8011 = vmul.f32 %v7445, %v7445
        %v8012 = vmul.f32 %v7967, %v7967
        %v8013 = vadd.f32 %v7997, %v7999
        %v8014 = vadd.f32 %v8013, %v8001
        %v8015 = vadd.f32 %v8014, %v8003
        %v8016 = vadd.f32 %v8015, %v8005
        %v8017 = vadd.f32 %v8016, %v8007
        %v8018 = vadd.f32 %v8017, %v8009
        %v8019 = vadd.f32 %v8018, %v8011
        %v8020 = vrot.slane %v8019, 4
        %v8021 = vadd.f32 %v8019, %v8020
        %v8022 = vrot.slane %v8021, 2
        %v8023 = vadd.f32 %v8021, %v8022
        %v8024 = vrot.slane %v8023, 1
        %v8025 = vadd.f32 %v8023, %v8024
        %v8026 = vadd.f32 %v7998, %v8000
        %v8027 = vadd.f32 %v8026, %v8002
        %v8028 = vadd.f32 %v8027, %v8004
        %v8029 = vadd.f32 %v8028, %v8006
        %v8030 = vadd.f32 %v8029, %v8008
        %v8031 = vadd.f32 %v8030, %v8010
        %v8032 = vadd.f32 %v8031, %v8012
        %v8033 = vrot.slane %v8032, 4
        %v8034 = vadd.f32 %v8032, %v8033
        %v8035 = vrot.slane %v8034, 2
        %v8036 = vadd.f32 %v8034, %v8035
        %v8037 = vrot.slane %v8036, 1
        %v8038 = vadd.f32 %v8036, %v8037
        %v8039 = vsel %vm869, %v7983, %v8025
        %v8040 = vsel %vm869, %v7996, %v8038
        %v8041 = vand.u32 %v716, 4294901760
        %8042 = vmatpush.msra.mxu0 %v8041
        %v8043 = vand.u32 %v715, 4294901760
        %8044 = vmatpush.msra.mxu0 %v8043
        %v8045 = vand.u32 %v714, 4294901760
        %8046 = vmatpush.msra.mxu0 %v8045
        %v8047 = vand.u32 %v713, 4294901760
        %8048 = vmatpush.msra.mxu0 %v8047
        %v8049 = vand.u32 %v712, 4294901760
        %8050 = vmatpush.msra.mxu0 %v8049
        %v8051 = vand.u32 %v711, 4294901760
        %8052 = vmatpush.msra.mxu0 %v8051
        %v8053 = vand.u32 %v710, 4294901760
        %8054 = vmatpush.msra.mxu0 %v8053
        %v8055 = vand.u32 %v709, 4294901760
        %8056 = vmatpush.msra.mxu0 %v8055
        %v8057 = vand.u32 %v708, 4294901760
        %8058 = vmatpush.msra.mxu0 %v8057
        %v8059 = vand.u32 %v707, 4294901760
        %8060 = vmatpush.msra.mxu0 %v8059
        %v8061 = vand.u32 %v706, 4294901760
        %8062 = vmatpush.msra.mxu0 %v8061
        %v8063 = vand.u32 %v705, 4294901760
        %8064 = vmatpush.msra.mxu0 %v8063
        %v8065 = vand.u32 %v704, 4294901760
        %8066 = vmatpush.msra.mxu0 %v8065
        %v8067 = vand.u32 %v703, 4294901760
        %8068 = vmatpush.msra.mxu0 %v8067
        %v8069 = vand.u32 %v702, 4294901760
        %8070 = vmatpush.msra.mxu0 %v8069
        %v8071 = vand.u32 %v701, 4294901760
        %8072 = vmatpush.msra.mxu0 %v8071
        %v8073 = vand.u32 %v8039, 4294901760
        %v8074 = vsub.f32 %v8039, %v8073
        %v8075 = vand.u32 %v8074, 4294901760
        %v8076 = vsub.f32 %v8074, %v8075
        %v8077 = vand.u32 %v8076, 4294901760
        %8078 = vmatmul.f32.gmra.mxu0 %v8077
        %v8079 = vpop.f32.mrf.mxu0
        %v8080 = vadd.f32 0.0, %v8079
        %8081 = vdwg.mxu0
        %v8082 = vand.u32 %v716, 4294901760
        %v8083 = vsub.f32 %v716, %v8082
        %v8084 = vand.u32 %v8083, 4294901760
        %v8085 = vsub.f32 %v8083, %v8084
        %v8086 = vand.u32 %v8085, 4294901760
        %8087 = vmatpush.msra.mxu0 %v8086
        %v8088 = vand.u32 %v715, 4294901760
        %v8089 = vsub.f32 %v715, %v8088
        %v8090 = vand.u32 %v8089, 4294901760
        %v8091 = vsub.f32 %v8089, %v8090
        %v8092 = vand.u32 %v8091, 4294901760
        %8093 = vmatpush.msra.mxu0 %v8092
        %v8094 = vand.u32 %v714, 4294901760
        %v8095 = vsub.f32 %v714, %v8094
        %v8096 = vand.u32 %v8095, 4294901760
        %v8097 = vsub.f32 %v8095, %v8096
        %v8098 = vand.u32 %v8097, 4294901760
        %8099 = vmatpush.msra.mxu0 %v8098
        %v8100 = vand.u32 %v713, 4294901760
        %v8101 = vsub.f32 %v713, %v8100
        %v8102 = vand.u32 %v8101, 4294901760
        %v8103 = vsub.f32 %v8101, %v8102
        %v8104 = vand.u32 %v8103, 4294901760
        %8105 = vmatpush.msra.mxu0 %v8104
        %v8106 = vand.u32 %v712, 4294901760
        %v8107 = vsub.f32 %v712, %v8106
        %v8108 = vand.u32 %v8107, 4294901760
        %v8109 = vsub.f32 %v8107, %v8108
        %v8110 = vand.u32 %v8109, 4294901760
        %8111 = vmatpush.msra.mxu0 %v8110
        %v8112 = vand.u32 %v711, 4294901760
        %v8113 = vsub.f32 %v711, %v8112
        %v8114 = vand.u32 %v8113, 4294901760
        %v8115 = vsub.f32 %v8113, %v8114
        %v8116 = vand.u32 %v8115, 4294901760
        %8117 = vmatpush.msra.mxu0 %v8116
        %v8118 = vand.u32 %v710, 4294901760
        %v8119 = vsub.f32 %v710, %v8118
        %v8120 = vand.u32 %v8119, 4294901760
        %v8121 = vsub.f32 %v8119, %v8120
        %v8122 = vand.u32 %v8121, 4294901760
        %8123 = vmatpush.msra.mxu0 %v8122
        %v8124 = vand.u32 %v709, 4294901760
        %v8125 = vsub.f32 %v709, %v8124
        %v8126 = vand.u32 %v8125, 4294901760
        %v8127 = vsub.f32 %v8125, %v8126
        %v8128 = vand.u32 %v8127, 4294901760
        %8129 = vmatpush.msra.mxu0 %v8128
        %v8130 = vand.u32 %v708, 4294901760
        %v8131 = vsub.f32 %v708, %v8130
        %v8132 = vand.u32 %v8131, 4294901760
        %v8133 = vsub.f32 %v8131, %v8132
        %v8134 = vand.u32 %v8133, 4294901760
        %8135 = vmatpush.msra.mxu0 %v8134
        %v8136 = vand.u32 %v707, 4294901760
        %v8137 = vsub.f32 %v707, %v8136
        %v8138 = vand.u32 %v8137, 4294901760
        %v8139 = vsub.f32 %v8137, %v8138
        %v8140 = vand.u32 %v8139, 4294901760
        %8141 = vmatpush.msra.mxu0 %v8140
        %v8142 = vand.u32 %v706, 4294901760
        %v8143 = vsub.f32 %v706, %v8142
        %v8144 = vand.u32 %v8143, 4294901760
        %v8145 = vsub.f32 %v8143, %v8144
        %v8146 = vand.u32 %v8145, 4294901760
        %8147 = vmatpush.msra.mxu0 %v8146
        %v8148 = vand.u32 %v705, 4294901760
        %v8149 = vsub.f32 %v705, %v8148
        %v8150 = vand.u32 %v8149, 4294901760
        %v8151 = vsub.f32 %v8149, %v8150
        %v8152 = vand.u32 %v8151, 4294901760
        %8153 = vmatpush.msra.mxu0 %v8152
        %v8154 = vand.u32 %v704, 4294901760
        %v8155 = vsub.f32 %v704, %v8154
        %v8156 = vand.u32 %v8155, 4294901760
        %v8157 = vsub.f32 %v8155, %v8156
        %v8158 = vand.u32 %v8157, 4294901760
        %8159 = vmatpush.msra.mxu0 %v8158
        %v8160 = vand.u32 %v703, 4294901760
        %v8161 = vsub.f32 %v703, %v8160
        %v8162 = vand.u32 %v8161, 4294901760
        %v8163 = vsub.f32 %v8161, %v8162
        %v8164 = vand.u32 %v8163, 4294901760
        %8165 = vmatpush.msra.mxu0 %v8164
        %v8166 = vand.u32 %v702, 4294901760
        %v8167 = vsub.f32 %v702, %v8166
        %v8168 = vand.u32 %v8167, 4294901760
        %v8169 = vsub.f32 %v8167, %v8168
        %v8170 = vand.u32 %v8169, 4294901760
        %8171 = vmatpush.msra.mxu0 %v8170
        %v8172 = vand.u32 %v701, 4294901760
        %v8173 = vsub.f32 %v701, %v8172
        %v8174 = vand.u32 %v8173, 4294901760
        %v8175 = vsub.f32 %v8173, %v8174
        %v8176 = vand.u32 %v8175, 4294901760
        %8177 = vmatpush.msra.mxu0 %v8176
        %v8178 = vand.u32 %v8039, 4294901760
        %8179 = vmatmul.f32.gmra.mxu0 %v8178
        %v8180 = vpop.f32.mrf.mxu0
        %v8181 = vadd.f32 %v8080, %v8180
        %8182 = vdwg.mxu0
        %v8183 = vand.u32 %v716, 4294901760
        %v8184 = vsub.f32 %v716, %v8183
        %8185 = vmatpush.msra.mxu0 %v8184
        %v8186 = vand.u32 %v715, 4294901760
        %v8187 = vsub.f32 %v715, %v8186
        %8188 = vmatpush.msra.mxu0 %v8187
        %v8189 = vand.u32 %v714, 4294901760
        %v8190 = vsub.f32 %v714, %v8189
        %8191 = vmatpush.msra.mxu0 %v8190
        %v8192 = vand.u32 %v713, 4294901760
        %v8193 = vsub.f32 %v713, %v8192
        %8194 = vmatpush.msra.mxu0 %v8193
        %v8195 = vand.u32 %v712, 4294901760
        %v8196 = vsub.f32 %v712, %v8195
        %8197 = vmatpush.msra.mxu0 %v8196
        %v8198 = vand.u32 %v711, 4294901760
        %v8199 = vsub.f32 %v711, %v8198
        %8200 = vmatpush.msra.mxu0 %v8199
        %v8201 = vand.u32 %v710, 4294901760
        %v8202 = vsub.f32 %v710, %v8201
        %8203 = vmatpush.msra.mxu0 %v8202
        %v8204 = vand.u32 %v709, 4294901760
        %v8205 = vsub.f32 %v709, %v8204
        %8206 = vmatpush.msra.mxu0 %v8205
        %v8207 = vand.u32 %v708, 4294901760
        %v8208 = vsub.f32 %v708, %v8207
        %8209 = vmatpush.msra.mxu0 %v8208
        %v8210 = vand.u32 %v707, 4294901760
        %v8211 = vsub.f32 %v707, %v8210
        %8212 = vmatpush.msra.mxu0 %v8211
        %v8213 = vand.u32 %v706, 4294901760
        %v8214 = vsub.f32 %v706, %v8213
        %8215 = vmatpush.msra.mxu0 %v8214
        %v8216 = vand.u32 %v705, 4294901760
        %v8217 = vsub.f32 %v705, %v8216
        %8218 = vmatpush.msra.mxu0 %v8217
        %v8219 = vand.u32 %v704, 4294901760
        %v8220 = vsub.f32 %v704, %v8219
        %8221 = vmatpush.msra.mxu0 %v8220
        %v8222 = vand.u32 %v703, 4294901760
        %v8223 = vsub.f32 %v703, %v8222
        %8224 = vmatpush.msra.mxu0 %v8223
        %v8225 = vand.u32 %v702, 4294901760
        %v8226 = vsub.f32 %v702, %v8225
        %8227 = vmatpush.msra.mxu0 %v8226
        %v8228 = vand.u32 %v701, 4294901760
        %v8229 = vsub.f32 %v701, %v8228
        %8230 = vmatpush.msra.mxu0 %v8229
        %v8231 = vand.u32 %v8039, 4294901760
        %v8232 = vsub.f32 %v8039, %v8231
        %8233 = vmatmul.f32.gmra.mxu0 %v8232
        %v8234 = vpop.f32.mrf.mxu0
        %v8235 = vadd.f32 %v8181, %v8234
        %8236 = vdwg.mxu0
        %v8237 = vand.u32 %v716, 4294901760
        %8238 = vmatpush.msra.mxu0 %v8237
        %v8239 = vand.u32 %v715, 4294901760
        %8240 = vmatpush.msra.mxu0 %v8239
        %v8241 = vand.u32 %v714, 4294901760
        %8242 = vmatpush.msra.mxu0 %v8241
        %v8243 = vand.u32 %v713, 4294901760
        %8244 = vmatpush.msra.mxu0 %v8243
        %v8245 = vand.u32 %v712, 4294901760
        %8246 = vmatpush.msra.mxu0 %v8245
        %v8247 = vand.u32 %v711, 4294901760
        %8248 = vmatpush.msra.mxu0 %v8247
        %v8249 = vand.u32 %v710, 4294901760
        %8250 = vmatpush.msra.mxu0 %v8249
        %v8251 = vand.u32 %v709, 4294901760
        %8252 = vmatpush.msra.mxu0 %v8251
        %v8253 = vand.u32 %v708, 4294901760
        %8254 = vmatpush.msra.mxu0 %v8253
        %v8255 = vand.u32 %v707, 4294901760
        %8256 = vmatpush.msra.mxu0 %v8255
        %v8257 = vand.u32 %v706, 4294901760
        %8258 = vmatpush.msra.mxu0 %v8257
        %v8259 = vand.u32 %v705, 4294901760
        %8260 = vmatpush.msra.mxu0 %v8259
        %v8261 = vand.u32 %v704, 4294901760
        %8262 = vmatpush.msra.mxu0 %v8261
        %v8263 = vand.u32 %v703, 4294901760
        %8264 = vmatpush.msra.mxu0 %v8263
        %v8265 = vand.u32 %v702, 4294901760
        %8266 = vmatpush.msra.mxu0 %v8265
        %v8267 = vand.u32 %v701, 4294901760
        %8268 = vmatpush.msra.mxu0 %v8267
        %v8269 = vand.u32 %v8039, 4294901760
        %v8270 = vsub.f32 %v8039, %v8269
        %v8271 = vand.u32 %v8270, 4294901760
        %8272 = vmatmul.f32.gmra.mxu0 %v8271
        %v8273 = vpop.f32.mrf.mxu0
        %v8274 = vadd.f32 %v8235, %v8273
        %8275 = vdwg.mxu0
        %v8276 = vand.u32 %v716, 4294901760
        %v8277 = vsub.f32 %v716, %v8276
        %v8278 = vand.u32 %v8277, 4294901760
        %8279 = vmatpush.msra.mxu0 %v8278
        %v8280 = vand.u32 %v715, 4294901760
        %v8281 = vsub.f32 %v715, %v8280
        %v8282 = vand.u32 %v8281, 4294901760
        %8283 = vmatpush.msra.mxu0 %v8282
        %v8284 = vand.u32 %v714, 4294901760
        %v8285 = vsub.f32 %v714, %v8284
        %v8286 = vand.u32 %v8285, 4294901760
        %8287 = vmatpush.msra.mxu0 %v8286
        %v8288 = vand.u32 %v713, 4294901760
        %v8289 = vsub.f32 %v713, %v8288
        %v8290 = vand.u32 %v8289, 4294901760
        %8291 = vmatpush.msra.mxu0 %v8290
        %v8292 = vand.u32 %v712, 4294901760
        %v8293 = vsub.f32 %v712, %v8292
        %v8294 = vand.u32 %v8293, 4294901760
        %8295 = vmatpush.msra.mxu0 %v8294
        %v8296 = vand.u32 %v711, 4294901760
        %v8297 = vsub.f32 %v711, %v8296
        %v8298 = vand.u32 %v8297, 4294901760
        %8299 = vmatpush.msra.mxu0 %v8298
        %v8300 = vand.u32 %v710, 4294901760
        %v8301 = vsub.f32 %v710, %v8300
        %v8302 = vand.u32 %v8301, 4294901760
        %8303 = vmatpush.msra.mxu0 %v8302
        %v8304 = vand.u32 %v709, 4294901760
        %v8305 = vsub.f32 %v709, %v8304
        %v8306 = vand.u32 %v8305, 4294901760
        %8307 = vmatpush.msra.mxu0 %v8306
        %v8308 = vand.u32 %v708, 4294901760
        %v8309 = vsub.f32 %v708, %v8308
        %v8310 = vand.u32 %v8309, 4294901760
        %8311 = vmatpush.msra.mxu0 %v8310
        %v8312 = vand.u32 %v707, 4294901760
        %v8313 = vsub.f32 %v707, %v8312
        %v8314 = vand.u32 %v8313, 4294901760
        %8315 = vmatpush.msra.mxu0 %v8314
        %v8316 = vand.u32 %v706, 4294901760
        %v8317 = vsub.f32 %v706, %v8316
        %v8318 = vand.u32 %v8317, 4294901760
        %8319 = vmatpush.msra.mxu0 %v8318
        %v8320 = vand.u32 %v705, 4294901760
        %v8321 = vsub.f32 %v705, %v8320
        %v8322 = vand.u32 %v8321, 4294901760
        %8323 = vmatpush.msra.mxu0 %v8322
        %v8324 = vand.u32 %v704, 4294901760
        %v8325 = vsub.f32 %v704, %v8324
        %v8326 = vand.u32 %v8325, 4294901760
        %8327 = vmatpush.msra.mxu0 %v8326
        %v8328 = vand.u32 %v703, 4294901760
        %v8329 = vsub.f32 %v703, %v8328
        %v8330 = vand.u32 %v8329, 4294901760
        %8331 = vmatpush.msra.mxu0 %v8330
        %v8332 = vand.u32 %v702, 4294901760
        %v8333 = vsub.f32 %v702, %v8332
        %v8334 = vand.u32 %v8333, 4294901760
        %8335 = vmatpush.msra.mxu0 %v8334
        %v8336 = vand.u32 %v701, 4294901760
        %v8337 = vsub.f32 %v701, %v8336
        %v8338 = vand.u32 %v8337, 4294901760
        %8339 = vmatpush.msra.mxu0 %v8338
        %v8340 = vand.u32 %v8039, 4294901760
        %8341 = vmatmul.f32.gmra.mxu0 %v8340
        %v8342 = vpop.f32.mrf.mxu0
        %v8343 = vadd.f32 %v8274, %v8342
        %8344 = vdwg.mxu0
        %v8345 = vand.u32 %v716, 4294901760
        %8346 = vmatpush.msra.mxu0 %v8345
        %v8347 = vand.u32 %v715, 4294901760
        %8348 = vmatpush.msra.mxu0 %v8347
        %v8349 = vand.u32 %v714, 4294901760
        %8350 = vmatpush.msra.mxu0 %v8349
        %v8351 = vand.u32 %v713, 4294901760
        %8352 = vmatpush.msra.mxu0 %v8351
        %v8353 = vand.u32 %v712, 4294901760
        %8354 = vmatpush.msra.mxu0 %v8353
        %v8355 = vand.u32 %v711, 4294901760
        %8356 = vmatpush.msra.mxu0 %v8355
        %v8357 = vand.u32 %v710, 4294901760
        %8358 = vmatpush.msra.mxu0 %v8357
        %v8359 = vand.u32 %v709, 4294901760
        %8360 = vmatpush.msra.mxu0 %v8359
        %v8361 = vand.u32 %v708, 4294901760
        %8362 = vmatpush.msra.mxu0 %v8361
        %v8363 = vand.u32 %v707, 4294901760
        %8364 = vmatpush.msra.mxu0 %v8363
        %v8365 = vand.u32 %v706, 4294901760
        %8366 = vmatpush.msra.mxu0 %v8365
        %v8367 = vand.u32 %v705, 4294901760
        %8368 = vmatpush.msra.mxu0 %v8367
        %v8369 = vand.u32 %v704, 4294901760
        %8370 = vmatpush.msra.mxu0 %v8369
        %v8371 = vand.u32 %v703, 4294901760
        %8372 = vmatpush.msra.mxu0 %v8371
        %v8373 = vand.u32 %v702, 4294901760
        %8374 = vmatpush.msra.mxu0 %v8373
        %v8375 = vand.u32 %v701, 4294901760
        %8376 = vmatpush.msra.mxu0 %v8375
        %v8377 = vand.u32 %v8039, 4294901760
        %8378 = vmatmul.f32.gmra.mxu0 %v8377
        %v8379 = vpop.f32.mrf.mxu0
        %v8380 = vadd.f32 %v8343, %v8379
        %8381 = vdwg.mxu0
        %v8382 = vand.u32 %v732, 4294901760
        %8383 = vmatpush.msra.mxu0 %v8382
        %v8384 = vand.u32 %v731, 4294901760
        %8385 = vmatpush.msra.mxu0 %v8384
        %v8386 = vand.u32 %v730, 4294901760
        %8387 = vmatpush.msra.mxu0 %v8386
        %v8388 = vand.u32 %v729, 4294901760
        %8389 = vmatpush.msra.mxu0 %v8388
        %v8390 = vand.u32 %v728, 4294901760
        %8391 = vmatpush.msra.mxu0 %v8390
        %v8392 = vand.u32 %v727, 4294901760
        %8393 = vmatpush.msra.mxu0 %v8392
        %v8394 = vand.u32 %v726, 4294901760
        %8395 = vmatpush.msra.mxu0 %v8394
        %v8396 = vand.u32 %v725, 4294901760
        %8397 = vmatpush.msra.mxu0 %v8396
        %v8398 = vand.u32 %v724, 4294901760
        %8399 = vmatpush.msra.mxu0 %v8398
        %v8400 = vand.u32 %v723, 4294901760
        %8401 = vmatpush.msra.mxu0 %v8400
        %v8402 = vand.u32 %v722, 4294901760
        %8403 = vmatpush.msra.mxu0 %v8402
        %v8404 = vand.u32 %v721, 4294901760
        %8405 = vmatpush.msra.mxu0 %v8404
        %v8406 = vand.u32 %v720, 4294901760
        %8407 = vmatpush.msra.mxu0 %v8406
        %v8408 = vand.u32 %v719, 4294901760
        %8409 = vmatpush.msra.mxu0 %v8408
        %v8410 = vand.u32 %v718, 4294901760
        %8411 = vmatpush.msra.mxu0 %v8410
        %v8412 = vand.u32 %v717, 4294901760
        %8413 = vmatpush.msra.mxu0 %v8412
        %v8414 = vand.u32 %v8040, 4294901760
        %v8415 = vsub.f32 %v8040, %v8414
        %v8416 = vand.u32 %v8415, 4294901760
        %v8417 = vsub.f32 %v8415, %v8416
        %v8418 = vand.u32 %v8417, 4294901760
        %8419 = vmatmul.f32.gmra.mxu0 %v8418
        %v8420 = vpop.f32.mrf.mxu0
        %v8421 = vadd.f32 %v8380, %v8420
        %8422 = vdwg.mxu0
        %v8423 = vand.u32 %v732, 4294901760
        %v8424 = vsub.f32 %v732, %v8423
        %v8425 = vand.u32 %v8424, 4294901760
        %v8426 = vsub.f32 %v8424, %v8425
        %v8427 = vand.u32 %v8426, 4294901760
        %8428 = vmatpush.msra.mxu0 %v8427
        %v8429 = vand.u32 %v731, 4294901760
        %v8430 = vsub.f32 %v731, %v8429
        %v8431 = vand.u32 %v8430, 4294901760
        %v8432 = vsub.f32 %v8430, %v8431
        %v8433 = vand.u32 %v8432, 4294901760
        %8434 = vmatpush.msra.mxu0 %v8433
        %v8435 = vand.u32 %v730, 4294901760
        %v8436 = vsub.f32 %v730, %v8435
        %v8437 = vand.u32 %v8436, 4294901760
        %v8438 = vsub.f32 %v8436, %v8437
        %v8439 = vand.u32 %v8438, 4294901760
        %8440 = vmatpush.msra.mxu0 %v8439
        %v8441 = vand.u32 %v729, 4294901760
        %v8442 = vsub.f32 %v729, %v8441
        %v8443 = vand.u32 %v8442, 4294901760
        %v8444 = vsub.f32 %v8442, %v8443
        %v8445 = vand.u32 %v8444, 4294901760
        %8446 = vmatpush.msra.mxu0 %v8445
        %v8447 = vand.u32 %v728, 4294901760
        %v8448 = vsub.f32 %v728, %v8447
        %v8449 = vand.u32 %v8448, 4294901760
        %v8450 = vsub.f32 %v8448, %v8449
        %v8451 = vand.u32 %v8450, 4294901760
        %8452 = vmatpush.msra.mxu0 %v8451
        %v8453 = vand.u32 %v727, 4294901760
        %v8454 = vsub.f32 %v727, %v8453
        %v8455 = vand.u32 %v8454, 4294901760
        %v8456 = vsub.f32 %v8454, %v8455
        %v8457 = vand.u32 %v8456, 4294901760
        %8458 = vmatpush.msra.mxu0 %v8457
        %v8459 = vand.u32 %v726, 4294901760
        %v8460 = vsub.f32 %v726, %v8459
        %v8461 = vand.u32 %v8460, 4294901760
        %v8462 = vsub.f32 %v8460, %v8461
        %v8463 = vand.u32 %v8462, 4294901760
        %8464 = vmatpush.msra.mxu0 %v8463
        %v8465 = vand.u32 %v725, 4294901760
        %v8466 = vsub.f32 %v725, %v8465
        %v8467 = vand.u32 %v8466, 4294901760
        %v8468 = vsub.f32 %v8466, %v8467
        %v8469 = vand.u32 %v8468, 4294901760
        %8470 = vmatpush.msra.mxu0 %v8469
        %v8471 = vand.u32 %v724, 4294901760
        %v8472 = vsub.f32 %v724, %v8471
        %v8473 = vand.u32 %v8472, 4294901760
        %v8474 = vsub.f32 %v8472, %v8473
        %v8475 = vand.u32 %v8474, 4294901760
        %8476 = vmatpush.msra.mxu0 %v8475
        %v8477 = vand.u32 %v723, 4294901760
        %v8478 = vsub.f32 %v723, %v8477
        %v8479 = vand.u32 %v8478, 4294901760
        %v8480 = vsub.f32 %v8478, %v8479
        %v8481 = vand.u32 %v8480, 4294901760
        %8482 = vmatpush.msra.mxu0 %v8481
        %v8483 = vand.u32 %v722, 4294901760
        %v8484 = vsub.f32 %v722, %v8483
        %v8485 = vand.u32 %v8484, 4294901760
        %v8486 = vsub.f32 %v8484, %v8485
        %v8487 = vand.u32 %v8486, 4294901760
        %8488 = vmatpush.msra.mxu0 %v8487
        %v8489 = vand.u32 %v721, 4294901760
        %v8490 = vsub.f32 %v721, %v8489
        %v8491 = vand.u32 %v8490, 4294901760
        %v8492 = vsub.f32 %v8490, %v8491
        %v8493 = vand.u32 %v8492, 4294901760
        %8494 = vmatpush.msra.mxu0 %v8493
        %v8495 = vand.u32 %v720, 4294901760
        %v8496 = vsub.f32 %v720, %v8495
        %v8497 = vand.u32 %v8496, 4294901760
        %v8498 = vsub.f32 %v8496, %v8497
        %v8499 = vand.u32 %v8498, 4294901760
        %8500 = vmatpush.msra.mxu0 %v8499
        %v8501 = vand.u32 %v719, 4294901760
        %v8502 = vsub.f32 %v719, %v8501
        %v8503 = vand.u32 %v8502, 4294901760
        %v8504 = vsub.f32 %v8502, %v8503
        %v8505 = vand.u32 %v8504, 4294901760
        %8506 = vmatpush.msra.mxu0 %v8505
        %v8507 = vand.u32 %v718, 4294901760
        %v8508 = vsub.f32 %v718, %v8507
        %v8509 = vand.u32 %v8508, 4294901760
        %v8510 = vsub.f32 %v8508, %v8509
        %v8511 = vand.u32 %v8510, 4294901760
        %8512 = vmatpush.msra.mxu0 %v8511
        %v8513 = vand.u32 %v717, 4294901760
        %v8514 = vsub.f32 %v717, %v8513
        %v8515 = vand.u32 %v8514, 4294901760
        %v8516 = vsub.f32 %v8514, %v8515
        %v8517 = vand.u32 %v8516, 4294901760
        %8518 = vmatpush.msra.mxu0 %v8517
        %v8519 = vand.u32 %v8040, 4294901760
        %8520 = vmatmul.f32.gmra.mxu0 %v8519
        %v8521 = vpop.f32.mrf.mxu0
        %v8522 = vadd.f32 %v8421, %v8521
        %8523 = vdwg.mxu0
        %v8524 = vand.u32 %v732, 4294901760
        %v8525 = vsub.f32 %v732, %v8524
        %8526 = vmatpush.msra.mxu0 %v8525
        %v8527 = vand.u32 %v731, 4294901760
        %v8528 = vsub.f32 %v731, %v8527
        %8529 = vmatpush.msra.mxu0 %v8528
        %v8530 = vand.u32 %v730, 4294901760
        %v8531 = vsub.f32 %v730, %v8530
        %8532 = vmatpush.msra.mxu0 %v8531
        %v8533 = vand.u32 %v729, 4294901760
        %v8534 = vsub.f32 %v729, %v8533
        %8535 = vmatpush.msra.mxu0 %v8534
        %v8536 = vand.u32 %v728, 4294901760
        %v8537 = vsub.f32 %v728, %v8536
        %8538 = vmatpush.msra.mxu0 %v8537
        %v8539 = vand.u32 %v727, 4294901760
        %v8540 = vsub.f32 %v727, %v8539
        %8541 = vmatpush.msra.mxu0 %v8540
        %v8542 = vand.u32 %v726, 4294901760
        %v8543 = vsub.f32 %v726, %v8542
        %8544 = vmatpush.msra.mxu0 %v8543
        %v8545 = vand.u32 %v725, 4294901760
        %v8546 = vsub.f32 %v725, %v8545
        %8547 = vmatpush.msra.mxu0 %v8546
        %v8548 = vand.u32 %v724, 4294901760
        %v8549 = vsub.f32 %v724, %v8548
        %8550 = vmatpush.msra.mxu0 %v8549
        %v8551 = vand.u32 %v723, 4294901760
        %v8552 = vsub.f32 %v723, %v8551
        %8553 = vmatpush.msra.mxu0 %v8552
        %v8554 = vand.u32 %v722, 4294901760
        %v8555 = vsub.f32 %v722, %v8554
        %8556 = vmatpush.msra.mxu0 %v8555
        %v8557 = vand.u32 %v721, 4294901760
        %v8558 = vsub.f32 %v721, %v8557
        %8559 = vmatpush.msra.mxu0 %v8558
        %v8560 = vand.u32 %v720, 4294901760
        %v8561 = vsub.f32 %v720, %v8560
        %8562 = vmatpush.msra.mxu0 %v8561
        %v8563 = vand.u32 %v719, 4294901760
        %v8564 = vsub.f32 %v719, %v8563
        %8565 = vmatpush.msra.mxu0 %v8564
        %v8566 = vand.u32 %v718, 4294901760
        %v8567 = vsub.f32 %v718, %v8566
        %8568 = vmatpush.msra.mxu0 %v8567
        %v8569 = vand.u32 %v717, 4294901760
        %v8570 = vsub.f32 %v717, %v8569
        %8571 = vmatpush.msra.mxu0 %v8570
        %v8572 = vand.u32 %v8040, 4294901760
        %v8573 = vsub.f32 %v8040, %v8572
        %8574 = vmatmul.f32.gmra.mxu0 %v8573
        %v8575 = vpop.f32.mrf.mxu0
        %v8576 = vadd.f32 %v8522, %v8575
        %8577 = vdwg.mxu0
        %v8578 = vand.u32 %v732, 4294901760
        %8579 = vmatpush.msra.mxu0 %v8578
        %v8580 = vand.u32 %v731, 4294901760
        %8581 = vmatpush.msra.mxu0 %v8580
        %v8582 = vand.u32 %v730, 4294901760
        %8583 = vmatpush.msra.mxu0 %v8582
        %v8584 = vand.u32 %v729, 4294901760
        %8585 = vmatpush.msra.mxu0 %v8584
        %v8586 = vand.u32 %v728, 4294901760
        %8587 = vmatpush.msra.mxu0 %v8586
        %v8588 = vand.u32 %v727, 4294901760
        %8589 = vmatpush.msra.mxu0 %v8588
        %v8590 = vand.u32 %v726, 4294901760
        %8591 = vmatpush.msra.mxu0 %v8590
        %v8592 = vand.u32 %v725, 4294901760
        %8593 = vmatpush.msra.mxu0 %v8592
        %v8594 = vand.u32 %v724, 4294901760
        %8595 = vmatpush.msra.mxu0 %v8594
        %v8596 = vand.u32 %v723, 4294901760
        %8597 = vmatpush.msra.mxu0 %v8596
        %v8598 = vand.u32 %v722, 4294901760
        %8599 = vmatpush.msra.mxu0 %v8598
        %v8600 = vand.u32 %v721, 4294901760
        %8601 = vmatpush.msra.mxu0 %v8600
        %v8602 = vand.u32 %v720, 4294901760
        %8603 = vmatpush.msra.mxu0 %v8602
        %v8604 = vand.u32 %v719, 4294901760
        %8605 = vmatpush.msra.mxu0 %v8604
        %v8606 = vand.u32 %v718, 4294901760
        %8607 = vmatpush.msra.mxu0 %v8606
        %v8608 = vand.u32 %v717, 4294901760
        %8609 = vmatpush.msra.mxu0 %v8608
        %v8610 = vand.u32 %v8040, 4294901760
        %v8611 = vsub.f32 %v8040, %v8610
        %v8612 = vand.u32 %v8611, 4294901760
        %8613 = vmatmul.f32.gmra.mxu0 %v8612
        %v8614 = vpop.f32.mrf.mxu0
        %v8615 = vadd.f32 %v8576, %v8614
        %8616 = vdwg.mxu0
        %v8617 = vand.u32 %v732, 4294901760
        %v8618 = vsub.f32 %v732, %v8617
        %v8619 = vand.u32 %v8618, 4294901760
        %8620 = vmatpush.msra.mxu0 %v8619
        %v8621 = vand.u32 %v731, 4294901760
        %v8622 = vsub.f32 %v731, %v8621
        %v8623 = vand.u32 %v8622, 4294901760
        %8624 = vmatpush.msra.mxu0 %v8623
        %v8625 = vand.u32 %v730, 4294901760
        %v8626 = vsub.f32 %v730, %v8625
        %v8627 = vand.u32 %v8626, 4294901760
        %8628 = vmatpush.msra.mxu0 %v8627
        %v8629 = vand.u32 %v729, 4294901760
        %v8630 = vsub.f32 %v729, %v8629
        %v8631 = vand.u32 %v8630, 4294901760
        %8632 = vmatpush.msra.mxu0 %v8631
        %v8633 = vand.u32 %v728, 4294901760
        %v8634 = vsub.f32 %v728, %v8633
        %v8635 = vand.u32 %v8634, 4294901760
        %8636 = vmatpush.msra.mxu0 %v8635
        %v8637 = vand.u32 %v727, 4294901760
        %v8638 = vsub.f32 %v727, %v8637
        %v8639 = vand.u32 %v8638, 4294901760
        %8640 = vmatpush.msra.mxu0 %v8639
        %v8641 = vand.u32 %v726, 4294901760
        %v8642 = vsub.f32 %v726, %v8641
        %v8643 = vand.u32 %v8642, 4294901760
        %8644 = vmatpush.msra.mxu0 %v8643
        %v8645 = vand.u32 %v725, 4294901760
        %v8646 = vsub.f32 %v725, %v8645
        %v8647 = vand.u32 %v8646, 4294901760
        %8648 = vmatpush.msra.mxu0 %v8647
        %v8649 = vand.u32 %v724, 4294901760
        %v8650 = vsub.f32 %v724, %v8649
        %v8651 = vand.u32 %v8650, 4294901760
        %8652 = vmatpush.msra.mxu0 %v8651
        %v8653 = vand.u32 %v723, 4294901760
        %v8654 = vsub.f32 %v723, %v8653
        %v8655 = vand.u32 %v8654, 4294901760
        %8656 = vmatpush.msra.mxu0 %v8655
        %v8657 = vand.u32 %v722, 4294901760
        %v8658 = vsub.f32 %v722, %v8657
        %v8659 = vand.u32 %v8658, 4294901760
        %8660 = vmatpush.msra.mxu0 %v8659
        %v8661 = vand.u32 %v721, 4294901760
        %v8662 = vsub.f32 %v721, %v8661
        %v8663 = vand.u32 %v8662, 4294901760
        %8664 = vmatpush.msra.mxu0 %v8663
        %v8665 = vand.u32 %v720, 4294901760
        %v8666 = vsub.f32 %v720, %v8665
        %v8667 = vand.u32 %v8666, 4294901760
        %8668 = vmatpush.msra.mxu0 %v8667
        %v8669 = vand.u32 %v719, 4294901760
        %v8670 = vsub.f32 %v719, %v8669
        %v8671 = vand.u32 %v8670, 4294901760
        %8672 = vmatpush.msra.mxu0 %v8671
        %v8673 = vand.u32 %v718, 4294901760
        %v8674 = vsub.f32 %v718, %v8673
        %v8675 = vand.u32 %v8674, 4294901760
        %8676 = vmatpush.msra.mxu0 %v8675
        %v8677 = vand.u32 %v717, 4294901760
        %v8678 = vsub.f32 %v717, %v8677
        %v8679 = vand.u32 %v8678, 4294901760
        %8680 = vmatpush.msra.mxu0 %v8679
        %v8681 = vand.u32 %v8040, 4294901760
        %8682 = vmatmul.f32.gmra.mxu0 %v8681
        %v8683 = vpop.f32.mrf.mxu0
        %v8684 = vadd.f32 %v8615, %v8683
        %8685 = vdwg.mxu0
        %v8686 = vand.u32 %v732, 4294901760
        %8687 = vmatpush.msra.mxu0 %v8686
        %v8688 = vand.u32 %v731, 4294901760
        %8689 = vmatpush.msra.mxu0 %v8688
        %v8690 = vand.u32 %v730, 4294901760
        %8691 = vmatpush.msra.mxu0 %v8690
        %v8692 = vand.u32 %v729, 4294901760
        %8693 = vmatpush.msra.mxu0 %v8692
        %v8694 = vand.u32 %v728, 4294901760
        %8695 = vmatpush.msra.mxu0 %v8694
        %v8696 = vand.u32 %v727, 4294901760
        %8697 = vmatpush.msra.mxu0 %v8696
        %v8698 = vand.u32 %v726, 4294901760
        %8699 = vmatpush.msra.mxu0 %v8698
        %v8700 = vand.u32 %v725, 4294901760
        %8701 = vmatpush.msra.mxu0 %v8700
        %v8702 = vand.u32 %v724, 4294901760
        %8703 = vmatpush.msra.mxu0 %v8702
        %v8704 = vand.u32 %v723, 4294901760
        %8705 = vmatpush.msra.mxu0 %v8704
        %v8706 = vand.u32 %v722, 4294901760
        %8707 = vmatpush.msra.mxu0 %v8706
        %v8708 = vand.u32 %v721, 4294901760
        %8709 = vmatpush.msra.mxu0 %v8708
        %v8710 = vand.u32 %v720, 4294901760
        %8711 = vmatpush.msra.mxu0 %v8710
        %v8712 = vand.u32 %v719, 4294901760
        %8713 = vmatpush.msra.mxu0 %v8712
        %v8714 = vand.u32 %v718, 4294901760
        %8715 = vmatpush.msra.mxu0 %v8714
        %v8716 = vand.u32 %v717, 4294901760
        %8717 = vmatpush.msra.mxu0 %v8716
        %v8718 = vand.u32 %v8040, 4294901760
        %8719 = vmatmul.f32.gmra.mxu0 %v8718
        %v8720 = vpop.f32.mrf.mxu0
        %v8721 = vadd.f32 %v8684, %v8720
        %8722 = vdwg.mxu0
        %v8723 = vmul.f32 %v8721, 0.001953125
        %v8724 = vmul.f32 %v8723, %v8723
        %v8726 = vrot.slane %v8724, 7
        %v8728 = vsub.f32 %v8723, %v8726
        %v8729 = vadd.f32 %v8728, 1e-05
        %v8730 = vrsqrt.pop %v8729
        %v8731 = vmul.f32 %v8730, %v8729
        %v8732 = vmul.f32 %v8731, %v8730
        %v8733 = vmul.f32 0.5, %v8732
        %v8734 = vsub.f32 1.5, %v8733
        %v8735 = vmul.f32 %v8730, %v8734
        %vm8736 = vweird.f32 %v8729
        %vm8737 = vweird.f32 %v8730
        %vm8738 = vmor %vm8736, %vm8737
        %v8739 = vsel %vm8738, %v8730, %v8735
        %v8740 = vsel %vm869, %v8723, %v8739
        %v8742 = vsel %vm1616, %v8740, 0
        %8744 = vmatpush.msra.mxu0 0.0
        %8745 = vmatpush.msra.mxu0 0.0
        %8746 = vmatpush.msra.mxu0 0.0
        %8747 = vmatpush.msra.mxu0 0.0
        %8748 = vmatpush.msra.mxu0 0.0
        %8749 = vmatpush.msra.mxu0 0.0
        %8750 = vmatpush.msra.mxu0 0.0
        %8751 = vmatpush.msra.mxu0 0.0
        %8752 = vmatpush.msra.mxu0 0.0
        %8753 = vmatpush.msra.mxu0 0.0
        %8754 = vmatpush.msra.mxu0 0.0
        %8755 = vmatpush.msra.mxu0 0.0
        %v8756 = vand.u32 %v739, 4294901760
        %8757 = vmatpush.msra.mxu0 %v8756
        %v8758 = vand.u32 %v737, 4294901760
        %8759 = vmatpush.msra.mxu0 %v8758
        %v8760 = vand.u32 %v735, 4294901760
        %8761 = vmatpush.msra.mxu0 %v8760
        %v8762 = vand.u32 %v733, 4294901760
        %8763 = vmatpush.msra.mxu0 %v8762
        %v8764 = vand.u32 %v8742, 4294901760
        %v8765 = vsub.f32 %v8742, %v8764
        %v8766 = vand.u32 %v8765, 4294901760
        %v8767 = vsub.f32 %v8765, %v8766
        %v8768 = vand.u32 %v8767, 4294901760
        %8769 = vmatmul.f32.gmra.mxu0 %v8768
        %v8770 = vpop.f32.mrf.mxu0
        %v8771 = vadd.f32 0.0, %v8770
        %8772 = vdwg.mxu0
        %8773 = vmatpush.msra.mxu0 0.0
        %8774 = vmatpush.msra.mxu0 0.0
        %8775 = vmatpush.msra.mxu0 0.0
        %8776 = vmatpush.msra.mxu0 0.0
        %8777 = vmatpush.msra.mxu0 0.0
        %8778 = vmatpush.msra.mxu0 0.0
        %8779 = vmatpush.msra.mxu0 0.0
        %8780 = vmatpush.msra.mxu0 0.0
        %8781 = vmatpush.msra.mxu0 0.0
        %8782 = vmatpush.msra.mxu0 0.0
        %8783 = vmatpush.msra.mxu0 0.0
        %8784 = vmatpush.msra.mxu0 0.0
        %v8785 = vand.u32 %v739, 4294901760
        %v8786 = vsub.f32 %v739, %v8785
        %v8787 = vand.u32 %v8786, 4294901760
        %v8788 = vsub.f32 %v8786, %v8787
        %v8789 = vand.u32 %v8788, 4294901760
        %8790 = vmatpush.msra.mxu0 %v8789
        %v8791 = vand.u32 %v737, 4294901760
        %v8792 = vsub.f32 %v737, %v8791
        %v8793 = vand.u32 %v8792, 4294901760
        %v8794 = vsub.f32 %v8792, %v8793
        %v8795 = vand.u32 %v8794, 4294901760
        %8796 = vmatpush.msra.mxu0 %v8795
        %v8797 = vand.u32 %v735, 4294901760
        %v8798 = vsub.f32 %v735, %v8797
        %v8799 = vand.u32 %v8798, 4294901760
        %v8800 = vsub.f32 %v8798, %v8799
        %v8801 = vand.u32 %v8800, 4294901760
        %8802 = vmatpush.msra.mxu0 %v8801
        %v8803 = vand.u32 %v733, 4294901760
        %v8804 = vsub.f32 %v733, %v8803
        %v8805 = vand.u32 %v8804, 4294901760
        %v8806 = vsub.f32 %v8804, %v8805
        %v8807 = vand.u32 %v8806, 4294901760
        %8808 = vmatpush.msra.mxu0 %v8807
        %v8809 = vand.u32 %v8742, 4294901760
        %8810 = vmatmul.f32.gmra.mxu0 %v8809
        %v8811 = vpop.f32.mrf.mxu0
        %v8812 = vadd.f32 %v8771, %v8811
        %8813 = vdwg.mxu0
        %8814 = vmatpush.msra.mxu0 0.0
        %8815 = vmatpush.msra.mxu0 0.0
        %8816 = vmatpush.msra.mxu0 0.0
        %8817 = vmatpush.msra.mxu0 0.0
        %8818 = vmatpush.msra.mxu0 0.0
        %8819 = vmatpush.msra.mxu0 0.0
        %8820 = vmatpush.msra.mxu0 0.0
        %8821 = vmatpush.msra.mxu0 0.0
        %8822 = vmatpush.msra.mxu0 0.0
        %8823 = vmatpush.msra.mxu0 0.0
        %8824 = vmatpush.msra.mxu0 0.0
        %8825 = vmatpush.msra.mxu0 0.0
        %v8826 = vand.u32 %v739, 4294901760
        %v8827 = vsub.f32 %v739, %v8826
        %8828 = vmatpush.msra.mxu0 %v8827
        %v8829 = vand.u32 %v737, 4294901760
        %v8830 = vsub.f32 %v737, %v8829
        %8831 = vmatpush.msra.mxu0 %v8830
        %v8832 = vand.u32 %v735, 4294901760
        %v8833 = vsub.f32 %v735, %v8832
        %8834 = vmatpush.msra.mxu0 %v8833
        %v8835 = vand.u32 %v733, 4294901760
        %v8836 = vsub.f32 %v733, %v8835
        %8837 = vmatpush.msra.mxu0 %v8836
        %v8838 = vand.u32 %v8742, 4294901760
        %v8839 = vsub.f32 %v8742, %v8838
        %8840 = vmatmul.f32.gmra.mxu0 %v8839
        %v8841 = vpop.f32.mrf.mxu0
        %v8842 = vadd.f32 %v8812, %v8841
        %8843 = vdwg.mxu0
        %8844 = vmatpush.msra.mxu0 0.0
        %8845 = vmatpush.msra.mxu0 0.0
        %8846 = vmatpush.msra.mxu0 0.0
        %8847 = vmatpush.msra.mxu0 0.0
        %8848 = vmatpush.msra.mxu0 0.0
        %8849 = vmatpush.msra.mxu0 0.0
        %8850 = vmatpush.msra.mxu0 0.0
        %8851 = vmatpush.msra.mxu0 0.0
        %8852 = vmatpush.msra.mxu0 0.0
        %8853 = vmatpush.msra.mxu0 0.0
        %8854 = vmatpush.msra.mxu0 0.0
        %8855 = vmatpush.msra.mxu0 0.0
        %v8856 = vand.u32 %v739, 4294901760
        %8857 = vmatpush.msra.mxu0 %v8856
        %v8858 = vand.u32 %v737, 4294901760
        %8859 = vmatpush.msra.mxu0 %v8858
        %v8860 = vand.u32 %v735, 4294901760
        %8861 = vmatpush.msra.mxu0 %v8860
        %v8862 = vand.u32 %v733, 4294901760
        %8863 = vmatpush.msra.mxu0 %v8862
        %v8864 = vand.u32 %v8742, 4294901760
        %v8865 = vsub.f32 %v8742, %v8864
        %v8866 = vand.u32 %v8865, 4294901760
        %8867 = vmatmul.f32.gmra.mxu0 %v8866
        %v8868 = vpop.f32.mrf.mxu0
        %v8869 = vadd.f32 %v8842, %v8868
        %8870 = vdwg.mxu0
        %8871 = vmatpush.msra.mxu0 0.0
        %8872 = vmatpush.msra.mxu0 0.0
        %8873 = vmatpush.msra.mxu0 0.0
        %8874 = vmatpush.msra.mxu0 0.0
        %8875 = vmatpush.msra.mxu0 0.0
        %8876 = vmatpush.msra.mxu0 0.0
        %8877 = vmatpush.msra.mxu0 0.0
        %8878 = vmatpush.msra.mxu0 0.0
        %8879 = vmatpush.msra.mxu0 0.0
        %8880 = vmatpush.msra.mxu0 0.0
        %8881 = vmatpush.msra.mxu0 0.0
        %8882 = vmatpush.msra.mxu0 0.0
        %v8883 = vand.u32 %v739, 4294901760
        %v8884 = vsub.f32 %v739, %v8883
        %v8885 = vand.u32 %v8884, 4294901760
        %8886 = vmatpush.msra.mxu0 %v8885
        %v8887 = vand.u32 %v737, 4294901760
        %v8888 = vsub.f32 %v737, %v8887
        %v8889 = vand.u32 %v8888, 4294901760
        %8890 = vmatpush.msra.mxu0 %v8889
        %v8891 = vand.u32 %v735, 4294901760
        %v8892 = vsub.f32 %v735, %v8891
        %v8893 = vand.u32 %v8892, 4294901760
        %8894 = vmatpush.msra.mxu0 %v8893
        %v8895 = vand.u32 %v733, 4294901760
        %v8896 = vsub.f32 %v733, %v8895
        %v8897 = vand.u32 %v8896, 4294901760
        %8898 = vmatpush.msra.mxu0 %v8897
        %v8899 = vand.u32 %v8742, 4294901760
        %8900 = vmatmul.f32.gmra.mxu0 %v8899
        %v8901 = vpop.f32.mrf.mxu0
        %v8902 = vadd.f32 %v8869, %v8901
        %8903 = vdwg.mxu0
        %8904 = vmatpush.msra.mxu0 0.0
        %8905 = vmatpush.msra.mxu0 0.0
        %8906 = vmatpush.msra.mxu0 0.0
        %8907 = vmatpush.msra.mxu0 0.0
        %8908 = vmatpush.msra.mxu0 0.0
        %8909 = vmatpush.msra.mxu0 0.0
        %8910 = vmatpush.msra.mxu0 0.0
        %8911 = vmatpush.msra.mxu0 0.0
        %8912 = vmatpush.msra.mxu0 0.0
        %8913 = vmatpush.msra.mxu0 0.0
        %8914 = vmatpush.msra.mxu0 0.0
        %8915 = vmatpush.msra.mxu0 0.0
        %v8916 = vand.u32 %v739, 4294901760
        %8917 = vmatpush.msra.mxu0 %v8916
        %v8918 = vand.u32 %v737, 4294901760
        %8919 = vmatpush.msra.mxu0 %v8918
        %v8920 = vand.u32 %v735, 4294901760
        %8921 = vmatpush.msra.mxu0 %v8920
        %v8922 = vand.u32 %v733, 4294901760
        %8923 = vmatpush.msra.mxu0 %v8922
        %v8924 = vand.u32 %v8742, 4294901760
        %8925 = vmatmul.f32.gmra.mxu0 %v8924
        %v8926 = vpop.f32.mrf.mxu0
        %v8927 = vadd.f32 %v8902, %v8926
        %8928 = vdwg.mxu0
        %8929 = vmatpush.msra.mxu0 0.0
        %8930 = vmatpush.msra.mxu0 0.0
        %8931 = vmatpush.msra.mxu0 0.0
        %8932 = vmatpush.msra.mxu0 0.0
        %8933 = vmatpush.msra.mxu0 0.0
        %8934 = vmatpush.msra.mxu0 0.0
        %8935 = vmatpush.msra.mxu0 0.0
        %8936 = vmatpush.msra.mxu0 0.0
        %8937 = vmatpush.msra.mxu0 0.0
        %8938 = vmatpush.msra.mxu0 0.0
        %8939 = vmatpush.msra.mxu0 0.0
        %8940 = vmatpush.msra.mxu0 0.0
        %v8941 = vand.u32 %v740, 4294901760
        %8942 = vmatpush.msra.mxu0 %v8941
        %v8943 = vand.u32 %v738, 4294901760
        %8944 = vmatpush.msra.mxu0 %v8943
        %v8945 = vand.u32 %v736, 4294901760
        %8946 = vmatpush.msra.mxu0 %v8945
        %v8947 = vand.u32 %v734, 4294901760
        %8948 = vmatpush.msra.mxu0 %v8947
        %v8949 = vand.u32 %v8742, 4294901760
        %v8950 = vsub.f32 %v8742, %v8949
        %v8951 = vand.u32 %v8950, 4294901760
        %v8952 = vsub.f32 %v8950, %v8951
        %v8953 = vand.u32 %v8952, 4294901760
        %8954 = vmatmul.f32.gmra.mxu0 %v8953
        %v8955 = vpop.f32.mrf.mxu0
        %v8956 = vadd.f32 0.0, %v8955
        %8957 = vdwg.mxu0
        %8958 = vmatpush.msra.mxu0 0.0
        %8959 = vmatpush.msra.mxu0 0.0
        %8960 = vmatpush.msra.mxu0 0.0
        %8961 = vmatpush.msra.mxu0 0.0
        %8962 = vmatpush.msra.mxu0 0.0
        %8963 = vmatpush.msra.mxu0 0.0
        %8964 = vmatpush.msra.mxu0 0.0
        %8965 = vmatpush.msra.mxu0 0.0
        %8966 = vmatpush.msra.mxu0 0.0
        %8967 = vmatpush.msra.mxu0 0.0
        %8968 = vmatpush.msra.mxu0 0.0
        %8969 = vmatpush.msra.mxu0 0.0
        %v8970 = vand.u32 %v740, 4294901760
        %v8971 = vsub.f32 %v740, %v8970
        %v8972 = vand.u32 %v8971, 4294901760
        %v8973 = vsub.f32 %v8971, %v8972
        %v8974 = vand.u32 %v8973, 4294901760
        %8975 = vmatpush.msra.mxu0 %v8974
        %v8976 = vand.u32 %v738, 4294901760
        %v8977 = vsub.f32 %v738, %v8976
        %v8978 = vand.u32 %v8977, 4294901760
        %v8979 = vsub.f32 %v8977, %v8978
        %v8980 = vand.u32 %v8979, 4294901760
        %8981 = vmatpush.msra.mxu0 %v8980
        %v8982 = vand.u32 %v736, 4294901760
        %v8983 = vsub.f32 %v736, %v8982
        %v8984 = vand.u32 %v8983, 4294901760
        %v8985 = vsub.f32 %v8983, %v8984
        %v8986 = vand.u32 %v8985, 4294901760
        %8987 = vmatpush.msra.mxu0 %v8986
        %v8988 = vand.u32 %v734, 4294901760
        %v8989 = vsub.f32 %v734, %v8988
        %v8990 = vand.u32 %v8989, 4294901760
        %v8991 = vsub.f32 %v8989, %v8990
        %v8992 = vand.u32 %v8991, 4294901760
        %8993 = vmatpush.msra.mxu0 %v8992
        %v8994 = vand.u32 %v8742, 4294901760
        %8995 = vmatmul.f32.gmra.mxu0 %v8994
        %v8996 = vpop.f32.mrf.mxu0
        %v8997 = vadd.f32 %v8956, %v8996
        %8998 = vdwg.mxu0
        %8999 = vmatpush.msra.mxu0 0.0
        %9000 = vmatpush.msra.mxu0 0.0
        %9001 = vmatpush.msra.mxu0 0.0
        %9002 = vmatpush.msra.mxu0 0.0
        %9003 = vmatpush.msra.mxu0 0.0
        %9004 = vmatpush.msra.mxu0 0.0
        %9005 = vmatpush.msra.mxu0 0.0
        %9006 = vmatpush.msra.mxu0 0.0
        %9007 = vmatpush.msra.mxu0 0.0
        %9008 = vmatpush.msra.mxu0 0.0
        %9009 = vmatpush.msra.mxu0 0.0
        %9010 = vmatpush.msra.mxu0 0.0
        %v9011 = vand.u32 %v740, 4294901760
        %v9012 = vsub.f32 %v740, %v9011
        %9013 = vmatpush.msra.mxu0 %v9012
        %v9014 = vand.u32 %v738, 4294901760
        %v9015 = vsub.f32 %v738, %v9014
        %9016 = vmatpush.msra.mxu0 %v9015
        %v9017 = vand.u32 %v736, 4294901760
        %v9018 = vsub.f32 %v736, %v9017
        %9019 = vmatpush.msra.mxu0 %v9018
        %v9020 = vand.u32 %v734, 4294901760
        %v9021 = vsub.f32 %v734, %v9020
        %9022 = vmatpush.msra.mxu0 %v9021
        %v9023 = vand.u32 %v8742, 4294901760
        %v9024 = vsub.f32 %v8742, %v9023
        %9025 = vmatmul.f32.gmra.mxu0 %v9024
        %v9026 = vpop.f32.mrf.mxu0
        %v9027 = vadd.f32 %v8997, %v9026
        %9028 = vdwg.mxu0
        %9029 = vmatpush.msra.mxu0 0.0
        %9030 = vmatpush.msra.mxu0 0.0
        %9031 = vmatpush.msra.mxu0 0.0
        %9032 = vmatpush.msra.mxu0 0.0
        %9033 = vmatpush.msra.mxu0 0.0
        %9034 = vmatpush.msra.mxu0 0.0
        %9035 = vmatpush.msra.mxu0 0.0
        %9036 = vmatpush.msra.mxu0 0.0
        %9037 = vmatpush.msra.mxu0 0.0
        %9038 = vmatpush.msra.mxu0 0.0
        %9039 = vmatpush.msra.mxu0 0.0
        %9040 = vmatpush.msra.mxu0 0.0
        %v9041 = vand.u32 %v740, 4294901760
        %9042 = vmatpush.msra.mxu0 %v9041
        %v9043 = vand.u32 %v738, 4294901760
        %9044 = vmatpush.msra.mxu0 %v9043
        %v9045 = vand.u32 %v736, 4294901760
        %9046 = vmatpush.msra.mxu0 %v9045
        %v9047 = vand.u32 %v734, 4294901760
        %9048 = vmatpush.msra.mxu0 %v9047
        %v9049 = vand.u32 %v8742, 4294901760
        %v9050 = vsub.f32 %v8742, %v9049
        %v9051 = vand.u32 %v9050, 4294901760
        %9052 = vmatmul.f32.gmra.mxu0 %v9051
        %v9053 = vpop.f32.mrf.mxu0
        %v9054 = vadd.f32 %v9027, %v9053
        %9055 = vdwg.mxu0
        %9056 = vmatpush.msra.mxu0 0.0
        %9057 = vmatpush.msra.mxu0 0.0
        %9058 = vmatpush.msra.mxu0 0.0
        %9059 = vmatpush.msra.mxu0 0.0
        %9060 = vmatpush.msra.mxu0 0.0
        %9061 = vmatpush.msra.mxu0 0.0
        %9062 = vmatpush.msra.mxu0 0.0
        %9063 = vmatpush.msra.mxu0 0.0
        %9064 = vmatpush.msra.mxu0 0.0
        %9065 = vmatpush.msra.mxu0 0.0
        %9066 = vmatpush.msra.mxu0 0.0
        %9067 = vmatpush.msra.mxu0 0.0
        %v9068 = vand.u32 %v740, 4294901760
        %v9069 = vsub.f32 %v740, %v9068
        %v9070 = vand.u32 %v9069, 4294901760
        %9071 = vmatpush.msra.mxu0 %v9070
        %v9072 = vand.u32 %v738, 4294901760
        %v9073 = vsub.f32 %v738, %v9072
        %v9074 = vand.u32 %v9073, 4294901760
        %9075 = vmatpush.msra.mxu0 %v9074
        %v9076 = vand.u32 %v736, 4294901760
        %v9077 = vsub.f32 %v736, %v9076
        %v9078 = vand.u32 %v9077, 4294901760
        %9079 = vmatpush.msra.mxu0 %v9078
        %v9080 = vand.u32 %v734, 4294901760
        %v9081 = vsub.f32 %v734, %v9080
        %v9082 = vand.u32 %v9081, 4294901760
        %9083 = vmatpush.msra.mxu0 %v9082
        %v9084 = vand.u32 %v8742, 4294901760
        %9085 = vmatmul.f32.gmra.mxu0 %v9084
        %v9086 = vpop.f32.mrf.mxu0
        %v9087 = vadd.f32 %v9054, %v9086
        %9088 = vdwg.mxu0
        %9089 = vmatpush.msra.mxu0 0.0
        %9090 = vmatpush.msra.mxu0 0.0
        %9091 = vmatpush.msra.mxu0 0.0
        %9092 = vmatpush.msra.mxu0 0.0
        %9093 = vmatpush.msra.mxu0 0.0
        %9094 = vmatpush.msra.mxu0 0.0
        %9095 = vmatpush.msra.mxu0 0.0
        %9096 = vmatpush.msra.mxu0 0.0
        %9097 = vmatpush.msra.mxu0 0.0
        %9098 = vmatpush.msra.mxu0 0.0
        %9099 = vmatpush.msra.mxu0 0.0
        %9100 = vmatpush.msra.mxu0 0.0
        %v9101 = vand.u32 %v740, 4294901760
        %9102 = vmatpush.msra.mxu0 %v9101
        %v9103 = vand.u32 %v738, 4294901760
        %9104 = vmatpush.msra.mxu0 %v9103
        %v9105 = vand.u32 %v736, 4294901760
        %9106 = vmatpush.msra.mxu0 %v9105
        %v9107 = vand.u32 %v734, 4294901760
        %9108 = vmatpush.msra.mxu0 %v9107
        %v9109 = vand.u32 %v8742, 4294901760
        %9110 = vmatmul.f32.gmra.mxu0 %v9109
        %v9111 = vpop.f32.mrf.mxu0
        %v9112 = vadd.f32 %v9087, %v9111
        %9113 = vdwg.mxu0
        %v9115 = vperm.slane %v7969, 0
        %v9116 = vperm.slane %v7969, 1
        %v9119 = vmul.f32 %v8927, %v9115
        %v9120 = vmul.f32 %v9112, %v9116
        %v9123 = vrot.slane %v9119, 1
        %v9124 = vrot.slane %v9120, 1
        %v9127 = vmul.f32 %v8927, %v9123
        %v9128 = vmul.f32 %v9112, %v9124
        %v9131 = vrot.slane %v9128, 7
        %v9132 = vsel %vm869, %v9127, %v9131
        %v9134 = vsub.f32 %v7970, %v9132
        %v9135 = vperm.slane %v9119, 1
        %v9136 = vperm.slane %v9120, 1
        %v9137 = vmul.f32 %v7428, %v9135
        %v9138 = vmul.f32 %v7950, %v9136
        %v9139 = vmul.f32 %v7430, %v9135
        %v9140 = vmul.f32 %v7952, %v9136
        %v9141 = vmul.f32 %v7433, %v9135
        %v9142 = vmul.f32 %v7955, %v9136
        %v9143 = vmul.f32 %v7435, %v9135
        %v9144 = vmul.f32 %v7957, %v9136
        %v9145 = vmul.f32 %v7438, %v9135
        %v9146 = vmul.f32 %v7960, %v9136
        %v9147 = vmul.f32 %v7440, %v9135
        %v9148 = vmul.f32 %v7962, %v9136
        %v9149 = vmul.f32 %v7443, %v9135
        %v9150 = vmul.f32 %v7965, %v9136
        %v9151 = vmul.f32 %v7445, %v9135
        %v9152 = vmul.f32 %v7967, %v9136
        %v9154 = vperm.slane %v9134, 0
        %v9155 = vperm.slane %v9134, 1
        %v9158 = vadd.f32 %v9137, %v9154
        %v9159 = vadd.f32 %v9138, %v9155
        %v9160 = vadd.f32 %v9139, %v9154
        %v9161 = vadd.f32 %v9140, %v9155
        %v9162 = vadd.f32 %v9141, %v9154
        %v9163 = vadd.f32 %v9142, %v9155
        %v9164 = vadd.f32 %v9143, %v9154
        %v9165 = vadd.f32 %v9144, %v9155
        %v9166 = vadd.f32 %v9145, %v9154
        %v9167 = vadd.f32 %v9146, %v9155
        %v9168 = vadd.f32 %v9147, %v9154
        %v9169 = vadd.f32 %v9148, %v9155
        %v9170 = vadd.f32 %v9149, %v9154
        %v9171 = vadd.f32 %v9150, %v9155
        %v9172 = vadd.f32 %v9151, %v9154
        %v9173 = vadd.f32 %v9152, %v9155
        %v9174 = vadd.f32 %v9158, %v4405
        %v9175 = vadd.f32 %v9159, %v4406
        %v9176 = vadd.f32 %v9160, %v4407
        %v9177 = vadd.f32 %v9161, %v4408
        %v9178 = vadd.f32 %v9162, %v4409
        %v9179 = vadd.f32 %v9163, %v4410
        %v9180 = vadd.f32 %v9164, %v4411
        %v9181 = vadd.f32 %v9165, %v4412
        %v9182 = vadd.f32 %v9166, %v4413
        %v9183 = vadd.f32 %v9167, %v4414
        %v9184 = vadd.f32 %v9168, %v4415
        %v9185 = vadd.f32 %v9169, %v4416
        %v9186 = vadd.f32 %v9170, %v4417
        %v9187 = vadd.f32 %v9171, %v4418
        %v9188 = vadd.f32 %v9172, %v4419
        %v9189 = vadd.f32 %v9173, %v4420
        %v9190 = vsub.f32 0.0, %v9174
        %v9191 = vsub.f32 0.0, %v9175
        %v9192 = vsub.f32 0.0, %v9176
        %v9193 = vsub.f32 0.0, %v9177
        %v9194 = vsub.f32 0.0, %v9178
        %v9195 = vsub.f32 0.0, %v9179
        %v9196 = vsub.f32 0.0, %v9180
        %v9197 = vsub.f32 0.0, %v9181
        %v9198 = vsub.f32 0.0, %v9182
        %v9199 = vsub.f32 0.0, %v9183
        %v9200 = vsub.f32 0.0, %v9184
        %v9201 = vsub.f32 0.0, %v9185
        %v9202 = vsub.f32 0.0, %v9186
        %v9203 = vsub.f32 0.0, %v9187
        %v9204 = vsub.f32 0.0, %v9188
        %v9205 = vsub.f32 0.0, %v9189
        %v9206 = vmul.f32 %v9190, 1.442695
        %v9207 = vpow.pop %v9206
        %v9208 = vmul.f32 %v9191, 1.442695
        %v9209 = vpow.pop %v9208
        %v9210 = vmul.f32 %v9192, 1.442695
        %v9211 = vpow.pop %v9210
        %v9212 = vmul.f32 %v9193, 1.442695
        %v9213 = vpow.pop %v9212
        %v9214 = vmul.f32 %v9194, 1.442695
        %v9215 = vpow.pop %v9214
        %v9216 = vmul.f32 %v9195, 1.442695
        %v9217 = vpow.pop %v9216
        %v9218 = vmul.f32 %v9196, 1.442695
        %v9219 = vpow.pop %v9218
        %v9220 = vmul.f32 %v9197, 1.442695
        %v9221 = vpow.pop %v9220
        %v9222 = vmul.f32 %v9198, 1.442695
        %v9223 = vpow.pop %v9222
        %v9224 = vmul.f32 %v9199, 1.442695
        %v9225 = vpow.pop %v9224
        %v9226 = vmul.f32 %v9200, 1.442695
        %v9227 = vpow.pop %v9226
        %v9228 = vmul.f32 %v9201, 1.442695
        %v9229 = vpow.pop %v9228
        %v9230 = vmul.f32 %v9202, 1.442695
        %v9231 = vpow.pop %v9230
        %v9232 = vmul.f32 %v9203, 1.442695
        %v9233 = vpow.pop %v9232
        %v9234 = vmul.f32 %v9204, 1.442695
        %v9235 = vpow.pop %v9234
        %v9236 = vmul.f32 %v9205, 1.442695
        %v9237 = vpow.pop %v9236
        %v9238 = vadd.f32 %v9207, 1.0
        %v9239 = vadd.f32 %v9209, 1.0
        %v9240 = vadd.f32 %v9211, 1.0
        %v9241 = vadd.f32 %v9213, 1.0
        %v9242 = vadd.f32 %v9215, 1.0
        %v9243 = vadd.f32 %v9217, 1.0
        %v9244 = vadd.f32 %v9219, 1.0
        %v9245 = vadd.f32 %v9221, 1.0
        %v9246 = vadd.f32 %v9223, 1.0
        %v9247 = vadd.f32 %v9225, 1.0
        %v9248 = vadd.f32 %v9227, 1.0
        %v9249 = vadd.f32 %v9229, 1.0
        %v9250 = vadd.f32 %v9231, 1.0
        %v9251 = vadd.f32 %v9233, 1.0
        %v9252 = vadd.f32 %v9235, 1.0
        %v9253 = vadd.f32 %v9237, 1.0
        %v9254 = vrcp.pop %v9238
        %v9255 = vrcp.pop %v9239
        %v9256 = vrcp.pop %v9240
        %v9257 = vrcp.pop %v9241
        %v9258 = vrcp.pop %v9242
        %v9259 = vrcp.pop %v9243
        %v9260 = vrcp.pop %v9244
        %v9261 = vrcp.pop %v9245
        %v9262 = vrcp.pop %v9246
        %v9263 = vrcp.pop %v9247
        %v9264 = vrcp.pop %v9248
        %v9265 = vrcp.pop %v9249
        %v9266 = vrcp.pop %v9250
        %v9267 = vrcp.pop %v9251
        %v9268 = vrcp.pop %v9252
        %v9269 = vrcp.pop %v9253
        %v9270 = vmul.f32 %v9174, %v9254
        %v9271 = vmul.f32 %v9175, %v9255
        %v9272 = vmul.f32 %v9176, %v9256
        %v9273 = vmul.f32 %v9177, %v9257
        %v9274 = vmul.f32 %v9178, %v9258
        %v9275 = vmul.f32 %v9179, %v9259
        %v9276 = vmul.f32 %v9180, %v9260
        %v9277 = vmul.f32 %v9181, %v9261
        %v9278 = vmul.f32 %v9182, %v9262
        %v9279 = vmul.f32 %v9183, %v9263
        %v9280 = vmul.f32 %v9184, %v9264
        %v9281 = vmul.f32 %v9185, %v9265
        %v9282 = vmul.f32 %v9186, %v9266
        %v9283 = vmul.f32 %v9187, %v9267
        %v9284 = vmul.f32 %v9188, %v9268
        %v9285 = vmul.f32 %v9189, %v9269
        %9286 = vst [vmem:[%s691] sm:$0xff] %v9270
        %9287 = vst [vmem:[%s691 + $0x8] sm:$0xff] %v9271
        %9288 = vst [vmem:[%s691 + $0x10] sm:$0xff] %v9272
        %9289 = vst [vmem:[%s691 + $0x18] sm:$0xff] %v9273
        %9290 = vst [vmem:[%s691 + $0x20] sm:$0xff] %v9274
        %9291 = vst [vmem:[%s691 + $0x28] sm:$0xff] %v9275
        %9292 = vst [vmem:[%s691 + $0x30] sm:$0xff] %v9276
        %9293 = vst [vmem:[%s691 + $0x38] sm:$0xff] %v9277
        %9294 = vst [vmem:[%s691 + $0x40] sm:$0xff] %v9278
        %9295 = vst [vmem:[%s691 + $0x48] sm:$0xff] %v9279
        %9296 = vst [vmem:[%s691 + $0x50] sm:$0xff] %v9280
        %9297 = vst [vmem:[%s691 + $0x58] sm:$0xff] %v9281
        %9298 = vst [vmem:[%s691 + $0x60] sm:$0xff] %v9282
        %9299 = vst [vmem:[%s691 + $0x68] sm:$0xff] %v9283
        %9300 = vst [vmem:[%s691 + $0x70] sm:$0xff] %v9284
        %9301 = vst [vmem:[%s691 + $0x78] sm:$0xff] %v9285
        %p9302 = scmp.lt.s32.totalorder %s33, 1
        %s9303 = scalar_select %p9302, %s33, 1
        %s9304 = smul.addr %s9303, 16
        %s9305 = smul.addr %s9304, 8
        %s9306 = scalar_lea.vmem %s15, %s9305
        // Predicated region
        $region133: #{residual_block_pallas.1} parent=79 // pred_check
          %p9307 = pneg %p371
        $region134: #{residual_block_pallas.1} parent=79 // pred_check_branch
          %9309 = sbr.rel (%p9307) target = $region136
        $region135: #{residual_block_pallas.1} parent=79 // pred_region
          _
        $region136: #{residual_block_pallas.1} parent=79 // pred_fallthru
          _
      $region80: #{residual_block_pallas.1} parent=5 // pred_fallthru
        _
      %p9310 = scmp.le.s32.totalorder 2, %s28
      // Predicated region
      $region137: #{residual_block_pallas.1} parent=5 // pred_check
        %p9311 = pneg %p9310
      $region138: #{residual_block_pallas.1} parent=5 // pred_check_branch
        %9313 = sbr.rel (%p9311) target = $region140
      $region139: #{residual_block_pallas.1} parent=5 // pred_region
        %s9314 = ssub.s32 %s28, 2
        // Predicated region
        $region141: #{residual_block_pallas.1} parent=139 // pred_check
          %p9315 = pneg %p377
        $region142: #{residual_block_pallas.1} parent=139 // pred_check_branch
          %9317 = sbr.rel (%p9315) target = $region144
        $region143: #{residual_block_pallas.1} parent=139 // pred_region
          %p9318 = scmp.lt.s32.totalorder %s34, 1
          %s9319 = scalar_select %p9318, %s34, 1
          %s9320 = smul.addr %s9319, 16
          %s9321 = smul.addr %s9320, 8
          %s9322 = scalar_lea.vmem %s15, %s9321
        $region144: #{residual_block_pallas.1} parent=139 // pred_fallthru
          _
      $region140: #{residual_block_pallas.1} parent=5 // pred_fallthru
        _
    $region6: #{residual_block_pallas.1} parent=1 // loop_footer
      %s32 = sadd.s32 1, %s28
    $region7: #{residual_block_pallas.1} parent=1 // loop_footer_branch
      %27 = sbr.rel target = $region3
    $region8: #{residual_block_pallas.1} parent=1 // loop_exit
      _
    %9323 = vsyncpa [#allocation5], 1
    %s9324 = scalar_lea.sflag [#allocation5], 1
    %9325 = vsyncpa %s9324, 1
    %9326 = vsyncpa [#allocation7], 1
    %9327 = vsyncpa [#allocation10], 1
    %9328 = vsyncpa [#allocation13], 1
    %9329 = vsyncpa [#allocation16], 1
    %9330 = vsyncpa [#allocation19], 1
    %9331 = vsyncpa [#allocation22], 1

</llo_original>
